<compile_context>
chip_gen: v7x
topology: tpu7x:2x2x1
jax: 0.10.0
libtpu: 0.0.40
codegen_flags: <defaults>
</compile_context>

<pallas_src>
import math
from functools import partial

import jax
import jax.numpy as jnp
import numpy as np
from jax import lax
from jax.experimental import pallas as pl
from jax.experimental.pallas import tpu as pltpu

_BN_EPS = 1e-5
_PAD = 2        # max conv 'same' padding (K=5 -> 2); K=3 layers need only 1 <= _PAD
_MARGIN = 128   # lane-aligned left margin of the tap staging scratch


def _encoder_kernel(x_ref,                                   # (40, Lp)    f32
                    w1_ref, w2_ref, w3_ref,                  # (5, C, cin) bf16
                    w4_ref, w5_ref, w6_ref,                  # (3, C, C)   bf16
                    g_ref, b_ref,                            # (6, C, 1)   f32
                    fcw_ref, fcb_ref,                        # (C, 2C), (C, 1) f32
                    mask_ref,                                # (1, Lp)     f32 0/1
                    sel_ref,                                 # (Lp, B)     f32 0/1
                    out_ref,                                 # (C, B)      f32
                    pad_ref,                                 # scratch (R, Lp+2*MARGIN) bf16
                    *, B, W):
    C = out_ref.shape[0]
    Lp = x_ref.shape[1]
    M = _MARGIN
    n_bn = B * W                      # BatchNorm sample count (N * H * W, H == 1)

    # Zero the staging scratch once; only its interior [:, M:M+Lp] is ever
    # rewritten, so the margins stay zero (finite tap reads near slab edges).
    pad_ref[...] = jnp.zeros_like(pad_ref)

    # Hoisted validity-mask broadcast: 1.0 on real data columns, 0.0 on the
    # per-segment conv padding and on the lane-round-up dead columns.
    mask_c = jnp.broadcast_to(mask_ref[...], (C, Lp))        # (C, Lp) f32

    layer_refs = (w1_ref, w2_ref, w3_ref, w4_ref, w5_ref, w6_ref)

    h = x_ref[...]                                           # (40, Lp) f32
    for layer, w_ref in enumerate(layer_refs):
        K, _, cin = w_ref.shape

        # ---- conv: stage once (bf16), then K accumulated MXU matmuls ----
        pad_ref[0:cin, M:M + Lp] = h.astype(jnp.bfloat16)    # lane-aligned store
        y = None
        for k in range(K):
            off = M + k - K // 2                             # static offset
            tap = pad_ref[0:cin, off:off + Lp]               # (cin, Lp) bf16
            part = jnp.dot(w_ref[k], tap,
                           preferred_element_type=jnp.float32)   # (C, Lp) f32
            y = part if y is None else y + part

        # ---- training-mode BatchNorm2d + ReLU, single fused pass --------
        yv = y * mask_c                                      # zero pad/dead cols
        stacked = jnp.concatenate([yv, yv * yv], axis=0)     # (2C, Lp)
        ssum = jnp.sum(stacked, axis=-1, keepdims=True)      # one XLU chain
        s1 = ssum[0:C]                                       # (C, 1)
        s2 = ssum[C:2 * C]                                   # (C, 1)
        mu = s1 / n_bn
        var = jnp.maximum(s2 / n_bn - mu * mu, 0.0)          # biased var, clamped
        scale = g_ref[layer] * lax.rsqrt(var + _BN_EPS)      # (C, 1)
        shift = b_ref[layer] - mu * scale
        # ReLU(0)=0 and mask is 0/1, so multiplying after the max restores
        # exact zeros in the padding columns for the next layer's taps.
        h = jnp.maximum(y * scale + shift, 0.0) * mask_c     # (C, Lp) f32

    # ---- pooling: ONE selector matmul gives per-batch sum & sum-of-squares
    stacked = jnp.concatenate([h, h * h], axis=0)            # (2C, Lp) f32
    S12 = jnp.dot(stacked, sel_ref[...],
                  preferred_element_type=jnp.float32)        # (2C, B)
    s1 = S12[0:C]                                            # (C, B)
    s2 = S12[C:2 * C]                                        # (C, B)
    mean = s1 / W
    var_u = (s2 - s1 * s1 / W) / (W - 1)                     # torch.std: ddof=1
    std = jnp.sqrt(jnp.maximum(var_u, 0.0))
    feat = jnp.concatenate([mean, std], axis=0)              # (2C, B)

    # ---- batched Linear + Tanh --------------------------------------------
    o = jnp.tanh(jnp.dot(fcw_ref[...], feat,
                         preferred_element_type=jnp.float32) + fcb_ref[...])
    out_ref[...] = o.astype(out_ref.dtype)                   # (C, B)


def _repack_conv(w):
    """PyTorch OIHW conv weight -> (K, Cout, Cin) per-tap bf16 matrices."""
    w = jnp.asarray(w)
    K = w.shape[-1]
    if w.shape[1] == 1 and w.shape[2] > 1:        # first layer: (C, 1, 40, K)
        taps = [w[:, 0, :, k] for k in range(K)]  # (C, 40) each
    else:                                         # later layers: (C, C, 1, K)
        taps = [w[:, :, 0, k] for k in range(K)]  # (C, C) each
    return jnp.stack(taps, axis=0).astype(jnp.bfloat16)


def encoder_pallas(x_nchw, params):
    """Pallas forward pass. x_nchw: (B, 1, 40, W) float32 -> (B, ndim)."""
    B, _, H, W = x_nchw.shape
    C = params["fc_w"].shape[0]
    assert W > 1, "unbiased std needs W > 1"
    P = _PAD
    S = W + 2 * P
    Lp_raw = B * S
    Lp = int(-(-Lp_raw // 128) * 128)             # round lane width up to 128x

    # Layout plumbing (plain XLA): channel-squeeze, zero-pad each sequence by
    # P on both sides, batch onto the lane axis, pad to a lane-tile multiple:
    #   (B, 1, 40, W) -> (40, Lp).
    x = x_nchw[:, 0]
    x_pad = jnp.pad(x, ((0, 0), (0, 0), (P, P)))              # (B, 40, W+2P)
    x_slab = jnp.transpose(x_pad, (1, 0, 2)).reshape(H, Lp_raw)
    x_slab = jnp.pad(x_slab, ((0, 0), (0, Lp - Lp_raw)))      # (40, Lp)

    conv_w = [_repack_conv(w) for w in params["conv_w"]]      # (K, C, cin) bf16
    g = params["bn_gamma"][..., None].astype(jnp.float32)     # (6, C, 1)
    bta = params["bn_beta"][..., None].astype(jnp.float32)    # (6, C, 1)
    fcw = params["fc_w"].astype(jnp.float32)                  # (C, 2C)
    fcb = params["fc_b"][:, None].astype(jnp.float32)         # (C, 1)

    # Static validity mask and (Lp, B) 0/1 per-batch segment selector.
    col = np.arange(Lp)
    local = col % S
    valid = (col < Lp_raw) & (local >= P) & (local < P + W)
    mask = jnp.asarray(valid.astype(np.float32)[None, :])     # (1, Lp)
    sel_np = np.zeros((Lp, B), np.float32)
    sel_np[valid, (col // S)[valid]] = 1.0
    sel = jnp.asarray(sel_np)                                 # (Lp, B)

    out_cb = pl.pallas_call(
        partial(_encoder_kernel, B=B, W=W),
        out_shape=jax.ShapeDtypeStruct((C, B), jnp.float32),
        in_specs=[pl.BlockSpec(memory_space=pltpu.MemorySpace.VMEM)] * 13,
        out_specs=pl.BlockSpec(memory_space=pltpu.MemorySpace.VMEM),
        scratch_shapes=[pltpu.VMEM((max(H, C), Lp + 2 * _MARGIN), jnp.bfloat16)],
    )(x_slab, *conv_w, g, bta, fcw, fcb, mask, sel)

    return out_cb.T                                           # (B, ndim)


def encoder_ref(x, params):
    """Pure-JAX reference (XLA convs) mirroring the PyTorch forward."""
    pads = (2, 2, 2, 1, 1, 1)
    h = x
    for i, (w, p) in enumerate(zip(params["conv_w"], pads)):
        h = lax.conv_general_dilated(
            h, w, window_strides=(1, 1), padding=[(0, 0), (p, p)],
            dimension_numbers=("NCHW", "OIHW", "NCHW"))
        mu = jnp.mean(h, axis=(0, 2, 3), keepdims=True)
        var = jnp.mean((h - mu) ** 2, axis=(0, 2, 3), keepdims=True)
        h = (h - mu) / jnp.sqrt(var + _BN_EPS)
        h = h * params["bn_gamma"][i][None, :, None, None] \
              + params["bn_beta"][i][None, :, None, None]
        h = jnp.maximum(h, 0.0)
    mean = jnp.mean(h, axis=-1)                               # (B, C, 1)
    std = jnp.std(h, axis=-1, ddof=1)                         # (B, C, 1)
    feat = jnp.concatenate([mean, std], axis=1)[..., 0]       # (B, 2C)
    return jnp.tanh(feat @ params["fc_w"].T + params["fc_b"][None, :])


if __name__ == "__main__":
    B, C, H, W = 2, 32, 40, 128                               # ndim = 32, H fixed at 40
    key = jax.random.PRNGKey(0)
    ks = jax.random.split(key, 12)

    conv_shapes = [(C, 1, 40, 5), (C, C, 1, 5), (C, C, 1, 5),
                   (C, C, 1, 3), (C, C, 1, 3), (C, C, 1, 3)]
    conv_w = []
    for i, s in enumerate(conv_shapes):
        fan_in = s[1] * s[2] * s[3]
        conv_w.append(jax.random.normal(ks[i], s, jnp.float32) / math.sqrt(fan_in))

    params = dict(
        conv_w=conv_w,
        bn_gamma=1.0 + 0.1 * jax.random.normal(ks[6], (6, C), jnp.float32),
        bn_beta=0.1 * jax.random.normal(ks[7], (6, C), jnp.float32),
        fc_w=jax.random.normal(ks[8], (C, 2 * C), jnp.float32) / math.sqrt(2 * C),
        fc_b=0.1 * jax.random.normal(ks[9], (C,), jnp.float32),
    )
    x = jax.random.normal(ks[10], (B, 1, H, W), jnp.float32)

    out = jax.block_until_ready(encoder_pallas(x, params))
    ref = jax.block_until_ready(encoder_ref(x, params))

    assert out.shape == (B, C), out.shape
    # Loose tolerance: conv matmuls use bf16 operands (f32 accumulate) on the
    # MXU across 6 stacked layers vs f32 XLA convs; outputs are tanh-bounded.
    np.testing.assert_allclose(np.asarray(out), np.asarray(ref),
                               rtol=5e-2, atol=5e-2)
    print("KERNEL_OK")
</pallas_src>

<mosaic_0001>
module attributes {stable_mosaic.version = 11 : i64} {
  func.func @_encoder_kernel(%arg0: memref<40x384xf32, #tpu.memory_space<vmem>>, %arg1: memref<5x32x40xbf16, #tpu.memory_space<vmem>>, %arg2: memref<5x32x32xbf16, #tpu.memory_space<vmem>>, %arg3: memref<5x32x32xbf16, #tpu.memory_space<vmem>>, %arg4: memref<3x32x32xbf16, #tpu.memory_space<vmem>>, %arg5: memref<3x32x32xbf16, #tpu.memory_space<vmem>>, %arg6: memref<3x32x32xbf16, #tpu.memory_space<vmem>>, %arg7: memref<6x32x1xf32, #tpu.memory_space<vmem>>, %arg8: memref<6x32x1xf32, #tpu.memory_space<vmem>>, %arg9: memref<32x64xf32, #tpu.memory_space<vmem>>, %arg10: memref<32x1xf32, #tpu.memory_space<vmem>>, %arg11: memref<1x384xf32, #tpu.memory_space<vmem>>, %arg12: memref<384x2xf32, #tpu.memory_space<vmem>>, %arg13: memref<32x2xf32, #tpu.memory_space<vmem>>, %arg14: memref<40x640xbf16, #tpu.memory_space<vmem>>) attributes {dimension_semantics = [], scalar_prefetch = 0 : i64, scratch_operands = 1 : i64, tpu.core_type = #tpu.core_type<tc>} {
    %cst = arith.constant 0.000000e+00 : bf16
    %0 = vector.broadcast %cst : bf16 to vector<40x640xbf16>
    %c0 = arith.constant 0 : index
    %c0_0 = arith.constant 0 : index
    %1 = vector.load %arg14[%c0, %c0_0] : memref<40x640xbf16, #tpu.memory_space<vmem>>, vector<40x640xbf16>
    tpu.vector_store %arg14[%c0, %c0_0], %0 {strides = array<i32>} : memref<40x640xbf16, #tpu.memory_space<vmem>>, vector<40x640xbf16>,
    %c0_1 = arith.constant 0 : index
    %c0_2 = arith.constant 0 : index
    %2 = vector.load %arg11[%c0_1, %c0_2] : memref<1x384xf32, #tpu.memory_space<vmem>>, vector<1x384xf32>
    %3 = vector.shape_cast %2 : vector<1x384xf32> to vector<1x384xf32>
    %4 = vector.broadcast %3 : vector<1x384xf32> to vector<32x384xf32>
    %c0_3 = arith.constant 0 : index
    %c0_4 = arith.constant 0 : index
    %5 = vector.load %arg0[%c0_3, %c0_4] : memref<40x384xf32, #tpu.memory_space<vmem>>, vector<40x384xf32>
    %6 = arith.truncf %5 : vector<40x384xf32> to vector<40x384xbf16>
    %c0_5 = arith.constant 0 : index
    %c128 = arith.constant 128 : index
    %7 = vector.load %arg14[%c0_5, %c128] : memref<40x640xbf16, #tpu.memory_space<vmem>>, vector<40x384xbf16>
    tpu.vector_store %arg14[%c0_5, %c128], %6 {strides = array<i32>} : memref<40x640xbf16, #tpu.memory_space<vmem>>, vector<40x384xbf16>,
    %c0_6 = arith.constant 0 : index
    %c126 = arith.constant 126 : index
    %8 = vector.load %arg14[%c0_6, %c126] : memref<40x640xbf16, #tpu.memory_space<vmem>>, vector<40x384xbf16>
    %c0_7 = arith.constant 0 : index
    %c0_8 = arith.constant 0 : index
    %c0_9 = arith.constant 0 : index
    %9 = vector.load %arg1[%c0_7, %c0_8, %c0_9] : memref<5x32x40xbf16, #tpu.memory_space<vmem>>, vector<1x32x40xbf16>
    %10 = vector.shape_cast %9 : vector<1x32x40xbf16> to vector<32x40xbf16>
    %cst_10 = arith.constant dense<0.000000e+00> : vector<32x384xf32>
    %11 = tpu.matmul %10, %8, %cst_10 {dimension_numbers = #tpu.dot_dimension_numbers<[1], [0], [0], [1], [0, 0, 1, 1], [], []>} : vector<32x40xbf16>, vector<40x384xbf16>, vector<32x384xf32> -> vector<32x384xf32>
    %c0_11 = arith.constant 0 : index
    %c127 = arith.constant 127 : index
    %12 = vector.load %arg14[%c0_11, %c127] : memref<40x640xbf16, #tpu.memory_space<vmem>>, vector<40x384xbf16>
    %c1 = arith.constant 1 : index
    %c0_12 = arith.constant 0 : index
    %c0_13 = arith.constant 0 : index
    %13 = vector.load %arg1[%c1, %c0_12, %c0_13] : memref<5x32x40xbf16, #tpu.memory_space<vmem>>, vector<1x32x40xbf16>
    %14 = vector.shape_cast %13 : vector<1x32x40xbf16> to vector<32x40xbf16>
    %cst_14 = arith.constant dense<0.000000e+00> : vector<32x384xf32>
    %15 = tpu.matmul %14, %12, %cst_14 {dimension_numbers = #tpu.dot_dimension_numbers<[1], [0], [0], [1], [0, 0, 1, 1], [], []>} : vector<32x40xbf16>, vector<40x384xbf16>, vector<32x384xf32> -> vector<32x384xf32>
    %16 = arith.addf %11, %15 : vector<32x384xf32>
    %c0_15 = arith.constant 0 : index
    %c128_16 = arith.constant 128 : index
    %17 = vector.load %arg14[%c0_15, %c128_16] : memref<40x640xbf16, #tpu.memory_space<vmem>>, vector<40x384xbf16>
    %c2 = arith.constant 2 : index
    %c0_17 = arith.constant 0 : index
    %c0_18 = arith.constant 0 : index
    %18 = vector.load %arg1[%c2, %c0_17, %c0_18] : memref<5x32x40xbf16, #tpu.memory_space<vmem>>, vector<1x32x40xbf16>
    %19 = vector.shape_cast %18 : vector<1x32x40xbf16> to vector<32x40xbf16>
    %cst_19 = arith.constant dense<0.000000e+00> : vector<32x384xf32>
    %20 = tpu.matmul %19, %17, %cst_19 {dimension_numbers = #tpu.dot_dimension_numbers<[1], [0], [0], [1], [0, 0, 1, 1], [], []>} : vector<32x40xbf16>, vector<40x384xbf16>, vector<32x384xf32> -> vector<32x384xf32>
    %21 = arith.addf %16, %20 : vector<32x384xf32>
    %c0_20 = arith.constant 0 : index
    %c129 = arith.constant 129 : index
    %22 = vector.load %arg14[%c0_20, %c129] : memref<40x640xbf16, #tpu.memory_space<vmem>>, vector<40x384xbf16>
    %c3 = arith.constant 3 : index
    %c0_21 = arith.constant 0 : index
    %c0_22 = arith.constant 0 : index
    %23 = vector.load %arg1[%c3, %c0_21, %c0_22] : memref<5x32x40xbf16, #tpu.memory_space<vmem>>, vector<1x32x40xbf16>
    %24 = vector.shape_cast %23 : vector<1x32x40xbf16> to vector<32x40xbf16>
    %cst_23 = arith.constant dense<0.000000e+00> : vector<32x384xf32>
    %25 = tpu.matmul %24, %22, %cst_23 {dimension_numbers = #tpu.dot_dimension_numbers<[1], [0], [0], [1], [0, 0, 1, 1], [], []>} : vector<32x40xbf16>, vector<40x384xbf16>, vector<32x384xf32> -> vector<32x384xf32>
    %26 = arith.addf %21, %25 : vector<32x384xf32>
    %c0_24 = arith.constant 0 : index
    %c130 = arith.constant 130 : index
    %27 = vector.load %arg14[%c0_24, %c130] : memref<40x640xbf16, #tpu.memory_space<vmem>>, vector<40x384xbf16>
    %c4 = arith.constant 4 : index
    %c0_25 = arith.constant 0 : index
    %c0_26 = arith.constant 0 : index
    %28 = vector.load %arg1[%c4, %c0_25, %c0_26] : memref<5x32x40xbf16, #tpu.memory_space<vmem>>, vector<1x32x40xbf16>
    %29 = vector.shape_cast %28 : vector<1x32x40xbf16> to vector<32x40xbf16>
    %cst_27 = arith.constant dense<0.000000e+00> : vector<32x384xf32>
    %30 = tpu.matmul %29, %27, %cst_27 {dimension_numbers = #tpu.dot_dimension_numbers<[1], [0], [0], [1], [0, 0, 1, 1], [], []>} : vector<32x40xbf16>, vector<40x384xbf16>, vector<32x384xf32> -> vector<32x384xf32>
    %31 = arith.addf %26, %30 : vector<32x384xf32>
    %32 = arith.mulf %31, %4 : vector<32x384xf32>
    %33 = arith.mulf %32, %32 : vector<32x384xf32>
    %34 = tpu.concatenate %32, %33 in 0 : vector<32x384xf32>, vector<32x384xf32> -> vector<64x384xf32>
    %cst_28 = arith.constant dense<0.000000e+00> : vector<64xf32>
    %35 = vector.multi_reduction <add>, %34, %cst_28 [1] : vector<64x384xf32> to vector<64xf32>
    %36 = vector.shape_cast %35 : vector<64xf32> to vector<64x1xf32>
    %37 = vector.extract_strided_slice %36 {offsets = [0, 0], sizes = [32, 1], strides = [1, 1]} : vector<64x1xf32> to vector<32x1xf32>
    %38 = vector.extract_strided_slice %36 {offsets = [32, 0], sizes = [32, 1], strides = [1, 1]} : vector<64x1xf32> to vector<32x1xf32>
    %cst_29 = arith.constant 2.560000e+02 : f32
    %39 = vector.broadcast %cst_29 : f32 to vector<32x1xf32>
    %40 = arith.divf %37, %39 : vector<32x1xf32>
    %cst_30 = arith.constant 2.560000e+02 : f32
    %41 = vector.broadcast %cst_30 : f32 to vector<32x1xf32>
    %42 = arith.divf %38, %41 : vector<32x1xf32>
    %43 = arith.mulf %40, %40 : vector<32x1xf32>
    %44 = arith.subf %42, %43 : vector<32x1xf32>
    %cst_31 = arith.constant 0.000000e+00 : f32
    %45 = vector.broadcast %cst_31 : f32 to vector<32x1xf32>
    %46 = arith.maximumf %44, %45 : vector<32x1xf32>
    %c0_32 = arith.constant 0 : index
    %c0_33 = arith.constant 0 : index
    %c0_34 = arith.constant 0 : index
    %47 = vector.load %arg7[%c0_32, %c0_33, %c0_34] : memref<6x32x1xf32, #tpu.memory_space<vmem>>, vector<1x32x1xf32>
    %48 = vector.shape_cast %47 : vector<1x32x1xf32> to vector<32x1xf32>
    %cst_35 = arith.constant 9.99999974E-6 : f32
    %49 = vector.broadcast %cst_35 : f32 to vector<32x1xf32>
    %50 = arith.addf %46, %49 : vector<32x1xf32>
    %51 = math.rsqrt %50 : vector<32x1xf32>
    %52 = arith.mulf %48, %51 : vector<32x1xf32>
    %c0_36 = arith.constant 0 : index
    %c0_37 = arith.constant 0 : index
    %c0_38 = arith.constant 0 : index
    %53 = vector.load %arg8[%c0_36, %c0_37, %c0_38] : memref<6x32x1xf32, #tpu.memory_space<vmem>>, vector<1x32x1xf32>
    %54 = vector.shape_cast %53 : vector<1x32x1xf32> to vector<32x1xf32>
    %55 = arith.mulf %40, %52 : vector<32x1xf32>
    %56 = arith.subf %54, %55 : vector<32x1xf32>
    %57 = vector.broadcast %52 : vector<32x1xf32> to vector<32x384xf32>
    %58 = arith.mulf %31, %57 : vector<32x384xf32>
    %59 = vector.broadcast %56 : vector<32x1xf32> to vector<32x384xf32>
    %60 = arith.addf %58, %59 : vector<32x384xf32>
    %cst_39 = arith.constant 0.000000e+00 : f32
    %61 = vector.broadcast %cst_39 : f32 to vector<32x384xf32>
    %62 = arith.maximumf %60, %61 : vector<32x384xf32>
    %63 = arith.mulf %62, %4 : vector<32x384xf32>
    %64 = arith.truncf %63 : vector<32x384xf32> to vector<32x384xbf16>
    %c0_40 = arith.constant 0 : index
    %c128_41 = arith.constant 128 : index
    %65 = vector.load %arg14[%c0_40, %c128_41] : memref<40x640xbf16, #tpu.memory_space<vmem>>, vector<32x384xbf16>
    tpu.vector_store %arg14[%c0_40, %c128_41], %64 {strides = array<i32>} : memref<40x640xbf16, #tpu.memory_space<vmem>>, vector<32x384xbf16>,
    %c0_42 = arith.constant 0 : index
    %c126_43 = arith.constant 126 : index
    %66 = vector.load %arg14[%c0_42, %c126_43] : memref<40x640xbf16, #tpu.memory_space<vmem>>, vector<32x384xbf16>
    %c0_44 = arith.constant 0 : index
    %c0_45 = arith.constant 0 : index
    %c0_46 = arith.constant 0 : index
    %67 = vector.load %arg2[%c0_44, %c0_45, %c0_46] : memref<5x32x32xbf16, #tpu.memory_space<vmem>>, vector<1x32x32xbf16>
    %68 = vector.shape_cast %67 : vector<1x32x32xbf16> to vector<32x32xbf16>
    %cst_47 = arith.constant dense<0.000000e+00> : vector<32x384xf32>
    %69 = tpu.matmul %68, %66, %cst_47 {dimension_numbers = #tpu.dot_dimension_numbers<[1], [0], [0], [1], [0, 0, 1, 1], [], []>} : vector<32x32xbf16>, vector<32x384xbf16>, vector<32x384xf32> -> vector<32x384xf32>
    %c0_48 = arith.constant 0 : index
    %c127_49 = arith.constant 127 : index
    %70 = vector.load %arg14[%c0_48, %c127_49] : memref<40x640xbf16, #tpu.memory_space<vmem>>, vector<32x384xbf16>
    %c1_50 = arith.constant 1 : index
    %c0_51 = arith.constant 0 : index
    %c0_52 = arith.constant 0 : index
    %71 = vector.load %arg2[%c1_50, %c0_51, %c0_52] : memref<5x32x32xbf16, #tpu.memory_space<vmem>>, vector<1x32x32xbf16>
    %72 = vector.shape_cast %71 : vector<1x32x32xbf16> to vector<32x32xbf16>
    %cst_53 = arith.constant dense<0.000000e+00> : vector<32x384xf32>
    %73 = tpu.matmul %72, %70, %cst_53 {dimension_numbers = #tpu.dot_dimension_numbers<[1], [0], [0], [1], [0, 0, 1, 1], [], []>} : vector<32x32xbf16>, vector<32x384xbf16>, vector<32x384xf32> -> vector<32x384xf32>
    %74 = arith.addf %69, %73 : vector<32x384xf32>
    %c0_54 = arith.constant 0 : index
    %c128_55 = arith.constant 128 : index
    %75 = vector.load %arg14[%c0_54, %c128_55] : memref<40x640xbf16, #tpu.memory_space<vmem>>, vector<32x384xbf16>
    %c2_56 = arith.constant 2 : index
    %c0_57 = arith.constant 0 : index
    %c0_58 = arith.constant 0 : index
    %76 = vector.load %arg2[%c2_56, %c0_57, %c0_58] : memref<5x32x32xbf16, #tpu.memory_space<vmem>>, vector<1x32x32xbf16>
    %77 = vector.shape_cast %76 : vector<1x32x32xbf16> to vector<32x32xbf16>
    %cst_59 = arith.constant dense<0.000000e+00> : vector<32x384xf32>
    %78 = tpu.matmul %77, %75, %cst_59 {dimension_numbers = #tpu.dot_dimension_numbers<[1], [0], [0], [1], [0, 0, 1, 1], [], []>} : vector<32x32xbf16>, vector<32x384xbf16>, vector<32x384xf32> -> vector<32x384xf32>
    %79 = arith.addf %74, %78 : vector<32x384xf32>
    %c0_60 = arith.constant 0 : index
    %c129_61 = arith.constant 129 : index
    %80 = vector.load %arg14[%c0_60, %c129_61] : memref<40x640xbf16, #tpu.memory_space<vmem>>, vector<32x384xbf16>
    %c3_62 = arith.constant 3 : index
    %c0_63 = arith.constant 0 : index
    %c0_64 = arith.constant 0 : index
    %81 = vector.load %arg2[%c3_62, %c0_63, %c0_64] : memref<5x32x32xbf16, #tpu.memory_space<vmem>>, vector<1x32x32xbf16>
    %82 = vector.shape_cast %81 : vector<1x32x32xbf16> to vector<32x32xbf16>
    %cst_65 = arith.constant dense<0.000000e+00> : vector<32x384xf32>
    %83 = tpu.matmul %82, %80, %cst_65 {dimension_numbers = #tpu.dot_dimension_numbers<[1], [0], [0], [1], [0, 0, 1, 1], [], []>} : vector<32x32xbf16>, vector<32x384xbf16>, vector<32x384xf32> -> vector<32x384xf32>
    %84 = arith.addf %79, %83 : vector<32x384xf32>
    %c0_66 = arith.constant 0 : index
    %c130_67 = arith.constant 130 : index
    %85 = vector.load %arg14[%c0_66, %c130_67] : memref<40x640xbf16, #tpu.memory_space<vmem>>, vector<32x384xbf16>
    %c4_68 = arith.constant 4 : index
    %c0_69 = arith.constant 0 : index
    %c0_70 = arith.constant 0 : index
    %86 = vector.load %arg2[%c4_68, %c0_69, %c0_70] : memref<5x32x32xbf16, #tpu.memory_space<vmem>>, vector<1x32x32xbf16>
    %87 = vector.shape_cast %86 : vector<1x32x32xbf16> to vector<32x32xbf16>
    %cst_71 = arith.constant dense<0.000000e+00> : vector<32x384xf32>
    %88 = tpu.matmul %87, %85, %cst_71 {dimension_numbers = #tpu.dot_dimension_numbers<[1], [0], [0], [1], [0, 0, 1, 1], [], []>} : vector<32x32xbf16>, vector<32x384xbf16>, vector<32x384xf32> -> vector<32x384xf32>
    %89 = arith.addf %84, %88 : vector<32x384xf32>
    %90 = arith.mulf %89, %4 : vector<32x384xf32>
    %91 = arith.mulf %90, %90 : vector<32x384xf32>
    %92 = tpu.concatenate %90, %91 in 0 : vector<32x384xf32>, vector<32x384xf32> -> vector<64x384xf32>
    %cst_72 = arith.constant dense<0.000000e+00> : vector<64xf32>
    %93 = vector.multi_reduction <add>, %92, %cst_72 [1] : vector<64x384xf32> to vector<64xf32>
    %94 = vector.shape_cast %93 : vector<64xf32> to vector<64x1xf32>
    %95 = vector.extract_strided_slice %94 {offsets = [0, 0], sizes = [32, 1], strides = [1, 1]} : vector<64x1xf32> to vector<32x1xf32>
    %96 = vector.extract_strided_slice %94 {offsets = [32, 0], sizes = [32, 1], strides = [1, 1]} : vector<64x1xf32> to vector<32x1xf32>
    %cst_73 = arith.constant 2.560000e+02 : f32
    %97 = vector.broadcast %cst_73 : f32 to vector<32x1xf32>
    %98 = arith.divf %95, %97 : vector<32x1xf32>
    %cst_74 = arith.constant 2.560000e+02 : f32
    %99 = vector.broadcast %cst_74 : f32 to vector<32x1xf32>
    %100 = arith.divf %96, %99 : vector<32x1xf32>
    %101 = arith.mulf %98, %98 : vector<32x1xf32>
    %102 = arith.subf %100, %101 : vector<32x1xf32>
    %cst_75 = arith.constant 0.000000e+00 : f32
    %103 = vector.broadcast %cst_75 : f32 to vector<32x1xf32>
    %104 = arith.maximumf %102, %103 : vector<32x1xf32>
    %c1_76 = arith.constant 1 : index
    %c0_77 = arith.constant 0 : index
    %c0_78 = arith.constant 0 : index
    %105 = vector.load %arg7[%c1_76, %c0_77, %c0_78] : memref<6x32x1xf32, #tpu.memory_space<vmem>>, vector<1x32x1xf32>
    %106 = vector.shape_cast %105 : vector<1x32x1xf32> to vector<32x1xf32>
    %cst_79 = arith.constant 9.99999974E-6 : f32
    %107 = vector.broadcast %cst_79 : f32 to vector<32x1xf32>
    %108 = arith.addf %104, %107 : vector<32x1xf32>
    %109 = math.rsqrt %108 : vector<32x1xf32>
    %110 = arith.mulf %106, %109 : vector<32x1xf32>
    %c1_80 = arith.constant 1 : index
    %c0_81 = arith.constant 0 : index
    %c0_82 = arith.constant 0 : index
    %111 = vector.load %arg8[%c1_80, %c0_81, %c0_82] : memref<6x32x1xf32, #tpu.memory_space<vmem>>, vector<1x32x1xf32>
    %112 = vector.shape_cast %111 : vector<1x32x1xf32> to vector<32x1xf32>
    %113 = arith.mulf %98, %110 : vector<32x1xf32>
    %114 = arith.subf %112, %113 : vector<32x1xf32>
    %115 = vector.broadcast %110 : vector<32x1xf32> to vector<32x384xf32>
    %116 = arith.mulf %89, %115 : vector<32x384xf32>
    %117 = vector.broadcast %114 : vector<32x1xf32> to vector<32x384xf32>
    %118 = arith.addf %116, %117 : vector<32x384xf32>
    %cst_83 = arith.constant 0.000000e+00 : f32
    %119 = vector.broadcast %cst_83 : f32 to vector<32x384xf32>
    %120 = arith.maximumf %118, %119 : vector<32x384xf32>
    %121 = arith.mulf %120, %4 : vector<32x384xf32>
    %122 = arith.truncf %121 : vector<32x384xf32> to vector<32x384xbf16>
    %c0_84 = arith.constant 0 : index
    %c128_85 = arith.constant 128 : index
    %123 = vector.load %arg14[%c0_84, %c128_85] : memref<40x640xbf16, #tpu.memory_space<vmem>>, vector<32x384xbf16>
    tpu.vector_store %arg14[%c0_84, %c128_85], %122 {strides = array<i32>} : memref<40x640xbf16, #tpu.memory_space<vmem>>, vector<32x384xbf16>,
    %c0_86 = arith.constant 0 : index
    %c126_87 = arith.constant 126 : index
    %124 = vector.load %arg14[%c0_86, %c126_87] : memref<40x640xbf16, #tpu.memory_space<vmem>>, vector<32x384xbf16>
    %c0_88 = arith.constant 0 : index
    %c0_89 = arith.constant 0 : index
    %c0_90 = arith.constant 0 : index
    %125 = vector.load %arg3[%c0_88, %c0_89, %c0_90] : memref<5x32x32xbf16, #tpu.memory_space<vmem>>, vector<1x32x32xbf16>
    %126 = vector.shape_cast %125 : vector<1x32x32xbf16> to vector<32x32xbf16>
    %cst_91 = arith.constant dense<0.000000e+00> : vector<32x384xf32>
    %127 = tpu.matmul %126, %124, %cst_91 {dimension_numbers = #tpu.dot_dimension_numbers<[1], [0], [0], [1], [0, 0, 1, 1], [], []>} : vector<32x32xbf16>, vector<32x384xbf16>, vector<32x384xf32> -> vector<32x384xf32>
    %c0_92 = arith.constant 0 : index
    %c127_93 = arith.constant 127 : index
    %128 = vector.load %arg14[%c0_92, %c127_93] : memref<40x640xbf16, #tpu.memory_space<vmem>>, vector<32x384xbf16>
    %c1_94 = arith.constant 1 : index
    %c0_95 = arith.constant 0 : index
    %c0_96 = arith.constant 0 : index
    %129 = vector.load %arg3[%c1_94, %c0_95, %c0_96] : memref<5x32x32xbf16, #tpu.memory_space<vmem>>, vector<1x32x32xbf16>
    %130 = vector.shape_cast %129 : vector<1x32x32xbf16> to vector<32x32xbf16>
    %cst_97 = arith.constant dense<0.000000e+00> : vector<32x384xf32>
    %131 = tpu.matmul %130, %128, %cst_97 {dimension_numbers = #tpu.dot_dimension_numbers<[1], [0], [0], [1], [0, 0, 1, 1], [], []>} : vector<32x32xbf16>, vector<32x384xbf16>, vector<32x384xf32> -> vector<32x384xf32>
    %132 = arith.addf %127, %131 : vector<32x384xf32>
    %c0_98 = arith.constant 0 : index
    %c128_99 = arith.constant 128 : index
    %133 = vector.load %arg14[%c0_98, %c128_99] : memref<40x640xbf16, #tpu.memory_space<vmem>>, vector<32x384xbf16>
    %c2_100 = arith.constant 2 : index
    %c0_101 = arith.constant 0 : index
    %c0_102 = arith.constant 0 : index
    %134 = vector.load %arg3[%c2_100, %c0_101, %c0_102] : memref<5x32x32xbf16, #tpu.memory_space<vmem>>, vector<1x32x32xbf16>
    %135 = vector.shape_cast %134 : vector<1x32x32xbf16> to vector<32x32xbf16>
    %cst_103 = arith.constant dense<0.000000e+00> : vector<32x384xf32>
    %136 = tpu.matmul %135, %133, %cst_103 {dimension_numbers = #tpu.dot_dimension_numbers<[1], [0], [0], [1], [0, 0, 1, 1], [], []>} : vector<32x32xbf16>, vector<32x384xbf16>, vector<32x384xf32> -> vector<32x384xf32>
    %137 = arith.addf %132, %136 : vector<32x384xf32>
    %c0_104 = arith.constant 0 : index
    %c129_105 = arith.constant 129 : index
    %138 = vector.load %arg14[%c0_104, %c129_105] : memref<40x640xbf16, #tpu.memory_space<vmem>>, vector<32x384xbf16>
    %c3_106 = arith.constant 3 : index
    %c0_107 = arith.constant 0 : index
    %c0_108 = arith.constant 0 : index
    %139 = vector.load %arg3[%c3_106, %c0_107, %c0_108] : memref<5x32x32xbf16, #tpu.memory_space<vmem>>, vector<1x32x32xbf16>
    %140 = vector.shape_cast %139 : vector<1x32x32xbf16> to vector<32x32xbf16>
    %cst_109 = arith.constant dense<0.000000e+00> : vector<32x384xf32>
    %141 = tpu.matmul %140, %138, %cst_109 {dimension_numbers = #tpu.dot_dimension_numbers<[1], [0], [0], [1], [0, 0, 1, 1], [], []>} : vector<32x32xbf16>, vector<32x384xbf16>, vector<32x384xf32> -> vector<32x384xf32>
    %142 = arith.addf %137, %141 : vector<32x384xf32>
    %c0_110 = arith.constant 0 : index
    %c130_111 = arith.constant 130 : index
    %143 = vector.load %arg14[%c0_110, %c130_111] : memref<40x640xbf16, #tpu.memory_space<vmem>>, vector<32x384xbf16>
    %c4_112 = arith.constant 4 : index
    %c0_113 = arith.constant 0 : index
    %c0_114 = arith.constant 0 : index
    %144 = vector.load %arg3[%c4_112, %c0_113, %c0_114] : memref<5x32x32xbf16, #tpu.memory_space<vmem>>, vector<1x32x32xbf16>
    %145 = vector.shape_cast %144 : vector<1x32x32xbf16> to vector<32x32xbf16>
    %cst_115 = arith.constant dense<0.000000e+00> : vector<32x384xf32>
    %146 = tpu.matmul %145, %143, %cst_115 {dimension_numbers = #tpu.dot_dimension_numbers<[1], [0], [0], [1], [0, 0, 1, 1], [], []>} : vector<32x32xbf16>, vector<32x384xbf16>, vector<32x384xf32> -> vector<32x384xf32>
    %147 = arith.addf %142, %146 : vector<32x384xf32>
    %148 = arith.mulf %147, %4 : vector<32x384xf32>
    %149 = arith.mulf %148, %148 : vector<32x384xf32>
    %150 = tpu.concatenate %148, %149 in 0 : vector<32x384xf32>, vector<32x384xf32> -> vector<64x384xf32>
    %cst_116 = arith.constant dense<0.000000e+00> : vector<64xf32>
    %151 = vector.multi_reduction <add>, %150, %cst_116 [1] : vector<64x384xf32> to vector<64xf32>
    %152 = vector.shape_cast %151 : vector<64xf32> to vector<64x1xf32>
    %153 = vector.extract_strided_slice %152 {offsets = [0, 0], sizes = [32, 1], strides = [1, 1]} : vector<64x1xf32> to vector<32x1xf32>
    %154 = vector.extract_strided_slice %152 {offsets = [32, 0], sizes = [32, 1], strides = [1, 1]} : vector<64x1xf32> to vector<32x1xf32>
    %cst_117 = arith.constant 2.560000e+02 : f32
    %155 = vector.broadcast %cst_117 : f32 to vector<32x1xf32>
    %156 = arith.divf %153, %155 : vector<32x1xf32>
    %cst_118 = arith.constant 2.560000e+02 : f32
    %157 = vector.broadcast %cst_118 : f32 to vector<32x1xf32>
    %158 = arith.divf %154, %157 : vector<32x1xf32>
    %159 = arith.mulf %156, %156 : vector<32x1xf32>
    %160 = arith.subf %158, %159 : vector<32x1xf32>
    %cst_119 = arith.constant 0.000000e+00 : f32
    %161 = vector.broadcast %cst_119 : f32 to vector<32x1xf32>
    %162 = arith.maximumf %160, %161 : vector<32x1xf32>
    %c2_120 = arith.constant 2 : index
    %c0_121 = arith.constant 0 : index
    %c0_122 = arith.constant 0 : index
    %163 = vector.load %arg7[%c2_120, %c0_121, %c0_122] : memref<6x32x1xf32, #tpu.memory_space<vmem>>, vector<1x32x1xf32>
    %164 = vector.shape_cast %163 : vector<1x32x1xf32> to vector<32x1xf32>
    %cst_123 = arith.constant 9.99999974E-6 : f32
    %165 = vector.broadcast %cst_123 : f32 to vector<32x1xf32>
    %166 = arith.addf %162, %165 : vector<32x1xf32>
    %167 = math.rsqrt %166 : vector<32x1xf32>
    %168 = arith.mulf %164, %167 : vector<32x1xf32>
    %c2_124 = arith.constant 2 : index
    %c0_125 = arith.constant 0 : index
    %c0_126 = arith.constant 0 : index
    %169 = vector.load %arg8[%c2_124, %c0_125, %c0_126] : memref<6x32x1xf32, #tpu.memory_space<vmem>>, vector<1x32x1xf32>
    %170 = vector.shape_cast %169 : vector<1x32x1xf32> to vector<32x1xf32>
    %171 = arith.mulf %156, %168 : vector<32x1xf32>
    %172 = arith.subf %170, %171 : vector<32x1xf32>
    %173 = vector.broadcast %168 : vector<32x1xf32> to vector<32x384xf32>
    %174 = arith.mulf %147, %173 : vector<32x384xf32>
    %175 = vector.broadcast %172 : vector<32x1xf32> to vector<32x384xf32>
    %176 = arith.addf %174, %175 : vector<32x384xf32>
    %cst_127 = arith.constant 0.000000e+00 : f32
    %177 = vector.broadcast %cst_127 : f32 to vector<32x384xf32>
    %178 = arith.maximumf %176, %177 : vector<32x384xf32>
    %179 = arith.mulf %178, %4 : vector<32x384xf32>
    %180 = arith.truncf %179 : vector<32x384xf32> to vector<32x384xbf16>
    %c0_128 = arith.constant 0 : index
    %c128_129 = arith.constant 128 : index
    %181 = vector.load %arg14[%c0_128, %c128_129] : memref<40x640xbf16, #tpu.memory_space<vmem>>, vector<32x384xbf16>
    tpu.vector_store %arg14[%c0_128, %c128_129], %180 {strides = array<i32>} : memref<40x640xbf16, #tpu.memory_space<vmem>>, vector<32x384xbf16>,
    %c0_130 = arith.constant 0 : index
    %c127_131 = arith.constant 127 : index
    %182 = vector.load %arg14[%c0_130, %c127_131] : memref<40x640xbf16, #tpu.memory_space<vmem>>, vector<32x384xbf16>
    %c0_132 = arith.constant 0 : index
    %c0_133 = arith.constant 0 : index
    %c0_134 = arith.constant 0 : index
    %183 = vector.load %arg4[%c0_132, %c0_133, %c0_134] : memref<3x32x32xbf16, #tpu.memory_space<vmem>>, vector<1x32x32xbf16>
    %184 = vector.shape_cast %183 : vector<1x32x32xbf16> to vector<32x32xbf16>
    %cst_135 = arith.constant dense<0.000000e+00> : vector<32x384xf32>
    %185 = tpu.matmul %184, %182, %cst_135 {dimension_numbers = #tpu.dot_dimension_numbers<[1], [0], [0], [1], [0, 0, 1, 1], [], []>} : vector<32x32xbf16>, vector<32x384xbf16>, vector<32x384xf32> -> vector<32x384xf32>
    %c0_136 = arith.constant 0 : index
    %c128_137 = arith.constant 128 : index
    %186 = vector.load %arg14[%c0_136, %c128_137] : memref<40x640xbf16, #tpu.memory_space<vmem>>, vector<32x384xbf16>
    %c1_138 = arith.constant 1 : index
    %c0_139 = arith.constant 0 : index
    %c0_140 = arith.constant 0 : index
    %187 = vector.load %arg4[%c1_138, %c0_139, %c0_140] : memref<3x32x32xbf16, #tpu.memory_space<vmem>>, vector<1x32x32xbf16>
    %188 = vector.shape_cast %187 : vector<1x32x32xbf16> to vector<32x32xbf16>
    %cst_141 = arith.constant dense<0.000000e+00> : vector<32x384xf32>
    %189 = tpu.matmul %188, %186, %cst_141 {dimension_numbers = #tpu.dot_dimension_numbers<[1], [0], [0], [1], [0, 0, 1, 1], [], []>} : vector<32x32xbf16>, vector<32x384xbf16>, vector<32x384xf32> -> vector<32x384xf32>
    %190 = arith.addf %185, %189 : vector<32x384xf32>
    %c0_142 = arith.constant 0 : index
    %c129_143 = arith.constant 129 : index
    %191 = vector.load %arg14[%c0_142, %c129_143] : memref<40x640xbf16, #tpu.memory_space<vmem>>, vector<32x384xbf16>
    %c2_144 = arith.constant 2 : index
    %c0_145 = arith.constant 0 : index
    %c0_146 = arith.constant 0 : index
    %192 = vector.load %arg4[%c2_144, %c0_145, %c0_146] : memref<3x32x32xbf16, #tpu.memory_space<vmem>>, vector<1x32x32xbf16>
    %193 = vector.shape_cast %192 : vector<1x32x32xbf16> to vector<32x32xbf16>
    %cst_147 = arith.constant dense<0.000000e+00> : vector<32x384xf32>
    %194 = tpu.matmul %193, %191, %cst_147 {dimension_numbers = #tpu.dot_dimension_numbers<[1], [0], [0], [1], [0, 0, 1, 1], [], []>} : vector<32x32xbf16>, vector<32x384xbf16>, vector<32x384xf32> -> vector<32x384xf32>
    %195 = arith.addf %190, %194 : vector<32x384xf32>
    %196 = arith.mulf %195, %4 : vector<32x384xf32>
    %197 = arith.mulf %196, %196 : vector<32x384xf32>
    %198 = tpu.concatenate %196, %197 in 0 : vector<32x384xf32>, vector<32x384xf32> -> vector<64x384xf32>
    %cst_148 = arith.constant dense<0.000000e+00> : vector<64xf32>
    %199 = vector.multi_reduction <add>, %198, %cst_148 [1] : vector<64x384xf32> to vector<64xf32>
    %200 = vector.shape_cast %199 : vector<64xf32> to vector<64x1xf32>
    %201 = vector.extract_strided_slice %200 {offsets = [0, 0], sizes = [32, 1], strides = [1, 1]} : vector<64x1xf32> to vector<32x1xf32>
    %202 = vector.extract_strided_slice %200 {offsets = [32, 0], sizes = [32, 1], strides = [1, 1]} : vector<64x1xf32> to vector<32x1xf32>
    %cst_149 = arith.constant 2.560000e+02 : f32
    %203 = vector.broadcast %cst_149 : f32 to vector<32x1xf32>
    %204 = arith.divf %201, %203 : vector<32x1xf32>
    %cst_150 = arith.constant 2.560000e+02 : f32
    %205 = vector.broadcast %cst_150 : f32 to vector<32x1xf32>
    %206 = arith.divf %202, %205 : vector<32x1xf32>
    %207 = arith.mulf %204, %204 : vector<32x1xf32>
    %208 = arith.subf %206, %207 : vector<32x1xf32>
    %cst_151 = arith.constant 0.000000e+00 : f32
    %209 = vector.broadcast %cst_151 : f32 to vector<32x1xf32>
    %210 = arith.maximumf %208, %209 : vector<32x1xf32>
    %c3_152 = arith.constant 3 : index
    %c0_153 = arith.constant 0 : index
    %c0_154 = arith.constant 0 : index
    %211 = vector.load %arg7[%c3_152, %c0_153, %c0_154] : memref<6x32x1xf32, #tpu.memory_space<vmem>>, vector<1x32x1xf32>
    %212 = vector.shape_cast %211 : vector<1x32x1xf32> to vector<32x1xf32>
    %cst_155 = arith.constant 9.99999974E-6 : f32
    %213 = vector.broadcast %cst_155 : f32 to vector<32x1xf32>
    %214 = arith.addf %210, %213 : vector<32x1xf32>
    %215 = math.rsqrt %214 : vector<32x1xf32>
    %216 = arith.mulf %212, %215 : vector<32x1xf32>
    %c3_156 = arith.constant 3 : index
    %c0_157 = arith.constant 0 : index
    %c0_158 = arith.constant 0 : index
    %217 = vector.load %arg8[%c3_156, %c0_157, %c0_158] : memref<6x32x1xf32, #tpu.memory_space<vmem>>, vector<1x32x1xf32>
    %218 = vector.shape_cast %217 : vector<1x32x1xf32> to vector<32x1xf32>
    %219 = arith.mulf %204, %216 : vector<32x1xf32>
    %220 = arith.subf %218, %219 : vector<32x1xf32>
    %221 = vector.broadcast %216 : vector<32x1xf32> to vector<32x384xf32>
    %222 = arith.mulf %195, %221 : vector<32x384xf32>
    %223 = vector.broadcast %220 : vector<32x1xf32> to vector<32x384xf32>
    %224 = arith.addf %222, %223 : vector<32x384xf32>
    %cst_159 = arith.constant 0.000000e+00 : f32
    %225 = vector.broadcast %cst_159 : f32 to vector<32x384xf32>
    %226 = arith.maximumf %224, %225 : vector<32x384xf32>
    %227 = arith.mulf %226, %4 : vector<32x384xf32>
    %228 = arith.truncf %227 : vector<32x384xf32> to vector<32x384xbf16>
    %c0_160 = arith.constant 0 : index
    %c128_161 = arith.constant 128 : index
    %229 = vector.load %arg14[%c0_160, %c128_161] : memref<40x640xbf16, #tpu.memory_space<vmem>>, vector<32x384xbf16>
    tpu.vector_store %arg14[%c0_160, %c128_161], %228 {strides = array<i32>} : memref<40x640xbf16, #tpu.memory_space<vmem>>, vector<32x384xbf16>,
    %c0_162 = arith.constant 0 : index
    %c127_163 = arith.constant 127 : index
    %230 = vector.load %arg14[%c0_162, %c127_163] : memref<40x640xbf16, #tpu.memory_space<vmem>>, vector<32x384xbf16>
    %c0_164 = arith.constant 0 : index
    %c0_165 = arith.constant 0 : index
    %c0_166 = arith.constant 0 : index
    %231 = vector.load %arg5[%c0_164, %c0_165, %c0_166] : memref<3x32x32xbf16, #tpu.memory_space<vmem>>, vector<1x32x32xbf16>
    %232 = vector.shape_cast %231 : vector<1x32x32xbf16> to vector<32x32xbf16>
    %cst_167 = arith.constant dense<0.000000e+00> : vector<32x384xf32>
    %233 = tpu.matmul %232, %230, %cst_167 {dimension_numbers = #tpu.dot_dimension_numbers<[1], [0], [0], [1], [0, 0, 1, 1], [], []>} : vector<32x32xbf16>, vector<32x384xbf16>, vector<32x384xf32> -> vector<32x384xf32>
    %c0_168 = arith.constant 0 : index
    %c128_169 = arith.constant 128 : index
    %234 = vector.load %arg14[%c0_168, %c128_169] : memref<40x640xbf16, #tpu.memory_space<vmem>>, vector<32x384xbf16>
    %c1_170 = arith.constant 1 : index
    %c0_171 = arith.constant 0 : index
    %c0_172 = arith.constant 0 : index
    %235 = vector.load %arg5[%c1_170, %c0_171, %c0_172] : memref<3x32x32xbf16, #tpu.memory_space<vmem>>, vector<1x32x32xbf16>
    %236 = vector.shape_cast %235 : vector<1x32x32xbf16> to vector<32x32xbf16>
    %cst_173 = arith.constant dense<0.000000e+00> : vector<32x384xf32>
    %237 = tpu.matmul %236, %234, %cst_173 {dimension_numbers = #tpu.dot_dimension_numbers<[1], [0], [0], [1], [0, 0, 1, 1], [], []>} : vector<32x32xbf16>, vector<32x384xbf16>, vector<32x384xf32> -> vector<32x384xf32>
    %238 = arith.addf %233, %237 : vector<32x384xf32>
    %c0_174 = arith.constant 0 : index
    %c129_175 = arith.constant 129 : index
    %239 = vector.load %arg14[%c0_174, %c129_175] : memref<40x640xbf16, #tpu.memory_space<vmem>>, vector<32x384xbf16>
    %c2_176 = arith.constant 2 : index
    %c0_177 = arith.constant 0 : index
    %c0_178 = arith.constant 0 : index
    %240 = vector.load %arg5[%c2_176, %c0_177, %c0_178] : memref<3x32x32xbf16, #tpu.memory_space<vmem>>, vector<1x32x32xbf16>
    %241 = vector.shape_cast %240 : vector<1x32x32xbf16> to vector<32x32xbf16>
    %cst_179 = arith.constant dense<0.000000e+00> : vector<32x384xf32>
    %242 = tpu.matmul %241, %239, %cst_179 {dimension_numbers = #tpu.dot_dimension_numbers<[1], [0], [0], [1], [0, 0, 1, 1], [], []>} : vector<32x32xbf16>, vector<32x384xbf16>, vector<32x384xf32> -> vector<32x384xf32>
    %243 = arith.addf %238, %242 : vector<32x384xf32>
    %244 = arith.mulf %243, %4 : vector<32x384xf32>
    %245 = arith.mulf %244, %244 : vector<32x384xf32>
    %246 = tpu.concatenate %244, %245 in 0 : vector<32x384xf32>, vector<32x384xf32> -> vector<64x384xf32>
    %cst_180 = arith.constant dense<0.000000e+00> : vector<64xf32>
    %247 = vector.multi_reduction <add>, %246, %cst_180 [1] : vector<64x384xf32> to vector<64xf32>
    %248 = vector.shape_cast %247 : vector<64xf32> to vector<64x1xf32>
    %249 = vector.extract_strided_slice %248 {offsets = [0, 0], sizes = [32, 1], strides = [1, 1]} : vector<64x1xf32> to vector<32x1xf32>
    %250 = vector.extract_strided_slice %248 {offsets = [32, 0], sizes = [32, 1], strides = [1, 1]} : vector<64x1xf32> to vector<32x1xf32>
    %cst_181 = arith.constant 2.560000e+02 : f32
    %251 = vector.broadcast %cst_181 : f32 to vector<32x1xf32>
    %252 = arith.divf %249, %251 : vector<32x1xf32>
    %cst_182 = arith.constant 2.560000e+02 : f32
    %253 = vector.broadcast %cst_182 : f32 to vector<32x1xf32>
    %254 = arith.divf %250, %253 : vector<32x1xf32>
    %255 = arith.mulf %252, %252 : vector<32x1xf32>
    %256 = arith.subf %254, %255 : vector<32x1xf32>
    %cst_183 = arith.constant 0.000000e+00 : f32
    %257 = vector.broadcast %cst_183 : f32 to vector<32x1xf32>
    %258 = arith.maximumf %256, %257 : vector<32x1xf32>
    %c4_184 = arith.constant 4 : index
    %c0_185 = arith.constant 0 : index
    %c0_186 = arith.constant 0 : index
    %259 = vector.load %arg7[%c4_184, %c0_185, %c0_186] : memref<6x32x1xf32, #tpu.memory_space<vmem>>, vector<1x32x1xf32>
    %260 = vector.shape_cast %259 : vector<1x32x1xf32> to vector<32x1xf32>
    %cst_187 = arith.constant 9.99999974E-6 : f32
    %261 = vector.broadcast %cst_187 : f32 to vector<32x1xf32>
    %262 = arith.addf %258, %261 : vector<32x1xf32>
    %263 = math.rsqrt %262 : vector<32x1xf32>
    %264 = arith.mulf %260, %263 : vector<32x1xf32>
    %c4_188 = arith.constant 4 : index
    %c0_189 = arith.constant 0 : index
    %c0_190 = arith.constant 0 : index
    %265 = vector.load %arg8[%c4_188, %c0_189, %c0_190] : memref<6x32x1xf32, #tpu.memory_space<vmem>>, vector<1x32x1xf32>
    %266 = vector.shape_cast %265 : vector<1x32x1xf32> to vector<32x1xf32>
    %267 = arith.mulf %252, %264 : vector<32x1xf32>
    %268 = arith.subf %266, %267 : vector<32x1xf32>
    %269 = vector.broadcast %264 : vector<32x1xf32> to vector<32x384xf32>
    %270 = arith.mulf %243, %269 : vector<32x384xf32>
    %271 = vector.broadcast %268 : vector<32x1xf32> to vector<32x384xf32>
    %272 = arith.addf %270, %271 : vector<32x384xf32>
    %cst_191 = arith.constant 0.000000e+00 : f32
    %273 = vector.broadcast %cst_191 : f32 to vector<32x384xf32>
    %274 = arith.maximumf %272, %273 : vector<32x384xf32>
    %275 = arith.mulf %274, %4 : vector<32x384xf32>
    %276 = arith.truncf %275 : vector<32x384xf32> to vector<32x384xbf16>
    %c0_192 = arith.constant 0 : index
    %c128_193 = arith.constant 128 : index
    %277 = vector.load %arg14[%c0_192, %c128_193] : memref<40x640xbf16, #tpu.memory_space<vmem>>, vector<32x384xbf16>
    tpu.vector_store %arg14[%c0_192, %c128_193], %276 {strides = array<i32>} : memref<40x640xbf16, #tpu.memory_space<vmem>>, vector<32x384xbf16>,
    %c0_194 = arith.constant 0 : index
    %c127_195 = arith.constant 127 : index
    %278 = vector.load %arg14[%c0_194, %c127_195] : memref<40x640xbf16, #tpu.memory_space<vmem>>, vector<32x384xbf16>
    %c0_196 = arith.constant 0 : index
    %c0_197 = arith.constant 0 : index
    %c0_198 = arith.constant 0 : index
    %279 = vector.load %arg6[%c0_196, %c0_197, %c0_198] : memref<3x32x32xbf16, #tpu.memory_space<vmem>>, vector<1x32x32xbf16>
    %280 = vector.shape_cast %279 : vector<1x32x32xbf16> to vector<32x32xbf16>
    %cst_199 = arith.constant dense<0.000000e+00> : vector<32x384xf32>
    %281 = tpu.matmul %280, %278, %cst_199 {dimension_numbers = #tpu.dot_dimension_numbers<[1], [0], [0], [1], [0, 0, 1, 1], [], []>} : vector<32x32xbf16>, vector<32x384xbf16>, vector<32x384xf32> -> vector<32x384xf32>
    %c0_200 = arith.constant 0 : index
    %c128_201 = arith.constant 128 : index
    %282 = vector.load %arg14[%c0_200, %c128_201] : memref<40x640xbf16, #tpu.memory_space<vmem>>, vector<32x384xbf16>
    %c1_202 = arith.constant 1 : index
    %c0_203 = arith.constant 0 : index
    %c0_204 = arith.constant 0 : index
    %283 = vector.load %arg6[%c1_202, %c0_203, %c0_204] : memref<3x32x32xbf16, #tpu.memory_space<vmem>>, vector<1x32x32xbf16>
    %284 = vector.shape_cast %283 : vector<1x32x32xbf16> to vector<32x32xbf16>
    %cst_205 = arith.constant dense<0.000000e+00> : vector<32x384xf32>
    %285 = tpu.matmul %284, %282, %cst_205 {dimension_numbers = #tpu.dot_dimension_numbers<[1], [0], [0], [1], [0, 0, 1, 1], [], []>} : vector<32x32xbf16>, vector<32x384xbf16>, vector<32x384xf32> -> vector<32x384xf32>
    %286 = arith.addf %281, %285 : vector<32x384xf32>
    %c0_206 = arith.constant 0 : index
    %c129_207 = arith.constant 129 : index
    %287 = vector.load %arg14[%c0_206, %c129_207] : memref<40x640xbf16, #tpu.memory_space<vmem>>, vector<32x384xbf16>
    %c2_208 = arith.constant 2 : index
    %c0_209 = arith.constant 0 : index
    %c0_210 = arith.constant 0 : index
    %288 = vector.load %arg6[%c2_208, %c0_209, %c0_210] : memref<3x32x32xbf16, #tpu.memory_space<vmem>>, vector<1x32x32xbf16>
    %289 = vector.shape_cast %288 : vector<1x32x32xbf16> to vector<32x32xbf16>
    %cst_211 = arith.constant dense<0.000000e+00> : vector<32x384xf32>
    %290 = tpu.matmul %289, %287, %cst_211 {dimension_numbers = #tpu.dot_dimension_numbers<[1], [0], [0], [1], [0, 0, 1, 1], [], []>} : vector<32x32xbf16>, vector<32x384xbf16>, vector<32x384xf32> -> vector<32x384xf32>
    %291 = arith.addf %286, %290 : vector<32x384xf32>
    %292 = arith.mulf %291, %4 : vector<32x384xf32>
    %293 = arith.mulf %292, %292 : vector<32x384xf32>
    %294 = tpu.concatenate %292, %293 in 0 : vector<32x384xf32>, vector<32x384xf32> -> vector<64x384xf32>
    %cst_212 = arith.constant dense<0.000000e+00> : vector<64xf32>
    %295 = vector.multi_reduction <add>, %294, %cst_212 [1] : vector<64x384xf32> to vector<64xf32>
    %296 = vector.shape_cast %295 : vector<64xf32> to vector<64x1xf32>
    %297 = vector.extract_strided_slice %296 {offsets = [0, 0], sizes = [32, 1], strides = [1, 1]} : vector<64x1xf32> to vector<32x1xf32>
    %298 = vector.extract_strided_slice %296 {offsets = [32, 0], sizes = [32, 1], strides = [1, 1]} : vector<64x1xf32> to vector<32x1xf32>
    %cst_213 = arith.constant 2.560000e+02 : f32
    %299 = vector.broadcast %cst_213 : f32 to vector<32x1xf32>
    %300 = arith.divf %297, %299 : vector<32x1xf32>
    %cst_214 = arith.constant 2.560000e+02 : f32
    %301 = vector.broadcast %cst_214 : f32 to vector<32x1xf32>
    %302 = arith.divf %298, %301 : vector<32x1xf32>
    %303 = arith.mulf %300, %300 : vector<32x1xf32>
    %304 = arith.subf %302, %303 : vector<32x1xf32>
    %cst_215 = arith.constant 0.000000e+00 : f32
    %305 = vector.broadcast %cst_215 : f32 to vector<32x1xf32>
    %306 = arith.maximumf %304, %305 : vector<32x1xf32>
    %c5 = arith.constant 5 : index
    %c0_216 = arith.constant 0 : index
    %c0_217 = arith.constant 0 : index
    %307 = vector.load %arg7[%c5, %c0_216, %c0_217] : memref<6x32x1xf32, #tpu.memory_space<vmem>>, vector<1x32x1xf32>
    %308 = vector.shape_cast %307 : vector<1x32x1xf32> to vector<32x1xf32>
    %cst_218 = arith.constant 9.99999974E-6 : f32
    %309 = vector.broadcast %cst_218 : f32 to vector<32x1xf32>
    %310 = arith.addf %306, %309 : vector<32x1xf32>
    %311 = math.rsqrt %310 : vector<32x1xf32>
    %312 = arith.mulf %308, %311 : vector<32x1xf32>
    %c5_219 = arith.constant 5 : index
    %c0_220 = arith.constant 0 : index
    %c0_221 = arith.constant 0 : index
    %313 = vector.load %arg8[%c5_219, %c0_220, %c0_221] : memref<6x32x1xf32, #tpu.memory_space<vmem>>, vector<1x32x1xf32>
    %314 = vector.shape_cast %313 : vector<1x32x1xf32> to vector<32x1xf32>
    %315 = arith.mulf %300, %312 : vector<32x1xf32>
    %316 = arith.subf %314, %315 : vector<32x1xf32>
    %317 = vector.broadcast %312 : vector<32x1xf32> to vector<32x384xf32>
    %318 = arith.mulf %291, %317 : vector<32x384xf32>
    %319 = vector.broadcast %316 : vector<32x1xf32> to vector<32x384xf32>
    %320 = arith.addf %318, %319 : vector<32x384xf32>
    %cst_222 = arith.constant 0.000000e+00 : f32
    %321 = vector.broadcast %cst_222 : f32 to vector<32x384xf32>
    %322 = arith.maximumf %320, %321 : vector<32x384xf32>
    %323 = arith.mulf %322, %4 : vector<32x384xf32>
    %324 = arith.mulf %323, %323 : vector<32x384xf32>
    %325 = tpu.concatenate %323, %324 in 0 : vector<32x384xf32>, vector<32x384xf32> -> vector<64x384xf32>
    %c0_223 = arith.constant 0 : index
    %c0_224 = arith.constant 0 : index
    %326 = vector.load %arg12[%c0_223, %c0_224] : memref<384x2xf32, #tpu.memory_space<vmem>>, vector<384x2xf32>
    %cst_225 = arith.constant dense<0.000000e+00> : vector<64x2xf32>
    %327 = tpu.matmul %325, %326, %cst_225 {dimension_numbers = #tpu.dot_dimension_numbers<[1], [0], [0], [1], [0, 0, 1, 1], [], []>} : vector<64x384xf32>, vector<384x2xf32>, vector<64x2xf32> -> vector<64x2xf32>
    %328 = vector.extract_strided_slice %327 {offsets = [0, 0], sizes = [32, 2], strides = [1, 1]} : vector<64x2xf32> to vector<32x2xf32>
    %329 = vector.extract_strided_slice %327 {offsets = [32, 0], sizes = [32, 2], strides = [1, 1]} : vector<64x2xf32> to vector<32x2xf32>
    %cst_226 = arith.constant 1.280000e+02 : f32
    %330 = vector.broadcast %cst_226 : f32 to vector<32x2xf32>
    %331 = arith.divf %328, %330 : vector<32x2xf32>
    %332 = arith.mulf %328, %328 : vector<32x2xf32>
    %cst_227 = arith.constant 1.280000e+02 : f32
    %333 = vector.broadcast %cst_227 : f32 to vector<32x2xf32>
    %334 = arith.divf %332, %333 : vector<32x2xf32>
    %335 = arith.subf %329, %334 : vector<32x2xf32>
    %cst_228 = arith.constant 1.270000e+02 : f32
    %336 = vector.broadcast %cst_228 : f32 to vector<32x2xf32>
    %337 = arith.divf %335, %336 : vector<32x2xf32>
    %cst_229 = arith.constant 0.000000e+00 : f32
    %338 = vector.broadcast %cst_229 : f32 to vector<32x2xf32>
    %339 = arith.maximumf %337, %338 : vector<32x2xf32>
    %340 = math.sqrt %339 : vector<32x2xf32>
    %341 = tpu.concatenate %331, %340 in 0 : vector<32x2xf32>, vector<32x2xf32> -> vector<64x2xf32>
    %c0_230 = arith.constant 0 : index
    %c0_231 = arith.constant 0 : index
    %342 = vector.load %arg9[%c0_230, %c0_231] : memref<32x64xf32, #tpu.memory_space<vmem>>, vector<32x64xf32>
    %cst_232 = arith.constant dense<0.000000e+00> : vector<32x2xf32>
    %343 = tpu.matmul %342, %341, %cst_232 {dimension_numbers = #tpu.dot_dimension_numbers<[1], [0], [0], [1], [0, 0, 1, 1], [], []>} : vector<32x64xf32>, vector<64x2xf32>, vector<32x2xf32> -> vector<32x2xf32>
    %c0_233 = arith.constant 0 : index
    %c0_234 = arith.constant 0 : index
    %344 = vector.load %arg10[%c0_233, %c0_234] : memref<32x1xf32, #tpu.memory_space<vmem>>, vector<32x1xf32>
    %345 = vector.broadcast %344 : vector<32x1xf32> to vector<32x2xf32>
    %346 = arith.addf %343, %345 : vector<32x2xf32>
    %347 = math.tanh %346 : vector<32x2xf32>
    %c0_235 = arith.constant 0 : index
    %c0_236 = arith.constant 0 : index
    %348 = vector.load %arg13[%c0_235, %c0_236] : memref<32x2xf32, #tpu.memory_space<vmem>>, vector<32x2xf32>
    tpu.vector_store %arg13[%c0_235, %c0_236], %347 {strides = array<i32>} : memref<32x2xf32, #tpu.memory_space<vmem>>, vector<32x2xf32>,
    return
  }
}

</mosaic_0001>

<llo_original>
// kernel: tpu_custom_call.1
$region0: #{tpu_custom_call.1}
  #allocation0 [shape = 'u32[]', space=smem, size = 0x4, offset = 0x4, fixed_abs, tag = 'smem constant byte address 0x4 - core index']
  #allocation1 [shape = 'u32[144,128]{1,0:T(1,128)}', space=vmem, size = 0x12000, scoped, tag = 'internal scratch']
  #allocation2 [shape = 'bf16[40,640]{1,0:T(8,128)(2,1)}', space=vmem, size = 0xc800, scoped, tag = 'scratch operand']
  %s0 = inlined_call_operand.vmem [shape: f32[40,384], index: 0, kind: input, shape index: {}]
  %s1 = inlined_call_operand.vmem [shape: bf16[5,32,40], index: 1, kind: input, shape index: {}]
  %s2 = inlined_call_operand.vmem [shape: bf16[5,32,32], index: 2, kind: input, shape index: {}]
  %s3 = inlined_call_operand.vmem [shape: bf16[5,32,32], index: 3, kind: input, shape index: {}]
  %s4 = inlined_call_operand.vmem [shape: bf16[3,32,32], index: 4, kind: input, shape index: {}]
  %s5 = inlined_call_operand.vmem [shape: bf16[3,32,32], index: 5, kind: input, shape index: {}]
  %s6 = inlined_call_operand.vmem [shape: bf16[3,32,32], index: 6, kind: input, shape index: {}]
  %s7 = inlined_call_operand.vmem [shape: f32[6,32,1], index: 7, kind: input, shape index: {}]
  %s8 = inlined_call_operand.vmem [shape: f32[6,32,1], index: 8, kind: input, shape index: {}]
  %s9 = inlined_call_operand.vmem [shape: f32[32,64], index: 9, kind: input, shape index: {}]
  %s10 = inlined_call_operand.vmem [shape: f32[32,1], index: 10, kind: input, shape index: {}]
  %s11 = inlined_call_operand.vmem [shape: f32[1,384], index: 11, kind: input, shape index: {}]
  %s12 = inlined_call_operand.vmem [shape: f32[384,2], index: 12, kind: input, shape index: {}]
  %s13 = inlined_call_operand.vmem [shape: f32[32,2], index: 13, kind: output, shape index: {}]
  %s14 = sld [smem:[#allocation0]]
  $region62: #{tpu_custom_call.1} parent=0
    _
  %s16 = ssub.s32 1, %s14
  %s17 = scalar_select 0, %s16, %s14
  // Predicated region
  $region2: #{tpu_custom_call.1} parent=0 // pred_check
    _
  $region3: #{tpu_custom_call.1} parent=0 // pred_check_branch
    %19 = sbr.rel (0) target = $region5
  $region4: #{tpu_custom_call.1} parent=0 // pred_region
    _
  $region5: #{tpu_custom_call.1} parent=0 // pred_fallthru
    _
  // Predicated region
  $region6: #{tpu_custom_call.1} parent=0 // pred_check
    _
  $region7: #{tpu_custom_call.1} parent=0 // pred_check_branch
    %21 = sbr.rel (0) target = $region9
  $region8: #{tpu_custom_call.1} parent=0 // pred_region
    _
  $region9: #{tpu_custom_call.1} parent=0 // pred_fallthru
    _
  // Predicated region
  $region10: #{tpu_custom_call.1} parent=0 // pred_check
    _
  $region11: #{tpu_custom_call.1} parent=0 // pred_check_branch
    %23 = sbr.rel (0) target = $region13
  $region12: #{tpu_custom_call.1} parent=0 // pred_region
    _
  $region13: #{tpu_custom_call.1} parent=0 // pred_fallthru
    _
  // Predicated region
  $region14: #{tpu_custom_call.1} parent=0 // pred_check
    _
  $region15: #{tpu_custom_call.1} parent=0 // pred_check_branch
    %25 = sbr.rel (0) target = $region17
  $region16: #{tpu_custom_call.1} parent=0 // pred_region
    _
  $region17: #{tpu_custom_call.1} parent=0 // pred_fallthru
    _
  // Predicated region
  $region18: #{tpu_custom_call.1} parent=0 // pred_check
    _
  $region19: #{tpu_custom_call.1} parent=0 // pred_check_branch
    %27 = sbr.rel (0) target = $region21
  $region20: #{tpu_custom_call.1} parent=0 // pred_region
    _
  $region21: #{tpu_custom_call.1} parent=0 // pred_fallthru
    _
  // Predicated region
  $region22: #{tpu_custom_call.1} parent=0 // pred_check
    _
  $region23: #{tpu_custom_call.1} parent=0 // pred_check_branch
    %29 = sbr.rel (0) target = $region25
  $region24: #{tpu_custom_call.1} parent=0 // pred_region
    _
  $region25: #{tpu_custom_call.1} parent=0 // pred_fallthru
    _
  // Predicated region
  $region26: #{tpu_custom_call.1} parent=0 // pred_check
    _
  $region27: #{tpu_custom_call.1} parent=0 // pred_check_branch
    %31 = sbr.rel (0) target = $region29
  $region28: #{tpu_custom_call.1} parent=0 // pred_region
    _
  $region29: #{tpu_custom_call.1} parent=0 // pred_fallthru
    _
  // Predicated region
  $region30: #{tpu_custom_call.1} parent=0 // pred_check
    _
  $region31: #{tpu_custom_call.1} parent=0 // pred_check_branch
    %33 = sbr.rel (0) target = $region33
  $region32: #{tpu_custom_call.1} parent=0 // pred_region
    _
  $region33: #{tpu_custom_call.1} parent=0 // pred_fallthru
    _
  // Predicated region
  $region34: #{tpu_custom_call.1} parent=0 // pred_check
    _
  $region35: #{tpu_custom_call.1} parent=0 // pred_check_branch
    %35 = sbr.rel (0) target = $region37
  $region36: #{tpu_custom_call.1} parent=0 // pred_region
    _
  $region37: #{tpu_custom_call.1} parent=0 // pred_fallthru
    _
  // Predicated region
  $region38: #{tpu_custom_call.1} parent=0 // pred_check
    _
  $region39: #{tpu_custom_call.1} parent=0 // pred_check_branch
    %37 = sbr.rel (0) target = $region41
  $region40: #{tpu_custom_call.1} parent=0 // pred_region
    _
  $region41: #{tpu_custom_call.1} parent=0 // pred_fallthru
    _
  // Predicated region
  $region42: #{tpu_custom_call.1} parent=0 // pred_check
    _
  $region43: #{tpu_custom_call.1} parent=0 // pred_check_branch
    %39 = sbr.rel (0) target = $region45
  $region44: #{tpu_custom_call.1} parent=0 // pred_region
    _
  $region45: #{tpu_custom_call.1} parent=0 // pred_fallthru
    _
  // Predicated region
  $region46: #{tpu_custom_call.1} parent=0 // pred_check
    _
  $region47: #{tpu_custom_call.1} parent=0 // pred_check_branch
    %41 = sbr.rel (0) target = $region49
  $region48: #{tpu_custom_call.1} parent=0 // pred_region
    _
  $region49: #{tpu_custom_call.1} parent=0 // pred_fallthru
    _
  // Predicated region
  $region50: #{tpu_custom_call.1} parent=0 // pred_check
    _
  $region51: #{tpu_custom_call.1} parent=0 // pred_check_branch
    %43 = sbr.rel (0) target = $region53
  $region52: #{tpu_custom_call.1} parent=0 // pred_region
    _
  $region53: #{tpu_custom_call.1} parent=0 // pred_fallthru
    _
  %45 = vst [vmem:[#allocation2] sm:$0xff] 0
  %46 = vst [vmem:[#allocation2 + $0x8] sm:$0xff] 0
  %47 = vst [vmem:[#allocation2 + $0x10] sm:$0xf] 0
  %48 = vst [vmem:[#allocation2 + $0x14] sm:$0xff] 0
  %49 = vst [vmem:[#allocation2 + $0x1c] sm:$0xff] 0
  %50 = vst [vmem:[#allocation2 + $0x24] sm:$0xf] 0
  %51 = vst [vmem:[#allocation2 + $0x28] sm:$0xff] 0
  %52 = vst [vmem:[#allocation2 + $0x30] sm:$0xff] 0
  %53 = vst [vmem:[#allocation2 + $0x38] sm:$0xf] 0
  %54 = vst [vmem:[#allocation2 + $0x3c] sm:$0xff] 0
  %55 = vst [vmem:[#allocation2 + $0x44] sm:$0xff] 0
  %56 = vst [vmem:[#allocation2 + $0x4c] sm:$0xf] 0
  %57 = vst [vmem:[#allocation2 + $0x50] sm:$0xff] 0
  %58 = vst [vmem:[#allocation2 + $0x58] sm:$0xff] 0
  %59 = vst [vmem:[#allocation2 + $0x60] sm:$0xf] 0
  %v60 = vld [vmem:[%s11] sm:$0x7]
  %v62 = vlaneseq
  %v63 = vshrl.u32 %v62, 7
  %v64 = vsub.s32 0, %v63
  %v65 = vrot.slane %v60, %v64
  %v66 = vlaneseq
  %v67 = vshrl.u32 %v66, 7
  %v68 = vsub.s32 1, %v67
  %v69 = vrot.slane %v60, %v68
  %v70 = vlaneseq
  %v71 = vshrl.u32 %v70, 7
  %v72 = vsub.s32 2, %v71
  %v73 = vrot.slane %v60, %v72
  %v77 = vld [vmem:[%s0] sm:$0xff]
  %v78 = vld [vmem:[%s0 + $0x8] sm:$0xff]
  %v79 = vld [vmem:[%s0 + $0x10] sm:$0xff]
  %v80 = vld [vmem:[%s0 + $0x18] sm:$0xff]
  %v81 = vld [vmem:[%s0 + $0x20] sm:$0xff]
  %v82 = vld [vmem:[%s0 + $0x28] sm:$0xff]
  %v83 = vld [vmem:[%s0 + $0x30] sm:$0xff]
  %v84 = vld [vmem:[%s0 + $0x38] sm:$0xff]
  %v85 = vld [vmem:[%s0 + $0x40] sm:$0xff]
  %v86 = vld [vmem:[%s0 + $0x48] sm:$0xff]
  %v87 = vld [vmem:[%s0 + $0x50] sm:$0xff]
  %v88 = vld [vmem:[%s0 + $0x58] sm:$0xff]
  %v89 = vld [vmem:[%s0 + $0x60] sm:$0xff]
  %v90 = vld [vmem:[%s0 + $0x68] sm:$0xff]
  %v91 = vld [vmem:[%s0 + $0x70] sm:$0xff]
  %v92 = vpack.c.bf16 %v80, %v77
  %v93 = vpack.c.bf16 %v81, %v78
  %v94 = vpack.c.bf16 %v82, %v79
  %v95 = vpack.c.bf16 %v86, %v83
  %v96 = vpack.c.bf16 %v87, %v84
  %v97 = vpack.c.bf16 %v88, %v85
  %v98 = vpack.c.bf16 %v89, %v89
  %v99 = vpack.c.bf16 %v90, %v90
  %v100 = vpack.c.bf16 %v91, %v91
  %v110 = vunpack.c.l.b16 %v92
  %v111 = vunpack.c.l.b16 %v93
  %v112 = vunpack.c.l.b16 %v94
  %v113 = vunpack.c.h.b16 %v92
  %v114 = vunpack.c.h.b16 %v93
  %v115 = vunpack.c.h.b16 %v94
  %v116 = vunpack.c.l.b16 %v95
  %v117 = vunpack.c.l.b16 %v96
  %v118 = vunpack.c.l.b16 %v97
  %v119 = vunpack.c.h.b16 %v95
  %v120 = vunpack.c.h.b16 %v96
  %v121 = vunpack.c.h.b16 %v97
  %v122 = vunpack.c.l.b16 %v98
  %v123 = vunpack.c.l.b16 %v99
  %v124 = vunpack.c.l.b16 %v100
  %v125 = vpack.c.b16 %v111, %v110
  %v126 = vpack.c.b16 %v112, %v112
  %v127 = vpack.c.b16 %v114, %v113
  %v128 = vpack.c.b16 %v115, %v115
  %v129 = vpack.c.b16 %v117, %v116
  %v130 = vpack.c.b16 %v118, %v118
  %v131 = vpack.c.b16 %v120, %v119
  %v132 = vpack.c.b16 %v121, %v121
  %v133 = vpack.c.b16 %v123, %v122
  %v134 = vpack.c.b16 %v124, %v124
  %145 = vst [vmem:[#allocation2 + $0x4] sm:$0xff] %v125
  %146 = vst [vmem:[#allocation2 + $0xc] sm:$0xf] %v126
  %147 = vst [vmem:[#allocation2 + $0x18] sm:$0xff] %v127
  %148 = vst [vmem:[#allocation2 + $0x20] sm:$0xf] %v128
  %149 = vst [vmem:[#allocation2 + $0x2c] sm:$0xff] %v129
  %150 = vst [vmem:[#allocation2 + $0x34] sm:$0xf] %v130
  %151 = vst [vmem:[#allocation2 + $0x40] sm:$0xff] %v131
  %152 = vst [vmem:[#allocation2 + $0x48] sm:$0xf] %v132
  %153 = vst [vmem:[#allocation2 + $0x54] sm:$0xff] %v133
  %154 = vst [vmem:[#allocation2 + $0x5c] sm:$0xf] %v134
  %v155 = vld [vmem:[#allocation2] sm:$0xff]
  %v156 = vld [vmem:[#allocation2 + $0x8] sm:$0xff]
  %v157 = vld [vmem:[#allocation2 + $0x14] sm:$0xff]
  %v158 = vld [vmem:[#allocation2 + $0x1c] sm:$0xff]
  %v159 = vld [vmem:[#allocation2 + $0x28] sm:$0xff]
  %v160 = vld [vmem:[#allocation2 + $0x30] sm:$0xff]
  %v161 = vld [vmem:[#allocation2 + $0x3c] sm:$0xff]
  %v162 = vld [vmem:[#allocation2 + $0x44] sm:$0xff]
  %v163 = vld [vmem:[#allocation2 + $0x50] sm:$0xff]
  %v164 = vld [vmem:[#allocation2 + $0x58] sm:$0xff]
  %v165 = vld [vmem:[%s1] sm:$0xf]
  %v166 = vld [vmem:[%s1 + $0x4] sm:$0xf]
  %v167 = vld [vmem:[%s1 + $0x8] sm:$0xf]
  %v168 = vld [vmem:[%s1 + $0xc] sm:$0xf]
  %s169 = scalar_lea.vmem %s1, 16
  %v170 = vld [vmem:[%s169] sm:$0xf]
  %v171 = vld [vmem:[%s169 + $0x4] sm:$0xf]
  %v172 = vld [vmem:[%s169 + $0x8] sm:$0xf]
  %v173 = vld [vmem:[%s169 + $0xc] sm:$0xf]
  %v178 = vunpack.c.l.b16 %v170
  %v179 = vunpack.c.l.b16 %v171
  %v180 = vunpack.c.l.b16 %v172
  %v181 = vunpack.c.l.b16 %v173
  %v182 = vpack.c.b16 %v179, %v178
  %v183 = vpack.c.b16 %v181, %v180
  %v194 = vunpack.c.l.b16 %v155
  %v195 = vunpack.c.h.b16 %v155
  %v196 = vunpack.c.l.b16 %v156
  %v197 = vunpack.c.h.b16 %v156
  %v198 = vunpack.c.l.b16 %v157
  %v199 = vunpack.c.h.b16 %v157
  %v200 = vunpack.c.l.b16 %v158
  %v201 = vunpack.c.h.b16 %v158
  %v202 = vunpack.c.l.b16 %v159
  %v203 = vunpack.c.h.b16 %v159
  %v204 = vunpack.c.l.b16 %v160
  %v205 = vunpack.c.h.b16 %v160
  %v206 = vunpack.c.l.b16 %v161
  %v207 = vunpack.c.h.b16 %v161
  %v208 = vunpack.c.l.b16 %v162
  %v209 = vunpack.c.h.b16 %v162
  %v210 = vunpack.c.l.b16 %v163
  %v211 = vunpack.c.h.b16 %v163
  %v212 = vunpack.c.l.b16 %v164
  %v213 = vunpack.c.h.b16 %v164
  %v214 = vpack.c.b16 %v198, %v194
  %v215 = vpack.c.b16 %v199, %v195
  %v216 = vpack.c.b16 %v200, %v196
  %v217 = vpack.c.b16 %v201, %v197
  %v218 = vpack.c.b16 %v206, %v202
  %v219 = vpack.c.b16 %v207, %v203
  %v220 = vpack.c.b16 %v208, %v204
  %v221 = vpack.c.b16 %v209, %v205
  %v222 = vpack.c.b16 %v210, %v210
  %v223 = vpack.c.b16 %v211, %v211
  %v224 = vpack.c.b16 %v212, %v212
  %v225 = vpack.c.b16 %v213, %v213
  %226 = vrot.lane.b32.xlu0 %v214, 1
  %v227 = vpop.permute.xlu0 %226
  %228 = vrot.lane.b32.xlu0 %v215, 1
  %v229 = vpop.permute.xlu0 %228
  %230 = vrot.lane.b32.xlu0 %v216, 1
  %v231 = vpop.permute.xlu0 %230
  %232 = vrot.lane.b32.xlu0 %v217, 1
  %v233 = vpop.permute.xlu0 %232
  %234 = vrot.lane.b32.xlu0 %v218, 1
  %v235 = vpop.permute.xlu0 %234
  %236 = vrot.lane.b32.xlu0 %v219, 1
  %v237 = vpop.permute.xlu0 %236
  %238 = vrot.lane.b32.xlu0 %v220, 1
  %v239 = vpop.permute.xlu0 %238
  %240 = vrot.lane.b32.xlu0 %v221, 1
  %v241 = vpop.permute.xlu0 %240
  %242 = vrot.lane.b32.xlu0 %v222, 1
  %v243 = vpop.permute.xlu0 %242
  %244 = vrot.lane.b32.xlu0 %v223, 1
  %v245 = vpop.permute.xlu0 %244
  %246 = vrot.lane.b32.xlu0 %v224, 1
  %v247 = vpop.permute.xlu0 %246
  %248 = vrot.lane.b32.xlu0 %v225, 1
  %v249 = vpop.permute.xlu0 %248
  %vm250 = vcmask 7168
  %v251 = vsel %vm250, %v227, %v229
  %v252 = vsel %vm250, %v229, %v231
  %v253 = vsel %vm250, %v231, %v233
  %v254 = vsel %vm250, %v235, %v237
  %v255 = vsel %vm250, %v237, %v239
  %v256 = vsel %vm250, %v239, %v241
  %v257 = vsel %vm250, %v243, %v245
  %v258 = vsel %vm250, %v245, %v247
  %v259 = vsel %vm250, %v247, %v249
  %vm266 = vcmask 326656
  %v268 = vsel %vm266, %v182, 0
  %v271 = vsel %vm266, %v183, 0
  %vm273 = vcmask 1043456
  %v275 = vsel %vm273, %v257, 0
  %v278 = vsel %vm273, %v258, 0
  %v281 = vsel %vm273, %v259, 0
  %283 = vmatprep.subr.bf16.mxu0 %v252
  %284 = vmatpush1.bf16.msra.mxu0 %v251
  %285 = vmatprep.subr.bf16.mxu0 %v255
  %286 = vmatpush1.bf16.msra.mxu0 %v254
  %287 = vmatprep.subr.bf16.mxu0 %v278
  %288 = vmatpush1.bf16.msra.mxu0 %v275
  %289 = vmatprep.subr.bf16.mxu0 0
  %290 = vmatpush1.bf16.msra.mxu0 0
  %291 = vmatprep.subr.bf16.mxu0 0
  %292 = vmatpush1.bf16.msra.mxu0 0
  %293 = vmatprep.subr.bf16.mxu0 0
  %294 = vmatpush1.bf16.msra.mxu0 0
  %295 = vmatprep.subr.bf16.mxu0 0
  %296 = vmatpush1.bf16.msra.mxu0 0
  %297 = vmatprep.subr.bf16.mxu0 0
  %298 = vmatpush1.bf16.msra.mxu0 0
  %299 = vmatprep.subr.bf16.mxu0 0
  %300 = vmatpush1.bf16.msra.mxu0 0
  %301 = vmatprep.subr.bf16.mxu0 0
  %302 = vmatpush1.bf16.msra.mxu0 0
  %303 = vmatprep.subr.bf16.mxu0 0
  %304 = vmatpush1.bf16.msra.mxu0 0
  %305 = vmatprep.subr.bf16.mxu0 0
  %306 = vmatpush1.bf16.msra.mxu0 0
  %307 = vmatprep.subr.bf16.mxu0 0
  %308 = vmatpush1.bf16.msra.mxu0 0
  %309 = vmatprep.subr.bf16.mxu0 0
  %310 = vmatpush1.bf16.msra.mxu0 0
  %311 = vmatprep.subr.bf16.mxu0 0
  %312 = vmatpush1.bf16.msra.mxu0 0
  %313 = vmatprep.subr.bf16.mxu0 0
  %314 = vmatpush1.bf16.msra.mxu0 0
  %315 = vmatprep.mubr.bf16.mxu0 0
  %316 = vmatmul.mubr.bf16.gmra.mrb[0].mxu0 %v268
  %v317 = vpop.f32.mrb[0].mxu0
  %v318 = vadd.f32 0.0, %v317
  %v319 = vpop.f32.mrb[0].mxu0
  %v320 = vadd.f32 0.0, %v319
  %v321 = vpop.f32.mrb[0].mxu0
  %v322 = vadd.f32 0.0, %v321
  %v323 = vpop.f32.mrb[0].mxu0
  %v324 = vadd.f32 0.0, %v323
  %325 = vmatprep.mubr.bf16.mxu0 0
  %326 = vmatmul.mubr.bf16.gmra.mrb[0].mxu0 %v271
  %v327 = vpop.f32.mrb[0].mxu0
  %v328 = vadd.f32 0.0, %v327
  %v329 = vpop.f32.mrb[0].mxu0
  %v330 = vadd.f32 0.0, %v329
  %v331 = vpop.f32.mrb[0].mxu0
  %v332 = vadd.f32 0.0, %v331
  %v333 = vpop.f32.mrb[0].mxu0
  %v334 = vadd.f32 0.0, %v333
  %335 = vdwg.mxu0
  %336 = vmatprep.subr.bf16.mxu0 0
  %337 = vmatpush1.bf16.msra.mxu0 %v253
  %338 = vmatprep.subr.bf16.mxu0 0
  %339 = vmatpush1.bf16.msra.mxu0 %v256
  %340 = vmatprep.subr.bf16.mxu0 0
  %341 = vmatpush1.bf16.msra.mxu0 %v281
  %342 = vmatprep.subr.bf16.mxu0 0
  %343 = vmatpush1.bf16.msra.mxu0 0
  %344 = vmatprep.subr.bf16.mxu0 0
  %345 = vmatpush1.bf16.msra.mxu0 0
  %346 = vmatprep.subr.bf16.mxu0 0
  %347 = vmatpush1.bf16.msra.mxu0 0
  %348 = vmatprep.subr.bf16.mxu0 0
  %349 = vmatpush1.bf16.msra.mxu0 0
  %350 = vmatprep.subr.bf16.mxu0 0
  %351 = vmatpush1.bf16.msra.mxu0 0
  %352 = vmatprep.subr.bf16.mxu0 0
  %353 = vmatpush1.bf16.msra.mxu0 0
  %354 = vmatprep.subr.bf16.mxu0 0
  %355 = vmatpush1.bf16.msra.mxu0 0
  %356 = vmatprep.subr.bf16.mxu0 0
  %357 = vmatpush1.bf16.msra.mxu0 0
  %358 = vmatprep.subr.bf16.mxu0 0
  %359 = vmatpush1.bf16.msra.mxu0 0
  %360 = vmatprep.subr.bf16.mxu0 0
  %361 = vmatpush1.bf16.msra.mxu0 0
  %362 = vmatprep.subr.bf16.mxu0 0
  %363 = vmatpush1.bf16.msra.mxu0 0
  %364 = vmatprep.subr.bf16.mxu0 0
  %365 = vmatpush1.bf16.msra.mxu0 0
  %366 = vmatprep.subr.bf16.mxu0 0
  %367 = vmatpush1.bf16.msra.mxu0 0
  %368 = vmatprep.mubr.bf16.mxu0 0
  %369 = vmatmul.mubr.bf16.gmra.mrb[0].mxu0 %v268
  %v370 = vpop.f32.mrb[0].mxu0
  %v371 = vadd.f32 0.0, %v370
  %v372 = vpop.f32.mrb[0].mxu0
  %v373 = vpop.f32.mrb[0].mxu0
  %v374 = vadd.f32 0.0, %v373
  %v375 = vpop.f32.mrb[0].mxu0
  %376 = vmatprep.mubr.bf16.mxu0 0
  %377 = vmatmul.mubr.bf16.gmra.mrb[0].mxu0 %v271
  %v378 = vpop.f32.mrb[0].mxu0
  %v379 = vadd.f32 0.0, %v378
  %v380 = vpop.f32.mrb[0].mxu0
  %v381 = vpop.f32.mrb[0].mxu0
  %v382 = vadd.f32 0.0, %v381
  %v383 = vpop.f32.mrb[0].mxu0
  %384 = vdwg.mxu0
  %v389 = vunpack.c.l.b16 %v165
  %v390 = vunpack.c.l.b16 %v166
  %v391 = vunpack.c.l.b16 %v167
  %v392 = vunpack.c.l.b16 %v168
  %v393 = vpack.c.b16 %v390, %v389
  %v394 = vpack.c.b16 %v392, %v391
  %395 = vrot.lane.b32.xlu0 %v214, 2
  %v396 = vpop.permute.xlu0 %395
  %397 = vrot.lane.b32.xlu0 %v215, 2
  %v398 = vpop.permute.xlu0 %397
  %399 = vrot.lane.b32.xlu0 %v216, 2
  %v400 = vpop.permute.xlu0 %399
  %401 = vrot.lane.b32.xlu0 %v217, 2
  %v402 = vpop.permute.xlu0 %401
  %403 = vrot.lane.b32.xlu0 %v218, 2
  %v404 = vpop.permute.xlu0 %403
  %405 = vrot.lane.b32.xlu0 %v219, 2
  %v406 = vpop.permute.xlu0 %405
  %407 = vrot.lane.b32.xlu0 %v220, 2
  %v408 = vpop.permute.xlu0 %407
  %409 = vrot.lane.b32.xlu0 %v221, 2
  %v410 = vpop.permute.xlu0 %409
  %411 = vrot.lane.b32.xlu0 %v222, 2
  %v412 = vpop.permute.xlu0 %411
  %413 = vrot.lane.b32.xlu0 %v223, 2
  %v414 = vpop.permute.xlu0 %413
  %415 = vrot.lane.b32.xlu0 %v224, 2
  %v416 = vpop.permute.xlu0 %415
  %417 = vrot.lane.b32.xlu0 %v225, 2
  %v418 = vpop.permute.xlu0 %417
  %vm419 = vcmask 15360
  %v420 = vsel %vm419, %v396, %v398
  %v421 = vsel %vm419, %v398, %v400
  %v422 = vsel %vm419, %v400, %v402
  %v423 = vsel %vm419, %v404, %v406
  %v424 = vsel %vm419, %v406, %v408
  %v425 = vsel %vm419, %v408, %v410
  %v426 = vsel %vm419, %v412, %v414
  %v427 = vsel %vm419, %v414, %v416
  %v428 = vsel %vm419, %v416, %v418
  %v436 = vsel %vm266, %v393, 0
  %v439 = vsel %vm266, %v394, 0
  %v442 = vsel %vm273, %v426, 0
  %v445 = vsel %vm273, %v427, 0
  %v448 = vsel %vm273, %v428, 0
  %450 = vmatprep.subr.bf16.mxu0 %v421
  %451 = vmatpush1.bf16.msra.mxu0 %v420
  %452 = vmatprep.subr.bf16.mxu0 %v424
  %453 = vmatpush1.bf16.msra.mxu0 %v423
  %454 = vmatprep.subr.bf16.mxu0 %v445
  %455 = vmatpush1.bf16.msra.mxu0 %v442
  %456 = vmatprep.subr.bf16.mxu0 0
  %457 = vmatpush1.bf16.msra.mxu0 0
  %458 = vmatprep.subr.bf16.mxu0 0
  %459 = vmatpush1.bf16.msra.mxu0 0
  %460 = vmatprep.subr.bf16.mxu0 0
  %461 = vmatpush1.bf16.msra.mxu0 0
  %462 = vmatprep.subr.bf16.mxu0 0
  %463 = vmatpush1.bf16.msra.mxu0 0
  %464 = vmatprep.subr.bf16.mxu0 0
  %465 = vmatpush1.bf16.msra.mxu0 0
  %466 = vmatprep.subr.bf16.mxu0 0
  %467 = vmatpush1.bf16.msra.mxu0 0
  %468 = vmatprep.subr.bf16.mxu0 0
  %469 = vmatpush1.bf16.msra.mxu0 0
  %470 = vmatprep.subr.bf16.mxu0 0
  %471 = vmatpush1.bf16.msra.mxu0 0
  %472 = vmatprep.subr.bf16.mxu0 0
  %473 = vmatpush1.bf16.msra.mxu0 0
  %474 = vmatprep.subr.bf16.mxu0 0
  %475 = vmatpush1.bf16.msra.mxu0 0
  %476 = vmatprep.subr.bf16.mxu0 0
  %477 = vmatpush1.bf16.msra.mxu0 0
  %478 = vmatprep.subr.bf16.mxu0 0
  %479 = vmatpush1.bf16.msra.mxu0 0
  %480 = vmatprep.subr.bf16.mxu0 0
  %481 = vmatpush1.bf16.msra.mxu0 0
  %482 = vmatprep.mubr.bf16.mxu0 0
  %483 = vmatmul.mubr.bf16.gmra.mrb[0].mxu0 %v436
  %v484 = vpop.f32.mrb[0].mxu0
  %v485 = vadd.f32 %v318, %v484
  %v486 = vpop.f32.mrb[0].mxu0
  %v487 = vadd.f32 %v320, %v486
  %v488 = vpop.f32.mrb[0].mxu0
  %v489 = vadd.f32 %v322, %v488
  %v490 = vpop.f32.mrb[0].mxu0
  %v491 = vadd.f32 %v324, %v490
  %492 = vmatprep.mubr.bf16.mxu0 0
  %493 = vmatmul.mubr.bf16.gmra.mrb[0].mxu0 %v439
  %v494 = vpop.f32.mrb[0].mxu0
  %v495 = vadd.f32 %v328, %v494
  %v496 = vpop.f32.mrb[0].mxu0
  %v497 = vadd.f32 %v330, %v496
  %v498 = vpop.f32.mrb[0].mxu0
  %v499 = vadd.f32 %v332, %v498
  %v500 = vpop.f32.mrb[0].mxu0
  %v501 = vadd.f32 %v334, %v500
  %502 = vdwg.mxu0
  %503 = vmatprep.subr.bf16.mxu0 0
  %504 = vmatpush1.bf16.msra.mxu0 %v422
  %505 = vmatprep.subr.bf16.mxu0 0
  %506 = vmatpush1.bf16.msra.mxu0 %v425
  %507 = vmatprep.subr.bf16.mxu0 0
  %508 = vmatpush1.bf16.msra.mxu0 %v448
  %509 = vmatprep.subr.bf16.mxu0 0
  %510 = vmatpush1.bf16.msra.mxu0 0
  %511 = vmatprep.subr.bf16.mxu0 0
  %512 = vmatpush1.bf16.msra.mxu0 0
  %513 = vmatprep.subr.bf16.mxu0 0
  %514 = vmatpush1.bf16.msra.mxu0 0
  %515 = vmatprep.subr.bf16.mxu0 0
  %516 = vmatpush1.bf16.msra.mxu0 0
  %517 = vmatprep.subr.bf16.mxu0 0
  %518 = vmatpush1.bf16.msra.mxu0 0
  %519 = vmatprep.subr.bf16.mxu0 0
  %520 = vmatpush1.bf16.msra.mxu0 0
  %521 = vmatprep.subr.bf16.mxu0 0
  %522 = vmatpush1.bf16.msra.mxu0 0
  %523 = vmatprep.subr.bf16.mxu0 0
  %524 = vmatpush1.bf16.msra.mxu0 0
  %525 = vmatprep.subr.bf16.mxu0 0
  %526 = vmatpush1.bf16.msra.mxu0 0
  %527 = vmatprep.subr.bf16.mxu0 0
  %528 = vmatpush1.bf16.msra.mxu0 0
  %529 = vmatprep.subr.bf16.mxu0 0
  %530 = vmatpush1.bf16.msra.mxu0 0
  %531 = vmatprep.subr.bf16.mxu0 0
  %532 = vmatpush1.bf16.msra.mxu0 0
  %533 = vmatprep.subr.bf16.mxu0 0
  %534 = vmatpush1.bf16.msra.mxu0 0
  %535 = vmatprep.mubr.bf16.mxu0 0
  %536 = vmatmul.mubr.bf16.gmra.mrb[0].mxu0 %v436
  %v537 = vpop.f32.mrb[0].mxu0
  %v538 = vadd.f32 %v371, %v537
  %v539 = vpop.f32.mrb[0].mxu0
  %v540 = vpop.f32.mrb[0].mxu0
  %v541 = vadd.f32 %v374, %v540
  %v542 = vpop.f32.mrb[0].mxu0
  %543 = vmatprep.mubr.bf16.mxu0 0
  %544 = vmatmul.mubr.bf16.gmra.mrb[0].mxu0 %v439
  %v545 = vpop.f32.mrb[0].mxu0
  %v546 = vadd.f32 %v379, %v545
  %v547 = vpop.f32.mrb[0].mxu0
  %v548 = vpop.f32.mrb[0].mxu0
  %v549 = vadd.f32 %v382, %v548
  %v550 = vpop.f32.mrb[0].mxu0
  %551 = vdwg.mxu0
  %v552 = vld [vmem:[#allocation2 + $0x4] sm:$0xff]
  %v553 = vld [vmem:[#allocation2 + $0xc] sm:$0xf]
  %v554 = vld [vmem:[#allocation2 + $0x18] sm:$0xff]
  %v555 = vld [vmem:[#allocation2 + $0x20] sm:$0xf]
  %v556 = vld [vmem:[#allocation2 + $0x2c] sm:$0xff]
  %v557 = vld [vmem:[#allocation2 + $0x34] sm:$0xf]
  %v558 = vld [vmem:[#allocation2 + $0x40] sm:$0xff]
  %v559 = vld [vmem:[#allocation2 + $0x48] sm:$0xf]
  %v560 = vld [vmem:[#allocation2 + $0x54] sm:$0xff]
  %v561 = vld [vmem:[#allocation2 + $0x5c] sm:$0xf]
  %s562 = scalar_lea.vmem %s1, 32
  %v563 = vld [vmem:[%s562] sm:$0xf]
  %v564 = vld [vmem:[%s562 + $0x4] sm:$0xf]
  %v565 = vld [vmem:[%s562 + $0x8] sm:$0xf]
  %v566 = vld [vmem:[%s562 + $0xc] sm:$0xf]
  %v571 = vunpack.c.l.b16 %v563
  %v572 = vunpack.c.l.b16 %v564
  %v573 = vunpack.c.l.b16 %v565
  %v574 = vunpack.c.l.b16 %v566
  %v575 = vpack.c.b16 %v572, %v571
  %v576 = vpack.c.b16 %v574, %v573
  %v587 = vunpack.c.l.b16 %v552
  %v588 = vunpack.c.h.b16 %v552
  %v589 = vunpack.c.l.b16 %v553
  %v590 = vunpack.c.l.b16 %v554
  %v591 = vunpack.c.h.b16 %v554
  %v592 = vunpack.c.l.b16 %v555
  %v593 = vunpack.c.l.b16 %v556
  %v594 = vunpack.c.h.b16 %v556
  %v595 = vunpack.c.l.b16 %v557
  %v596 = vunpack.c.l.b16 %v558
  %v597 = vunpack.c.h.b16 %v558
  %v598 = vunpack.c.l.b16 %v559
  %v599 = vunpack.c.l.b16 %v560
  %v600 = vunpack.c.h.b16 %v560
  %v601 = vunpack.c.l.b16 %v561
  %v602 = vpack.c.b16 %v590, %v587
  %v603 = vpack.c.b16 %v591, %v588
  %v604 = vpack.c.b16 %v592, %v589
  %v605 = vpack.c.b16 %v596, %v593
  %v606 = vpack.c.b16 %v597, %v594
  %v607 = vpack.c.b16 %v598, %v595
  %v608 = vpack.c.b16 %v599, %v599
  %v609 = vpack.c.b16 %v600, %v600
  %v610 = vpack.c.b16 %v601, %v601
  %v618 = vsel %vm266, %v575, 0
  %v621 = vsel %vm266, %v576, 0
  %v624 = vsel %vm273, %v608, 0
  %v627 = vsel %vm273, %v609, 0
  %v630 = vsel %vm273, %v610, 0
  %632 = vmatprep.subr.bf16.mxu0 %v603
  %633 = vmatpush1.bf16.msra.mxu0 %v602
  %634 = vmatprep.subr.bf16.mxu0 %v606
  %635 = vmatpush1.bf16.msra.mxu0 %v605
  %636 = vmatprep.subr.bf16.mxu0 %v627
  %637 = vmatpush1.bf16.msra.mxu0 %v624
  %638 = vmatprep.subr.bf16.mxu0 0
  %639 = vmatpush1.bf16.msra.mxu0 0
  %640 = vmatprep.subr.bf16.mxu0 0
  %641 = vmatpush1.bf16.msra.mxu0 0
  %642 = vmatprep.subr.bf16.mxu0 0
  %643 = vmatpush1.bf16.msra.mxu0 0
  %644 = vmatprep.subr.bf16.mxu0 0
  %645 = vmatpush1.bf16.msra.mxu0 0
  %646 = vmatprep.subr.bf16.mxu0 0
  %647 = vmatpush1.bf16.msra.mxu0 0
  %648 = vmatprep.subr.bf16.mxu0 0
  %649 = vmatpush1.bf16.msra.mxu0 0
  %650 = vmatprep.subr.bf16.mxu0 0
  %651 = vmatpush1.bf16.msra.mxu0 0
  %652 = vmatprep.subr.bf16.mxu0 0
  %653 = vmatpush1.bf16.msra.mxu0 0
  %654 = vmatprep.subr.bf16.mxu0 0
  %655 = vmatpush1.bf16.msra.mxu0 0
  %656 = vmatprep.subr.bf16.mxu0 0
  %657 = vmatpush1.bf16.msra.mxu0 0
  %658 = vmatprep.subr.bf16.mxu0 0
  %659 = vmatpush1.bf16.msra.mxu0 0
  %660 = vmatprep.subr.bf16.mxu0 0
  %661 = vmatpush1.bf16.msra.mxu0 0
  %662 = vmatprep.subr.bf16.mxu0 0
  %663 = vmatpush1.bf16.msra.mxu0 0
  %664 = vmatprep.mubr.bf16.mxu0 0
  %665 = vmatmul.mubr.bf16.gmra.mrb[0].mxu0 %v618
  %v666 = vpop.f32.mrb[0].mxu0
  %v667 = vadd.f32 0.0, %v666
  %v668 = vpop.f32.mrb[0].mxu0
  %v669 = vadd.f32 0.0, %v668
  %v670 = vpop.f32.mrb[0].mxu0
  %v671 = vadd.f32 0.0, %v670
  %v672 = vpop.f32.mrb[0].mxu0
  %v673 = vadd.f32 0.0, %v672
  %674 = vmatprep.mubr.bf16.mxu0 0
  %675 = vmatmul.mubr.bf16.gmra.mrb[0].mxu0 %v621
  %v676 = vpop.f32.mrb[0].mxu0
  %v677 = vadd.f32 0.0, %v676
  %v678 = vpop.f32.mrb[0].mxu0
  %v679 = vadd.f32 0.0, %v678
  %v680 = vpop.f32.mrb[0].mxu0
  %v681 = vadd.f32 0.0, %v680
  %v682 = vpop.f32.mrb[0].mxu0
  %v683 = vadd.f32 0.0, %v682
  %684 = vdwg.mxu0
  %685 = vmatprep.subr.bf16.mxu0 0
  %686 = vmatpush1.bf16.msra.mxu0 %v604
  %687 = vmatprep.subr.bf16.mxu0 0
  %688 = vmatpush1.bf16.msra.mxu0 %v607
  %689 = vmatprep.subr.bf16.mxu0 0
  %690 = vmatpush1.bf16.msra.mxu0 %v630
  %691 = vmatprep.subr.bf16.mxu0 0
  %692 = vmatpush1.bf16.msra.mxu0 0
  %693 = vmatprep.subr.bf16.mxu0 0
  %694 = vmatpush1.bf16.msra.mxu0 0
  %695 = vmatprep.subr.bf16.mxu0 0
  %696 = vmatpush1.bf16.msra.mxu0 0
  %697 = vmatprep.subr.bf16.mxu0 0
  %698 = vmatpush1.bf16.msra.mxu0 0
  %699 = vmatprep.subr.bf16.mxu0 0
  %700 = vmatpush1.bf16.msra.mxu0 0
  %701 = vmatprep.subr.bf16.mxu0 0
  %702 = vmatpush1.bf16.msra.mxu0 0
  %703 = vmatprep.subr.bf16.mxu0 0
  %704 = vmatpush1.bf16.msra.mxu0 0
  %705 = vmatprep.subr.bf16.mxu0 0
  %706 = vmatpush1.bf16.msra.mxu0 0
  %707 = vmatprep.subr.bf16.mxu0 0
  %708 = vmatpush1.bf16.msra.mxu0 0
  %709 = vmatprep.subr.bf16.mxu0 0
  %710 = vmatpush1.bf16.msra.mxu0 0
  %711 = vmatprep.subr.bf16.mxu0 0
  %712 = vmatpush1.bf16.msra.mxu0 0
  %713 = vmatprep.subr.bf16.mxu0 0
  %714 = vmatpush1.bf16.msra.mxu0 0
  %715 = vmatprep.subr.bf16.mxu0 0
  %716 = vmatpush1.bf16.msra.mxu0 0
  %717 = vmatprep.mubr.bf16.mxu0 0
  %718 = vmatmul.mubr.bf16.gmra.mrb[0].mxu0 %v618
  %v719 = vpop.f32.mrb[0].mxu0
  %v720 = vadd.f32 0.0, %v719
  %v721 = vpop.f32.mrb[0].mxu0
  %v722 = vpop.f32.mrb[0].mxu0
  %v723 = vadd.f32 0.0, %v722
  %v724 = vpop.f32.mrb[0].mxu0
  %725 = vmatprep.mubr.bf16.mxu0 0
  %726 = vmatmul.mubr.bf16.gmra.mrb[0].mxu0 %v621
  %v727 = vpop.f32.mrb[0].mxu0
  %v728 = vadd.f32 0.0, %v727
  %v729 = vpop.f32.mrb[0].mxu0
  %v730 = vpop.f32.mrb[0].mxu0
  %v731 = vadd.f32 0.0, %v730
  %v732 = vpop.f32.mrb[0].mxu0
  %733 = vdwg.mxu0
  %v734 = vadd.f32 %v485, %v667
  %v735 = vadd.f32 %v487, %v669
  %v736 = vadd.f32 %v538, %v720
  %v737 = vadd.f32 %v489, %v671
  %v738 = vadd.f32 %v491, %v673
  %v739 = vadd.f32 %v541, %v723
  %v740 = vadd.f32 %v495, %v677
  %v741 = vadd.f32 %v497, %v679
  %v742 = vadd.f32 %v546, %v728
  %v743 = vadd.f32 %v499, %v681
  %v744 = vadd.f32 %v501, %v683
  %v745 = vadd.f32 %v549, %v731
  %v746 = vld [vmem:[#allocation2 + $0x4] sm:$0xff]
  %v747 = vld [vmem:[#allocation2 + $0xc] sm:$0xff]
  %v748 = vld [vmem:[#allocation2 + $0x18] sm:$0xff]
  %v749 = vld [vmem:[#allocation2 + $0x20] sm:$0xff]
  %v750 = vld [vmem:[#allocation2 + $0x2c] sm:$0xff]
  %v751 = vld [vmem:[#allocation2 + $0x34] sm:$0xff]
  %v752 = vld [vmem:[#allocation2 + $0x40] sm:$0xff]
  %v753 = vld [vmem:[#allocation2 + $0x48] sm:$0xff]
  %v754 = vld [vmem:[#allocation2 + $0x54] sm:$0xff]
  %v755 = vld [vmem:[#allocation2 + $0x5c] sm:$0xff]
  %s756 = scalar_lea.vmem %s1, 48
  %v757 = vld [vmem:[%s756] sm:$0xf]
  %v758 = vld [vmem:[%s756 + $0x4] sm:$0xf]
  %v759 = vld [vmem:[%s756 + $0x8] sm:$0xf]
  %v760 = vld [vmem:[%s756 + $0xc] sm:$0xf]
  %v765 = vunpack.c.l.b16 %v757
  %v766 = vunpack.c.l.b16 %v758
  %v767 = vunpack.c.l.b16 %v759
  %v768 = vunpack.c.l.b16 %v760
  %v769 = vpack.c.b16 %v766, %v765
  %v770 = vpack.c.b16 %v768, %v767
  %v781 = vunpack.c.l.b16 %v746
  %v782 = vunpack.c.h.b16 %v746
  %v783 = vunpack.c.l.b16 %v747
  %v784 = vunpack.c.h.b16 %v747
  %v785 = vunpack.c.l.b16 %v748
  %v786 = vunpack.c.h.b16 %v748
  %v787 = vunpack.c.l.b16 %v749
  %v788 = vunpack.c.h.b16 %v749
  %v789 = vunpack.c.l.b16 %v750
  %v790 = vunpack.c.h.b16 %v750
  %v791 = vunpack.c.l.b16 %v751
  %v792 = vunpack.c.h.b16 %v751
  %v793 = vunpack.c.l.b16 %v752
  %v794 = vunpack.c.h.b16 %v752
  %v795 = vunpack.c.l.b16 %v753
  %v796 = vunpack.c.h.b16 %v753
  %v797 = vunpack.c.l.b16 %v754
  %v798 = vunpack.c.h.b16 %v754
  %v799 = vunpack.c.l.b16 %v755
  %v800 = vunpack.c.h.b16 %v755
  %v801 = vpack.c.b16 %v785, %v781
  %v802 = vpack.c.b16 %v786, %v782
  %v803 = vpack.c.b16 %v787, %v783
  %v804 = vpack.c.b16 %v788, %v784
  %v805 = vpack.c.b16 %v793, %v789
  %v806 = vpack.c.b16 %v794, %v790
  %v807 = vpack.c.b16 %v795, %v791
  %v808 = vpack.c.b16 %v796, %v792
  %v809 = vpack.c.b16 %v797, %v797
  %v810 = vpack.c.b16 %v798, %v798
  %v811 = vpack.c.b16 %v799, %v799
  %v812 = vpack.c.b16 %v800, %v800
  %813 = vrot.lane.b32.xlu0 %v801, 127
  %v814 = vpop.permute.xlu0 %813
  %815 = vrot.lane.b32.xlu0 %v802, 127
  %v816 = vpop.permute.xlu0 %815
  %817 = vrot.lane.b32.xlu0 %v803, 127
  %v818 = vpop.permute.xlu0 %817
  %819 = vrot.lane.b32.xlu0 %v804, 127
  %v820 = vpop.permute.xlu0 %819
  %821 = vrot.lane.b32.xlu0 %v805, 127
  %v822 = vpop.permute.xlu0 %821
  %823 = vrot.lane.b32.xlu0 %v806, 127
  %v824 = vpop.permute.xlu0 %823
  %825 = vrot.lane.b32.xlu0 %v807, 127
  %v826 = vpop.permute.xlu0 %825
  %827 = vrot.lane.b32.xlu0 %v808, 127
  %v828 = vpop.permute.xlu0 %827
  %829 = vrot.lane.b32.xlu0 %v809, 127
  %v830 = vpop.permute.xlu0 %829
  %831 = vrot.lane.b32.xlu0 %v810, 127
  %v832 = vpop.permute.xlu0 %831
  %833 = vrot.lane.b32.xlu0 %v811, 127
  %v834 = vpop.permute.xlu0 %833
  %835 = vrot.lane.b32.xlu0 %v812, 127
  %v836 = vpop.permute.xlu0 %835
  %vm837 = vcmask 1039360
  %v838 = vsel %vm837, %v814, %v816
  %v839 = vsel %vm837, %v816, %v818
  %v840 = vsel %vm837, %v818, %v820
  %v841 = vsel %vm837, %v822, %v824
  %v842 = vsel %vm837, %v824, %v826
  %v843 = vsel %vm837, %v826, %v828
  %v844 = vsel %vm837, %v830, %v832
  %v845 = vsel %vm837, %v832, %v834
  %v846 = vsel %vm837, %v834, %v836
  %v854 = vsel %vm266, %v769, 0
  %v857 = vsel %vm266, %v770, 0
  %v860 = vsel %vm273, %v844, 0
  %v863 = vsel %vm273, %v845, 0
  %v866 = vsel %vm273, %v846, 0
  %868 = vmatprep.subr.bf16.mxu0 %v839
  %869 = vmatpush1.bf16.msra.mxu0 %v838
  %870 = vmatprep.subr.bf16.mxu0 %v842
  %871 = vmatpush1.bf16.msra.mxu0 %v841
  %872 = vmatprep.subr.bf16.mxu0 %v863
  %873 = vmatpush1.bf16.msra.mxu0 %v860
  %874 = vmatprep.subr.bf16.mxu0 0
  %875 = vmatpush1.bf16.msra.mxu0 0
  %876 = vmatprep.subr.bf16.mxu0 0
  %877 = vmatpush1.bf16.msra.mxu0 0
  %878 = vmatprep.subr.bf16.mxu0 0
  %879 = vmatpush1.bf16.msra.mxu0 0
  %880 = vmatprep.subr.bf16.mxu0 0
  %881 = vmatpush1.bf16.msra.mxu0 0
  %882 = vmatprep.subr.bf16.mxu0 0
  %883 = vmatpush1.bf16.msra.mxu0 0
  %884 = vmatprep.subr.bf16.mxu0 0
  %885 = vmatpush1.bf16.msra.mxu0 0
  %886 = vmatprep.subr.bf16.mxu0 0
  %887 = vmatpush1.bf16.msra.mxu0 0
  %888 = vmatprep.subr.bf16.mxu0 0
  %889 = vmatpush1.bf16.msra.mxu0 0
  %890 = vmatprep.subr.bf16.mxu0 0
  %891 = vmatpush1.bf16.msra.mxu0 0
  %892 = vmatprep.subr.bf16.mxu0 0
  %893 = vmatpush1.bf16.msra.mxu0 0
  %894 = vmatprep.subr.bf16.mxu0 0
  %895 = vmatpush1.bf16.msra.mxu0 0
  %896 = vmatprep.subr.bf16.mxu0 0
  %897 = vmatpush1.bf16.msra.mxu0 0
  %898 = vmatprep.subr.bf16.mxu0 0
  %899 = vmatpush1.bf16.msra.mxu0 0
  %900 = vmatprep.mubr.bf16.mxu0 0
  %901 = vmatmul.mubr.bf16.gmra.mrb[0].mxu0 %v854
  %v902 = vpop.f32.mrb[0].mxu0
  %v903 = vadd.f32 0.0, %v902
  %v904 = vpop.f32.mrb[0].mxu0
  %v905 = vadd.f32 0.0, %v904
  %v906 = vpop.f32.mrb[0].mxu0
  %v907 = vadd.f32 0.0, %v906
  %v908 = vpop.f32.mrb[0].mxu0
  %v909 = vadd.f32 0.0, %v908
  %910 = vmatprep.mubr.bf16.mxu0 0
  %911 = vmatmul.mubr.bf16.gmra.mrb[0].mxu0 %v857
  %v912 = vpop.f32.mrb[0].mxu0
  %v913 = vadd.f32 0.0, %v912
  %v914 = vpop.f32.mrb[0].mxu0
  %v915 = vadd.f32 0.0, %v914
  %v916 = vpop.f32.mrb[0].mxu0
  %v917 = vadd.f32 0.0, %v916
  %v918 = vpop.f32.mrb[0].mxu0
  %v919 = vadd.f32 0.0, %v918
  %920 = vdwg.mxu0
  %921 = vmatprep.subr.bf16.mxu0 0
  %922 = vmatpush1.bf16.msra.mxu0 %v840
  %923 = vmatprep.subr.bf16.mxu0 0
  %924 = vmatpush1.bf16.msra.mxu0 %v843
  %925 = vmatprep.subr.bf16.mxu0 0
  %926 = vmatpush1.bf16.msra.mxu0 %v866
  %927 = vmatprep.subr.bf16.mxu0 0
  %928 = vmatpush1.bf16.msra.mxu0 0
  %929 = vmatprep.subr.bf16.mxu0 0
  %930 = vmatpush1.bf16.msra.mxu0 0
  %931 = vmatprep.subr.bf16.mxu0 0
  %932 = vmatpush1.bf16.msra.mxu0 0
  %933 = vmatprep.subr.bf16.mxu0 0
  %934 = vmatpush1.bf16.msra.mxu0 0
  %935 = vmatprep.subr.bf16.mxu0 0
  %936 = vmatpush1.bf16.msra.mxu0 0
  %937 = vmatprep.subr.bf16.mxu0 0
  %938 = vmatpush1.bf16.msra.mxu0 0
  %939 = vmatprep.subr.bf16.mxu0 0
  %940 = vmatpush1.bf16.msra.mxu0 0
  %941 = vmatprep.subr.bf16.mxu0 0
  %942 = vmatpush1.bf16.msra.mxu0 0
  %943 = vmatprep.subr.bf16.mxu0 0
  %944 = vmatpush1.bf16.msra.mxu0 0
  %945 = vmatprep.subr.bf16.mxu0 0
  %946 = vmatpush1.bf16.msra.mxu0 0
  %947 = vmatprep.subr.bf16.mxu0 0
  %948 = vmatpush1.bf16.msra.mxu0 0
  %949 = vmatprep.subr.bf16.mxu0 0
  %950 = vmatpush1.bf16.msra.mxu0 0
  %951 = vmatprep.subr.bf16.mxu0 0
  %952 = vmatpush1.bf16.msra.mxu0 0
  %953 = vmatprep.mubr.bf16.mxu0 0
  %954 = vmatmul.mubr.bf16.gmra.mrb[0].mxu0 %v854
  %v955 = vpop.f32.mrb[0].mxu0
  %v956 = vadd.f32 0.0, %v955
  %v957 = vpop.f32.mrb[0].mxu0
  %v958 = vpop.f32.mrb[0].mxu0
  %v959 = vadd.f32 0.0, %v958
  %v960 = vpop.f32.mrb[0].mxu0
  %961 = vmatprep.mubr.bf16.mxu0 0
  %962 = vmatmul.mubr.bf16.gmra.mrb[0].mxu0 %v857
  %v963 = vpop.f32.mrb[0].mxu0
  %v964 = vadd.f32 0.0, %v963
  %v965 = vpop.f32.mrb[0].mxu0
  %v966 = vpop.f32.mrb[0].mxu0
  %v967 = vadd.f32 0.0, %v966
  %v968 = vpop.f32.mrb[0].mxu0
  %969 = vdwg.mxu0
  %v970 = vadd.f32 %v734, %v903
  %v971 = vadd.f32 %v735, %v905
  %v972 = vadd.f32 %v736, %v956
  %v973 = vadd.f32 %v737, %v907
  %v974 = vadd.f32 %v738, %v909
  %v975 = vadd.f32 %v739, %v959
  %v976 = vadd.f32 %v740, %v913
  %v977 = vadd.f32 %v741, %v915
  %v978 = vadd.f32 %v742, %v964
  %v979 = vadd.f32 %v743, %v917
  %v980 = vadd.f32 %v744, %v919
  %v981 = vadd.f32 %v745, %v967
  %s982 = scalar_lea.vmem %s1, 64
  %v983 = vld [vmem:[%s982] sm:$0xf]
  %v984 = vld [vmem:[%s982 + $0x4] sm:$0xf]
  %v985 = vld [vmem:[%s982 + $0x8] sm:$0xf]
  %v986 = vld [vmem:[%s982 + $0xc] sm:$0xf]
  %v991 = vunpack.c.l.b16 %v983
  %v992 = vunpack.c.l.b16 %v984
  %v993 = vunpack.c.l.b16 %v985
  %v994 = vunpack.c.l.b16 %v986
  %v995 = vpack.c.b16 %v992, %v991
  %v996 = vpack.c.b16 %v994, %v993
  %997 = vrot.lane.b32.xlu0 %v801, 126
  %v998 = vpop.permute.xlu0 %997
  %999 = vrot.lane.b32.xlu0 %v802, 126
  %v1000 = vpop.permute.xlu0 %999
  %1001 = vrot.lane.b32.xlu0 %v803, 126
  %v1002 = vpop.permute.xlu0 %1001
  %1003 = vrot.lane.b32.xlu0 %v804, 126
  %v1004 = vpop.permute.xlu0 %1003
  %1005 = vrot.lane.b32.xlu0 %v805, 126
  %v1006 = vpop.permute.xlu0 %1005
  %1007 = vrot.lane.b32.xlu0 %v806, 126
  %v1008 = vpop.permute.xlu0 %1007
  %1009 = vrot.lane.b32.xlu0 %v807, 126
  %v1010 = vpop.permute.xlu0 %1009
  %1011 = vrot.lane.b32.xlu0 %v808, 126
  %v1012 = vpop.permute.xlu0 %1011
  %1013 = vrot.lane.b32.xlu0 %v809, 126
  %v1014 = vpop.permute.xlu0 %1013
  %1015 = vrot.lane.b32.xlu0 %v810, 126
  %v1016 = vpop.permute.xlu0 %1015
  %1017 = vrot.lane.b32.xlu0 %v811, 126
  %v1018 = vpop.permute.xlu0 %1017
  %1019 = vrot.lane.b32.xlu0 %v812, 126
  %v1020 = vpop.permute.xlu0 %1019
  %vm1021 = vcmask 1031168
  %v1022 = vsel %vm1021, %v998, %v1000
  %v1023 = vsel %vm1021, %v1000, %v1002
  %v1024 = vsel %vm1021, %v1002, %v1004
  %v1025 = vsel %vm1021, %v1006, %v1008
  %v1026 = vsel %vm1021, %v1008, %v1010
  %v1027 = vsel %vm1021, %v1010, %v1012
  %v1028 = vsel %vm1021, %v1014, %v1016
  %v1029 = vsel %vm1021, %v1016, %v1018
  %v1030 = vsel %vm1021, %v1018, %v1020
  %v1038 = vsel %vm266, %v995, 0
  %v1041 = vsel %vm266, %v996, 0
  %v1044 = vsel %vm273, %v1028, 0
  %v1047 = vsel %vm273, %v1029, 0
  %v1050 = vsel %vm273, %v1030, 0
  %1052 = vmatprep.subr.bf16.mxu0 %v1023
  %1053 = vmatpush1.bf16.msra.mxu0 %v1022
  %1054 = vmatprep.subr.bf16.mxu0 %v1026
  %1055 = vmatpush1.bf16.msra.mxu0 %v1025
  %1056 = vmatprep.subr.bf16.mxu0 %v1047
  %1057 = vmatpush1.bf16.msra.mxu0 %v1044
  %1058 = vmatprep.subr.bf16.mxu0 0
  %1059 = vmatpush1.bf16.msra.mxu0 0
  %1060 = vmatprep.subr.bf16.mxu0 0
  %1061 = vmatpush1.bf16.msra.mxu0 0
  %1062 = vmatprep.subr.bf16.mxu0 0
  %1063 = vmatpush1.bf16.msra.mxu0 0
  %1064 = vmatprep.subr.bf16.mxu0 0
  %1065 = vmatpush1.bf16.msra.mxu0 0
  %1066 = vmatprep.subr.bf16.mxu0 0
  %1067 = vmatpush1.bf16.msra.mxu0 0
  %1068 = vmatprep.subr.bf16.mxu0 0
  %1069 = vmatpush1.bf16.msra.mxu0 0
  %1070 = vmatprep.subr.bf16.mxu0 0
  %1071 = vmatpush1.bf16.msra.mxu0 0
  %1072 = vmatprep.subr.bf16.mxu0 0
  %1073 = vmatpush1.bf16.msra.mxu0 0
  %1074 = vmatprep.subr.bf16.mxu0 0
  %1075 = vmatpush1.bf16.msra.mxu0 0
  %1076 = vmatprep.subr.bf16.mxu0 0
  %1077 = vmatpush1.bf16.msra.mxu0 0
  %1078 = vmatprep.subr.bf16.mxu0 0
  %1079 = vmatpush1.bf16.msra.mxu0 0
  %1080 = vmatprep.subr.bf16.mxu0 0
  %1081 = vmatpush1.bf16.msra.mxu0 0
  %1082 = vmatprep.subr.bf16.mxu0 0
  %1083 = vmatpush1.bf16.msra.mxu0 0
  %1084 = vmatprep.mubr.bf16.mxu0 0
  %1085 = vmatmul.mubr.bf16.gmra.mrb[0].mxu0 %v1038
  %v1086 = vpop.f32.mrb[0].mxu0
  %v1087 = vadd.f32 0.0, %v1086
  %v1088 = vpop.f32.mrb[0].mxu0
  %v1089 = vadd.f32 0.0, %v1088
  %v1090 = vpop.f32.mrb[0].mxu0
  %v1091 = vadd.f32 0.0, %v1090
  %v1092 = vpop.f32.mrb[0].mxu0
  %v1093 = vadd.f32 0.0, %v1092
  %1094 = vmatprep.mubr.bf16.mxu0 0
  %1095 = vmatmul.mubr.bf16.gmra.mrb[0].mxu0 %v1041
  %v1096 = vpop.f32.mrb[0].mxu0
  %v1097 = vadd.f32 0.0, %v1096
  %v1098 = vpop.f32.mrb[0].mxu0
  %v1099 = vadd.f32 0.0, %v1098
  %v1100 = vpop.f32.mrb[0].mxu0
  %v1101 = vadd.f32 0.0, %v1100
  %v1102 = vpop.f32.mrb[0].mxu0
  %v1103 = vadd.f32 0.0, %v1102
  %1104 = vdwg.mxu0
  %1105 = vmatprep.subr.bf16.mxu0 0
  %1106 = vmatpush1.bf16.msra.mxu0 %v1024
  %1107 = vmatprep.subr.bf16.mxu0 0
  %1108 = vmatpush1.bf16.msra.mxu0 %v1027
  %1109 = vmatprep.subr.bf16.mxu0 0
  %1110 = vmatpush1.bf16.msra.mxu0 %v1050
  %1111 = vmatprep.subr.bf16.mxu0 0
  %1112 = vmatpush1.bf16.msra.mxu0 0
  %1113 = vmatprep.subr.bf16.mxu0 0
  %1114 = vmatpush1.bf16.msra.mxu0 0
  %1115 = vmatprep.subr.bf16.mxu0 0
  %1116 = vmatpush1.bf16.msra.mxu0 0
  %1117 = vmatprep.subr.bf16.mxu0 0
  %1118 = vmatpush1.bf16.msra.mxu0 0
  %1119 = vmatprep.subr.bf16.mxu0 0
  %1120 = vmatpush1.bf16.msra.mxu0 0
  %1121 = vmatprep.subr.bf16.mxu0 0
  %1122 = vmatpush1.bf16.msra.mxu0 0
  %1123 = vmatprep.subr.bf16.mxu0 0
  %1124 = vmatpush1.bf16.msra.mxu0 0
  %1125 = vmatprep.subr.bf16.mxu0 0
  %1126 = vmatpush1.bf16.msra.mxu0 0
  %1127 = vmatprep.subr.bf16.mxu0 0
  %1128 = vmatpush1.bf16.msra.mxu0 0
  %1129 = vmatprep.subr.bf16.mxu0 0
  %1130 = vmatpush1.bf16.msra.mxu0 0
  %1131 = vmatprep.subr.bf16.mxu0 0
  %1132 = vmatpush1.bf16.msra.mxu0 0
  %1133 = vmatprep.subr.bf16.mxu0 0
  %1134 = vmatpush1.bf16.msra.mxu0 0
  %1135 = vmatprep.subr.bf16.mxu0 0
  %1136 = vmatpush1.bf16.msra.mxu0 0
  %1137 = vmatprep.mubr.bf16.mxu0 0
  %1138 = vmatmul.mubr.bf16.gmra.mrb[0].mxu0 %v1038
  %v1139 = vpop.f32.mrb[0].mxu0
  %v1140 = vadd.f32 0.0, %v1139
  %v1141 = vpop.f32.mrb[0].mxu0
  %v1142 = vpop.f32.mrb[0].mxu0
  %v1143 = vadd.f32 0.0, %v1142
  %v1144 = vpop.f32.mrb[0].mxu0
  %1145 = vmatprep.mubr.bf16.mxu0 0
  %1146 = vmatmul.mubr.bf16.gmra.mrb[0].mxu0 %v1041
  %v1147 = vpop.f32.mrb[0].mxu0
  %v1148 = vadd.f32 0.0, %v1147
  %v1149 = vpop.f32.mrb[0].mxu0
  %v1150 = vpop.f32.mrb[0].mxu0
  %v1151 = vadd.f32 0.0, %v1150
  %v1152 = vpop.f32.mrb[0].mxu0
  %1153 = vdwg.mxu0
  %v1154 = vadd.f32 %v970, %v1087
  %v1155 = vadd.f32 %v971, %v1089
  %v1156 = vadd.f32 %v972, %v1140
  %v1157 = vadd.f32 %v973, %v1091
  %v1158 = vadd.f32 %v974, %v1093
  %v1159 = vadd.f32 %v975, %v1143
  %v1160 = vadd.f32 %v976, %v1097
  %v1161 = vadd.f32 %v977, %v1099
  %v1162 = vadd.f32 %v978, %v1148
  %v1163 = vadd.f32 %v979, %v1101
  %v1164 = vadd.f32 %v980, %v1103
  %v1165 = vadd.f32 %v981, %v1151
  %v1166 = vmul.f32 %v1154, %v65
  %v1167 = vmul.f32 %v1155, %v69
  %v1168 = vmul.f32 %v1156, %v73
  %v1169 = vmul.f32 %v1157, %v65
  %v1170 = vmul.f32 %v1158, %v69
  %v1171 = vmul.f32 %v1159, %v73
  %v1172 = vmul.f32 %v1160, %v65
  %v1173 = vmul.f32 %v1161, %v69
  %v1174 = vmul.f32 %v1162, %v73
  %v1175 = vmul.f32 %v1163, %v65
  %v1176 = vmul.f32 %v1164, %v69
  %v1177 = vmul.f32 %v1165, %v73
  %v1178 = vmul.f32 %v1166, %v1166
  %v1179 = vmul.f32 %v1167, %v1167
  %v1180 = vmul.f32 %v1168, %v1168
  %v1181 = vmul.f32 %v1169, %v1169
  %v1182 = vmul.f32 %v1170, %v1170
  %v1183 = vmul.f32 %v1171, %v1171
  %v1184 = vmul.f32 %v1172, %v1172
  %v1185 = vmul.f32 %v1173, %v1173
  %v1186 = vmul.f32 %v1174, %v1174
  %v1187 = vmul.f32 %v1175, %v1175
  %v1188 = vmul.f32 %v1176, %v1176
  %v1189 = vmul.f32 %v1177, %v1177
  %v1190 = vadd.f32 %v1166, %v1167
  %v1191 = vadd.f32 %v1190, %v1168
  %1192 = vadd.xlane.f32.xlu0 %v1191
  %v1193 = vpop.xlane.xlu0 %1192
  %v1194 = vadd.f32 %v1169, %v1170
  %v1195 = vadd.f32 %v1194, %v1171
  %1196 = vadd.xlane.f32.xlu0 %v1195
  %v1197 = vpop.xlane.xlu0 %1196
  %v1198 = vadd.f32 %v1172, %v1173
  %v1199 = vadd.f32 %v1198, %v1174
  %1200 = vadd.xlane.f32.xlu0 %v1199
  %v1201 = vpop.xlane.xlu0 %1200
  %v1202 = vadd.f32 %v1175, %v1176
  %v1203 = vadd.f32 %v1202, %v1177
  %1204 = vadd.xlane.f32.xlu0 %v1203
  %v1205 = vpop.xlane.xlu0 %1204
  %v1206 = vadd.f32 %v1178, %v1179
  %v1207 = vadd.f32 %v1206, %v1180
  %1208 = vadd.xlane.f32.xlu0 %v1207
  %v1209 = vpop.xlane.xlu0 %1208
  %v1210 = vadd.f32 %v1181, %v1182
  %v1211 = vadd.f32 %v1210, %v1183
  %1212 = vadd.xlane.f32.xlu0 %v1211
  %v1213 = vpop.xlane.xlu0 %1212
  %v1214 = vadd.f32 %v1184, %v1185
  %v1215 = vadd.f32 %v1214, %v1186
  %1216 = vadd.xlane.f32.xlu0 %v1215
  %v1217 = vpop.xlane.xlu0 %1216
  %v1218 = vadd.f32 %v1187, %v1188
  %v1219 = vadd.f32 %v1218, %v1189
  %1220 = vadd.xlane.f32.xlu0 %v1219
  %v1221 = vpop.xlane.xlu0 %1220
  %v1222 = vrcp.pop 256.0
  %v1223 = vmul.f32 %v1193, %v1222
  %v1224 = vmul.f32 %v1197, %v1222
  %v1225 = vmul.f32 %v1201, %v1222
  %v1226 = vmul.f32 %v1205, %v1222
  %v1227 = vmul.f32 %v1209, %v1222
  %v1228 = vmul.f32 %v1213, %v1222
  %v1229 = vmul.f32 %v1217, %v1222
  %v1230 = vmul.f32 %v1221, %v1222
  %v1231 = vmul.f32 %v1223, %v1223
  %v1232 = vmul.f32 %v1224, %v1224
  %v1233 = vmul.f32 %v1225, %v1225
  %v1234 = vmul.f32 %v1226, %v1226
  %v1235 = vsub.f32 %v1227, %v1231
  %v1236 = vsub.f32 %v1228, %v1232
  %v1237 = vsub.f32 %v1229, %v1233
  %v1238 = vsub.f32 %v1230, %v1234
  %v1239 = vmax.f32 %v1235, 0.0
  %v1240 = vmax.f32 %v1236, 0.0
  %v1241 = vmax.f32 %v1237, 0.0
  %v1242 = vmax.f32 %v1238, 0.0
  %v1243 = vld [vmem:[%s7] sm:$0xff]
  %v1244 = vld [vmem:[%s7 + $0x8] sm:$0xff]
  %v1245 = vld [vmem:[%s7 + $0x10] sm:$0xff]
  %v1246 = vld [vmem:[%s7 + $0x18] sm:$0xff]
  %v1247 = vadd.f32 %v1239, 1e-05
  %v1248 = vadd.f32 %v1240, 1e-05
  %v1249 = vadd.f32 %v1241, 1e-05
  %v1250 = vadd.f32 %v1242, 1e-05
  %v1251 = vrsqrt.pop %v1247
  %v1252 = vrsqrt.pop %v1248
  %v1253 = vrsqrt.pop %v1249
  %v1254 = vrsqrt.pop %v1250
  %v1255 = vmul.f32 %v1243, %v1251
  %v1256 = vmul.f32 %v1244, %v1252
  %v1257 = vmul.f32 %v1245, %v1253
  %v1258 = vmul.f32 %v1246, %v1254
  %v1259 = vld [vmem:[%s8] sm:$0xff]
  %v1260 = vld [vmem:[%s8 + $0x8] sm:$0xff]
  %v1261 = vld [vmem:[%s8 + $0x10] sm:$0xff]
  %v1262 = vld [vmem:[%s8 + $0x18] sm:$0xff]
  %v1263 = vmul.f32 %v1223, %v1255
  %v1264 = vmul.f32 %v1224, %v1256
  %v1265 = vmul.f32 %v1225, %v1257
  %v1266 = vmul.f32 %v1226, %v1258
  %v1267 = vsub.f32 %v1259, %v1263
  %v1268 = vsub.f32 %v1260, %v1264
  %v1269 = vsub.f32 %v1261, %v1265
  %v1270 = vsub.f32 %v1262, %v1266
  %1272 = vset.pattern.permute.xlu0 0
  %1273 = vperm.xlu0 %1272, %v1255
  %v1274 = vpop.permute.xlu0 %1273
  %1277 = vset.pattern.permute.xlu0 0
  %1278 = vperm.xlu0 %1277, %v1256
  %v1279 = vpop.permute.xlu0 %1278
  %1282 = vset.pattern.permute.xlu0 0
  %1283 = vperm.xlu0 %1282, %v1257
  %v1284 = vpop.permute.xlu0 %1283
  %1287 = vset.pattern.permute.xlu0 0
  %1288 = vperm.xlu0 %1287, %v1258
  %v1289 = vpop.permute.xlu0 %1288
  %v1291 = vmul.f32 %v1154, %v1274
  %v1292 = vmul.f32 %v1155, %v1274
  %v1293 = vmul.f32 %v1156, %v1274
  %v1294 = vmul.f32 %v1157, %v1279
  %v1295 = vmul.f32 %v1158, %v1279
  %v1296 = vmul.f32 %v1159, %v1279
  %v1297 = vmul.f32 %v1160, %v1284
  %v1298 = vmul.f32 %v1161, %v1284
  %v1299 = vmul.f32 %v1162, %v1284
  %v1300 = vmul.f32 %v1163, %v1289
  %v1301 = vmul.f32 %v1164, %v1289
  %v1302 = vmul.f32 %v1165, %v1289
  %1304 = vset.pattern.permute.xlu0 0
  %1305 = vperm.xlu0 %1304, %v1267
  %v1306 = vpop.permute.xlu0 %1305
  %1309 = vset.pattern.permute.xlu0 0
  %1310 = vperm.xlu0 %1309, %v1268
  %v1311 = vpop.permute.xlu0 %1310
  %1314 = vset.pattern.permute.xlu0 0
  %1315 = vperm.xlu0 %1314, %v1269
  %v1316 = vpop.permute.xlu0 %1315
  %1319 = vset.pattern.permute.xlu0 0
  %1320 = vperm.xlu0 %1319, %v1270
  %v1321 = vpop.permute.xlu0 %1320
  %v1323 = vadd.f32 %v1291, %v1306
  %v1324 = vadd.f32 %v1292, %v1306
  %v1325 = vadd.f32 %v1293, %v1306
  %v1326 = vadd.f32 %v1294, %v1311
  %v1327 = vadd.f32 %v1295, %v1311
  %v1328 = vadd.f32 %v1296, %v1311
  %v1329 = vadd.f32 %v1297, %v1316
  %v1330 = vadd.f32 %v1298, %v1316
  %v1331 = vadd.f32 %v1299, %v1316
  %v1332 = vadd.f32 %v1300, %v1321
  %v1333 = vadd.f32 %v1301, %v1321
  %v1334 = vadd.f32 %v1302, %v1321
  %v1335 = vmax.f32 %v1323, 0.0
  %v1336 = vmax.f32 %v1324, 0.0
  %v1337 = vmax.f32 %v1325, 0.0
  %v1338 = vmax.f32 %v1326, 0.0
  %v1339 = vmax.f32 %v1327, 0.0
  %v1340 = vmax.f32 %v1328, 0.0
  %v1341 = vmax.f32 %v1329, 0.0
  %v1342 = vmax.f32 %v1330, 0.0
  %v1343 = vmax.f32 %v1331, 0.0
  %v1344 = vmax.f32 %v1332, 0.0
  %v1345 = vmax.f32 %v1333, 0.0
  %v1346 = vmax.f32 %v1334, 0.0
  %v1347 = vmul.f32 %v1335, %v65
  %v1348 = vmul.f32 %v1336, %v69
  %v1349 = vmul.f32 %v1337, %v73
  %v1350 = vmul.f32 %v1338, %v65
  %v1351 = vmul.f32 %v1339, %v69
  %v1352 = vmul.f32 %v1340, %v73
  %v1353 = vmul.f32 %v1341, %v65
  %v1354 = vmul.f32 %v1342, %v69
  %v1355 = vmul.f32 %v1343, %v73
  %v1356 = vmul.f32 %v1344, %v65
  %v1357 = vmul.f32 %v1345, %v69
  %v1358 = vmul.f32 %v1346, %v73
  %v1359 = vpack.c.bf16 %v1350, %v1347
  %v1360 = vpack.c.bf16 %v1351, %v1348
  %v1361 = vpack.c.bf16 %v1352, %v1349
  %v1362 = vpack.c.bf16 %v1356, %v1353
  %v1363 = vpack.c.bf16 %v1357, %v1354
  %v1364 = vpack.c.bf16 %v1358, %v1355
  %v1371 = vunpack.c.l.b16 %v1359
  %v1372 = vunpack.c.l.b16 %v1360
  %v1373 = vunpack.c.l.b16 %v1361
  %v1374 = vunpack.c.h.b16 %v1359
  %v1375 = vunpack.c.h.b16 %v1360
  %v1376 = vunpack.c.h.b16 %v1361
  %v1377 = vunpack.c.l.b16 %v1362
  %v1378 = vunpack.c.l.b16 %v1363
  %v1379 = vunpack.c.l.b16 %v1364
  %v1380 = vunpack.c.h.b16 %v1362
  %v1381 = vunpack.c.h.b16 %v1363
  %v1382 = vunpack.c.h.b16 %v1364
  %v1383 = vpack.c.b16 %v1372, %v1371
  %v1384 = vpack.c.b16 %v1373, %v1373
  %v1385 = vpack.c.b16 %v1375, %v1374
  %v1386 = vpack.c.b16 %v1376, %v1376
  %v1387 = vpack.c.b16 %v1378, %v1377
  %v1388 = vpack.c.b16 %v1379, %v1379
  %v1389 = vpack.c.b16 %v1381, %v1380
  %v1390 = vpack.c.b16 %v1382, %v1382
  %1399 = vst [vmem:[#allocation2 + $0x4] sm:$0xff] %v1383
  %1400 = vst [vmem:[#allocation2 + $0xc] sm:$0xf] %v1384
  %1401 = vst [vmem:[#allocation2 + $0x18] sm:$0xff] %v1385
  %1402 = vst [vmem:[#allocation2 + $0x20] sm:$0xf] %v1386
  %1403 = vst [vmem:[#allocation2 + $0x2c] sm:$0xff] %v1387
  %1404 = vst [vmem:[#allocation2 + $0x34] sm:$0xf] %v1388
  %1405 = vst [vmem:[#allocation2 + $0x40] sm:$0xff] %v1389
  %1406 = vst [vmem:[#allocation2 + $0x48] sm:$0xf] %v1390
  %v1407 = vld [vmem:[#allocation2] sm:$0xff]
  %v1408 = vld [vmem:[#allocation2 + $0x8] sm:$0xff]
  %v1409 = vld [vmem:[#allocation2 + $0x14] sm:$0xff]
  %v1410 = vld [vmem:[#allocation2 + $0x1c] sm:$0xff]
  %v1411 = vld [vmem:[#allocation2 + $0x28] sm:$0xff]
  %v1412 = vld [vmem:[#allocation2 + $0x30] sm:$0xff]
  %v1413 = vld [vmem:[#allocation2 + $0x3c] sm:$0xff]
  %v1414 = vld [vmem:[#allocation2 + $0x44] sm:$0xff]
  %v1415 = vld [vmem:[%s2] sm:$0xf]
  %v1416 = vld [vmem:[%s2 + $0x4] sm:$0xf]
  %v1417 = vld [vmem:[%s2 + $0x8] sm:$0xf]
  %v1418 = vld [vmem:[%s2 + $0xc] sm:$0xf]
  %s1419 = scalar_lea.vmem %s2, 16
  %v1420 = vld [vmem:[%s1419] sm:$0xf]
  %v1421 = vld [vmem:[%s1419 + $0x4] sm:$0xf]
  %v1422 = vld [vmem:[%s1419 + $0x8] sm:$0xf]
  %v1423 = vld [vmem:[%s1419 + $0xc] sm:$0xf]
  %v1428 = vunpack.c.l.b16 %v1420
  %v1429 = vunpack.c.l.b16 %v1421
  %v1430 = vunpack.c.l.b16 %v1422
  %v1431 = vunpack.c.l.b16 %v1423
  %v1432 = vpack.c.b16 %v1429, %v1428
  %v1433 = vpack.c.b16 %v1431, %v1430
  %v1442 = vunpack.c.l.b16 %v1407
  %v1443 = vunpack.c.h.b16 %v1407
  %v1444 = vunpack.c.l.b16 %v1408
  %v1445 = vunpack.c.h.b16 %v1408
  %v1446 = vunpack.c.l.b16 %v1409
  %v1447 = vunpack.c.h.b16 %v1409
  %v1448 = vunpack.c.l.b16 %v1410
  %v1449 = vunpack.c.h.b16 %v1410
  %v1450 = vunpack.c.l.b16 %v1411
  %v1451 = vunpack.c.h.b16 %v1411
  %v1452 = vunpack.c.l.b16 %v1412
  %v1453 = vunpack.c.h.b16 %v1412
  %v1454 = vunpack.c.l.b16 %v1413
  %v1455 = vunpack.c.h.b16 %v1413
  %v1456 = vunpack.c.l.b16 %v1414
  %v1457 = vunpack.c.h.b16 %v1414
  %v1458 = vpack.c.b16 %v1446, %v1442
  %v1459 = vpack.c.b16 %v1447, %v1443
  %v1460 = vpack.c.b16 %v1448, %v1444
  %v1461 = vpack.c.b16 %v1449, %v1445
  %v1462 = vpack.c.b16 %v1454, %v1450
  %v1463 = vpack.c.b16 %v1455, %v1451
  %v1464 = vpack.c.b16 %v1456, %v1452
  %v1465 = vpack.c.b16 %v1457, %v1453
  %1466 = vrot.lane.b32.xlu0 %v1458, 1
  %v1467 = vpop.permute.xlu0 %1466
  %1468 = vrot.lane.b32.xlu0 %v1459, 1
  %v1469 = vpop.permute.xlu0 %1468
  %1470 = vrot.lane.b32.xlu0 %v1460, 1
  %v1471 = vpop.permute.xlu0 %1470
  %1472 = vrot.lane.b32.xlu0 %v1461, 1
  %v1473 = vpop.permute.xlu0 %1472
  %1474 = vrot.lane.b32.xlu0 %v1462, 1
  %v1475 = vpop.permute.xlu0 %1474
  %1476 = vrot.lane.b32.xlu0 %v1463, 1
  %v1477 = vpop.permute.xlu0 %1476
  %1478 = vrot.lane.b32.xlu0 %v1464, 1
  %v1479 = vpop.permute.xlu0 %1478
  %1480 = vrot.lane.b32.xlu0 %v1465, 1
  %v1481 = vpop.permute.xlu0 %1480
  %v1482 = vsel %vm250, %v1467, %v1469
  %v1483 = vsel %vm250, %v1469, %v1471
  %v1484 = vsel %vm250, %v1471, %v1473
  %v1485 = vsel %vm250, %v1475, %v1477
  %v1486 = vsel %vm250, %v1477, %v1479
  %v1487 = vsel %vm250, %v1479, %v1481
  %vm1494 = vcmask 261120
  %v1496 = vsel %vm1494, %v1432, 0
  %v1499 = vsel %vm1494, %v1433, 0
  %1501 = vmatprep.subr.bf16.mxu0 %v1483
  %1502 = vmatpush1.bf16.msra.mxu0 %v1482
  %1503 = vmatprep.subr.bf16.mxu0 %v1486
  %1504 = vmatpush1.bf16.msra.mxu0 %v1485
  %1505 = vmatprep.subr.bf16.mxu0 0
  %1506 = vmatpush1.bf16.msra.mxu0 0
  %1507 = vmatprep.subr.bf16.mxu0 0
  %1508 = vmatpush1.bf16.msra.mxu0 0
  %1509 = vmatprep.subr.bf16.mxu0 0
  %1510 = vmatpush1.bf16.msra.mxu0 0
  %1511 = vmatprep.subr.bf16.mxu0 0
  %1512 = vmatpush1.bf16.msra.mxu0 0
  %1513 = vmatprep.subr.bf16.mxu0 0
  %1514 = vmatpush1.bf16.msra.mxu0 0
  %1515 = vmatprep.subr.bf16.mxu0 0
  %1516 = vmatpush1.bf16.msra.mxu0 0
  %1517 = vmatprep.subr.bf16.mxu0 0
  %1518 = vmatpush1.bf16.msra.mxu0 0
  %1519 = vmatprep.subr.bf16.mxu0 0
  %1520 = vmatpush1.bf16.msra.mxu0 0
  %1521 = vmatprep.subr.bf16.mxu0 0
  %1522 = vmatpush1.bf16.msra.mxu0 0
  %1523 = vmatprep.subr.bf16.mxu0 0
  %1524 = vmatpush1.bf16.msra.mxu0 0
  %1525 = vmatprep.subr.bf16.mxu0 0
  %1526 = vmatpush1.bf16.msra.mxu0 0
  %1527 = vmatprep.subr.bf16.mxu0 0
  %1528 = vmatpush1.bf16.msra.mxu0 0
  %1529 = vmatprep.subr.bf16.mxu0 0
  %1530 = vmatpush1.bf16.msra.mxu0 0
  %1531 = vmatprep.subr.bf16.mxu0 0
  %1532 = vmatpush1.bf16.msra.mxu0 0
  %1533 = vmatprep.mubr.bf16.mxu0 0
  %1534 = vmatmul.mubr.bf16.gmra.mrb[0].mxu0 %v1496
  %v1535 = vpop.f32.mrb[0].mxu0
  %v1536 = vadd.f32 0.0, %v1535
  %v1537 = vpop.f32.mrb[0].mxu0
  %v1538 = vadd.f32 0.0, %v1537
  %v1539 = vpop.f32.mrb[0].mxu0
  %v1540 = vadd.f32 0.0, %v1539
  %v1541 = vpop.f32.mrb[0].mxu0
  %v1542 = vadd.f32 0.0, %v1541
  %1543 = vmatprep.mubr.bf16.mxu0 0
  %1544 = vmatmul.mubr.bf16.gmra.mrb[0].mxu0 %v1499
  %v1545 = vpop.f32.mrb[0].mxu0
  %v1546 = vadd.f32 0.0, %v1545
  %v1547 = vpop.f32.mrb[0].mxu0
  %v1548 = vadd.f32 0.0, %v1547
  %v1549 = vpop.f32.mrb[0].mxu0
  %v1550 = vadd.f32 0.0, %v1549
  %v1551 = vpop.f32.mrb[0].mxu0
  %v1552 = vadd.f32 0.0, %v1551
  %1553 = vdwg.mxu0
  %1554 = vmatprep.subr.bf16.mxu0 0
  %1555 = vmatpush1.bf16.msra.mxu0 %v1484
  %1556 = vmatprep.subr.bf16.mxu0 0
  %1557 = vmatpush1.bf16.msra.mxu0 %v1487
  %1558 = vmatprep.subr.bf16.mxu0 0
  %1559 = vmatpush1.bf16.msra.mxu0 0
  %1560 = vmatprep.subr.bf16.mxu0 0
  %1561 = vmatpush1.bf16.msra.mxu0 0
  %1562 = vmatprep.subr.bf16.mxu0 0
  %1563 = vmatpush1.bf16.msra.mxu0 0
  %1564 = vmatprep.subr.bf16.mxu0 0
  %1565 = vmatpush1.bf16.msra.mxu0 0
  %1566 = vmatprep.subr.bf16.mxu0 0
  %1567 = vmatpush1.bf16.msra.mxu0 0
  %1568 = vmatprep.subr.bf16.mxu0 0
  %1569 = vmatpush1.bf16.msra.mxu0 0
  %1570 = vmatprep.subr.bf16.mxu0 0
  %1571 = vmatpush1.bf16.msra.mxu0 0
  %1572 = vmatprep.subr.bf16.mxu0 0
  %1573 = vmatpush1.bf16.msra.mxu0 0
  %1574 = vmatprep.subr.bf16.mxu0 0
  %1575 = vmatpush1.bf16.msra.mxu0 0
  %1576 = vmatprep.subr.bf16.mxu0 0
  %1577 = vmatpush1.bf16.msra.mxu0 0
  %1578 = vmatprep.subr.bf16.mxu0 0
  %1579 = vmatpush1.bf16.msra.mxu0 0
  %1580 = vmatprep.subr.bf16.mxu0 0
  %1581 = vmatpush1.bf16.msra.mxu0 0
  %1582 = vmatprep.subr.bf16.mxu0 0
  %1583 = vmatpush1.bf16.msra.mxu0 0
  %1584 = vmatprep.subr.bf16.mxu0 0
  %1585 = vmatpush1.bf16.msra.mxu0 0
  %1586 = vmatprep.mubr.bf16.mxu0 0
  %1587 = vmatmul.mubr.bf16.gmra.mrb[0].mxu0 %v1496
  %v1588 = vpop.f32.mrb[0].mxu0
  %v1589 = vadd.f32 0.0, %v1588
  %v1590 = vpop.f32.mrb[0].mxu0
  %v1591 = vpop.f32.mrb[0].mxu0
  %v1592 = vadd.f32 0.0, %v1591
  %v1593 = vpop.f32.mrb[0].mxu0
  %1594 = vmatprep.mubr.bf16.mxu0 0
  %1595 = vmatmul.mubr.bf16.gmra.mrb[0].mxu0 %v1499
  %v1596 = vpop.f32.mrb[0].mxu0
  %v1597 = vadd.f32 0.0, %v1596
  %v1598 = vpop.f32.mrb[0].mxu0
  %v1599 = vpop.f32.mrb[0].mxu0
  %v1600 = vadd.f32 0.0, %v1599
  %v1601 = vpop.f32.mrb[0].mxu0
  %1602 = vdwg.mxu0
  %v1607 = vunpack.c.l.b16 %v1415
  %v1608 = vunpack.c.l.b16 %v1416
  %v1609 = vunpack.c.l.b16 %v1417
  %v1610 = vunpack.c.l.b16 %v1418
  %v1611 = vpack.c.b16 %v1608, %v1607
  %v1612 = vpack.c.b16 %v1610, %v1609
  %1613 = vrot.lane.b32.xlu0 %v1458, 2
  %v1614 = vpop.permute.xlu0 %1613
  %1615 = vrot.lane.b32.xlu0 %v1459, 2
  %v1616 = vpop.permute.xlu0 %1615
  %1617 = vrot.lane.b32.xlu0 %v1460, 2
  %v1618 = vpop.permute.xlu0 %1617
  %1619 = vrot.lane.b32.xlu0 %v1461, 2
  %v1620 = vpop.permute.xlu0 %1619
  %1621 = vrot.lane.b32.xlu0 %v1462, 2
  %v1622 = vpop.permute.xlu0 %1621
  %1623 = vrot.lane.b32.xlu0 %v1463, 2
  %v1624 = vpop.permute.xlu0 %1623
  %1625 = vrot.lane.b32.xlu0 %v1464, 2
  %v1626 = vpop.permute.xlu0 %1625
  %1627 = vrot.lane.b32.xlu0 %v1465, 2
  %v1628 = vpop.permute.xlu0 %1627
  %v1629 = vsel %vm419, %v1614, %v1616
  %v1630 = vsel %vm419, %v1616, %v1618
  %v1631 = vsel %vm419, %v1618, %v1620
  %v1632 = vsel %vm419, %v1622, %v1624
  %v1633 = vsel %vm419, %v1624, %v1626
  %v1634 = vsel %vm419, %v1626, %v1628
  %v1642 = vsel %vm1494, %v1611, 0
  %v1645 = vsel %vm1494, %v1612, 0
  %1647 = vmatprep.subr.bf16.mxu0 %v1630
  %1648 = vmatpush1.bf16.msra.mxu0 %v1629
  %1649 = vmatprep.subr.bf16.mxu0 %v1633
  %1650 = vmatpush1.bf16.msra.mxu0 %v1632
  %1651 = vmatprep.subr.bf16.mxu0 0
  %1652 = vmatpush1.bf16.msra.mxu0 0
  %1653 = vmatprep.subr.bf16.mxu0 0
  %1654 = vmatpush1.bf16.msra.mxu0 0
  %1655 = vmatprep.subr.bf16.mxu0 0
  %1656 = vmatpush1.bf16.msra.mxu0 0
  %1657 = vmatprep.subr.bf16.mxu0 0
  %1658 = vmatpush1.bf16.msra.mxu0 0
  %1659 = vmatprep.subr.bf16.mxu0 0
  %1660 = vmatpush1.bf16.msra.mxu0 0
  %1661 = vmatprep.subr.bf16.mxu0 0
  %1662 = vmatpush1.bf16.msra.mxu0 0
  %1663 = vmatprep.subr.bf16.mxu0 0
  %1664 = vmatpush1.bf16.msra.mxu0 0
  %1665 = vmatprep.subr.bf16.mxu0 0
  %1666 = vmatpush1.bf16.msra.mxu0 0
  %1667 = vmatprep.subr.bf16.mxu0 0
  %1668 = vmatpush1.bf16.msra.mxu0 0
  %1669 = vmatprep.subr.bf16.mxu0 0
  %1670 = vmatpush1.bf16.msra.mxu0 0
  %1671 = vmatprep.subr.bf16.mxu0 0
  %1672 = vmatpush1.bf16.msra.mxu0 0
  %1673 = vmatprep.subr.bf16.mxu0 0
  %1674 = vmatpush1.bf16.msra.mxu0 0
  %1675 = vmatprep.subr.bf16.mxu0 0
  %1676 = vmatpush1.bf16.msra.mxu0 0
  %1677 = vmatprep.subr.bf16.mxu0 0
  %1678 = vmatpush1.bf16.msra.mxu0 0
  %1679 = vmatprep.mubr.bf16.mxu0 0
  %1680 = vmatmul.mubr.bf16.gmra.mrb[0].mxu0 %v1642
  %v1681 = vpop.f32.mrb[0].mxu0
  %v1682 = vadd.f32 %v1536, %v1681
  %v1683 = vpop.f32.mrb[0].mxu0
  %v1684 = vadd.f32 %v1538, %v1683
  %v1685 = vpop.f32.mrb[0].mxu0
  %v1686 = vadd.f32 %v1540, %v1685
  %v1687 = vpop.f32.mrb[0].mxu0
  %v1688 = vadd.f32 %v1542, %v1687
  %1689 = vmatprep.mubr.bf16.mxu0 0
  %1690 = vmatmul.mubr.bf16.gmra.mrb[0].mxu0 %v1645
  %v1691 = vpop.f32.mrb[0].mxu0
  %v1692 = vadd.f32 %v1546, %v1691
  %v1693 = vpop.f32.mrb[0].mxu0
  %v1694 = vadd.f32 %v1548, %v1693
  %v1695 = vpop.f32.mrb[0].mxu0
  %v1696 = vadd.f32 %v1550, %v1695
  %v1697 = vpop.f32.mrb[0].mxu0
  %v1698 = vadd.f32 %v1552, %v1697
  %1699 = vdwg.mxu0
  %1700 = vmatprep.subr.bf16.mxu0 0
  %1701 = vmatpush1.bf16.msra.mxu0 %v1631
  %1702 = vmatprep.subr.bf16.mxu0 0
  %1703 = vmatpush1.bf16.msra.mxu0 %v1634
  %1704 = vmatprep.subr.bf16.mxu0 0
  %1705 = vmatpush1.bf16.msra.mxu0 0
  %1706 = vmatprep.subr.bf16.mxu0 0
  %1707 = vmatpush1.bf16.msra.mxu0 0
  %1708 = vmatprep.subr.bf16.mxu0 0
  %1709 = vmatpush1.bf16.msra.mxu0 0
  %1710 = vmatprep.subr.bf16.mxu0 0
  %1711 = vmatpush1.bf16.msra.mxu0 0
  %1712 = vmatprep.subr.bf16.mxu0 0
  %1713 = vmatpush1.bf16.msra.mxu0 0
  %1714 = vmatprep.subr.bf16.mxu0 0
  %1715 = vmatpush1.bf16.msra.mxu0 0
  %1716 = vmatprep.subr.bf16.mxu0 0
  %1717 = vmatpush1.bf16.msra.mxu0 0
  %1718 = vmatprep.subr.bf16.mxu0 0
  %1719 = vmatpush1.bf16.msra.mxu0 0
  %1720 = vmatprep.subr.bf16.mxu0 0
  %1721 = vmatpush1.bf16.msra.mxu0 0
  %1722 = vmatprep.subr.bf16.mxu0 0
  %1723 = vmatpush1.bf16.msra.mxu0 0
  %1724 = vmatprep.subr.bf16.mxu0 0
  %1725 = vmatpush1.bf16.msra.mxu0 0
  %1726 = vmatprep.subr.bf16.mxu0 0
  %1727 = vmatpush1.bf16.msra.mxu0 0
  %1728 = vmatprep.subr.bf16.mxu0 0
  %1729 = vmatpush1.bf16.msra.mxu0 0
  %1730 = vmatprep.subr.bf16.mxu0 0
  %1731 = vmatpush1.bf16.msra.mxu0 0
  %1732 = vmatprep.mubr.bf16.mxu0 0
  %1733 = vmatmul.mubr.bf16.gmra.mrb[0].mxu0 %v1642
  %v1734 = vpop.f32.mrb[0].mxu0
  %v1735 = vadd.f32 %v1589, %v1734
  %v1736 = vpop.f32.mrb[0].mxu0
  %v1737 = vpop.f32.mrb[0].mxu0
  %v1738 = vadd.f32 %v1592, %v1737
  %v1739 = vpop.f32.mrb[0].mxu0
  %1740 = vmatprep.mubr.bf16.mxu0 0
  %1741 = vmatmul.mubr.bf16.gmra.mrb[0].mxu0 %v1645
  %v1742 = vpop.f32.mrb[0].mxu0
  %v1743 = vadd.f32 %v1597, %v1742
  %v1744 = vpop.f32.mrb[0].mxu0
  %v1745 = vpop.f32.mrb[0].mxu0
  %v1746 = vadd.f32 %v1600, %v1745
  %v1747 = vpop.f32.mrb[0].mxu0
  %1748 = vdwg.mxu0
  %v1749 = vld [vmem:[#allocation2 + $0x4] sm:$0xff]
  %v1750 = vld [vmem:[#allocation2 + $0xc] sm:$0xf]
  %v1751 = vld [vmem:[#allocation2 + $0x18] sm:$0xff]
  %v1752 = vld [vmem:[#allocation2 + $0x20] sm:$0xf]
  %v1753 = vld [vmem:[#allocation2 + $0x2c] sm:$0xff]
  %v1754 = vld [vmem:[#allocation2 + $0x34] sm:$0xf]
  %v1755 = vld [vmem:[#allocation2 + $0x40] sm:$0xff]
  %v1756 = vld [vmem:[#allocation2 + $0x48] sm:$0xf]
  %s1757 = scalar_lea.vmem %s2, 32
  %v1758 = vld [vmem:[%s1757] sm:$0xf]
  %v1759 = vld [vmem:[%s1757 + $0x4] sm:$0xf]
  %v1760 = vld [vmem:[%s1757 + $0x8] sm:$0xf]
  %v1761 = vld [vmem:[%s1757 + $0xc] sm:$0xf]
  %v1766 = vunpack.c.l.b16 %v1758
  %v1767 = vunpack.c.l.b16 %v1759
  %v1768 = vunpack.c.l.b16 %v1760
  %v1769 = vunpack.c.l.b16 %v1761
  %v1770 = vpack.c.b16 %v1767, %v1766
  %v1771 = vpack.c.b16 %v1769, %v1768
  %v1780 = vunpack.c.l.b16 %v1749
  %v1781 = vunpack.c.h.b16 %v1749
  %v1782 = vunpack.c.l.b16 %v1750
  %v1783 = vunpack.c.l.b16 %v1751
  %v1784 = vunpack.c.h.b16 %v1751
  %v1785 = vunpack.c.l.b16 %v1752
  %v1786 = vunpack.c.l.b16 %v1753
  %v1787 = vunpack.c.h.b16 %v1753
  %v1788 = vunpack.c.l.b16 %v1754
  %v1789 = vunpack.c.l.b16 %v1755
  %v1790 = vunpack.c.h.b16 %v1755
  %v1791 = vunpack.c.l.b16 %v1756
  %v1792 = vpack.c.b16 %v1783, %v1780
  %v1793 = vpack.c.b16 %v1784, %v1781
  %v1794 = vpack.c.b16 %v1785, %v1782
  %v1795 = vpack.c.b16 %v1789, %v1786
  %v1796 = vpack.c.b16 %v1790, %v1787
  %v1797 = vpack.c.b16 %v1791, %v1788
  %v1805 = vsel %vm1494, %v1770, 0
  %v1808 = vsel %vm1494, %v1771, 0
  %1810 = vmatprep.subr.bf16.mxu0 %v1793
  %1811 = vmatpush1.bf16.msra.mxu0 %v1792
  %1812 = vmatprep.subr.bf16.mxu0 %v1796
  %1813 = vmatpush1.bf16.msra.mxu0 %v1795
  %1814 = vmatprep.subr.bf16.mxu0 0
  %1815 = vmatpush1.bf16.msra.mxu0 0
  %1816 = vmatprep.subr.bf16.mxu0 0
  %1817 = vmatpush1.bf16.msra.mxu0 0
  %1818 = vmatprep.subr.bf16.mxu0 0
  %1819 = vmatpush1.bf16.msra.mxu0 0
  %1820 = vmatprep.subr.bf16.mxu0 0
  %1821 = vmatpush1.bf16.msra.mxu0 0
  %1822 = vmatprep.subr.bf16.mxu0 0
  %1823 = vmatpush1.bf16.msra.mxu0 0
  %1824 = vmatprep.subr.bf16.mxu0 0
  %1825 = vmatpush1.bf16.msra.mxu0 0
  %1826 = vmatprep.subr.bf16.mxu0 0
  %1827 = vmatpush1.bf16.msra.mxu0 0
  %1828 = vmatprep.subr.bf16.mxu0 0
  %1829 = vmatpush1.bf16.msra.mxu0 0
  %1830 = vmatprep.subr.bf16.mxu0 0
  %1831 = vmatpush1.bf16.msra.mxu0 0
  %1832 = vmatprep.subr.bf16.mxu0 0
  %1833 = vmatpush1.bf16.msra.mxu0 0
  %1834 = vmatprep.subr.bf16.mxu0 0
  %1835 = vmatpush1.bf16.msra.mxu0 0
  %1836 = vmatprep.subr.bf16.mxu0 0
  %1837 = vmatpush1.bf16.msra.mxu0 0
  %1838 = vmatprep.subr.bf16.mxu0 0
  %1839 = vmatpush1.bf16.msra.mxu0 0
  %1840 = vmatprep.subr.bf16.mxu0 0
  %1841 = vmatpush1.bf16.msra.mxu0 0
  %1842 = vmatprep.mubr.bf16.mxu0 0
  %1843 = vmatmul.mubr.bf16.gmra.mrb[0].mxu0 %v1805
  %v1844 = vpop.f32.mrb[0].mxu0
  %v1845 = vadd.f32 0.0, %v1844
  %v1846 = vpop.f32.mrb[0].mxu0
  %v1847 = vadd.f32 0.0, %v1846
  %v1848 = vpop.f32.mrb[0].mxu0
  %v1849 = vadd.f32 0.0, %v1848
  %v1850 = vpop.f32.mrb[0].mxu0
  %v1851 = vadd.f32 0.0, %v1850
  %1852 = vmatprep.mubr.bf16.mxu0 0
  %1853 = vmatmul.mubr.bf16.gmra.mrb[0].mxu0 %v1808
  %v1854 = vpop.f32.mrb[0].mxu0
  %v1855 = vadd.f32 0.0, %v1854
  %v1856 = vpop.f32.mrb[0].mxu0
  %v1857 = vadd.f32 0.0, %v1856
  %v1858 = vpop.f32.mrb[0].mxu0
  %v1859 = vadd.f32 0.0, %v1858
  %v1860 = vpop.f32.mrb[0].mxu0
  %v1861 = vadd.f32 0.0, %v1860
  %1862 = vdwg.mxu0
  %1863 = vmatprep.subr.bf16.mxu0 0
  %1864 = vmatpush1.bf16.msra.mxu0 %v1794
  %1865 = vmatprep.subr.bf16.mxu0 0
  %1866 = vmatpush1.bf16.msra.mxu0 %v1797
  %1867 = vmatprep.subr.bf16.mxu0 0
  %1868 = vmatpush1.bf16.msra.mxu0 0
  %1869 = vmatprep.subr.bf16.mxu0 0
  %1870 = vmatpush1.bf16.msra.mxu0 0
  %1871 = vmatprep.subr.bf16.mxu0 0
  %1872 = vmatpush1.bf16.msra.mxu0 0
  %1873 = vmatprep.subr.bf16.mxu0 0
  %1874 = vmatpush1.bf16.msra.mxu0 0
  %1875 = vmatprep.subr.bf16.mxu0 0
  %1876 = vmatpush1.bf16.msra.mxu0 0
  %1877 = vmatprep.subr.bf16.mxu0 0
  %1878 = vmatpush1.bf16.msra.mxu0 0
  %1879 = vmatprep.subr.bf16.mxu0 0
  %1880 = vmatpush1.bf16.msra.mxu0 0
  %1881 = vmatprep.subr.bf16.mxu0 0
  %1882 = vmatpush1.bf16.msra.mxu0 0
  %1883 = vmatprep.subr.bf16.mxu0 0
  %1884 = vmatpush1.bf16.msra.mxu0 0
  %1885 = vmatprep.subr.bf16.mxu0 0
  %1886 = vmatpush1.bf16.msra.mxu0 0
  %1887 = vmatprep.subr.bf16.mxu0 0
  %1888 = vmatpush1.bf16.msra.mxu0 0
  %1889 = vmatprep.subr.bf16.mxu0 0
  %1890 = vmatpush1.bf16.msra.mxu0 0
  %1891 = vmatprep.subr.bf16.mxu0 0
  %1892 = vmatpush1.bf16.msra.mxu0 0
  %1893 = vmatprep.subr.bf16.mxu0 0
  %1894 = vmatpush1.bf16.msra.mxu0 0
  %1895 = vmatprep.mubr.bf16.mxu0 0
  %1896 = vmatmul.mubr.bf16.gmra.mrb[0].mxu0 %v1805
  %v1897 = vpop.f32.mrb[0].mxu0
  %v1898 = vadd.f32 0.0, %v1897
  %v1899 = vpop.f32.mrb[0].mxu0
  %v1900 = vpop.f32.mrb[0].mxu0
  %v1901 = vadd.f32 0.0, %v1900
  %v1902 = vpop.f32.mrb[0].mxu0
  %1903 = vmatprep.mubr.bf16.mxu0 0
  %1904 = vmatmul.mubr.bf16.gmra.mrb[0].mxu0 %v1808
  %v1905 = vpop.f32.mrb[0].mxu0
  %v1906 = vadd.f32 0.0, %v1905
  %v1907 = vpop.f32.mrb[0].mxu0
  %v1908 = vpop.f32.mrb[0].mxu0
  %v1909 = vadd.f32 0.0, %v1908
  %v1910 = vpop.f32.mrb[0].mxu0
  %1911 = vdwg.mxu0
  %v1912 = vadd.f32 %v1682, %v1845
  %v1913 = vadd.f32 %v1684, %v1847
  %v1914 = vadd.f32 %v1735, %v1898
  %v1915 = vadd.f32 %v1686, %v1849
  %v1916 = vadd.f32 %v1688, %v1851
  %v1917 = vadd.f32 %v1738, %v1901
  %v1918 = vadd.f32 %v1692, %v1855
  %v1919 = vadd.f32 %v1694, %v1857
  %v1920 = vadd.f32 %v1743, %v1906
  %v1921 = vadd.f32 %v1696, %v1859
  %v1922 = vadd.f32 %v1698, %v1861
  %v1923 = vadd.f32 %v1746, %v1909
  %v1924 = vld [vmem:[#allocation2 + $0x4] sm:$0xff]
  %v1925 = vld [vmem:[#allocation2 + $0xc] sm:$0xff]
  %v1926 = vld [vmem:[#allocation2 + $0x18] sm:$0xff]
  %v1927 = vld [vmem:[#allocation2 + $0x20] sm:$0xff]
  %v1928 = vld [vmem:[#allocation2 + $0x2c] sm:$0xff]
  %v1929 = vld [vmem:[#allocation2 + $0x34] sm:$0xff]
  %v1930 = vld [vmem:[#allocation2 + $0x40] sm:$0xff]
  %v1931 = vld [vmem:[#allocation2 + $0x48] sm:$0xff]
  %s1932 = scalar_lea.vmem %s2, 48
  %v1933 = vld [vmem:[%s1932] sm:$0xf]
  %v1934 = vld [vmem:[%s1932 + $0x4] sm:$0xf]
  %v1935 = vld [vmem:[%s1932 + $0x8] sm:$0xf]
  %v1936 = vld [vmem:[%s1932 + $0xc] sm:$0xf]
  %v1941 = vunpack.c.l.b16 %v1933
  %v1942 = vunpack.c.l.b16 %v1934
  %v1943 = vunpack.c.l.b16 %v1935
  %v1944 = vunpack.c.l.b16 %v1936
  %v1945 = vpack.c.b16 %v1942, %v1941
  %v1946 = vpack.c.b16 %v1944, %v1943
  %v1955 = vunpack.c.l.b16 %v1924
  %v1956 = vunpack.c.h.b16 %v1924
  %v1957 = vunpack.c.l.b16 %v1925
  %v1958 = vunpack.c.h.b16 %v1925
  %v1959 = vunpack.c.l.b16 %v1926
  %v1960 = vunpack.c.h.b16 %v1926
  %v1961 = vunpack.c.l.b16 %v1927
  %v1962 = vunpack.c.h.b16 %v1927
  %v1963 = vunpack.c.l.b16 %v1928
  %v1964 = vunpack.c.h.b16 %v1928
  %v1965 = vunpack.c.l.b16 %v1929
  %v1966 = vunpack.c.h.b16 %v1929
  %v1967 = vunpack.c.l.b16 %v1930
  %v1968 = vunpack.c.h.b16 %v1930
  %v1969 = vunpack.c.l.b16 %v1931
  %v1970 = vunpack.c.h.b16 %v1931
  %v1971 = vpack.c.b16 %v1959, %v1955
  %v1972 = vpack.c.b16 %v1960, %v1956
  %v1973 = vpack.c.b16 %v1961, %v1957
  %v1974 = vpack.c.b16 %v1962, %v1958
  %v1975 = vpack.c.b16 %v1967, %v1963
  %v1976 = vpack.c.b16 %v1968, %v1964
  %v1977 = vpack.c.b16 %v1969, %v1965
  %v1978 = vpack.c.b16 %v1970, %v1966
  %1979 = vrot.lane.b32.xlu0 %v1971, 127
  %v1980 = vpop.permute.xlu0 %1979
  %1981 = vrot.lane.b32.xlu0 %v1972, 127
  %v1982 = vpop.permute.xlu0 %1981
  %1983 = vrot.lane.b32.xlu0 %v1973, 127
  %v1984 = vpop.permute.xlu0 %1983
  %1985 = vrot.lane.b32.xlu0 %v1974, 127
  %v1986 = vpop.permute.xlu0 %1985
  %1987 = vrot.lane.b32.xlu0 %v1975, 127
  %v1988 = vpop.permute.xlu0 %1987
  %1989 = vrot.lane.b32.xlu0 %v1976, 127
  %v1990 = vpop.permute.xlu0 %1989
  %1991 = vrot.lane.b32.xlu0 %v1977, 127
  %v1992 = vpop.permute.xlu0 %1991
  %1993 = vrot.lane.b32.xlu0 %v1978, 127
  %v1994 = vpop.permute.xlu0 %1993
  %v1995 = vsel %vm837, %v1980, %v1982
  %v1996 = vsel %vm837, %v1982, %v1984
  %v1997 = vsel %vm837, %v1984, %v1986
  %v1998 = vsel %vm837, %v1988, %v1990
  %v1999 = vsel %vm837, %v1990, %v1992
  %v2000 = vsel %vm837, %v1992, %v1994
  %v2008 = vsel %vm1494, %v1945, 0
  %v2011 = vsel %vm1494, %v1946, 0
  %2013 = vmatprep.subr.bf16.mxu0 %v1996
  %2014 = vmatpush1.bf16.msra.mxu0 %v1995
  %2015 = vmatprep.subr.bf16.mxu0 %v1999
  %2016 = vmatpush1.bf16.msra.mxu0 %v1998
  %2017 = vmatprep.subr.bf16.mxu0 0
  %2018 = vmatpush1.bf16.msra.mxu0 0
  %2019 = vmatprep.subr.bf16.mxu0 0
  %2020 = vmatpush1.bf16.msra.mxu0 0
  %2021 = vmatprep.subr.bf16.mxu0 0
  %2022 = vmatpush1.bf16.msra.mxu0 0
  %2023 = vmatprep.subr.bf16.mxu0 0
  %2024 = vmatpush1.bf16.msra.mxu0 0
  %2025 = vmatprep.subr.bf16.mxu0 0
  %2026 = vmatpush1.bf16.msra.mxu0 0
  %2027 = vmatprep.subr.bf16.mxu0 0
  %2028 = vmatpush1.bf16.msra.mxu0 0
  %2029 = vmatprep.subr.bf16.mxu0 0
  %2030 = vmatpush1.bf16.msra.mxu0 0
  %2031 = vmatprep.subr.bf16.mxu0 0
  %2032 = vmatpush1.bf16.msra.mxu0 0
  %2033 = vmatprep.subr.bf16.mxu0 0
  %2034 = vmatpush1.bf16.msra.mxu0 0
  %2035 = vmatprep.subr.bf16.mxu0 0
  %2036 = vmatpush1.bf16.msra.mxu0 0
  %2037 = vmatprep.subr.bf16.mxu0 0
  %2038 = vmatpush1.bf16.msra.mxu0 0
  %2039 = vmatprep.subr.bf16.mxu0 0
  %2040 = vmatpush1.bf16.msra.mxu0 0
  %2041 = vmatprep.subr.bf16.mxu0 0
  %2042 = vmatpush1.bf16.msra.mxu0 0
  %2043 = vmatprep.subr.bf16.mxu0 0
  %2044 = vmatpush1.bf16.msra.mxu0 0
  %2045 = vmatprep.mubr.bf16.mxu0 0
  %2046 = vmatmul.mubr.bf16.gmra.mrb[0].mxu0 %v2008
  %v2047 = vpop.f32.mrb[0].mxu0
  %v2048 = vadd.f32 0.0, %v2047
  %v2049 = vpop.f32.mrb[0].mxu0
  %v2050 = vadd.f32 0.0, %v2049
  %v2051 = vpop.f32.mrb[0].mxu0
  %v2052 = vadd.f32 0.0, %v2051
  %v2053 = vpop.f32.mrb[0].mxu0
  %v2054 = vadd.f32 0.0, %v2053
  %2055 = vmatprep.mubr.bf16.mxu0 0
  %2056 = vmatmul.mubr.bf16.gmra.mrb[0].mxu0 %v2011
  %v2057 = vpop.f32.mrb[0].mxu0
  %v2058 = vadd.f32 0.0, %v2057
  %v2059 = vpop.f32.mrb[0].mxu0
  %v2060 = vadd.f32 0.0, %v2059
  %v2061 = vpop.f32.mrb[0].mxu0
  %v2062 = vadd.f32 0.0, %v2061
  %v2063 = vpop.f32.mrb[0].mxu0
  %v2064 = vadd.f32 0.0, %v2063
  %2065 = vdwg.mxu0
  %2066 = vmatprep.subr.bf16.mxu0 0
  %2067 = vmatpush1.bf16.msra.mxu0 %v1997
  %2068 = vmatprep.subr.bf16.mxu0 0
  %2069 = vmatpush1.bf16.msra.mxu0 %v2000
  %2070 = vmatprep.subr.bf16.mxu0 0
  %2071 = vmatpush1.bf16.msra.mxu0 0
  %2072 = vmatprep.subr.bf16.mxu0 0
  %2073 = vmatpush1.bf16.msra.mxu0 0
  %2074 = vmatprep.subr.bf16.mxu0 0
  %2075 = vmatpush1.bf16.msra.mxu0 0
  %2076 = vmatprep.subr.bf16.mxu0 0
  %2077 = vmatpush1.bf16.msra.mxu0 0
  %2078 = vmatprep.subr.bf16.mxu0 0
  %2079 = vmatpush1.bf16.msra.mxu0 0
  %2080 = vmatprep.subr.bf16.mxu0 0
  %2081 = vmatpush1.bf16.msra.mxu0 0
  %2082 = vmatprep.subr.bf16.mxu0 0
  %2083 = vmatpush1.bf16.msra.mxu0 0
  %2084 = vmatprep.subr.bf16.mxu0 0
  %2085 = vmatpush1.bf16.msra.mxu0 0
  %2086 = vmatprep.subr.bf16.mxu0 0
  %2087 = vmatpush1.bf16.msra.mxu0 0
  %2088 = vmatprep.subr.bf16.mxu0 0
  %2089 = vmatpush1.bf16.msra.mxu0 0
  %2090 = vmatprep.subr.bf16.mxu0 0
  %2091 = vmatpush1.bf16.msra.mxu0 0
  %2092 = vmatprep.subr.bf16.mxu0 0
  %2093 = vmatpush1.bf16.msra.mxu0 0
  %2094 = vmatprep.subr.bf16.mxu0 0
  %2095 = vmatpush1.bf16.msra.mxu0 0
  %2096 = vmatprep.subr.bf16.mxu0 0
  %2097 = vmatpush1.bf16.msra.mxu0 0
  %2098 = vmatprep.mubr.bf16.mxu0 0
  %2099 = vmatmul.mubr.bf16.gmra.mrb[0].mxu0 %v2008
  %v2100 = vpop.f32.mrb[0].mxu0
  %v2101 = vadd.f32 0.0, %v2100
  %v2102 = vpop.f32.mrb[0].mxu0
  %v2103 = vpop.f32.mrb[0].mxu0
  %v2104 = vadd.f32 0.0, %v2103
  %v2105 = vpop.f32.mrb[0].mxu0
  %2106 = vmatprep.mubr.bf16.mxu0 0
  %2107 = vmatmul.mubr.bf16.gmra.mrb[0].mxu0 %v2011
  %v2108 = vpop.f32.mrb[0].mxu0
  %v2109 = vadd.f32 0.0, %v2108
  %v2110 = vpop.f32.mrb[0].mxu0
  %v2111 = vpop.f32.mrb[0].mxu0
  %v2112 = vadd.f32 0.0, %v2111
  %v2113 = vpop.f32.mrb[0].mxu0
  %2114 = vdwg.mxu0
  %v2115 = vadd.f32 %v1912, %v2048
  %v2116 = vadd.f32 %v1913, %v2050
  %v2117 = vadd.f32 %v1914, %v2101
  %v2118 = vadd.f32 %v1915, %v2052
  %v2119 = vadd.f32 %v1916, %v2054
  %v2120 = vadd.f32 %v1917, %v2104
  %v2121 = vadd.f32 %v1918, %v2058
  %v2122 = vadd.f32 %v1919, %v2060
  %v2123 = vadd.f32 %v1920, %v2109
  %v2124 = vadd.f32 %v1921, %v2062
  %v2125 = vadd.f32 %v1922, %v2064
  %v2126 = vadd.f32 %v1923, %v2112
  %s2127 = scalar_lea.vmem %s2, 64
  %v2128 = vld [vmem:[%s2127] sm:$0xf]
  %v2129 = vld [vmem:[%s2127 + $0x4] sm:$0xf]
  %v2130 = vld [vmem:[%s2127 + $0x8] sm:$0xf]
  %v2131 = vld [vmem:[%s2127 + $0xc] sm:$0xf]
  %v2136 = vunpack.c.l.b16 %v2128
  %v2137 = vunpack.c.l.b16 %v2129
  %v2138 = vunpack.c.l.b16 %v2130
  %v2139 = vunpack.c.l.b16 %v2131
  %v2140 = vpack.c.b16 %v2137, %v2136
  %v2141 = vpack.c.b16 %v2139, %v2138
  %2142 = vrot.lane.b32.xlu0 %v1971, 126
  %v2143 = vpop.permute.xlu0 %2142
  %2144 = vrot.lane.b32.xlu0 %v1972, 126
  %v2145 = vpop.permute.xlu0 %2144
  %2146 = vrot.lane.b32.xlu0 %v1973, 126
  %v2147 = vpop.permute.xlu0 %2146
  %2148 = vrot.lane.b32.xlu0 %v1974, 126
  %v2149 = vpop.permute.xlu0 %2148
  %2150 = vrot.lane.b32.xlu0 %v1975, 126
  %v2151 = vpop.permute.xlu0 %2150
  %2152 = vrot.lane.b32.xlu0 %v1976, 126
  %v2153 = vpop.permute.xlu0 %2152
  %2154 = vrot.lane.b32.xlu0 %v1977, 126
  %v2155 = vpop.permute.xlu0 %2154
  %2156 = vrot.lane.b32.xlu0 %v1978, 126
  %v2157 = vpop.permute.xlu0 %2156
  %v2158 = vsel %vm1021, %v2143, %v2145
  %v2159 = vsel %vm1021, %v2145, %v2147
  %v2160 = vsel %vm1021, %v2147, %v2149
  %v2161 = vsel %vm1021, %v2151, %v2153
  %v2162 = vsel %vm1021, %v2153, %v2155
  %v2163 = vsel %vm1021, %v2155, %v2157
  %v2171 = vsel %vm1494, %v2140, 0
  %v2174 = vsel %vm1494, %v2141, 0
  %2176 = vmatprep.subr.bf16.mxu0 %v2159
  %2177 = vmatpush1.bf16.msra.mxu0 %v2158
  %2178 = vmatprep.subr.bf16.mxu0 %v2162
  %2179 = vmatpush1.bf16.msra.mxu0 %v2161
  %2180 = vmatprep.subr.bf16.mxu0 0
  %2181 = vmatpush1.bf16.msra.mxu0 0
  %2182 = vmatprep.subr.bf16.mxu0 0
  %2183 = vmatpush1.bf16.msra.mxu0 0
  %2184 = vmatprep.subr.bf16.mxu0 0
  %2185 = vmatpush1.bf16.msra.mxu0 0
  %2186 = vmatprep.subr.bf16.mxu0 0
  %2187 = vmatpush1.bf16.msra.mxu0 0
  %2188 = vmatprep.subr.bf16.mxu0 0
  %2189 = vmatpush1.bf16.msra.mxu0 0
  %2190 = vmatprep.subr.bf16.mxu0 0
  %2191 = vmatpush1.bf16.msra.mxu0 0
  %2192 = vmatprep.subr.bf16.mxu0 0
  %2193 = vmatpush1.bf16.msra.mxu0 0
  %2194 = vmatprep.subr.bf16.mxu0 0
  %2195 = vmatpush1.bf16.msra.mxu0 0
  %2196 = vmatprep.subr.bf16.mxu0 0
  %2197 = vmatpush1.bf16.msra.mxu0 0
  %2198 = vmatprep.subr.bf16.mxu0 0
  %2199 = vmatpush1.bf16.msra.mxu0 0
  %2200 = vmatprep.subr.bf16.mxu0 0
  %2201 = vmatpush1.bf16.msra.mxu0 0
  %2202 = vmatprep.subr.bf16.mxu0 0
  %2203 = vmatpush1.bf16.msra.mxu0 0
  %2204 = vmatprep.subr.bf16.mxu0 0
  %2205 = vmatpush1.bf16.msra.mxu0 0
  %2206 = vmatprep.subr.bf16.mxu0 0
  %2207 = vmatpush1.bf16.msra.mxu0 0
  %2208 = vmatprep.mubr.bf16.mxu0 0
  %2209 = vmatmul.mubr.bf16.gmra.mrb[0].mxu0 %v2171
  %v2210 = vpop.f32.mrb[0].mxu0
  %v2211 = vadd.f32 0.0, %v2210
  %v2212 = vpop.f32.mrb[0].mxu0
  %v2213 = vadd.f32 0.0, %v2212
  %v2214 = vpop.f32.mrb[0].mxu0
  %v2215 = vadd.f32 0.0, %v2214
  %v2216 = vpop.f32.mrb[0].mxu0
  %v2217 = vadd.f32 0.0, %v2216
  %2218 = vmatprep.mubr.bf16.mxu0 0
  %2219 = vmatmul.mubr.bf16.gmra.mrb[0].mxu0 %v2174
  %v2220 = vpop.f32.mrb[0].mxu0
  %v2221 = vadd.f32 0.0, %v2220
  %v2222 = vpop.f32.mrb[0].mxu0
  %v2223 = vadd.f32 0.0, %v2222
  %v2224 = vpop.f32.mrb[0].mxu0
  %v2225 = vadd.f32 0.0, %v2224
  %v2226 = vpop.f32.mrb[0].mxu0
  %v2227 = vadd.f32 0.0, %v2226
  %2228 = vdwg.mxu0
  %2229 = vmatprep.subr.bf16.mxu0 0
  %2230 = vmatpush1.bf16.msra.mxu0 %v2160
  %2231 = vmatprep.subr.bf16.mxu0 0
  %2232 = vmatpush1.bf16.msra.mxu0 %v2163
  %2233 = vmatprep.subr.bf16.mxu0 0
  %2234 = vmatpush1.bf16.msra.mxu0 0
  %2235 = vmatprep.subr.bf16.mxu0 0
  %2236 = vmatpush1.bf16.msra.mxu0 0
  %2237 = vmatprep.subr.bf16.mxu0 0
  %2238 = vmatpush1.bf16.msra.mxu0 0
  %2239 = vmatprep.subr.bf16.mxu0 0
  %2240 = vmatpush1.bf16.msra.mxu0 0
  %2241 = vmatprep.subr.bf16.mxu0 0
  %2242 = vmatpush1.bf16.msra.mxu0 0
  %2243 = vmatprep.subr.bf16.mxu0 0
  %2244 = vmatpush1.bf16.msra.mxu0 0
  %2245 = vmatprep.subr.bf16.mxu0 0
  %2246 = vmatpush1.bf16.msra.mxu0 0
  %2247 = vmatprep.subr.bf16.mxu0 0
  %2248 = vmatpush1.bf16.msra.mxu0 0
  %2249 = vmatprep.subr.bf16.mxu0 0
  %2250 = vmatpush1.bf16.msra.mxu0 0
  %2251 = vmatprep.subr.bf16.mxu0 0
  %2252 = vmatpush1.bf16.msra.mxu0 0
  %2253 = vmatprep.subr.bf16.mxu0 0
  %2254 = vmatpush1.bf16.msra.mxu0 0
  %2255 = vmatprep.subr.bf16.mxu0 0
  %2256 = vmatpush1.bf16.msra.mxu0 0
  %2257 = vmatprep.subr.bf16.mxu0 0
  %2258 = vmatpush1.bf16.msra.mxu0 0
  %2259 = vmatprep.subr.bf16.mxu0 0
  %2260 = vmatpush1.bf16.msra.mxu0 0
  %2261 = vmatprep.mubr.bf16.mxu0 0
  %2262 = vmatmul.mubr.bf16.gmra.mrb[0].mxu0 %v2171
  %v2263 = vpop.f32.mrb[0].mxu0
  %v2264 = vadd.f32 0.0, %v2263
  %v2265 = vpop.f32.mrb[0].mxu0
  %v2266 = vpop.f32.mrb[0].mxu0
  %v2267 = vadd.f32 0.0, %v2266
  %v2268 = vpop.f32.mrb[0].mxu0
  %2269 = vmatprep.mubr.bf16.mxu0 0
  %2270 = vmatmul.mubr.bf16.gmra.mrb[0].mxu0 %v2174
  %v2271 = vpop.f32.mrb[0].mxu0
  %v2272 = vadd.f32 0.0, %v2271
  %v2273 = vpop.f32.mrb[0].mxu0
  %v2274 = vpop.f32.mrb[0].mxu0
  %v2275 = vadd.f32 0.0, %v2274
  %v2276 = vpop.f32.mrb[0].mxu0
  %2277 = vdwg.mxu0
  %v2278 = vadd.f32 %v2115, %v2211
  %v2279 = vadd.f32 %v2116, %v2213
  %v2280 = vadd.f32 %v2117, %v2264
  %v2281 = vadd.f32 %v2118, %v2215
  %v2282 = vadd.f32 %v2119, %v2217
  %v2283 = vadd.f32 %v2120, %v2267
  %v2284 = vadd.f32 %v2121, %v2221
  %v2285 = vadd.f32 %v2122, %v2223
  %v2286 = vadd.f32 %v2123, %v2272
  %v2287 = vadd.f32 %v2124, %v2225
  %v2288 = vadd.f32 %v2125, %v2227
  %v2289 = vadd.f32 %v2126, %v2275
  %v2290 = vmul.f32 %v2278, %v65
  %v2291 = vmul.f32 %v2279, %v69
  %v2292 = vmul.f32 %v2280, %v73
  %v2293 = vmul.f32 %v2281, %v65
  %v2294 = vmul.f32 %v2282, %v69
  %v2295 = vmul.f32 %v2283, %v73
  %v2296 = vmul.f32 %v2284, %v65
  %v2297 = vmul.f32 %v2285, %v69
  %v2298 = vmul.f32 %v2286, %v73
  %v2299 = vmul.f32 %v2287, %v65
  %v2300 = vmul.f32 %v2288, %v69
  %v2301 = vmul.f32 %v2289, %v73
  %v2302 = vmul.f32 %v2290, %v2290
  %v2303 = vmul.f32 %v2291, %v2291
  %v2304 = vmul.f32 %v2292, %v2292
  %v2305 = vmul.f32 %v2293, %v2293
  %v2306 = vmul.f32 %v2294, %v2294
  %v2307 = vmul.f32 %v2295, %v2295
  %v2308 = vmul.f32 %v2296, %v2296
  %v2309 = vmul.f32 %v2297, %v2297
  %v2310 = vmul.f32 %v2298, %v2298
  %v2311 = vmul.f32 %v2299, %v2299
  %v2312 = vmul.f32 %v2300, %v2300
  %v2313 = vmul.f32 %v2301, %v2301
  %v2314 = vadd.f32 %v2290, %v2291
  %v2315 = vadd.f32 %v2314, %v2292
  %2316 = vadd.xlane.f32.xlu0 %v2315
  %v2317 = vpop.xlane.xlu0 %2316
  %v2318 = vadd.f32 %v2293, %v2294
  %v2319 = vadd.f32 %v2318, %v2295
  %2320 = vadd.xlane.f32.xlu0 %v2319
  %v2321 = vpop.xlane.xlu0 %2320
  %v2322 = vadd.f32 %v2296, %v2297
  %v2323 = vadd.f32 %v2322, %v2298
  %2324 = vadd.xlane.f32.xlu0 %v2323
  %v2325 = vpop.xlane.xlu0 %2324
  %v2326 = vadd.f32 %v2299, %v2300
  %v2327 = vadd.f32 %v2326, %v2301
  %2328 = vadd.xlane.f32.xlu0 %v2327
  %v2329 = vpop.xlane.xlu0 %2328
  %v2330 = vadd.f32 %v2302, %v2303
  %v2331 = vadd.f32 %v2330, %v2304
  %2332 = vadd.xlane.f32.xlu0 %v2331
  %v2333 = vpop.xlane.xlu0 %2332
  %v2334 = vadd.f32 %v2305, %v2306
  %v2335 = vadd.f32 %v2334, %v2307
  %2336 = vadd.xlane.f32.xlu0 %v2335
  %v2337 = vpop.xlane.xlu0 %2336
  %v2338 = vadd.f32 %v2308, %v2309
  %v2339 = vadd.f32 %v2338, %v2310
  %2340 = vadd.xlane.f32.xlu0 %v2339
  %v2341 = vpop.xlane.xlu0 %2340
  %v2342 = vadd.f32 %v2311, %v2312
  %v2343 = vadd.f32 %v2342, %v2313
  %2344 = vadd.xlane.f32.xlu0 %v2343
  %v2345 = vpop.xlane.xlu0 %2344
  %v2346 = vmul.f32 %v2317, %v1222
  %v2347 = vmul.f32 %v2321, %v1222
  %v2348 = vmul.f32 %v2325, %v1222
  %v2349 = vmul.f32 %v2329, %v1222
  %v2350 = vmul.f32 %v2333, %v1222
  %v2351 = vmul.f32 %v2337, %v1222
  %v2352 = vmul.f32 %v2341, %v1222
  %v2353 = vmul.f32 %v2345, %v1222
  %v2354 = vmul.f32 %v2346, %v2346
  %v2355 = vmul.f32 %v2347, %v2347
  %v2356 = vmul.f32 %v2348, %v2348
  %v2357 = vmul.f32 %v2349, %v2349
  %v2358 = vsub.f32 %v2350, %v2354
  %v2359 = vsub.f32 %v2351, %v2355
  %v2360 = vsub.f32 %v2352, %v2356
  %v2361 = vsub.f32 %v2353, %v2357
  %v2362 = vmax.f32 %v2358, 0.0
  %v2363 = vmax.f32 %v2359, 0.0
  %v2364 = vmax.f32 %v2360, 0.0
  %v2365 = vmax.f32 %v2361, 0.0
  %s2366 = scalar_lea.vmem %s7, 32
  %v2367 = vld [vmem:[%s2366] sm:$0xff]
  %v2368 = vld [vmem:[%s2366 + $0x8] sm:$0xff]
  %v2369 = vld [vmem:[%s2366 + $0x10] sm:$0xff]
  %v2370 = vld [vmem:[%s2366 + $0x18] sm:$0xff]
  %v2371 = vadd.f32 %v2362, 1e-05
  %v2372 = vadd.f32 %v2363, 1e-05
  %v2373 = vadd.f32 %v2364, 1e-05
  %v2374 = vadd.f32 %v2365, 1e-05
  %v2375 = vrsqrt.pop %v2371
  %v2376 = vrsqrt.pop %v2372
  %v2377 = vrsqrt.pop %v2373
  %v2378 = vrsqrt.pop %v2374
  %v2379 = vmul.f32 %v2367, %v2375
  %v2380 = vmul.f32 %v2368, %v2376
  %v2381 = vmul.f32 %v2369, %v2377
  %v2382 = vmul.f32 %v2370, %v2378
  %s2383 = scalar_lea.vmem %s8, 32
  %v2384 = vld [vmem:[%s2383] sm:$0xff]
  %v2385 = vld [vmem:[%s2383 + $0x8] sm:$0xff]
  %v2386 = vld [vmem:[%s2383 + $0x10] sm:$0xff]
  %v2387 = vld [vmem:[%s2383 + $0x18] sm:$0xff]
  %v2388 = vmul.f32 %v2346, %v2379
  %v2389 = vmul.f32 %v2347, %v2380
  %v2390 = vmul.f32 %v2348, %v2381
  %v2391 = vmul.f32 %v2349, %v2382
  %v2392 = vsub.f32 %v2384, %v2388
  %v2393 = vsub.f32 %v2385, %v2389
  %v2394 = vsub.f32 %v2386, %v2390
  %v2395 = vsub.f32 %v2387, %v2391
  %2397 = vset.pattern.permute.xlu0 0
  %2398 = vperm.xlu0 %2397, %v2379
  %v2399 = vpop.permute.xlu0 %2398
  %2402 = vset.pattern.permute.xlu0 0
  %2403 = vperm.xlu0 %2402, %v2380
  %v2404 = vpop.permute.xlu0 %2403
  %2407 = vset.pattern.permute.xlu0 0
  %2408 = vperm.xlu0 %2407, %v2381
  %v2409 = vpop.permute.xlu0 %2408
  %2412 = vset.pattern.permute.xlu0 0
  %2413 = vperm.xlu0 %2412, %v2382
  %v2414 = vpop.permute.xlu0 %2413
  %v2416 = vmul.f32 %v2278, %v2399
  %v2417 = vmul.f32 %v2279, %v2399
  %v2418 = vmul.f32 %v2280, %v2399
  %v2419 = vmul.f32 %v2281, %v2404
  %v2420 = vmul.f32 %v2282, %v2404
  %v2421 = vmul.f32 %v2283, %v2404
  %v2422 = vmul.f32 %v2284, %v2409
  %v2423 = vmul.f32 %v2285, %v2409
  %v2424 = vmul.f32 %v2286, %v2409
  %v2425 = vmul.f32 %v2287, %v2414
  %v2426 = vmul.f32 %v2288, %v2414
  %v2427 = vmul.f32 %v2289, %v2414
  %2429 = vset.pattern.permute.xlu0 0
  %2430 = vperm.xlu0 %2429, %v2392
  %v2431 = vpop.permute.xlu0 %2430
  %2434 = vset.pattern.permute.xlu0 0
  %2435 = vperm.xlu0 %2434, %v2393
  %v2436 = vpop.permute.xlu0 %2435
  %2439 = vset.pattern.permute.xlu0 0
  %2440 = vperm.xlu0 %2439, %v2394
  %v2441 = vpop.permute.xlu0 %2440
  %2444 = vset.pattern.permute.xlu0 0
  %2445 = vperm.xlu0 %2444, %v2395
  %v2446 = vpop.permute.xlu0 %2445
  %v2448 = vadd.f32 %v2416, %v2431
  %v2449 = vadd.f32 %v2417, %v2431
  %v2450 = vadd.f32 %v2418, %v2431
  %v2451 = vadd.f32 %v2419, %v2436
  %v2452 = vadd.f32 %v2420, %v2436
  %v2453 = vadd.f32 %v2421, %v2436
  %v2454 = vadd.f32 %v2422, %v2441
  %v2455 = vadd.f32 %v2423, %v2441
  %v2456 = vadd.f32 %v2424, %v2441
  %v2457 = vadd.f32 %v2425, %v2446
  %v2458 = vadd.f32 %v2426, %v2446
  %v2459 = vadd.f32 %v2427, %v2446
  %v2460 = vmax.f32 %v2448, 0.0
  %v2461 = vmax.f32 %v2449, 0.0
  %v2462 = vmax.f32 %v2450, 0.0
  %v2463 = vmax.f32 %v2451, 0.0
  %v2464 = vmax.f32 %v2452, 0.0
  %v2465 = vmax.f32 %v2453, 0.0
  %v2466 = vmax.f32 %v2454, 0.0
  %v2467 = vmax.f32 %v2455, 0.0
  %v2468 = vmax.f32 %v2456, 0.0
  %v2469 = vmax.f32 %v2457, 0.0
  %v2470 = vmax.f32 %v2458, 0.0
  %v2471 = vmax.f32 %v2459, 0.0
  %v2472 = vmul.f32 %v2460, %v65
  %v2473 = vmul.f32 %v2461, %v69
  %v2474 = vmul.f32 %v2462, %v73
  %v2475 = vmul.f32 %v2463, %v65
  %v2476 = vmul.f32 %v2464, %v69
  %v2477 = vmul.f32 %v2465, %v73
  %v2478 = vmul.f32 %v2466, %v65
  %v2479 = vmul.f32 %v2467, %v69
  %v2480 = vmul.f32 %v2468, %v73
  %v2481 = vmul.f32 %v2469, %v65
  %v2482 = vmul.f32 %v2470, %v69
  %v2483 = vmul.f32 %v2471, %v73
  %v2484 = vpack.c.bf16 %v2475, %v2472
  %v2485 = vpack.c.bf16 %v2476, %v2473
  %v2486 = vpack.c.bf16 %v2477, %v2474
  %v2487 = vpack.c.bf16 %v2481, %v2478
  %v2488 = vpack.c.bf16 %v2482, %v2479
  %v2489 = vpack.c.bf16 %v2483, %v2480
  %v2496 = vunpack.c.l.b16 %v2484
  %v2497 = vunpack.c.l.b16 %v2485
  %v2498 = vunpack.c.l.b16 %v2486
  %v2499 = vunpack.c.h.b16 %v2484
  %v2500 = vunpack.c.h.b16 %v2485
  %v2501 = vunpack.c.h.b16 %v2486
  %v2502 = vunpack.c.l.b16 %v2487
  %v2503 = vunpack.c.l.b16 %v2488
  %v2504 = vunpack.c.l.b16 %v2489
  %v2505 = vunpack.c.h.b16 %v2487
  %v2506 = vunpack.c.h.b16 %v2488
  %v2507 = vunpack.c.h.b16 %v2489
  %v2508 = vpack.c.b16 %v2497, %v2496
  %v2509 = vpack.c.b16 %v2498, %v2498
  %v2510 = vpack.c.b16 %v2500, %v2499
  %v2511 = vpack.c.b16 %v2501, %v2501
  %v2512 = vpack.c.b16 %v2503, %v2502
  %v2513 = vpack.c.b16 %v2504, %v2504
  %v2514 = vpack.c.b16 %v2506, %v2505
  %v2515 = vpack.c.b16 %v2507, %v2507
  %2524 = vst [vmem:[#allocation2 + $0x4] sm:$0xff] %v2508
  %2525 = vst [vmem:[#allocation2 + $0xc] sm:$0xf] %v2509
  %2526 = vst [vmem:[#allocation2 + $0x18] sm:$0xff] %v2510
  %2527 = vst [vmem:[#allocation2 + $0x20] sm:$0xf] %v2511
  %2528 = vst [vmem:[#allocation2 + $0x2c] sm:$0xff] %v2512
  %2529 = vst [vmem:[#allocation2 + $0x34] sm:$0xf] %v2513
  %2530 = vst [vmem:[#allocation2 + $0x40] sm:$0xff] %v2514
  %2531 = vst [vmem:[#allocation2 + $0x48] sm:$0xf] %v2515
  %v2532 = vld [vmem:[#allocation2] sm:$0xff]
  %v2533 = vld [vmem:[#allocation2 + $0x8] sm:$0xff]
  %v2534 = vld [vmem:[#allocation2 + $0x14] sm:$0xff]
  %v2535 = vld [vmem:[#allocation2 + $0x1c] sm:$0xff]
  %v2536 = vld [vmem:[#allocation2 + $0x28] sm:$0xff]
  %v2537 = vld [vmem:[#allocation2 + $0x30] sm:$0xff]
  %v2538 = vld [vmem:[#allocation2 + $0x3c] sm:$0xff]
  %v2539 = vld [vmem:[#allocation2 + $0x44] sm:$0xff]
  %v2540 = vld [vmem:[%s3] sm:$0xf]
  %v2541 = vld [vmem:[%s3 + $0x4] sm:$0xf]
  %v2542 = vld [vmem:[%s3 + $0x8] sm:$0xf]
  %v2543 = vld [vmem:[%s3 + $0xc] sm:$0xf]
  %s2544 = scalar_lea.vmem %s3, 16
  %v2545 = vld [vmem:[%s2544] sm:$0xf]
  %v2546 = vld [vmem:[%s2544 + $0x4] sm:$0xf]
  %v2547 = vld [vmem:[%s2544 + $0x8] sm:$0xf]
  %v2548 = vld [vmem:[%s2544 + $0xc] sm:$0xf]
  %v2553 = vunpack.c.l.b16 %v2545
  %v2554 = vunpack.c.l.b16 %v2546
  %v2555 = vunpack.c.l.b16 %v2547
  %v2556 = vunpack.c.l.b16 %v2548
  %v2557 = vpack.c.b16 %v2554, %v2553
  %v2558 = vpack.c.b16 %v2556, %v2555
  %v2567 = vunpack.c.l.b16 %v2532
  %v2568 = vunpack.c.h.b16 %v2532
  %v2569 = vunpack.c.l.b16 %v2533
  %v2570 = vunpack.c.h.b16 %v2533
  %v2571 = vunpack.c.l.b16 %v2534
  %v2572 = vunpack.c.h.b16 %v2534
  %v2573 = vunpack.c.l.b16 %v2535
  %v2574 = vunpack.c.h.b16 %v2535
  %v2575 = vunpack.c.l.b16 %v2536
  %v2576 = vunpack.c.h.b16 %v2536
  %v2577 = vunpack.c.l.b16 %v2537
  %v2578 = vunpack.c.h.b16 %v2537
  %v2579 = vunpack.c.l.b16 %v2538
  %v2580 = vunpack.c.h.b16 %v2538
  %v2581 = vunpack.c.l.b16 %v2539
  %v2582 = vunpack.c.h.b16 %v2539
  %v2583 = vpack.c.b16 %v2571, %v2567
  %v2584 = vpack.c.b16 %v2572, %v2568
  %v2585 = vpack.c.b16 %v2573, %v2569
  %v2586 = vpack.c.b16 %v2574, %v2570
  %v2587 = vpack.c.b16 %v2579, %v2575
  %v2588 = vpack.c.b16 %v2580, %v2576
  %v2589 = vpack.c.b16 %v2581, %v2577
  %v2590 = vpack.c.b16 %v2582, %v2578
  %2591 = vrot.lane.b32.xlu0 %v2583, 1
  %v2592 = vpop.permute.xlu0 %2591
  %2593 = vrot.lane.b32.xlu0 %v2584, 1
  %v2594 = vpop.permute.xlu0 %2593
  %2595 = vrot.lane.b32.xlu0 %v2585, 1
  %v2596 = vpop.permute.xlu0 %2595
  %2597 = vrot.lane.b32.xlu0 %v2586, 1
  %v2598 = vpop.permute.xlu0 %2597
  %2599 = vrot.lane.b32.xlu0 %v2587, 1
  %v2600 = vpop.permute.xlu0 %2599
  %2601 = vrot.lane.b32.xlu0 %v2588, 1
  %v2602 = vpop.permute.xlu0 %2601
  %2603 = vrot.lane.b32.xlu0 %v2589, 1
  %v2604 = vpop.permute.xlu0 %2603
  %2605 = vrot.lane.b32.xlu0 %v2590, 1
  %v2606 = vpop.permute.xlu0 %2605
  %v2607 = vsel %vm250, %v2592, %v2594
  %v2608 = vsel %vm250, %v2594, %v2596
  %v2609 = vsel %vm250, %v2596, %v2598
  %v2610 = vsel %vm250, %v2600, %v2602
  %v2611 = vsel %vm250, %v2602, %v2604
  %v2612 = vsel %vm250, %v2604, %v2606
  %v2620 = vsel %vm1494, %v2557, 0
  %v2623 = vsel %vm1494, %v2558, 0
  %2625 = vmatprep.subr.bf16.mxu0 %v2608
  %2626 = vmatpush1.bf16.msra.mxu0 %v2607
  %2627 = vmatprep.subr.bf16.mxu0 %v2611
  %2628 = vmatpush1.bf16.msra.mxu0 %v2610
  %2629 = vmatprep.subr.bf16.mxu0 0
  %2630 = vmatpush1.bf16.msra.mxu0 0
  %2631 = vmatprep.subr.bf16.mxu0 0
  %2632 = vmatpush1.bf16.msra.mxu0 0
  %2633 = vmatprep.subr.bf16.mxu0 0
  %2634 = vmatpush1.bf16.msra.mxu0 0
  %2635 = vmatprep.subr.bf16.mxu0 0
  %2636 = vmatpush1.bf16.msra.mxu0 0
  %2637 = vmatprep.subr.bf16.mxu0 0
  %2638 = vmatpush1.bf16.msra.mxu0 0
  %2639 = vmatprep.subr.bf16.mxu0 0
  %2640 = vmatpush1.bf16.msra.mxu0 0
  %2641 = vmatprep.subr.bf16.mxu0 0
  %2642 = vmatpush1.bf16.msra.mxu0 0
  %2643 = vmatprep.subr.bf16.mxu0 0
  %2644 = vmatpush1.bf16.msra.mxu0 0
  %2645 = vmatprep.subr.bf16.mxu0 0
  %2646 = vmatpush1.bf16.msra.mxu0 0
  %2647 = vmatprep.subr.bf16.mxu0 0
  %2648 = vmatpush1.bf16.msra.mxu0 0
  %2649 = vmatprep.subr.bf16.mxu0 0
  %2650 = vmatpush1.bf16.msra.mxu0 0
  %2651 = vmatprep.subr.bf16.mxu0 0
  %2652 = vmatpush1.bf16.msra.mxu0 0
  %2653 = vmatprep.subr.bf16.mxu0 0
  %2654 = vmatpush1.bf16.msra.mxu0 0
  %2655 = vmatprep.subr.bf16.mxu0 0
  %2656 = vmatpush1.bf16.msra.mxu0 0
  %2657 = vmatprep.mubr.bf16.mxu0 0
  %2658 = vmatmul.mubr.bf16.gmra.mrb[0].mxu0 %v2620
  %v2659 = vpop.f32.mrb[0].mxu0
  %v2660 = vadd.f32 0.0, %v2659
  %v2661 = vpop.f32.mrb[0].mxu0
  %v2662 = vadd.f32 0.0, %v2661
  %v2663 = vpop.f32.mrb[0].mxu0
  %v2664 = vadd.f32 0.0, %v2663
  %v2665 = vpop.f32.mrb[0].mxu0
  %v2666 = vadd.f32 0.0, %v2665
  %2667 = vmatprep.mubr.bf16.mxu0 0
  %2668 = vmatmul.mubr.bf16.gmra.mrb[0].mxu0 %v2623
  %v2669 = vpop.f32.mrb[0].mxu0
  %v2670 = vadd.f32 0.0, %v2669
  %v2671 = vpop.f32.mrb[0].mxu0
  %v2672 = vadd.f32 0.0, %v2671
  %v2673 = vpop.f32.mrb[0].mxu0
  %v2674 = vadd.f32 0.0, %v2673
  %v2675 = vpop.f32.mrb[0].mxu0
  %v2676 = vadd.f32 0.0, %v2675
  %2677 = vdwg.mxu0
  %2678 = vmatprep.subr.bf16.mxu0 0
  %2679 = vmatpush1.bf16.msra.mxu0 %v2609
  %2680 = vmatprep.subr.bf16.mxu0 0
  %2681 = vmatpush1.bf16.msra.mxu0 %v2612
  %2682 = vmatprep.subr.bf16.mxu0 0
  %2683 = vmatpush1.bf16.msra.mxu0 0
  %2684 = vmatprep.subr.bf16.mxu0 0
  %2685 = vmatpush1.bf16.msra.mxu0 0
  %2686 = vmatprep.subr.bf16.mxu0 0
  %2687 = vmatpush1.bf16.msra.mxu0 0
  %2688 = vmatprep.subr.bf16.mxu0 0
  %2689 = vmatpush1.bf16.msra.mxu0 0
  %2690 = vmatprep.subr.bf16.mxu0 0
  %2691 = vmatpush1.bf16.msra.mxu0 0
  %2692 = vmatprep.subr.bf16.mxu0 0
  %2693 = vmatpush1.bf16.msra.mxu0 0
  %2694 = vmatprep.subr.bf16.mxu0 0
  %2695 = vmatpush1.bf16.msra.mxu0 0
  %2696 = vmatprep.subr.bf16.mxu0 0
  %2697 = vmatpush1.bf16.msra.mxu0 0
  %2698 = vmatprep.subr.bf16.mxu0 0
  %2699 = vmatpush1.bf16.msra.mxu0 0
  %2700 = vmatprep.subr.bf16.mxu0 0
  %2701 = vmatpush1.bf16.msra.mxu0 0
  %2702 = vmatprep.subr.bf16.mxu0 0
  %2703 = vmatpush1.bf16.msra.mxu0 0
  %2704 = vmatprep.subr.bf16.mxu0 0
  %2705 = vmatpush1.bf16.msra.mxu0 0
  %2706 = vmatprep.subr.bf16.mxu0 0
  %2707 = vmatpush1.bf16.msra.mxu0 0
  %2708 = vmatprep.subr.bf16.mxu0 0
  %2709 = vmatpush1.bf16.msra.mxu0 0
  %2710 = vmatprep.mubr.bf16.mxu0 0
  %2711 = vmatmul.mubr.bf16.gmra.mrb[0].mxu0 %v2620
  %v2712 = vpop.f32.mrb[0].mxu0
  %v2713 = vadd.f32 0.0, %v2712
  %v2714 = vpop.f32.mrb[0].mxu0
  %v2715 = vpop.f32.mrb[0].mxu0
  %v2716 = vadd.f32 0.0, %v2715
  %v2717 = vpop.f32.mrb[0].mxu0
  %2718 = vmatprep.mubr.bf16.mxu0 0
  %2719 = vmatmul.mubr.bf16.gmra.mrb[0].mxu0 %v2623
  %v2720 = vpop.f32.mrb[0].mxu0
  %v2721 = vadd.f32 0.0, %v2720
  %v2722 = vpop.f32.mrb[0].mxu0
  %v2723 = vpop.f32.mrb[0].mxu0
  %v2724 = vadd.f32 0.0, %v2723
  %v2725 = vpop.f32.mrb[0].mxu0
  %2726 = vdwg.mxu0
  %v2731 = vunpack.c.l.b16 %v2540
  %v2732 = vunpack.c.l.b16 %v2541
  %v2733 = vunpack.c.l.b16 %v2542
  %v2734 = vunpack.c.l.b16 %v2543
  %v2735 = vpack.c.b16 %v2732, %v2731
  %v2736 = vpack.c.b16 %v2734, %v2733
  %2737 = vrot.lane.b32.xlu0 %v2583, 2
  %v2738 = vpop.permute.xlu0 %2737
  %2739 = vrot.lane.b32.xlu0 %v2584, 2
  %v2740 = vpop.permute.xlu0 %2739
  %2741 = vrot.lane.b32.xlu0 %v2585, 2
  %v2742 = vpop.permute.xlu0 %2741
  %2743 = vrot.lane.b32.xlu0 %v2586, 2
  %v2744 = vpop.permute.xlu0 %2743
  %2745 = vrot.lane.b32.xlu0 %v2587, 2
  %v2746 = vpop.permute.xlu0 %2745
  %2747 = vrot.lane.b32.xlu0 %v2588, 2
  %v2748 = vpop.permute.xlu0 %2747
  %2749 = vrot.lane.b32.xlu0 %v2589, 2
  %v2750 = vpop.permute.xlu0 %2749
  %2751 = vrot.lane.b32.xlu0 %v2590, 2
  %v2752 = vpop.permute.xlu0 %2751
  %v2753 = vsel %vm419, %v2738, %v2740
  %v2754 = vsel %vm419, %v2740, %v2742
  %v2755 = vsel %vm419, %v2742, %v2744
  %v2756 = vsel %vm419, %v2746, %v2748
  %v2757 = vsel %vm419, %v2748, %v2750
  %v2758 = vsel %vm419, %v2750, %v2752
  %v2766 = vsel %vm1494, %v2735, 0
  %v2769 = vsel %vm1494, %v2736, 0
  %2771 = vmatprep.subr.bf16.mxu0 %v2754
  %2772 = vmatpush1.bf16.msra.mxu0 %v2753
  %2773 = vmatprep.subr.bf16.mxu0 %v2757
  %2774 = vmatpush1.bf16.msra.mxu0 %v2756
  %2775 = vmatprep.subr.bf16.mxu0 0
  %2776 = vmatpush1.bf16.msra.mxu0 0
  %2777 = vmatprep.subr.bf16.mxu0 0
  %2778 = vmatpush1.bf16.msra.mxu0 0
  %2779 = vmatprep.subr.bf16.mxu0 0
  %2780 = vmatpush1.bf16.msra.mxu0 0
  %2781 = vmatprep.subr.bf16.mxu0 0
  %2782 = vmatpush1.bf16.msra.mxu0 0
  %2783 = vmatprep.subr.bf16.mxu0 0
  %2784 = vmatpush1.bf16.msra.mxu0 0
  %2785 = vmatprep.subr.bf16.mxu0 0
  %2786 = vmatpush1.bf16.msra.mxu0 0
  %2787 = vmatprep.subr.bf16.mxu0 0
  %2788 = vmatpush1.bf16.msra.mxu0 0
  %2789 = vmatprep.subr.bf16.mxu0 0
  %2790 = vmatpush1.bf16.msra.mxu0 0
  %2791 = vmatprep.subr.bf16.mxu0 0
  %2792 = vmatpush1.bf16.msra.mxu0 0
  %2793 = vmatprep.subr.bf16.mxu0 0
  %2794 = vmatpush1.bf16.msra.mxu0 0
  %2795 = vmatprep.subr.bf16.mxu0 0
  %2796 = vmatpush1.bf16.msra.mxu0 0
  %2797 = vmatprep.subr.bf16.mxu0 0
  %2798 = vmatpush1.bf16.msra.mxu0 0
  %2799 = vmatprep.subr.bf16.mxu0 0
  %2800 = vmatpush1.bf16.msra.mxu0 0
  %2801 = vmatprep.subr.bf16.mxu0 0
  %2802 = vmatpush1.bf16.msra.mxu0 0
  %2803 = vmatprep.mubr.bf16.mxu0 0
  %2804 = vmatmul.mubr.bf16.gmra.mrb[0].mxu0 %v2766
  %v2805 = vpop.f32.mrb[0].mxu0
  %v2806 = vadd.f32 %v2660, %v2805
  %v2807 = vpop.f32.mrb[0].mxu0
  %v2808 = vadd.f32 %v2662, %v2807
  %v2809 = vpop.f32.mrb[0].mxu0
  %v2810 = vadd.f32 %v2664, %v2809
  %v2811 = vpop.f32.mrb[0].mxu0
  %v2812 = vadd.f32 %v2666, %v2811
  %2813 = vmatprep.mubr.bf16.mxu0 0
  %2814 = vmatmul.mubr.bf16.gmra.mrb[0].mxu0 %v2769
  %v2815 = vpop.f32.mrb[0].mxu0
  %v2816 = vadd.f32 %v2670, %v2815
  %v2817 = vpop.f32.mrb[0].mxu0
  %v2818 = vadd.f32 %v2672, %v2817
  %v2819 = vpop.f32.mrb[0].mxu0
  %v2820 = vadd.f32 %v2674, %v2819
  %v2821 = vpop.f32.mrb[0].mxu0
  %v2822 = vadd.f32 %v2676, %v2821
  %2823 = vdwg.mxu0
  %2824 = vmatprep.subr.bf16.mxu0 0
  %2825 = vmatpush1.bf16.msra.mxu0 %v2755
  %2826 = vmatprep.subr.bf16.mxu0 0
  %2827 = vmatpush1.bf16.msra.mxu0 %v2758
  %2828 = vmatprep.subr.bf16.mxu0 0
  %2829 = vmatpush1.bf16.msra.mxu0 0
  %2830 = vmatprep.subr.bf16.mxu0 0
  %2831 = vmatpush1.bf16.msra.mxu0 0
  %2832 = vmatprep.subr.bf16.mxu0 0
  %2833 = vmatpush1.bf16.msra.mxu0 0
  %2834 = vmatprep.subr.bf16.mxu0 0
  %2835 = vmatpush1.bf16.msra.mxu0 0
  %2836 = vmatprep.subr.bf16.mxu0 0
  %2837 = vmatpush1.bf16.msra.mxu0 0
  %2838 = vmatprep.subr.bf16.mxu0 0
  %2839 = vmatpush1.bf16.msra.mxu0 0
  %2840 = vmatprep.subr.bf16.mxu0 0
  %2841 = vmatpush1.bf16.msra.mxu0 0
  %2842 = vmatprep.subr.bf16.mxu0 0
  %2843 = vmatpush1.bf16.msra.mxu0 0
  %2844 = vmatprep.subr.bf16.mxu0 0
  %2845 = vmatpush1.bf16.msra.mxu0 0
  %2846 = vmatprep.subr.bf16.mxu0 0
  %2847 = vmatpush1.bf16.msra.mxu0 0
  %2848 = vmatprep.subr.bf16.mxu0 0
  %2849 = vmatpush1.bf16.msra.mxu0 0
  %2850 = vmatprep.subr.bf16.mxu0 0
  %2851 = vmatpush1.bf16.msra.mxu0 0
  %2852 = vmatprep.subr.bf16.mxu0 0
  %2853 = vmatpush1.bf16.msra.mxu0 0
  %2854 = vmatprep.subr.bf16.mxu0 0
  %2855 = vmatpush1.bf16.msra.mxu0 0
  %2856 = vmatprep.mubr.bf16.mxu0 0
  %2857 = vmatmul.mubr.bf16.gmra.mrb[0].mxu0 %v2766
  %v2858 = vpop.f32.mrb[0].mxu0
  %v2859 = vadd.f32 %v2713, %v2858
  %v2860 = vpop.f32.mrb[0].mxu0
  %v2861 = vpop.f32.mrb[0].mxu0
  %v2862 = vadd.f32 %v2716, %v2861
  %v2863 = vpop.f32.mrb[0].mxu0
  %2864 = vmatprep.mubr.bf16.mxu0 0
  %2865 = vmatmul.mubr.bf16.gmra.mrb[0].mxu0 %v2769
  %v2866 = vpop.f32.mrb[0].mxu0
  %v2867 = vadd.f32 %v2721, %v2866
  %v2868 = vpop.f32.mrb[0].mxu0
  %v2869 = vpop.f32.mrb[0].mxu0
  %v2870 = vadd.f32 %v2724, %v2869
  %v2871 = vpop.f32.mrb[0].mxu0
  %2872 = vdwg.mxu0
  %v2873 = vld [vmem:[#allocation2 + $0x4] sm:$0xff]
  %v2874 = vld [vmem:[#allocation2 + $0xc] sm:$0xf]
  %v2875 = vld [vmem:[#allocation2 + $0x18] sm:$0xff]
  %v2876 = vld [vmem:[#allocation2 + $0x20] sm:$0xf]
  %v2877 = vld [vmem:[#allocation2 + $0x2c] sm:$0xff]
  %v2878 = vld [vmem:[#allocation2 + $0x34] sm:$0xf]
  %v2879 = vld [vmem:[#allocation2 + $0x40] sm:$0xff]
  %v2880 = vld [vmem:[#allocation2 + $0x48] sm:$0xf]
  %s2881 = scalar_lea.vmem %s3, 32
  %v2882 = vld [vmem:[%s2881] sm:$0xf]
  %v2883 = vld [vmem:[%s2881 + $0x4] sm:$0xf]
  %v2884 = vld [vmem:[%s2881 + $0x8] sm:$0xf]
  %v2885 = vld [vmem:[%s2881 + $0xc] sm:$0xf]
  %v2890 = vunpack.c.l.b16 %v2882
  %v2891 = vunpack.c.l.b16 %v2883
  %v2892 = vunpack.c.l.b16 %v2884
  %v2893 = vunpack.c.l.b16 %v2885
  %v2894 = vpack.c.b16 %v2891, %v2890
  %v2895 = vpack.c.b16 %v2893, %v2892
  %v2904 = vunpack.c.l.b16 %v2873
  %v2905 = vunpack.c.h.b16 %v2873
  %v2906 = vunpack.c.l.b16 %v2874
  %v2907 = vunpack.c.l.b16 %v2875
  %v2908 = vunpack.c.h.b16 %v2875
  %v2909 = vunpack.c.l.b16 %v2876
  %v2910 = vunpack.c.l.b16 %v2877
  %v2911 = vunpack.c.h.b16 %v2877
  %v2912 = vunpack.c.l.b16 %v2878
  %v2913 = vunpack.c.l.b16 %v2879
  %v2914 = vunpack.c.h.b16 %v2879
  %v2915 = vunpack.c.l.b16 %v2880
  %v2916 = vpack.c.b16 %v2907, %v2904
  %v2917 = vpack.c.b16 %v2908, %v2905
  %v2918 = vpack.c.b16 %v2909, %v2906
  %v2919 = vpack.c.b16 %v2913, %v2910
  %v2920 = vpack.c.b16 %v2914, %v2911
  %v2921 = vpack.c.b16 %v2915, %v2912
  %v2929 = vsel %vm1494, %v2894, 0
  %v2932 = vsel %vm1494, %v2895, 0
  %2934 = vmatprep.subr.bf16.mxu0 %v2917
  %2935 = vmatpush1.bf16.msra.mxu0 %v2916
  %2936 = vmatprep.subr.bf16.mxu0 %v2920
  %2937 = vmatpush1.bf16.msra.mxu0 %v2919
  %2938 = vmatprep.subr.bf16.mxu0 0
  %2939 = vmatpush1.bf16.msra.mxu0 0
  %2940 = vmatprep.subr.bf16.mxu0 0
  %2941 = vmatpush1.bf16.msra.mxu0 0
  %2942 = vmatprep.subr.bf16.mxu0 0
  %2943 = vmatpush1.bf16.msra.mxu0 0
  %2944 = vmatprep.subr.bf16.mxu0 0
  %2945 = vmatpush1.bf16.msra.mxu0 0
  %2946 = vmatprep.subr.bf16.mxu0 0
  %2947 = vmatpush1.bf16.msra.mxu0 0
  %2948 = vmatprep.subr.bf16.mxu0 0
  %2949 = vmatpush1.bf16.msra.mxu0 0
  %2950 = vmatprep.subr.bf16.mxu0 0
  %2951 = vmatpush1.bf16.msra.mxu0 0
  %2952 = vmatprep.subr.bf16.mxu0 0
  %2953 = vmatpush1.bf16.msra.mxu0 0
  %2954 = vmatprep.subr.bf16.mxu0 0
  %2955 = vmatpush1.bf16.msra.mxu0 0
  %2956 = vmatprep.subr.bf16.mxu0 0
  %2957 = vmatpush1.bf16.msra.mxu0 0
  %2958 = vmatprep.subr.bf16.mxu0 0
  %2959 = vmatpush1.bf16.msra.mxu0 0
  %2960 = vmatprep.subr.bf16.mxu0 0
  %2961 = vmatpush1.bf16.msra.mxu0 0
  %2962 = vmatprep.subr.bf16.mxu0 0
  %2963 = vmatpush1.bf16.msra.mxu0 0
  %2964 = vmatprep.subr.bf16.mxu0 0
  %2965 = vmatpush1.bf16.msra.mxu0 0
  %2966 = vmatprep.mubr.bf16.mxu0 0
  %2967 = vmatmul.mubr.bf16.gmra.mrb[0].mxu0 %v2929
  %v2968 = vpop.f32.mrb[0].mxu0
  %v2969 = vadd.f32 0.0, %v2968
  %v2970 = vpop.f32.mrb[0].mxu0
  %v2971 = vadd.f32 0.0, %v2970
  %v2972 = vpop.f32.mrb[0].mxu0
  %v2973 = vadd.f32 0.0, %v2972
  %v2974 = vpop.f32.mrb[0].mxu0
  %v2975 = vadd.f32 0.0, %v2974
  %2976 = vmatprep.mubr.bf16.mxu0 0
  %2977 = vmatmul.mubr.bf16.gmra.mrb[0].mxu0 %v2932
  %v2978 = vpop.f32.mrb[0].mxu0
  %v2979 = vadd.f32 0.0, %v2978
  %v2980 = vpop.f32.mrb[0].mxu0
  %v2981 = vadd.f32 0.0, %v2980
  %v2982 = vpop.f32.mrb[0].mxu0
  %v2983 = vadd.f32 0.0, %v2982
  %v2984 = vpop.f32.mrb[0].mxu0
  %v2985 = vadd.f32 0.0, %v2984
  %2986 = vdwg.mxu0
  %2987 = vmatprep.subr.bf16.mxu0 0
  %2988 = vmatpush1.bf16.msra.mxu0 %v2918
  %2989 = vmatprep.subr.bf16.mxu0 0
  %2990 = vmatpush1.bf16.msra.mxu0 %v2921
  %2991 = vmatprep.subr.bf16.mxu0 0
  %2992 = vmatpush1.bf16.msra.mxu0 0
  %2993 = vmatprep.subr.bf16.mxu0 0
  %2994 = vmatpush1.bf16.msra.mxu0 0
  %2995 = vmatprep.subr.bf16.mxu0 0
  %2996 = vmatpush1.bf16.msra.mxu0 0
  %2997 = vmatprep.subr.bf16.mxu0 0
  %2998 = vmatpush1.bf16.msra.mxu0 0
  %2999 = vmatprep.subr.bf16.mxu0 0
  %3000 = vmatpush1.bf16.msra.mxu0 0
  %3001 = vmatprep.subr.bf16.mxu0 0
  %3002 = vmatpush1.bf16.msra.mxu0 0
  %3003 = vmatprep.subr.bf16.mxu0 0
  %3004 = vmatpush1.bf16.msra.mxu0 0
  %3005 = vmatprep.subr.bf16.mxu0 0
  %3006 = vmatpush1.bf16.msra.mxu0 0
  %3007 = vmatprep.subr.bf16.mxu0 0
  %3008 = vmatpush1.bf16.msra.mxu0 0
  %3009 = vmatprep.subr.bf16.mxu0 0
  %3010 = vmatpush1.bf16.msra.mxu0 0
  %3011 = vmatprep.subr.bf16.mxu0 0
  %3012 = vmatpush1.bf16.msra.mxu0 0
  %3013 = vmatprep.subr.bf16.mxu0 0
  %3014 = vmatpush1.bf16.msra.mxu0 0
  %3015 = vmatprep.subr.bf16.mxu0 0
  %3016 = vmatpush1.bf16.msra.mxu0 0
  %3017 = vmatprep.subr.bf16.mxu0 0
  %3018 = vmatpush1.bf16.msra.mxu0 0
  %3019 = vmatprep.mubr.bf16.mxu0 0
  %3020 = vmatmul.mubr.bf16.gmra.mrb[0].mxu0 %v2929
  %v3021 = vpop.f32.mrb[0].mxu0
  %v3022 = vadd.f32 0.0, %v3021
  %v3023 = vpop.f32.mrb[0].mxu0
  %v3024 = vpop.f32.mrb[0].mxu0
  %v3025 = vadd.f32 0.0, %v3024
  %v3026 = vpop.f32.mrb[0].mxu0
  %3027 = vmatprep.mubr.bf16.mxu0 0
  %3028 = vmatmul.mubr.bf16.gmra.mrb[0].mxu0 %v2932
  %v3029 = vpop.f32.mrb[0].mxu0
  %v3030 = vadd.f32 0.0, %v3029
  %v3031 = vpop.f32.mrb[0].mxu0
  %v3032 = vpop.f32.mrb[0].mxu0
  %v3033 = vadd.f32 0.0, %v3032
  %v3034 = vpop.f32.mrb[0].mxu0
  %3035 = vdwg.mxu0
  %v3036 = vadd.f32 %v2806, %v2969
  %v3037 = vadd.f32 %v2808, %v2971
  %v3038 = vadd.f32 %v2859, %v3022
  %v3039 = vadd.f32 %v2810, %v2973
  %v3040 = vadd.f32 %v2812, %v2975
  %v3041 = vadd.f32 %v2862, %v3025
  %v3042 = vadd.f32 %v2816, %v2979
  %v3043 = vadd.f32 %v2818, %v2981
  %v3044 = vadd.f32 %v2867, %v3030
  %v3045 = vadd.f32 %v2820, %v2983
  %v3046 = vadd.f32 %v2822, %v2985
  %v3047 = vadd.f32 %v2870, %v3033
  %v3048 = vld [vmem:[#allocation2 + $0x4] sm:$0xff]
  %v3049 = vld [vmem:[#allocation2 + $0xc] sm:$0xff]
  %v3050 = vld [vmem:[#allocation2 + $0x18] sm:$0xff]
  %v3051 = vld [vmem:[#allocation2 + $0x20] sm:$0xff]
  %v3052 = vld [vmem:[#allocation2 + $0x2c] sm:$0xff]
  %v3053 = vld [vmem:[#allocation2 + $0x34] sm:$0xff]
  %v3054 = vld [vmem:[#allocation2 + $0x40] sm:$0xff]
  %v3055 = vld [vmem:[#allocation2 + $0x48] sm:$0xff]
  %s3056 = scalar_lea.vmem %s3, 48
  %v3057 = vld [vmem:[%s3056] sm:$0xf]
  %v3058 = vld [vmem:[%s3056 + $0x4] sm:$0xf]
  %v3059 = vld [vmem:[%s3056 + $0x8] sm:$0xf]
  %v3060 = vld [vmem:[%s3056 + $0xc] sm:$0xf]
  %v3065 = vunpack.c.l.b16 %v3057
  %v3066 = vunpack.c.l.b16 %v3058
  %v3067 = vunpack.c.l.b16 %v3059
  %v3068 = vunpack.c.l.b16 %v3060
  %v3069 = vpack.c.b16 %v3066, %v3065
  %v3070 = vpack.c.b16 %v3068, %v3067
  %v3079 = vunpack.c.l.b16 %v3048
  %v3080 = vunpack.c.h.b16 %v3048
  %v3081 = vunpack.c.l.b16 %v3049
  %v3082 = vunpack.c.h.b16 %v3049
  %v3083 = vunpack.c.l.b16 %v3050
  %v3084 = vunpack.c.h.b16 %v3050
  %v3085 = vunpack.c.l.b16 %v3051
  %v3086 = vunpack.c.h.b16 %v3051
  %v3087 = vunpack.c.l.b16 %v3052
  %v3088 = vunpack.c.h.b16 %v3052
  %v3089 = vunpack.c.l.b16 %v3053
  %v3090 = vunpack.c.h.b16 %v3053
  %v3091 = vunpack.c.l.b16 %v3054
  %v3092 = vunpack.c.h.b16 %v3054
  %v3093 = vunpack.c.l.b16 %v3055
  %v3094 = vunpack.c.h.b16 %v3055
  %v3095 = vpack.c.b16 %v3083, %v3079
  %v3096 = vpack.c.b16 %v3084, %v3080
  %v3097 = vpack.c.b16 %v3085, %v3081
  %v3098 = vpack.c.b16 %v3086, %v3082
  %v3099 = vpack.c.b16 %v3091, %v3087
  %v3100 = vpack.c.b16 %v3092, %v3088
  %v3101 = vpack.c.b16 %v3093, %v3089
  %v3102 = vpack.c.b16 %v3094, %v3090
  %3103 = vrot.lane.b32.xlu0 %v3095, 127
  %v3104 = vpop.permute.xlu0 %3103
  %3105 = vrot.lane.b32.xlu0 %v3096, 127
  %v3106 = vpop.permute.xlu0 %3105
  %3107 = vrot.lane.b32.xlu0 %v3097, 127
  %v3108 = vpop.permute.xlu0 %3107
  %3109 = vrot.lane.b32.xlu0 %v3098, 127
  %v3110 = vpop.permute.xlu0 %3109
  %3111 = vrot.lane.b32.xlu0 %v3099, 127
  %v3112 = vpop.permute.xlu0 %3111
  %3113 = vrot.lane.b32.xlu0 %v3100, 127
  %v3114 = vpop.permute.xlu0 %3113
  %3115 = vrot.lane.b32.xlu0 %v3101, 127
  %v3116 = vpop.permute.xlu0 %3115
  %3117 = vrot.lane.b32.xlu0 %v3102, 127
  %v3118 = vpop.permute.xlu0 %3117
  %v3119 = vsel %vm837, %v3104, %v3106
  %v3120 = vsel %vm837, %v3106, %v3108
  %v3121 = vsel %vm837, %v3108, %v3110
  %v3122 = vsel %vm837, %v3112, %v3114
  %v3123 = vsel %vm837, %v3114, %v3116
  %v3124 = vsel %vm837, %v3116, %v3118
  %v3132 = vsel %vm1494, %v3069, 0
  %v3135 = vsel %vm1494, %v3070, 0
  %3137 = vmatprep.subr.bf16.mxu0 %v3120
  %3138 = vmatpush1.bf16.msra.mxu0 %v3119
  %3139 = vmatprep.subr.bf16.mxu0 %v3123
  %3140 = vmatpush1.bf16.msra.mxu0 %v3122
  %3141 = vmatprep.subr.bf16.mxu0 0
  %3142 = vmatpush1.bf16.msra.mxu0 0
  %3143 = vmatprep.subr.bf16.mxu0 0
  %3144 = vmatpush1.bf16.msra.mxu0 0
  %3145 = vmatprep.subr.bf16.mxu0 0
  %3146 = vmatpush1.bf16.msra.mxu0 0
  %3147 = vmatprep.subr.bf16.mxu0 0
  %3148 = vmatpush1.bf16.msra.mxu0 0
  %3149 = vmatprep.subr.bf16.mxu0 0
  %3150 = vmatpush1.bf16.msra.mxu0 0
  %3151 = vmatprep.subr.bf16.mxu0 0
  %3152 = vmatpush1.bf16.msra.mxu0 0
  %3153 = vmatprep.subr.bf16.mxu0 0
  %3154 = vmatpush1.bf16.msra.mxu0 0
  %3155 = vmatprep.subr.bf16.mxu0 0
  %3156 = vmatpush1.bf16.msra.mxu0 0
  %3157 = vmatprep.subr.bf16.mxu0 0
  %3158 = vmatpush1.bf16.msra.mxu0 0
  %3159 = vmatprep.subr.bf16.mxu0 0
  %3160 = vmatpush1.bf16.msra.mxu0 0
  %3161 = vmatprep.subr.bf16.mxu0 0
  %3162 = vmatpush1.bf16.msra.mxu0 0
  %3163 = vmatprep.subr.bf16.mxu0 0
  %3164 = vmatpush1.bf16.msra.mxu0 0
  %3165 = vmatprep.subr.bf16.mxu0 0
  %3166 = vmatpush1.bf16.msra.mxu0 0
  %3167 = vmatprep.subr.bf16.mxu0 0
  %3168 = vmatpush1.bf16.msra.mxu0 0
  %3169 = vmatprep.mubr.bf16.mxu0 0
  %3170 = vmatmul.mubr.bf16.gmra.mrb[0].mxu0 %v3132
  %v3171 = vpop.f32.mrb[0].mxu0
  %v3172 = vadd.f32 0.0, %v3171
  %v3173 = vpop.f32.mrb[0].mxu0
  %v3174 = vadd.f32 0.0, %v3173
  %v3175 = vpop.f32.mrb[0].mxu0
  %v3176 = vadd.f32 0.0, %v3175
  %v3177 = vpop.f32.mrb[0].mxu0
  %v3178 = vadd.f32 0.0, %v3177
  %3179 = vmatprep.mubr.bf16.mxu0 0
  %3180 = vmatmul.mubr.bf16.gmra.mrb[0].mxu0 %v3135
  %v3181 = vpop.f32.mrb[0].mxu0
  %v3182 = vadd.f32 0.0, %v3181
  %v3183 = vpop.f32.mrb[0].mxu0
  %v3184 = vadd.f32 0.0, %v3183
  %v3185 = vpop.f32.mrb[0].mxu0
  %v3186 = vadd.f32 0.0, %v3185
  %v3187 = vpop.f32.mrb[0].mxu0
  %v3188 = vadd.f32 0.0, %v3187
  %3189 = vdwg.mxu0
  %3190 = vmatprep.subr.bf16.mxu0 0
  %3191 = vmatpush1.bf16.msra.mxu0 %v3121
  %3192 = vmatprep.subr.bf16.mxu0 0
  %3193 = vmatpush1.bf16.msra.mxu0 %v3124
  %3194 = vmatprep.subr.bf16.mxu0 0
  %3195 = vmatpush1.bf16.msra.mxu0 0
  %3196 = vmatprep.subr.bf16.mxu0 0
  %3197 = vmatpush1.bf16.msra.mxu0 0
  %3198 = vmatprep.subr.bf16.mxu0 0
  %3199 = vmatpush1.bf16.msra.mxu0 0
  %3200 = vmatprep.subr.bf16.mxu0 0
  %3201 = vmatpush1.bf16.msra.mxu0 0
  %3202 = vmatprep.subr.bf16.mxu0 0
  %3203 = vmatpush1.bf16.msra.mxu0 0
  %3204 = vmatprep.subr.bf16.mxu0 0
  %3205 = vmatpush1.bf16.msra.mxu0 0
  %3206 = vmatprep.subr.bf16.mxu0 0
  %3207 = vmatpush1.bf16.msra.mxu0 0
  %3208 = vmatprep.subr.bf16.mxu0 0
  %3209 = vmatpush1.bf16.msra.mxu0 0
  %3210 = vmatprep.subr.bf16.mxu0 0
  %3211 = vmatpush1.bf16.msra.mxu0 0
  %3212 = vmatprep.subr.bf16.mxu0 0
  %3213 = vmatpush1.bf16.msra.mxu0 0
  %3214 = vmatprep.subr.bf16.mxu0 0
  %3215 = vmatpush1.bf16.msra.mxu0 0
  %3216 = vmatprep.subr.bf16.mxu0 0
  %3217 = vmatpush1.bf16.msra.mxu0 0
  %3218 = vmatprep.subr.bf16.mxu0 0
  %3219 = vmatpush1.bf16.msra.mxu0 0
  %3220 = vmatprep.subr.bf16.mxu0 0
  %3221 = vmatpush1.bf16.msra.mxu0 0
  %3222 = vmatprep.mubr.bf16.mxu0 0
  %3223 = vmatmul.mubr.bf16.gmra.mrb[0].mxu0 %v3132
  %v3224 = vpop.f32.mrb[0].mxu0
  %v3225 = vadd.f32 0.0, %v3224
  %v3226 = vpop.f32.mrb[0].mxu0
  %v3227 = vpop.f32.mrb[0].mxu0
  %v3228 = vadd.f32 0.0, %v3227
  %v3229 = vpop.f32.mrb[0].mxu0
  %3230 = vmatprep.mubr.bf16.mxu0 0
  %3231 = vmatmul.mubr.bf16.gmra.mrb[0].mxu0 %v3135
  %v3232 = vpop.f32.mrb[0].mxu0
  %v3233 = vadd.f32 0.0, %v3232
  %v3234 = vpop.f32.mrb[0].mxu0
  %v3235 = vpop.f32.mrb[0].mxu0
  %v3236 = vadd.f32 0.0, %v3235
  %v3237 = vpop.f32.mrb[0].mxu0
  %3238 = vdwg.mxu0
  %v3239 = vadd.f32 %v3036, %v3172
  %v3240 = vadd.f32 %v3037, %v3174
  %v3241 = vadd.f32 %v3038, %v3225
  %v3242 = vadd.f32 %v3039, %v3176
  %v3243 = vadd.f32 %v3040, %v3178
  %v3244 = vadd.f32 %v3041, %v3228
  %v3245 = vadd.f32 %v3042, %v3182
  %v3246 = vadd.f32 %v3043, %v3184
  %v3247 = vadd.f32 %v3044, %v3233
  %v3248 = vadd.f32 %v3045, %v3186
  %v3249 = vadd.f32 %v3046, %v3188
  %v3250 = vadd.f32 %v3047, %v3236
  %s3251 = scalar_lea.vmem %s3, 64
  %v3252 = vld [vmem:[%s3251] sm:$0xf]
  %v3253 = vld [vmem:[%s3251 + $0x4] sm:$0xf]
  %v3254 = vld [vmem:[%s3251 + $0x8] sm:$0xf]
  %v3255 = vld [vmem:[%s3251 + $0xc] sm:$0xf]
  %v3260 = vunpack.c.l.b16 %v3252
  %v3261 = vunpack.c.l.b16 %v3253
  %v3262 = vunpack.c.l.b16 %v3254
  %v3263 = vunpack.c.l.b16 %v3255
  %v3264 = vpack.c.b16 %v3261, %v3260
  %v3265 = vpack.c.b16 %v3263, %v3262
  %3266 = vrot.lane.b32.xlu0 %v3095, 126
  %v3267 = vpop.permute.xlu0 %3266
  %3268 = vrot.lane.b32.xlu0 %v3096, 126
  %v3269 = vpop.permute.xlu0 %3268
  %3270 = vrot.lane.b32.xlu0 %v3097, 126
  %v3271 = vpop.permute.xlu0 %3270
  %3272 = vrot.lane.b32.xlu0 %v3098, 126
  %v3273 = vpop.permute.xlu0 %3272
  %3274 = vrot.lane.b32.xlu0 %v3099, 126
  %v3275 = vpop.permute.xlu0 %3274
  %3276 = vrot.lane.b32.xlu0 %v3100, 126
  %v3277 = vpop.permute.xlu0 %3276
  %3278 = vrot.lane.b32.xlu0 %v3101, 126
  %v3279 = vpop.permute.xlu0 %3278
  %3280 = vrot.lane.b32.xlu0 %v3102, 126
  %v3281 = vpop.permute.xlu0 %3280
  %v3282 = vsel %vm1021, %v3267, %v3269
  %v3283 = vsel %vm1021, %v3269, %v3271
  %v3284 = vsel %vm1021, %v3271, %v3273
  %v3285 = vsel %vm1021, %v3275, %v3277
  %v3286 = vsel %vm1021, %v3277, %v3279
  %v3287 = vsel %vm1021, %v3279, %v3281
  %v3295 = vsel %vm1494, %v3264, 0
  %v3298 = vsel %vm1494, %v3265, 0
  %3300 = vmatprep.subr.bf16.mxu0 %v3283
  %3301 = vmatpush1.bf16.msra.mxu0 %v3282
  %3302 = vmatprep.subr.bf16.mxu0 %v3286
  %3303 = vmatpush1.bf16.msra.mxu0 %v3285
  %3304 = vmatprep.subr.bf16.mxu0 0
  %3305 = vmatpush1.bf16.msra.mxu0 0
  %3306 = vmatprep.subr.bf16.mxu0 0
  %3307 = vmatpush1.bf16.msra.mxu0 0
  %3308 = vmatprep.subr.bf16.mxu0 0
  %3309 = vmatpush1.bf16.msra.mxu0 0
  %3310 = vmatprep.subr.bf16.mxu0 0
  %3311 = vmatpush1.bf16.msra.mxu0 0
  %3312 = vmatprep.subr.bf16.mxu0 0
  %3313 = vmatpush1.bf16.msra.mxu0 0
  %3314 = vmatprep.subr.bf16.mxu0 0
  %3315 = vmatpush1.bf16.msra.mxu0 0
  %3316 = vmatprep.subr.bf16.mxu0 0
  %3317 = vmatpush1.bf16.msra.mxu0 0
  %3318 = vmatprep.subr.bf16.mxu0 0
  %3319 = vmatpush1.bf16.msra.mxu0 0
  %3320 = vmatprep.subr.bf16.mxu0 0
  %3321 = vmatpush1.bf16.msra.mxu0 0
  %3322 = vmatprep.subr.bf16.mxu0 0
  %3323 = vmatpush1.bf16.msra.mxu0 0
  %3324 = vmatprep.subr.bf16.mxu0 0
  %3325 = vmatpush1.bf16.msra.mxu0 0
  %3326 = vmatprep.subr.bf16.mxu0 0
  %3327 = vmatpush1.bf16.msra.mxu0 0
  %3328 = vmatprep.subr.bf16.mxu0 0
  %3329 = vmatpush1.bf16.msra.mxu0 0
  %3330 = vmatprep.subr.bf16.mxu0 0
  %3331 = vmatpush1.bf16.msra.mxu0 0
  %3332 = vmatprep.mubr.bf16.mxu0 0
  %3333 = vmatmul.mubr.bf16.gmra.mrb[0].mxu0 %v3295
  %v3334 = vpop.f32.mrb[0].mxu0
  %v3335 = vadd.f32 0.0, %v3334
  %v3336 = vpop.f32.mrb[0].mxu0
  %v3337 = vadd.f32 0.0, %v3336
  %v3338 = vpop.f32.mrb[0].mxu0
  %v3339 = vadd.f32 0.0, %v3338
  %v3340 = vpop.f32.mrb[0].mxu0
  %v3341 = vadd.f32 0.0, %v3340
  %3342 = vmatprep.mubr.bf16.mxu0 0
  %3343 = vmatmul.mubr.bf16.gmra.mrb[0].mxu0 %v3298
  %v3344 = vpop.f32.mrb[0].mxu0
  %v3345 = vadd.f32 0.0, %v3344
  %v3346 = vpop.f32.mrb[0].mxu0
  %v3347 = vadd.f32 0.0, %v3346
  %v3348 = vpop.f32.mrb[0].mxu0
  %v3349 = vadd.f32 0.0, %v3348
  %v3350 = vpop.f32.mrb[0].mxu0
  %v3351 = vadd.f32 0.0, %v3350
  %3352 = vdwg.mxu0
  %3353 = vmatprep.subr.bf16.mxu0 0
  %3354 = vmatpush1.bf16.msra.mxu0 %v3284
  %3355 = vmatprep.subr.bf16.mxu0 0
  %3356 = vmatpush1.bf16.msra.mxu0 %v3287
  %3357 = vmatprep.subr.bf16.mxu0 0
  %3358 = vmatpush1.bf16.msra.mxu0 0
  %3359 = vmatprep.subr.bf16.mxu0 0
  %3360 = vmatpush1.bf16.msra.mxu0 0
  %3361 = vmatprep.subr.bf16.mxu0 0
  %3362 = vmatpush1.bf16.msra.mxu0 0
  %3363 = vmatprep.subr.bf16.mxu0 0
  %3364 = vmatpush1.bf16.msra.mxu0 0
  %3365 = vmatprep.subr.bf16.mxu0 0
  %3366 = vmatpush1.bf16.msra.mxu0 0
  %3367 = vmatprep.subr.bf16.mxu0 0
  %3368 = vmatpush1.bf16.msra.mxu0 0
  %3369 = vmatprep.subr.bf16.mxu0 0
  %3370 = vmatpush1.bf16.msra.mxu0 0
  %3371 = vmatprep.subr.bf16.mxu0 0
  %3372 = vmatpush1.bf16.msra.mxu0 0
  %3373 = vmatprep.subr.bf16.mxu0 0
  %3374 = vmatpush1.bf16.msra.mxu0 0
  %3375 = vmatprep.subr.bf16.mxu0 0
  %3376 = vmatpush1.bf16.msra.mxu0 0
  %3377 = vmatprep.subr.bf16.mxu0 0
  %3378 = vmatpush1.bf16.msra.mxu0 0
  %3379 = vmatprep.subr.bf16.mxu0 0
  %3380 = vmatpush1.bf16.msra.mxu0 0
  %3381 = vmatprep.subr.bf16.mxu0 0
  %3382 = vmatpush1.bf16.msra.mxu0 0
  %3383 = vmatprep.subr.bf16.mxu0 0
  %3384 = vmatpush1.bf16.msra.mxu0 0
  %3385 = vmatprep.mubr.bf16.mxu0 0
  %3386 = vmatmul.mubr.bf16.gmra.mrb[0].mxu0 %v3295
  %v3387 = vpop.f32.mrb[0].mxu0
  %v3388 = vadd.f32 0.0, %v3387
  %v3389 = vpop.f32.mrb[0].mxu0
  %v3390 = vpop.f32.mrb[0].mxu0
  %v3391 = vadd.f32 0.0, %v3390
  %v3392 = vpop.f32.mrb[0].mxu0
  %3393 = vmatprep.mubr.bf16.mxu0 0
  %3394 = vmatmul.mubr.bf16.gmra.mrb[0].mxu0 %v3298
  %v3395 = vpop.f32.mrb[0].mxu0
  %v3396 = vadd.f32 0.0, %v3395
  %v3397 = vpop.f32.mrb[0].mxu0
  %v3398 = vpop.f32.mrb[0].mxu0
  %v3399 = vadd.f32 0.0, %v3398
  %v3400 = vpop.f32.mrb[0].mxu0
  %3401 = vdwg.mxu0
  %v3402 = vadd.f32 %v3239, %v3335
  %v3403 = vadd.f32 %v3240, %v3337
  %v3404 = vadd.f32 %v3241, %v3388
  %v3405 = vadd.f32 %v3242, %v3339
  %v3406 = vadd.f32 %v3243, %v3341
  %v3407 = vadd.f32 %v3244, %v3391
  %v3408 = vadd.f32 %v3245, %v3345
  %v3409 = vadd.f32 %v3246, %v3347
  %v3410 = vadd.f32 %v3247, %v3396
  %v3411 = vadd.f32 %v3248, %v3349
  %v3412 = vadd.f32 %v3249, %v3351
  %v3413 = vadd.f32 %v3250, %v3399
  %v3414 = vmul.f32 %v3402, %v65
  %v3415 = vmul.f32 %v3403, %v69
  %v3416 = vmul.f32 %v3404, %v73
  %v3417 = vmul.f32 %v3405, %v65
  %v3418 = vmul.f32 %v3406, %v69
  %v3419 = vmul.f32 %v3407, %v73
  %v3420 = vmul.f32 %v3408, %v65
  %v3421 = vmul.f32 %v3409, %v69
  %v3422 = vmul.f32 %v3410, %v73
  %v3423 = vmul.f32 %v3411, %v65
  %v3424 = vmul.f32 %v3412, %v69
  %v3425 = vmul.f32 %v3413, %v73
  %v3426 = vmul.f32 %v3414, %v3414
  %v3427 = vmul.f32 %v3415, %v3415
  %v3428 = vmul.f32 %v3416, %v3416
  %v3429 = vmul.f32 %v3417, %v3417
  %v3430 = vmul.f32 %v3418, %v3418
  %v3431 = vmul.f32 %v3419, %v3419
  %v3432 = vmul.f32 %v3420, %v3420
  %v3433 = vmul.f32 %v3421, %v3421
  %v3434 = vmul.f32 %v3422, %v3422
  %v3435 = vmul.f32 %v3423, %v3423
  %v3436 = vmul.f32 %v3424, %v3424
  %v3437 = vmul.f32 %v3425, %v3425
  %v3438 = vadd.f32 %v3414, %v3415
  %v3439 = vadd.f32 %v3438, %v3416
  %3440 = vadd.xlane.f32.xlu0 %v3439
  %v3441 = vpop.xlane.xlu0 %3440
  %v3442 = vadd.f32 %v3417, %v3418
  %v3443 = vadd.f32 %v3442, %v3419
  %3444 = vadd.xlane.f32.xlu0 %v3443
  %v3445 = vpop.xlane.xlu0 %3444
  %v3446 = vadd.f32 %v3420, %v3421
  %v3447 = vadd.f32 %v3446, %v3422
  %3448 = vadd.xlane.f32.xlu0 %v3447
  %v3449 = vpop.xlane.xlu0 %3448
  %v3450 = vadd.f32 %v3423, %v3424
  %v3451 = vadd.f32 %v3450, %v3425
  %3452 = vadd.xlane.f32.xlu0 %v3451
  %v3453 = vpop.xlane.xlu0 %3452
  %v3454 = vadd.f32 %v3426, %v3427
  %v3455 = vadd.f32 %v3454, %v3428
  %3456 = vadd.xlane.f32.xlu0 %v3455
  %v3457 = vpop.xlane.xlu0 %3456
  %v3458 = vadd.f32 %v3429, %v3430
  %v3459 = vadd.f32 %v3458, %v3431
  %3460 = vadd.xlane.f32.xlu0 %v3459
  %v3461 = vpop.xlane.xlu0 %3460
  %v3462 = vadd.f32 %v3432, %v3433
  %v3463 = vadd.f32 %v3462, %v3434
  %3464 = vadd.xlane.f32.xlu0 %v3463
  %v3465 = vpop.xlane.xlu0 %3464
  %v3466 = vadd.f32 %v3435, %v3436
  %v3467 = vadd.f32 %v3466, %v3437
  %3468 = vadd.xlane.f32.xlu0 %v3467
  %v3469 = vpop.xlane.xlu0 %3468
  %v3470 = vmul.f32 %v3441, %v1222
  %v3471 = vmul.f32 %v3445, %v1222
  %v3472 = vmul.f32 %v3449, %v1222
  %v3473 = vmul.f32 %v3453, %v1222
  %v3474 = vmul.f32 %v3457, %v1222
  %v3475 = vmul.f32 %v3461, %v1222
  %v3476 = vmul.f32 %v3465, %v1222
  %v3477 = vmul.f32 %v3469, %v1222
  %v3478 = vmul.f32 %v3470, %v3470
  %v3479 = vmul.f32 %v3471, %v3471
  %v3480 = vmul.f32 %v3472, %v3472
  %v3481 = vmul.f32 %v3473, %v3473
  %v3482 = vsub.f32 %v3474, %v3478
  %v3483 = vsub.f32 %v3475, %v3479
  %v3484 = vsub.f32 %v3476, %v3480
  %v3485 = vsub.f32 %v3477, %v3481
  %v3486 = vmax.f32 %v3482, 0.0
  %v3487 = vmax.f32 %v3483, 0.0
  %v3488 = vmax.f32 %v3484, 0.0
  %v3489 = vmax.f32 %v3485, 0.0
  %s3490 = scalar_lea.vmem %s7, 64
  %v3491 = vld [vmem:[%s3490] sm:$0xff]
  %v3492 = vld [vmem:[%s3490 + $0x8] sm:$0xff]
  %v3493 = vld [vmem:[%s3490 + $0x10] sm:$0xff]
  %v3494 = vld [vmem:[%s3490 + $0x18] sm:$0xff]
  %v3495 = vadd.f32 %v3486, 1e-05
  %v3496 = vadd.f32 %v3487, 1e-05
  %v3497 = vadd.f32 %v3488, 1e-05
  %v3498 = vadd.f32 %v3489, 1e-05
  %v3499 = vrsqrt.pop %v3495
  %v3500 = vrsqrt.pop %v3496
  %v3501 = vrsqrt.pop %v3497
  %v3502 = vrsqrt.pop %v3498
  %v3503 = vmul.f32 %v3491, %v3499
  %v3504 = vmul.f32 %v3492, %v3500
  %v3505 = vmul.f32 %v3493, %v3501
  %v3506 = vmul.f32 %v3494, %v3502
  %s3507 = scalar_lea.vmem %s8, 64
  %v3508 = vld [vmem:[%s3507] sm:$0xff]
  %v3509 = vld [vmem:[%s3507 + $0x8] sm:$0xff]
  %v3510 = vld [vmem:[%s3507 + $0x10] sm:$0xff]
  %v3511 = vld [vmem:[%s3507 + $0x18] sm:$0xff]
  %v3512 = vmul.f32 %v3470, %v3503
  %v3513 = vmul.f32 %v3471, %v3504
  %v3514 = vmul.f32 %v3472, %v3505
  %v3515 = vmul.f32 %v3473, %v3506
  %v3516 = vsub.f32 %v3508, %v3512
  %v3517 = vsub.f32 %v3509, %v3513
  %v3518 = vsub.f32 %v3510, %v3514
  %v3519 = vsub.f32 %v3511, %v3515
  %3521 = vset.pattern.permute.xlu0 0
  %3522 = vperm.xlu0 %3521, %v3503
  %v3523 = vpop.permute.xlu0 %3522
  %3526 = vset.pattern.permute.xlu0 0
  %3527 = vperm.xlu0 %3526, %v3504
  %v3528 = vpop.permute.xlu0 %3527
  %3531 = vset.pattern.permute.xlu0 0
  %3532 = vperm.xlu0 %3531, %v3505
  %v3533 = vpop.permute.xlu0 %3532
  %3536 = vset.pattern.permute.xlu0 0
  %3537 = vperm.xlu0 %3536, %v3506
  %v3538 = vpop.permute.xlu0 %3537
  %v3540 = vmul.f32 %v3402, %v3523
  %v3541 = vmul.f32 %v3403, %v3523
  %v3542 = vmul.f32 %v3404, %v3523
  %v3543 = vmul.f32 %v3405, %v3528
  %v3544 = vmul.f32 %v3406, %v3528
  %v3545 = vmul.f32 %v3407, %v3528
  %v3546 = vmul.f32 %v3408, %v3533
  %v3547 = vmul.f32 %v3409, %v3533
  %v3548 = vmul.f32 %v3410, %v3533
  %v3549 = vmul.f32 %v3411, %v3538
  %v3550 = vmul.f32 %v3412, %v3538
  %v3551 = vmul.f32 %v3413, %v3538
  %3553 = vset.pattern.permute.xlu0 0
  %3554 = vperm.xlu0 %3553, %v3516
  %v3555 = vpop.permute.xlu0 %3554
  %3558 = vset.pattern.permute.xlu0 0
  %3559 = vperm.xlu0 %3558, %v3517
  %v3560 = vpop.permute.xlu0 %3559
  %3563 = vset.pattern.permute.xlu0 0
  %3564 = vperm.xlu0 %3563, %v3518
  %v3565 = vpop.permute.xlu0 %3564
  %3568 = vset.pattern.permute.xlu0 0
  %3569 = vperm.xlu0 %3568, %v3519
  %v3570 = vpop.permute.xlu0 %3569
  %v3572 = vadd.f32 %v3540, %v3555
  %v3573 = vadd.f32 %v3541, %v3555
  %v3574 = vadd.f32 %v3542, %v3555
  %v3575 = vadd.f32 %v3543, %v3560
  %v3576 = vadd.f32 %v3544, %v3560
  %v3577 = vadd.f32 %v3545, %v3560
  %v3578 = vadd.f32 %v3546, %v3565
  %v3579 = vadd.f32 %v3547, %v3565
  %v3580 = vadd.f32 %v3548, %v3565
  %v3581 = vadd.f32 %v3549, %v3570
  %v3582 = vadd.f32 %v3550, %v3570
  %v3583 = vadd.f32 %v3551, %v3570
  %v3584 = vmax.f32 %v3572, 0.0
  %v3585 = vmax.f32 %v3573, 0.0
  %v3586 = vmax.f32 %v3574, 0.0
  %v3587 = vmax.f32 %v3575, 0.0
  %v3588 = vmax.f32 %v3576, 0.0
  %v3589 = vmax.f32 %v3577, 0.0
  %v3590 = vmax.f32 %v3578, 0.0
  %v3591 = vmax.f32 %v3579, 0.0
  %v3592 = vmax.f32 %v3580, 0.0
  %v3593 = vmax.f32 %v3581, 0.0
  %v3594 = vmax.f32 %v3582, 0.0
  %v3595 = vmax.f32 %v3583, 0.0
  %v3596 = vmul.f32 %v3584, %v65
  %v3597 = vmul.f32 %v3585, %v69
  %v3598 = vmul.f32 %v3586, %v73
  %v3599 = vmul.f32 %v3587, %v65
  %v3600 = vmul.f32 %v3588, %v69
  %v3601 = vmul.f32 %v3589, %v73
  %v3602 = vmul.f32 %v3590, %v65
  %v3603 = vmul.f32 %v3591, %v69
  %v3604 = vmul.f32 %v3592, %v73
  %v3605 = vmul.f32 %v3593, %v65
  %v3606 = vmul.f32 %v3594, %v69
  %v3607 = vmul.f32 %v3595, %v73
  %v3608 = vpack.c.bf16 %v3599, %v3596
  %v3609 = vpack.c.bf16 %v3600, %v3597
  %v3610 = vpack.c.bf16 %v3601, %v3598
  %v3611 = vpack.c.bf16 %v3605, %v3602
  %v3612 = vpack.c.bf16 %v3606, %v3603
  %v3613 = vpack.c.bf16 %v3607, %v3604
  %v3620 = vunpack.c.l.b16 %v3608
  %v3621 = vunpack.c.l.b16 %v3609
  %v3622 = vunpack.c.l.b16 %v3610
  %v3623 = vunpack.c.h.b16 %v3608
  %v3624 = vunpack.c.h.b16 %v3609
  %v3625 = vunpack.c.h.b16 %v3610
  %v3626 = vunpack.c.l.b16 %v3611
  %v3627 = vunpack.c.l.b16 %v3612
  %v3628 = vunpack.c.l.b16 %v3613
  %v3629 = vunpack.c.h.b16 %v3611
  %v3630 = vunpack.c.h.b16 %v3612
  %v3631 = vunpack.c.h.b16 %v3613
  %v3632 = vpack.c.b16 %v3621, %v3620
  %v3633 = vpack.c.b16 %v3622, %v3622
  %v3634 = vpack.c.b16 %v3624, %v3623
  %v3635 = vpack.c.b16 %v3625, %v3625
  %v3636 = vpack.c.b16 %v3627, %v3626
  %v3637 = vpack.c.b16 %v3628, %v3628
  %v3638 = vpack.c.b16 %v3630, %v3629
  %v3639 = vpack.c.b16 %v3631, %v3631
  %3648 = vst [vmem:[#allocation2 + $0x4] sm:$0xff] %v3632
  %3649 = vst [vmem:[#allocation2 + $0xc] sm:$0xf] %v3633
  %3650 = vst [vmem:[#allocation2 + $0x18] sm:$0xff] %v3634
  %3651 = vst [vmem:[#allocation2 + $0x20] sm:$0xf] %v3635
  %3652 = vst [vmem:[#allocation2 + $0x2c] sm:$0xff] %v3636
  %3653 = vst [vmem:[#allocation2 + $0x34] sm:$0xf] %v3637
  %3654 = vst [vmem:[#allocation2 + $0x40] sm:$0xff] %v3638
  %3655 = vst [vmem:[#allocation2 + $0x48] sm:$0xf] %v3639
  %v3656 = vld [vmem:[#allocation2] sm:$0xff]
  %v3657 = vld [vmem:[#allocation2 + $0x8] sm:$0xff]
  %v3658 = vld [vmem:[#allocation2 + $0x14] sm:$0xff]
  %v3659 = vld [vmem:[#allocation2 + $0x1c] sm:$0xff]
  %v3660 = vld [vmem:[#allocation2 + $0x28] sm:$0xff]
  %v3661 = vld [vmem:[#allocation2 + $0x30] sm:$0xff]
  %v3662 = vld [vmem:[#allocation2 + $0x3c] sm:$0xff]
  %v3663 = vld [vmem:[#allocation2 + $0x44] sm:$0xff]
  %v3664 = vld [vmem:[%s4] sm:$0xf]
  %v3665 = vld [vmem:[%s4 + $0x4] sm:$0xf]
  %v3666 = vld [vmem:[%s4 + $0x8] sm:$0xf]
  %v3667 = vld [vmem:[%s4 + $0xc] sm:$0xf]
  %v3668 = vld [vmem:[#allocation2 + $0x4] sm:$0xff]
  %v3669 = vld [vmem:[#allocation2 + $0xc] sm:$0xf]
  %v3670 = vld [vmem:[#allocation2 + $0x18] sm:$0xff]
  %v3671 = vld [vmem:[#allocation2 + $0x20] sm:$0xf]
  %v3672 = vld [vmem:[#allocation2 + $0x2c] sm:$0xff]
  %v3673 = vld [vmem:[#allocation2 + $0x34] sm:$0xf]
  %v3674 = vld [vmem:[#allocation2 + $0x40] sm:$0xff]
  %v3675 = vld [vmem:[#allocation2 + $0x48] sm:$0xf]
  %s3676 = scalar_lea.vmem %s4, 16
  %v3677 = vld [vmem:[%s3676] sm:$0xf]
  %v3678 = vld [vmem:[%s3676 + $0x4] sm:$0xf]
  %v3679 = vld [vmem:[%s3676 + $0x8] sm:$0xf]
  %v3680 = vld [vmem:[%s3676 + $0xc] sm:$0xf]
  %v3685 = vunpack.c.l.b16 %v3677
  %v3686 = vunpack.c.l.b16 %v3678
  %v3687 = vunpack.c.l.b16 %v3679
  %v3688 = vunpack.c.l.b16 %v3680
  %v3689 = vpack.c.b16 %v3686, %v3685
  %v3690 = vpack.c.b16 %v3688, %v3687
  %v3699 = vunpack.c.l.b16 %v3668
  %v3700 = vunpack.c.h.b16 %v3668
  %v3701 = vunpack.c.l.b16 %v3669
  %v3702 = vunpack.c.l.b16 %v3670
  %v3703 = vunpack.c.h.b16 %v3670
  %v3704 = vunpack.c.l.b16 %v3671
  %v3705 = vunpack.c.l.b16 %v3672
  %v3706 = vunpack.c.h.b16 %v3672
  %v3707 = vunpack.c.l.b16 %v3673
  %v3708 = vunpack.c.l.b16 %v3674
  %v3709 = vunpack.c.h.b16 %v3674
  %v3710 = vunpack.c.l.b16 %v3675
  %v3711 = vpack.c.b16 %v3702, %v3699
  %v3712 = vpack.c.b16 %v3703, %v3700
  %v3713 = vpack.c.b16 %v3704, %v3701
  %v3714 = vpack.c.b16 %v3708, %v3705
  %v3715 = vpack.c.b16 %v3709, %v3706
  %v3716 = vpack.c.b16 %v3710, %v3707
  %v3724 = vsel %vm1494, %v3689, 0
  %v3727 = vsel %vm1494, %v3690, 0
  %3729 = vmatprep.subr.bf16.mxu0 %v3712
  %3730 = vmatpush1.bf16.msra.mxu0 %v3711
  %3731 = vmatprep.subr.bf16.mxu0 %v3715
  %3732 = vmatpush1.bf16.msra.mxu0 %v3714
  %3733 = vmatprep.subr.bf16.mxu0 0
  %3734 = vmatpush1.bf16.msra.mxu0 0
  %3735 = vmatprep.subr.bf16.mxu0 0
  %3736 = vmatpush1.bf16.msra.mxu0 0
  %3737 = vmatprep.subr.bf16.mxu0 0
  %3738 = vmatpush1.bf16.msra.mxu0 0
  %3739 = vmatprep.subr.bf16.mxu0 0
  %3740 = vmatpush1.bf16.msra.mxu0 0
  %3741 = vmatprep.subr.bf16.mxu0 0
  %3742 = vmatpush1.bf16.msra.mxu0 0
  %3743 = vmatprep.subr.bf16.mxu0 0
  %3744 = vmatpush1.bf16.msra.mxu0 0
  %3745 = vmatprep.subr.bf16.mxu0 0
  %3746 = vmatpush1.bf16.msra.mxu0 0
  %3747 = vmatprep.subr.bf16.mxu0 0
  %3748 = vmatpush1.bf16.msra.mxu0 0
  %3749 = vmatprep.subr.bf16.mxu0 0
  %3750 = vmatpush1.bf16.msra.mxu0 0
  %3751 = vmatprep.subr.bf16.mxu0 0
  %3752 = vmatpush1.bf16.msra.mxu0 0
  %3753 = vmatprep.subr.bf16.mxu0 0
  %3754 = vmatpush1.bf16.msra.mxu0 0
  %3755 = vmatprep.subr.bf16.mxu0 0
  %3756 = vmatpush1.bf16.msra.mxu0 0
  %3757 = vmatprep.subr.bf16.mxu0 0
  %3758 = vmatpush1.bf16.msra.mxu0 0
  %3759 = vmatprep.subr.bf16.mxu0 0
  %3760 = vmatpush1.bf16.msra.mxu0 0
  %3761 = vmatprep.mubr.bf16.mxu0 0
  %3762 = vmatmul.mubr.bf16.gmra.mrb[0].mxu0 %v3724
  %v3763 = vpop.f32.mrb[0].mxu0
  %v3764 = vadd.f32 0.0, %v3763
  %v3765 = vpop.f32.mrb[0].mxu0
  %v3766 = vadd.f32 0.0, %v3765
  %v3767 = vpop.f32.mrb[0].mxu0
  %v3768 = vadd.f32 0.0, %v3767
  %v3769 = vpop.f32.mrb[0].mxu0
  %v3770 = vadd.f32 0.0, %v3769
  %3771 = vmatprep.mubr.bf16.mxu0 0
  %3772 = vmatmul.mubr.bf16.gmra.mrb[0].mxu0 %v3727
  %v3773 = vpop.f32.mrb[0].mxu0
  %v3774 = vadd.f32 0.0, %v3773
  %v3775 = vpop.f32.mrb[0].mxu0
  %v3776 = vadd.f32 0.0, %v3775
  %v3777 = vpop.f32.mrb[0].mxu0
  %v3778 = vadd.f32 0.0, %v3777
  %v3779 = vpop.f32.mrb[0].mxu0
  %v3780 = vadd.f32 0.0, %v3779
  %3781 = vdwg.mxu0
  %3782 = vmatprep.subr.bf16.mxu0 0
  %3783 = vmatpush1.bf16.msra.mxu0 %v3713
  %3784 = vmatprep.subr.bf16.mxu0 0
  %3785 = vmatpush1.bf16.msra.mxu0 %v3716
  %3786 = vmatprep.subr.bf16.mxu0 0
  %3787 = vmatpush1.bf16.msra.mxu0 0
  %3788 = vmatprep.subr.bf16.mxu0 0
  %3789 = vmatpush1.bf16.msra.mxu0 0
  %3790 = vmatprep.subr.bf16.mxu0 0
  %3791 = vmatpush1.bf16.msra.mxu0 0
  %3792 = vmatprep.subr.bf16.mxu0 0
  %3793 = vmatpush1.bf16.msra.mxu0 0
  %3794 = vmatprep.subr.bf16.mxu0 0
  %3795 = vmatpush1.bf16.msra.mxu0 0
  %3796 = vmatprep.subr.bf16.mxu0 0
  %3797 = vmatpush1.bf16.msra.mxu0 0
  %3798 = vmatprep.subr.bf16.mxu0 0
  %3799 = vmatpush1.bf16.msra.mxu0 0
  %3800 = vmatprep.subr.bf16.mxu0 0
  %3801 = vmatpush1.bf16.msra.mxu0 0
  %3802 = vmatprep.subr.bf16.mxu0 0
  %3803 = vmatpush1.bf16.msra.mxu0 0
  %3804 = vmatprep.subr.bf16.mxu0 0
  %3805 = vmatpush1.bf16.msra.mxu0 0
  %3806 = vmatprep.subr.bf16.mxu0 0
  %3807 = vmatpush1.bf16.msra.mxu0 0
  %3808 = vmatprep.subr.bf16.mxu0 0
  %3809 = vmatpush1.bf16.msra.mxu0 0
  %3810 = vmatprep.subr.bf16.mxu0 0
  %3811 = vmatpush1.bf16.msra.mxu0 0
  %3812 = vmatprep.subr.bf16.mxu0 0
  %3813 = vmatpush1.bf16.msra.mxu0 0
  %3814 = vmatprep.mubr.bf16.mxu0 0
  %3815 = vmatmul.mubr.bf16.gmra.mrb[0].mxu0 %v3724
  %v3816 = vpop.f32.mrb[0].mxu0
  %v3817 = vadd.f32 0.0, %v3816
  %v3818 = vpop.f32.mrb[0].mxu0
  %v3819 = vpop.f32.mrb[0].mxu0
  %v3820 = vadd.f32 0.0, %v3819
  %v3821 = vpop.f32.mrb[0].mxu0
  %3822 = vmatprep.mubr.bf16.mxu0 0
  %3823 = vmatmul.mubr.bf16.gmra.mrb[0].mxu0 %v3727
  %v3824 = vpop.f32.mrb[0].mxu0
  %v3825 = vadd.f32 0.0, %v3824
  %v3826 = vpop.f32.mrb[0].mxu0
  %v3827 = vpop.f32.mrb[0].mxu0
  %v3828 = vadd.f32 0.0, %v3827
  %v3829 = vpop.f32.mrb[0].mxu0
  %3830 = vdwg.mxu0
  %v3835 = vunpack.c.l.b16 %v3664
  %v3836 = vunpack.c.l.b16 %v3665
  %v3837 = vunpack.c.l.b16 %v3666
  %v3838 = vunpack.c.l.b16 %v3667
  %v3839 = vpack.c.b16 %v3836, %v3835
  %v3840 = vpack.c.b16 %v3838, %v3837
  %v3849 = vunpack.c.l.b16 %v3656
  %v3850 = vunpack.c.h.b16 %v3656
  %v3851 = vunpack.c.l.b16 %v3657
  %v3852 = vunpack.c.h.b16 %v3657
  %v3853 = vunpack.c.l.b16 %v3658
  %v3854 = vunpack.c.h.b16 %v3658
  %v3855 = vunpack.c.l.b16 %v3659
  %v3856 = vunpack.c.h.b16 %v3659
  %v3857 = vunpack.c.l.b16 %v3660
  %v3858 = vunpack.c.h.b16 %v3660
  %v3859 = vunpack.c.l.b16 %v3661
  %v3860 = vunpack.c.h.b16 %v3661
  %v3861 = vunpack.c.l.b16 %v3662
  %v3862 = vunpack.c.h.b16 %v3662
  %v3863 = vunpack.c.l.b16 %v3663
  %v3864 = vunpack.c.h.b16 %v3663
  %v3865 = vpack.c.b16 %v3853, %v3849
  %v3866 = vpack.c.b16 %v3854, %v3850
  %v3867 = vpack.c.b16 %v3855, %v3851
  %v3868 = vpack.c.b16 %v3856, %v3852
  %v3869 = vpack.c.b16 %v3861, %v3857
  %v3870 = vpack.c.b16 %v3862, %v3858
  %v3871 = vpack.c.b16 %v3863, %v3859
  %v3872 = vpack.c.b16 %v3864, %v3860
  %3873 = vrot.lane.b32.xlu0 %v3865, 1
  %v3874 = vpop.permute.xlu0 %3873
  %3875 = vrot.lane.b32.xlu0 %v3866, 1
  %v3876 = vpop.permute.xlu0 %3875
  %3877 = vrot.lane.b32.xlu0 %v3867, 1
  %v3878 = vpop.permute.xlu0 %3877
  %3879 = vrot.lane.b32.xlu0 %v3868, 1
  %v3880 = vpop.permute.xlu0 %3879
  %3881 = vrot.lane.b32.xlu0 %v3869, 1
  %v3882 = vpop.permute.xlu0 %3881
  %3883 = vrot.lane.b32.xlu0 %v3870, 1
  %v3884 = vpop.permute.xlu0 %3883
  %3885 = vrot.lane.b32.xlu0 %v3871, 1
  %v3886 = vpop.permute.xlu0 %3885
  %3887 = vrot.lane.b32.xlu0 %v3872, 1
  %v3888 = vpop.permute.xlu0 %3887
  %v3889 = vsel %vm250, %v3874, %v3876
  %v3890 = vsel %vm250, %v3876, %v3878
  %v3891 = vsel %vm250, %v3878, %v3880
  %v3892 = vsel %vm250, %v3882, %v3884
  %v3893 = vsel %vm250, %v3884, %v3886
  %v3894 = vsel %vm250, %v3886, %v3888
  %v3902 = vsel %vm1494, %v3839, 0
  %v3905 = vsel %vm1494, %v3840, 0
  %3907 = vmatprep.subr.bf16.mxu0 %v3890
  %3908 = vmatpush1.bf16.msra.mxu0 %v3889
  %3909 = vmatprep.subr.bf16.mxu0 %v3893
  %3910 = vmatpush1.bf16.msra.mxu0 %v3892
  %3911 = vmatprep.subr.bf16.mxu0 0
  %3912 = vmatpush1.bf16.msra.mxu0 0
  %3913 = vmatprep.subr.bf16.mxu0 0
  %3914 = vmatpush1.bf16.msra.mxu0 0
  %3915 = vmatprep.subr.bf16.mxu0 0
  %3916 = vmatpush1.bf16.msra.mxu0 0
  %3917 = vmatprep.subr.bf16.mxu0 0
  %3918 = vmatpush1.bf16.msra.mxu0 0
  %3919 = vmatprep.subr.bf16.mxu0 0
  %3920 = vmatpush1.bf16.msra.mxu0 0
  %3921 = vmatprep.subr.bf16.mxu0 0
  %3922 = vmatpush1.bf16.msra.mxu0 0
  %3923 = vmatprep.subr.bf16.mxu0 0
  %3924 = vmatpush1.bf16.msra.mxu0 0
  %3925 = vmatprep.subr.bf16.mxu0 0
  %3926 = vmatpush1.bf16.msra.mxu0 0
  %3927 = vmatprep.subr.bf16.mxu0 0
  %3928 = vmatpush1.bf16.msra.mxu0 0
  %3929 = vmatprep.subr.bf16.mxu0 0
  %3930 = vmatpush1.bf16.msra.mxu0 0
  %3931 = vmatprep.subr.bf16.mxu0 0
  %3932 = vmatpush1.bf16.msra.mxu0 0
  %3933 = vmatprep.subr.bf16.mxu0 0
  %3934 = vmatpush1.bf16.msra.mxu0 0
  %3935 = vmatprep.subr.bf16.mxu0 0
  %3936 = vmatpush1.bf16.msra.mxu0 0
  %3937 = vmatprep.subr.bf16.mxu0 0
  %3938 = vmatpush1.bf16.msra.mxu0 0
  %3939 = vmatprep.mubr.bf16.mxu0 0
  %3940 = vmatmul.mubr.bf16.gmra.mrb[0].mxu0 %v3902
  %v3941 = vpop.f32.mrb[0].mxu0
  %v3942 = vadd.f32 %v3764, %v3941
  %v3943 = vpop.f32.mrb[0].mxu0
  %v3944 = vadd.f32 %v3766, %v3943
  %v3945 = vpop.f32.mrb[0].mxu0
  %v3946 = vadd.f32 %v3768, %v3945
  %v3947 = vpop.f32.mrb[0].mxu0
  %v3948 = vadd.f32 %v3770, %v3947
  %3949 = vmatprep.mubr.bf16.mxu0 0
  %3950 = vmatmul.mubr.bf16.gmra.mrb[0].mxu0 %v3905
  %v3951 = vpop.f32.mrb[0].mxu0
  %v3952 = vadd.f32 %v3774, %v3951
  %v3953 = vpop.f32.mrb[0].mxu0
  %v3954 = vadd.f32 %v3776, %v3953
  %v3955 = vpop.f32.mrb[0].mxu0
  %v3956 = vadd.f32 %v3778, %v3955
  %v3957 = vpop.f32.mrb[0].mxu0
  %v3958 = vadd.f32 %v3780, %v3957
  %3959 = vdwg.mxu0
  %3960 = vmatprep.subr.bf16.mxu0 0
  %3961 = vmatpush1.bf16.msra.mxu0 %v3891
  %3962 = vmatprep.subr.bf16.mxu0 0
  %3963 = vmatpush1.bf16.msra.mxu0 %v3894
  %3964 = vmatprep.subr.bf16.mxu0 0
  %3965 = vmatpush1.bf16.msra.mxu0 0
  %3966 = vmatprep.subr.bf16.mxu0 0
  %3967 = vmatpush1.bf16.msra.mxu0 0
  %3968 = vmatprep.subr.bf16.mxu0 0
  %3969 = vmatpush1.bf16.msra.mxu0 0
  %3970 = vmatprep.subr.bf16.mxu0 0
  %3971 = vmatpush1.bf16.msra.mxu0 0
  %3972 = vmatprep.subr.bf16.mxu0 0
  %3973 = vmatpush1.bf16.msra.mxu0 0
  %3974 = vmatprep.subr.bf16.mxu0 0
  %3975 = vmatpush1.bf16.msra.mxu0 0
  %3976 = vmatprep.subr.bf16.mxu0 0
  %3977 = vmatpush1.bf16.msra.mxu0 0
  %3978 = vmatprep.subr.bf16.mxu0 0
  %3979 = vmatpush1.bf16.msra.mxu0 0
  %3980 = vmatprep.subr.bf16.mxu0 0
  %3981 = vmatpush1.bf16.msra.mxu0 0
  %3982 = vmatprep.subr.bf16.mxu0 0
  %3983 = vmatpush1.bf16.msra.mxu0 0
  %3984 = vmatprep.subr.bf16.mxu0 0
  %3985 = vmatpush1.bf16.msra.mxu0 0
  %3986 = vmatprep.subr.bf16.mxu0 0
  %3987 = vmatpush1.bf16.msra.mxu0 0
  %3988 = vmatprep.subr.bf16.mxu0 0
  %3989 = vmatpush1.bf16.msra.mxu0 0
  %3990 = vmatprep.subr.bf16.mxu0 0
  %3991 = vmatpush1.bf16.msra.mxu0 0
  %3992 = vmatprep.mubr.bf16.mxu0 0
  %3993 = vmatmul.mubr.bf16.gmra.mrb[0].mxu0 %v3902
  %v3994 = vpop.f32.mrb[0].mxu0
  %v3995 = vadd.f32 %v3817, %v3994
  %v3996 = vpop.f32.mrb[0].mxu0
  %v3997 = vpop.f32.mrb[0].mxu0
  %v3998 = vadd.f32 %v3820, %v3997
  %v3999 = vpop.f32.mrb[0].mxu0
  %4000 = vmatprep.mubr.bf16.mxu0 0
  %4001 = vmatmul.mubr.bf16.gmra.mrb[0].mxu0 %v3905
  %v4002 = vpop.f32.mrb[0].mxu0
  %v4003 = vadd.f32 %v3825, %v4002
  %v4004 = vpop.f32.mrb[0].mxu0
  %v4005 = vpop.f32.mrb[0].mxu0
  %v4006 = vadd.f32 %v3828, %v4005
  %v4007 = vpop.f32.mrb[0].mxu0
  %4008 = vdwg.mxu0
  %v4009 = vld [vmem:[#allocation2 + $0x4] sm:$0xff]
  %v4010 = vld [vmem:[#allocation2 + $0xc] sm:$0xff]
  %v4011 = vld [vmem:[#allocation2 + $0x18] sm:$0xff]
  %v4012 = vld [vmem:[#allocation2 + $0x20] sm:$0xff]
  %v4013 = vld [vmem:[#allocation2 + $0x2c] sm:$0xff]
  %v4014 = vld [vmem:[#allocation2 + $0x34] sm:$0xff]
  %v4015 = vld [vmem:[#allocation2 + $0x40] sm:$0xff]
  %v4016 = vld [vmem:[#allocation2 + $0x48] sm:$0xff]
  %s4017 = scalar_lea.vmem %s4, 32
  %v4018 = vld [vmem:[%s4017] sm:$0xf]
  %v4019 = vld [vmem:[%s4017 + $0x4] sm:$0xf]
  %v4020 = vld [vmem:[%s4017 + $0x8] sm:$0xf]
  %v4021 = vld [vmem:[%s4017 + $0xc] sm:$0xf]
  %v4026 = vunpack.c.l.b16 %v4018
  %v4027 = vunpack.c.l.b16 %v4019
  %v4028 = vunpack.c.l.b16 %v4020
  %v4029 = vunpack.c.l.b16 %v4021
  %v4030 = vpack.c.b16 %v4027, %v4026
  %v4031 = vpack.c.b16 %v4029, %v4028
  %v4040 = vunpack.c.l.b16 %v4009
  %v4041 = vunpack.c.h.b16 %v4009
  %v4042 = vunpack.c.l.b16 %v4010
  %v4043 = vunpack.c.h.b16 %v4010
  %v4044 = vunpack.c.l.b16 %v4011
  %v4045 = vunpack.c.h.b16 %v4011
  %v4046 = vunpack.c.l.b16 %v4012
  %v4047 = vunpack.c.h.b16 %v4012
  %v4048 = vunpack.c.l.b16 %v4013
  %v4049 = vunpack.c.h.b16 %v4013
  %v4050 = vunpack.c.l.b16 %v4014
  %v4051 = vunpack.c.h.b16 %v4014
  %v4052 = vunpack.c.l.b16 %v4015
  %v4053 = vunpack.c.h.b16 %v4015
  %v4054 = vunpack.c.l.b16 %v4016
  %v4055 = vunpack.c.h.b16 %v4016
  %v4056 = vpack.c.b16 %v4044, %v4040
  %v4057 = vpack.c.b16 %v4045, %v4041
  %v4058 = vpack.c.b16 %v4046, %v4042
  %v4059 = vpack.c.b16 %v4047, %v4043
  %v4060 = vpack.c.b16 %v4052, %v4048
  %v4061 = vpack.c.b16 %v4053, %v4049
  %v4062 = vpack.c.b16 %v4054, %v4050
  %v4063 = vpack.c.b16 %v4055, %v4051
  %4064 = vrot.lane.b32.xlu0 %v4056, 127
  %v4065 = vpop.permute.xlu0 %4064
  %4066 = vrot.lane.b32.xlu0 %v4057, 127
  %v4067 = vpop.permute.xlu0 %4066
  %4068 = vrot.lane.b32.xlu0 %v4058, 127
  %v4069 = vpop.permute.xlu0 %4068
  %4070 = vrot.lane.b32.xlu0 %v4059, 127
  %v4071 = vpop.permute.xlu0 %4070
  %4072 = vrot.lane.b32.xlu0 %v4060, 127
  %v4073 = vpop.permute.xlu0 %4072
  %4074 = vrot.lane.b32.xlu0 %v4061, 127
  %v4075 = vpop.permute.xlu0 %4074
  %4076 = vrot.lane.b32.xlu0 %v4062, 127
  %v4077 = vpop.permute.xlu0 %4076
  %4078 = vrot.lane.b32.xlu0 %v4063, 127
  %v4079 = vpop.permute.xlu0 %4078
  %v4080 = vsel %vm837, %v4065, %v4067
  %v4081 = vsel %vm837, %v4067, %v4069
  %v4082 = vsel %vm837, %v4069, %v4071
  %v4083 = vsel %vm837, %v4073, %v4075
  %v4084 = vsel %vm837, %v4075, %v4077
  %v4085 = vsel %vm837, %v4077, %v4079
  %v4093 = vsel %vm1494, %v4030, 0
  %v4096 = vsel %vm1494, %v4031, 0
  %4098 = vmatprep.subr.bf16.mxu0 %v4081
  %4099 = vmatpush1.bf16.msra.mxu0 %v4080
  %4100 = vmatprep.subr.bf16.mxu0 %v4084
  %4101 = vmatpush1.bf16.msra.mxu0 %v4083
  %4102 = vmatprep.subr.bf16.mxu0 0
  %4103 = vmatpush1.bf16.msra.mxu0 0
  %4104 = vmatprep.subr.bf16.mxu0 0
  %4105 = vmatpush1.bf16.msra.mxu0 0
  %4106 = vmatprep.subr.bf16.mxu0 0
  %4107 = vmatpush1.bf16.msra.mxu0 0
  %4108 = vmatprep.subr.bf16.mxu0 0
  %4109 = vmatpush1.bf16.msra.mxu0 0
  %4110 = vmatprep.subr.bf16.mxu0 0
  %4111 = vmatpush1.bf16.msra.mxu0 0
  %4112 = vmatprep.subr.bf16.mxu0 0
  %4113 = vmatpush1.bf16.msra.mxu0 0
  %4114 = vmatprep.subr.bf16.mxu0 0
  %4115 = vmatpush1.bf16.msra.mxu0 0
  %4116 = vmatprep.subr.bf16.mxu0 0
  %4117 = vmatpush1.bf16.msra.mxu0 0
  %4118 = vmatprep.subr.bf16.mxu0 0
  %4119 = vmatpush1.bf16.msra.mxu0 0
  %4120 = vmatprep.subr.bf16.mxu0 0
  %4121 = vmatpush1.bf16.msra.mxu0 0
  %4122 = vmatprep.subr.bf16.mxu0 0
  %4123 = vmatpush1.bf16.msra.mxu0 0
  %4124 = vmatprep.subr.bf16.mxu0 0
  %4125 = vmatpush1.bf16.msra.mxu0 0
  %4126 = vmatprep.subr.bf16.mxu0 0
  %4127 = vmatpush1.bf16.msra.mxu0 0
  %4128 = vmatprep.subr.bf16.mxu0 0
  %4129 = vmatpush1.bf16.msra.mxu0 0
  %4130 = vmatprep.mubr.bf16.mxu0 0
  %4131 = vmatmul.mubr.bf16.gmra.mrb[0].mxu0 %v4093
  %v4132 = vpop.f32.mrb[0].mxu0
  %v4133 = vadd.f32 0.0, %v4132
  %v4134 = vpop.f32.mrb[0].mxu0
  %v4135 = vadd.f32 0.0, %v4134
  %v4136 = vpop.f32.mrb[0].mxu0
  %v4137 = vadd.f32 0.0, %v4136
  %v4138 = vpop.f32.mrb[0].mxu0
  %v4139 = vadd.f32 0.0, %v4138
  %4140 = vmatprep.mubr.bf16.mxu0 0
  %4141 = vmatmul.mubr.bf16.gmra.mrb[0].mxu0 %v4096
  %v4142 = vpop.f32.mrb[0].mxu0
  %v4143 = vadd.f32 0.0, %v4142
  %v4144 = vpop.f32.mrb[0].mxu0
  %v4145 = vadd.f32 0.0, %v4144
  %v4146 = vpop.f32.mrb[0].mxu0
  %v4147 = vadd.f32 0.0, %v4146
  %v4148 = vpop.f32.mrb[0].mxu0
  %v4149 = vadd.f32 0.0, %v4148
  %4150 = vdwg.mxu0
  %4151 = vmatprep.subr.bf16.mxu0 0
  %4152 = vmatpush1.bf16.msra.mxu0 %v4082
  %4153 = vmatprep.subr.bf16.mxu0 0
  %4154 = vmatpush1.bf16.msra.mxu0 %v4085
  %4155 = vmatprep.subr.bf16.mxu0 0
  %4156 = vmatpush1.bf16.msra.mxu0 0
  %4157 = vmatprep.subr.bf16.mxu0 0
  %4158 = vmatpush1.bf16.msra.mxu0 0
  %4159 = vmatprep.subr.bf16.mxu0 0
  %4160 = vmatpush1.bf16.msra.mxu0 0
  %4161 = vmatprep.subr.bf16.mxu0 0
  %4162 = vmatpush1.bf16.msra.mxu0 0
  %4163 = vmatprep.subr.bf16.mxu0 0
  %4164 = vmatpush1.bf16.msra.mxu0 0
  %4165 = vmatprep.subr.bf16.mxu0 0
  %4166 = vmatpush1.bf16.msra.mxu0 0
  %4167 = vmatprep.subr.bf16.mxu0 0
  %4168 = vmatpush1.bf16.msra.mxu0 0
  %4169 = vmatprep.subr.bf16.mxu0 0
  %4170 = vmatpush1.bf16.msra.mxu0 0
  %4171 = vmatprep.subr.bf16.mxu0 0
  %4172 = vmatpush1.bf16.msra.mxu0 0
  %4173 = vmatprep.subr.bf16.mxu0 0
  %4174 = vmatpush1.bf16.msra.mxu0 0
  %4175 = vmatprep.subr.bf16.mxu0 0
  %4176 = vmatpush1.bf16.msra.mxu0 0
  %4177 = vmatprep.subr.bf16.mxu0 0
  %4178 = vmatpush1.bf16.msra.mxu0 0
  %4179 = vmatprep.subr.bf16.mxu0 0
  %4180 = vmatpush1.bf16.msra.mxu0 0
  %4181 = vmatprep.subr.bf16.mxu0 0
  %4182 = vmatpush1.bf16.msra.mxu0 0
  %4183 = vmatprep.mubr.bf16.mxu0 0
  %4184 = vmatmul.mubr.bf16.gmra.mrb[0].mxu0 %v4093
  %v4185 = vpop.f32.mrb[0].mxu0
  %v4186 = vadd.f32 0.0, %v4185
  %v4187 = vpop.f32.mrb[0].mxu0
  %v4188 = vpop.f32.mrb[0].mxu0
  %v4189 = vadd.f32 0.0, %v4188
  %v4190 = vpop.f32.mrb[0].mxu0
  %4191 = vmatprep.mubr.bf16.mxu0 0
  %4192 = vmatmul.mubr.bf16.gmra.mrb[0].mxu0 %v4096
  %v4193 = vpop.f32.mrb[0].mxu0
  %v4194 = vadd.f32 0.0, %v4193
  %v4195 = vpop.f32.mrb[0].mxu0
  %v4196 = vpop.f32.mrb[0].mxu0
  %v4197 = vadd.f32 0.0, %v4196
  %v4198 = vpop.f32.mrb[0].mxu0
  %4199 = vdwg.mxu0
  %v4200 = vadd.f32 %v3942, %v4133
  %v4201 = vadd.f32 %v3944, %v4135
  %v4202 = vadd.f32 %v3995, %v4186
  %v4203 = vadd.f32 %v3946, %v4137
  %v4204 = vadd.f32 %v3948, %v4139
  %v4205 = vadd.f32 %v3998, %v4189
  %v4206 = vadd.f32 %v3952, %v4143
  %v4207 = vadd.f32 %v3954, %v4145
  %v4208 = vadd.f32 %v4003, %v4194
  %v4209 = vadd.f32 %v3956, %v4147
  %v4210 = vadd.f32 %v3958, %v4149
  %v4211 = vadd.f32 %v4006, %v4197
  %v4212 = vmul.f32 %v4200, %v65
  %v4213 = vmul.f32 %v4201, %v69
  %v4214 = vmul.f32 %v4202, %v73
  %v4215 = vmul.f32 %v4203, %v65
  %v4216 = vmul.f32 %v4204, %v69
  %v4217 = vmul.f32 %v4205, %v73
  %v4218 = vmul.f32 %v4206, %v65
  %v4219 = vmul.f32 %v4207, %v69
  %v4220 = vmul.f32 %v4208, %v73
  %v4221 = vmul.f32 %v4209, %v65
  %v4222 = vmul.f32 %v4210, %v69
  %v4223 = vmul.f32 %v4211, %v73
  %v4224 = vmul.f32 %v4212, %v4212
  %v4225 = vmul.f32 %v4213, %v4213
  %v4226 = vmul.f32 %v4214, %v4214
  %v4227 = vmul.f32 %v4215, %v4215
  %v4228 = vmul.f32 %v4216, %v4216
  %v4229 = vmul.f32 %v4217, %v4217
  %v4230 = vmul.f32 %v4218, %v4218
  %v4231 = vmul.f32 %v4219, %v4219
  %v4232 = vmul.f32 %v4220, %v4220
  %v4233 = vmul.f32 %v4221, %v4221
  %v4234 = vmul.f32 %v4222, %v4222
  %v4235 = vmul.f32 %v4223, %v4223
  %v4236 = vadd.f32 %v4212, %v4213
  %v4237 = vadd.f32 %v4236, %v4214
  %4238 = vadd.xlane.f32.xlu0 %v4237
  %v4239 = vpop.xlane.xlu0 %4238
  %v4240 = vadd.f32 %v4215, %v4216
  %v4241 = vadd.f32 %v4240, %v4217
  %4242 = vadd.xlane.f32.xlu0 %v4241
  %v4243 = vpop.xlane.xlu0 %4242
  %v4244 = vadd.f32 %v4218, %v4219
  %v4245 = vadd.f32 %v4244, %v4220
  %4246 = vadd.xlane.f32.xlu0 %v4245
  %v4247 = vpop.xlane.xlu0 %4246
  %v4248 = vadd.f32 %v4221, %v4222
  %v4249 = vadd.f32 %v4248, %v4223
  %4250 = vadd.xlane.f32.xlu0 %v4249
  %v4251 = vpop.xlane.xlu0 %4250
  %v4252 = vadd.f32 %v4224, %v4225
  %v4253 = vadd.f32 %v4252, %v4226
  %4254 = vadd.xlane.f32.xlu0 %v4253
  %v4255 = vpop.xlane.xlu0 %4254
  %v4256 = vadd.f32 %v4227, %v4228
  %v4257 = vadd.f32 %v4256, %v4229
  %4258 = vadd.xlane.f32.xlu0 %v4257
  %v4259 = vpop.xlane.xlu0 %4258
  %v4260 = vadd.f32 %v4230, %v4231
  %v4261 = vadd.f32 %v4260, %v4232
  %4262 = vadd.xlane.f32.xlu0 %v4261
  %v4263 = vpop.xlane.xlu0 %4262
  %v4264 = vadd.f32 %v4233, %v4234
  %v4265 = vadd.f32 %v4264, %v4235
  %4266 = vadd.xlane.f32.xlu0 %v4265
  %v4267 = vpop.xlane.xlu0 %4266
  %v4268 = vmul.f32 %v4239, %v1222
  %v4269 = vmul.f32 %v4243, %v1222
  %v4270 = vmul.f32 %v4247, %v1222
  %v4271 = vmul.f32 %v4251, %v1222
  %v4272 = vmul.f32 %v4255, %v1222
  %v4273 = vmul.f32 %v4259, %v1222
  %v4274 = vmul.f32 %v4263, %v1222
  %v4275 = vmul.f32 %v4267, %v1222
  %v4276 = vmul.f32 %v4268, %v4268
  %v4277 = vmul.f32 %v4269, %v4269
  %v4278 = vmul.f32 %v4270, %v4270
  %v4279 = vmul.f32 %v4271, %v4271
  %v4280 = vsub.f32 %v4272, %v4276
  %v4281 = vsub.f32 %v4273, %v4277
  %v4282 = vsub.f32 %v4274, %v4278
  %v4283 = vsub.f32 %v4275, %v4279
  %v4284 = vmax.f32 %v4280, 0.0
  %v4285 = vmax.f32 %v4281, 0.0
  %v4286 = vmax.f32 %v4282, 0.0
  %v4287 = vmax.f32 %v4283, 0.0
  %s4288 = scalar_lea.vmem %s7, 96
  %v4289 = vld [vmem:[%s4288] sm:$0xff]
  %v4290 = vld [vmem:[%s4288 + $0x8] sm:$0xff]
  %v4291 = vld [vmem:[%s4288 + $0x10] sm:$0xff]
  %v4292 = vld [vmem:[%s4288 + $0x18] sm:$0xff]
  %v4293 = vadd.f32 %v4284, 1e-05
  %v4294 = vadd.f32 %v4285, 1e-05
  %v4295 = vadd.f32 %v4286, 1e-05
  %v4296 = vadd.f32 %v4287, 1e-05
  %v4297 = vrsqrt.pop %v4293
  %v4298 = vrsqrt.pop %v4294
  %v4299 = vrsqrt.pop %v4295
  %v4300 = vrsqrt.pop %v4296
  %v4301 = vmul.f32 %v4289, %v4297
  %v4302 = vmul.f32 %v4290, %v4298
  %v4303 = vmul.f32 %v4291, %v4299
  %v4304 = vmul.f32 %v4292, %v4300
  %s4305 = scalar_lea.vmem %s8, 96
  %v4306 = vld [vmem:[%s4305] sm:$0xff]
  %v4307 = vld [vmem:[%s4305 + $0x8] sm:$0xff]
  %v4308 = vld [vmem:[%s4305 + $0x10] sm:$0xff]
  %v4309 = vld [vmem:[%s4305 + $0x18] sm:$0xff]
  %v4310 = vmul.f32 %v4268, %v4301
  %v4311 = vmul.f32 %v4269, %v4302
  %v4312 = vmul.f32 %v4270, %v4303
  %v4313 = vmul.f32 %v4271, %v4304
  %v4314 = vsub.f32 %v4306, %v4310
  %v4315 = vsub.f32 %v4307, %v4311
  %v4316 = vsub.f32 %v4308, %v4312
  %v4317 = vsub.f32 %v4309, %v4313
  %4319 = vset.pattern.permute.xlu0 0
  %4320 = vperm.xlu0 %4319, %v4301
  %v4321 = vpop.permute.xlu0 %4320
  %4324 = vset.pattern.permute.xlu0 0
  %4325 = vperm.xlu0 %4324, %v4302
  %v4326 = vpop.permute.xlu0 %4325
  %4329 = vset.pattern.permute.xlu0 0
  %4330 = vperm.xlu0 %4329, %v4303
  %v4331 = vpop.permute.xlu0 %4330
  %4334 = vset.pattern.permute.xlu0 0
  %4335 = vperm.xlu0 %4334, %v4304
  %v4336 = vpop.permute.xlu0 %4335
  %v4338 = vmul.f32 %v4200, %v4321
  %v4339 = vmul.f32 %v4201, %v4321
  %v4340 = vmul.f32 %v4202, %v4321
  %v4341 = vmul.f32 %v4203, %v4326
  %v4342 = vmul.f32 %v4204, %v4326
  %v4343 = vmul.f32 %v4205, %v4326
  %v4344 = vmul.f32 %v4206, %v4331
  %v4345 = vmul.f32 %v4207, %v4331
  %v4346 = vmul.f32 %v4208, %v4331
  %v4347 = vmul.f32 %v4209, %v4336
  %v4348 = vmul.f32 %v4210, %v4336
  %v4349 = vmul.f32 %v4211, %v4336
  %4351 = vset.pattern.permute.xlu0 0
  %4352 = vperm.xlu0 %4351, %v4314
  %v4353 = vpop.permute.xlu0 %4352
  %4356 = vset.pattern.permute.xlu0 0
  %4357 = vperm.xlu0 %4356, %v4315
  %v4358 = vpop.permute.xlu0 %4357
  %4361 = vset.pattern.permute.xlu0 0
  %4362 = vperm.xlu0 %4361, %v4316
  %v4363 = vpop.permute.xlu0 %4362
  %4366 = vset.pattern.permute.xlu0 0
  %4367 = vperm.xlu0 %4366, %v4317
  %v4368 = vpop.permute.xlu0 %4367
  %v4370 = vadd.f32 %v4338, %v4353
  %v4371 = vadd.f32 %v4339, %v4353
  %v4372 = vadd.f32 %v4340, %v4353
  %v4373 = vadd.f32 %v4341, %v4358
  %v4374 = vadd.f32 %v4342, %v4358
  %v4375 = vadd.f32 %v4343, %v4358
  %v4376 = vadd.f32 %v4344, %v4363
  %v4377 = vadd.f32 %v4345, %v4363
  %v4378 = vadd.f32 %v4346, %v4363
  %v4379 = vadd.f32 %v4347, %v4368
  %v4380 = vadd.f32 %v4348, %v4368
  %v4381 = vadd.f32 %v4349, %v4368
  %v4382 = vmax.f32 %v4370, 0.0
  %v4383 = vmax.f32 %v4371, 0.0
  %v4384 = vmax.f32 %v4372, 0.0
  %v4385 = vmax.f32 %v4373, 0.0
  %v4386 = vmax.f32 %v4374, 0.0
  %v4387 = vmax.f32 %v4375, 0.0
  %v4388 = vmax.f32 %v4376, 0.0
  %v4389 = vmax.f32 %v4377, 0.0
  %v4390 = vmax.f32 %v4378, 0.0
  %v4391 = vmax.f32 %v4379, 0.0
  %v4392 = vmax.f32 %v4380, 0.0
  %v4393 = vmax.f32 %v4381, 0.0
  %v4394 = vmul.f32 %v4382, %v65
  %v4395 = vmul.f32 %v4383, %v69
  %v4396 = vmul.f32 %v4384, %v73
  %v4397 = vmul.f32 %v4385, %v65
  %v4398 = vmul.f32 %v4386, %v69
  %v4399 = vmul.f32 %v4387, %v73
  %v4400 = vmul.f32 %v4388, %v65
  %v4401 = vmul.f32 %v4389, %v69
  %v4402 = vmul.f32 %v4390, %v73
  %v4403 = vmul.f32 %v4391, %v65
  %v4404 = vmul.f32 %v4392, %v69
  %v4405 = vmul.f32 %v4393, %v73
  %v4406 = vpack.c.bf16 %v4397, %v4394
  %v4407 = vpack.c.bf16 %v4398, %v4395
  %v4408 = vpack.c.bf16 %v4399, %v4396
  %v4409 = vpack.c.bf16 %v4403, %v4400
  %v4410 = vpack.c.bf16 %v4404, %v4401
  %v4411 = vpack.c.bf16 %v4405, %v4402
  %v4418 = vunpack.c.l.b16 %v4406
  %v4419 = vunpack.c.l.b16 %v4407
  %v4420 = vunpack.c.l.b16 %v4408
  %v4421 = vunpack.c.h.b16 %v4406
  %v4422 = vunpack.c.h.b16 %v4407
  %v4423 = vunpack.c.h.b16 %v4408
  %v4424 = vunpack.c.l.b16 %v4409
  %v4425 = vunpack.c.l.b16 %v4410
  %v4426 = vunpack.c.l.b16 %v4411
  %v4427 = vunpack.c.h.b16 %v4409
  %v4428 = vunpack.c.h.b16 %v4410
  %v4429 = vunpack.c.h.b16 %v4411
  %v4430 = vpack.c.b16 %v4419, %v4418
  %v4431 = vpack.c.b16 %v4420, %v4420
  %v4432 = vpack.c.b16 %v4422, %v4421
  %v4433 = vpack.c.b16 %v4423, %v4423
  %v4434 = vpack.c.b16 %v4425, %v4424
  %v4435 = vpack.c.b16 %v4426, %v4426
  %v4436 = vpack.c.b16 %v4428, %v4427
  %v4437 = vpack.c.b16 %v4429, %v4429
  %4446 = vst [vmem:[#allocation2 + $0x4] sm:$0xff] %v4430
  %4447 = vst [vmem:[#allocation2 + $0xc] sm:$0xf] %v4431
  %4448 = vst [vmem:[#allocation2 + $0x18] sm:$0xff] %v4432
  %4449 = vst [vmem:[#allocation2 + $0x20] sm:$0xf] %v4433
  %4450 = vst [vmem:[#allocation2 + $0x2c] sm:$0xff] %v4434
  %4451 = vst [vmem:[#allocation2 + $0x34] sm:$0xf] %v4435
  %4452 = vst [vmem:[#allocation2 + $0x40] sm:$0xff] %v4436
  %4453 = vst [vmem:[#allocation2 + $0x48] sm:$0xf] %v4437
  %v4454 = vld [vmem:[#allocation2] sm:$0xff]
  %v4455 = vld [vmem:[#allocation2 + $0x8] sm:$0xff]
  %v4456 = vld [vmem:[#allocation2 + $0x14] sm:$0xff]
  %v4457 = vld [vmem:[#allocation2 + $0x1c] sm:$0xff]
  %v4458 = vld [vmem:[#allocation2 + $0x28] sm:$0xff]
  %v4459 = vld [vmem:[#allocation2 + $0x30] sm:$0xff]
  %v4460 = vld [vmem:[#allocation2 + $0x3c] sm:$0xff]
  %v4461 = vld [vmem:[#allocation2 + $0x44] sm:$0xff]
  %v4462 = vld [vmem:[%s5] sm:$0xf]
  %v4463 = vld [vmem:[%s5 + $0x4] sm:$0xf]
  %v4464 = vld [vmem:[%s5 + $0x8] sm:$0xf]
  %v4465 = vld [vmem:[%s5 + $0xc] sm:$0xf]
  %v4466 = vld [vmem:[#allocation2 + $0x4] sm:$0xff]
  %v4467 = vld [vmem:[#allocation2 + $0xc] sm:$0xf]
  %v4468 = vld [vmem:[#allocation2 + $0x18] sm:$0xff]
  %v4469 = vld [vmem:[#allocation2 + $0x20] sm:$0xf]
  %v4470 = vld [vmem:[#allocation2 + $0x2c] sm:$0xff]
  %v4471 = vld [vmem:[#allocation2 + $0x34] sm:$0xf]
  %v4472 = vld [vmem:[#allocation2 + $0x40] sm:$0xff]
  %v4473 = vld [vmem:[#allocation2 + $0x48] sm:$0xf]
  %s4474 = scalar_lea.vmem %s5, 16
  %v4475 = vld [vmem:[%s4474] sm:$0xf]
  %v4476 = vld [vmem:[%s4474 + $0x4] sm:$0xf]
  %v4477 = vld [vmem:[%s4474 + $0x8] sm:$0xf]
  %v4478 = vld [vmem:[%s4474 + $0xc] sm:$0xf]
  %v4483 = vunpack.c.l.b16 %v4475
  %v4484 = vunpack.c.l.b16 %v4476
  %v4485 = vunpack.c.l.b16 %v4477
  %v4486 = vunpack.c.l.b16 %v4478
  %v4487 = vpack.c.b16 %v4484, %v4483
  %v4488 = vpack.c.b16 %v4486, %v4485
  %v4497 = vunpack.c.l.b16 %v4466
  %v4498 = vunpack.c.h.b16 %v4466
  %v4499 = vunpack.c.l.b16 %v4467
  %v4500 = vunpack.c.l.b16 %v4468
  %v4501 = vunpack.c.h.b16 %v4468
  %v4502 = vunpack.c.l.b16 %v4469
  %v4503 = vunpack.c.l.b16 %v4470
  %v4504 = vunpack.c.h.b16 %v4470
  %v4505 = vunpack.c.l.b16 %v4471
  %v4506 = vunpack.c.l.b16 %v4472
  %v4507 = vunpack.c.h.b16 %v4472
  %v4508 = vunpack.c.l.b16 %v4473
  %v4509 = vpack.c.b16 %v4500, %v4497
  %v4510 = vpack.c.b16 %v4501, %v4498
  %v4511 = vpack.c.b16 %v4502, %v4499
  %v4512 = vpack.c.b16 %v4506, %v4503
  %v4513 = vpack.c.b16 %v4507, %v4504
  %v4514 = vpack.c.b16 %v4508, %v4505
  %v4522 = vsel %vm1494, %v4487, 0
  %v4525 = vsel %vm1494, %v4488, 0
  %4527 = vmatprep.subr.bf16.mxu0 %v4510
  %4528 = vmatpush1.bf16.msra.mxu0 %v4509
  %4529 = vmatprep.subr.bf16.mxu0 %v4513
  %4530 = vmatpush1.bf16.msra.mxu0 %v4512
  %4531 = vmatprep.subr.bf16.mxu0 0
  %4532 = vmatpush1.bf16.msra.mxu0 0
  %4533 = vmatprep.subr.bf16.mxu0 0
  %4534 = vmatpush1.bf16.msra.mxu0 0
  %4535 = vmatprep.subr.bf16.mxu0 0
  %4536 = vmatpush1.bf16.msra.mxu0 0
  %4537 = vmatprep.subr.bf16.mxu0 0
  %4538 = vmatpush1.bf16.msra.mxu0 0
  %4539 = vmatprep.subr.bf16.mxu0 0
  %4540 = vmatpush1.bf16.msra.mxu0 0
  %4541 = vmatprep.subr.bf16.mxu0 0
  %4542 = vmatpush1.bf16.msra.mxu0 0
  %4543 = vmatprep.subr.bf16.mxu0 0
  %4544 = vmatpush1.bf16.msra.mxu0 0
  %4545 = vmatprep.subr.bf16.mxu0 0
  %4546 = vmatpush1.bf16.msra.mxu0 0
  %4547 = vmatprep.subr.bf16.mxu0 0
  %4548 = vmatpush1.bf16.msra.mxu0 0
  %4549 = vmatprep.subr.bf16.mxu0 0
  %4550 = vmatpush1.bf16.msra.mxu0 0
  %4551 = vmatprep.subr.bf16.mxu0 0
  %4552 = vmatpush1.bf16.msra.mxu0 0
  %4553 = vmatprep.subr.bf16.mxu0 0
  %4554 = vmatpush1.bf16.msra.mxu0 0
  %4555 = vmatprep.subr.bf16.mxu0 0
  %4556 = vmatpush1.bf16.msra.mxu0 0
  %4557 = vmatprep.subr.bf16.mxu0 0
  %4558 = vmatpush1.bf16.msra.mxu0 0
  %4559 = vmatprep.mubr.bf16.mxu0 0
  %4560 = vmatmul.mubr.bf16.gmra.mrb[0].mxu0 %v4522
  %v4561 = vpop.f32.mrb[0].mxu0
  %v4562 = vadd.f32 0.0, %v4561
  %v4563 = vpop.f32.mrb[0].mxu0
  %v4564 = vadd.f32 0.0, %v4563
  %v4565 = vpop.f32.mrb[0].mxu0
  %v4566 = vadd.f32 0.0, %v4565
  %v4567 = vpop.f32.mrb[0].mxu0
  %v4568 = vadd.f32 0.0, %v4567
  %4569 = vmatprep.mubr.bf16.mxu0 0
  %4570 = vmatmul.mubr.bf16.gmra.mrb[0].mxu0 %v4525
  %v4571 = vpop.f32.mrb[0].mxu0
  %v4572 = vadd.f32 0.0, %v4571
  %v4573 = vpop.f32.mrb[0].mxu0
  %v4574 = vadd.f32 0.0, %v4573
  %v4575 = vpop.f32.mrb[0].mxu0
  %v4576 = vadd.f32 0.0, %v4575
  %v4577 = vpop.f32.mrb[0].mxu0
  %v4578 = vadd.f32 0.0, %v4577
  %4579 = vdwg.mxu0
  %4580 = vmatprep.subr.bf16.mxu0 0
  %4581 = vmatpush1.bf16.msra.mxu0 %v4511
  %4582 = vmatprep.subr.bf16.mxu0 0
  %4583 = vmatpush1.bf16.msra.mxu0 %v4514
  %4584 = vmatprep.subr.bf16.mxu0 0
  %4585 = vmatpush1.bf16.msra.mxu0 0
  %4586 = vmatprep.subr.bf16.mxu0 0
  %4587 = vmatpush1.bf16.msra.mxu0 0
  %4588 = vmatprep.subr.bf16.mxu0 0
  %4589 = vmatpush1.bf16.msra.mxu0 0
  %4590 = vmatprep.subr.bf16.mxu0 0
  %4591 = vmatpush1.bf16.msra.mxu0 0
  %4592 = vmatprep.subr.bf16.mxu0 0
  %4593 = vmatpush1.bf16.msra.mxu0 0
  %4594 = vmatprep.subr.bf16.mxu0 0
  %4595 = vmatpush1.bf16.msra.mxu0 0
  %4596 = vmatprep.subr.bf16.mxu0 0
  %4597 = vmatpush1.bf16.msra.mxu0 0
  %4598 = vmatprep.subr.bf16.mxu0 0
  %4599 = vmatpush1.bf16.msra.mxu0 0
  %4600 = vmatprep.subr.bf16.mxu0 0
  %4601 = vmatpush1.bf16.msra.mxu0 0
  %4602 = vmatprep.subr.bf16.mxu0 0
  %4603 = vmatpush1.bf16.msra.mxu0 0
  %4604 = vmatprep.subr.bf16.mxu0 0
  %4605 = vmatpush1.bf16.msra.mxu0 0
  %4606 = vmatprep.subr.bf16.mxu0 0
  %4607 = vmatpush1.bf16.msra.mxu0 0
  %4608 = vmatprep.subr.bf16.mxu0 0
  %4609 = vmatpush1.bf16.msra.mxu0 0
  %4610 = vmatprep.subr.bf16.mxu0 0
  %4611 = vmatpush1.bf16.msra.mxu0 0
  %4612 = vmatprep.mubr.bf16.mxu0 0
  %4613 = vmatmul.mubr.bf16.gmra.mrb[0].mxu0 %v4522
  %v4614 = vpop.f32.mrb[0].mxu0
  %v4615 = vadd.f32 0.0, %v4614
  %v4616 = vpop.f32.mrb[0].mxu0
  %v4617 = vpop.f32.mrb[0].mxu0
  %v4618 = vadd.f32 0.0, %v4617
  %v4619 = vpop.f32.mrb[0].mxu0
  %4620 = vmatprep.mubr.bf16.mxu0 0
  %4621 = vmatmul.mubr.bf16.gmra.mrb[0].mxu0 %v4525
  %v4622 = vpop.f32.mrb[0].mxu0
  %v4623 = vadd.f32 0.0, %v4622
  %v4624 = vpop.f32.mrb[0].mxu0
  %v4625 = vpop.f32.mrb[0].mxu0
  %v4626 = vadd.f32 0.0, %v4625
  %v4627 = vpop.f32.mrb[0].mxu0
  %4628 = vdwg.mxu0
  %v4633 = vunpack.c.l.b16 %v4462
  %v4634 = vunpack.c.l.b16 %v4463
  %v4635 = vunpack.c.l.b16 %v4464
  %v4636 = vunpack.c.l.b16 %v4465
  %v4637 = vpack.c.b16 %v4634, %v4633
  %v4638 = vpack.c.b16 %v4636, %v4635
  %v4647 = vunpack.c.l.b16 %v4454
  %v4648 = vunpack.c.h.b16 %v4454
  %v4649 = vunpack.c.l.b16 %v4455
  %v4650 = vunpack.c.h.b16 %v4455
  %v4651 = vunpack.c.l.b16 %v4456
  %v4652 = vunpack.c.h.b16 %v4456
  %v4653 = vunpack.c.l.b16 %v4457
  %v4654 = vunpack.c.h.b16 %v4457
  %v4655 = vunpack.c.l.b16 %v4458
  %v4656 = vunpack.c.h.b16 %v4458
  %v4657 = vunpack.c.l.b16 %v4459
  %v4658 = vunpack.c.h.b16 %v4459
  %v4659 = vunpack.c.l.b16 %v4460
  %v4660 = vunpack.c.h.b16 %v4460
  %v4661 = vunpack.c.l.b16 %v4461
  %v4662 = vunpack.c.h.b16 %v4461
  %v4663 = vpack.c.b16 %v4651, %v4647
  %v4664 = vpack.c.b16 %v4652, %v4648
  %v4665 = vpack.c.b16 %v4653, %v4649
  %v4666 = vpack.c.b16 %v4654, %v4650
  %v4667 = vpack.c.b16 %v4659, %v4655
  %v4668 = vpack.c.b16 %v4660, %v4656
  %v4669 = vpack.c.b16 %v4661, %v4657
  %v4670 = vpack.c.b16 %v4662, %v4658
  %4671 = vrot.lane.b32.xlu0 %v4663, 1
  %v4672 = vpop.permute.xlu0 %4671
  %4673 = vrot.lane.b32.xlu0 %v4664, 1
  %v4674 = vpop.permute.xlu0 %4673
  %4675 = vrot.lane.b32.xlu0 %v4665, 1
  %v4676 = vpop.permute.xlu0 %4675
  %4677 = vrot.lane.b32.xlu0 %v4666, 1
  %v4678 = vpop.permute.xlu0 %4677
  %4679 = vrot.lane.b32.xlu0 %v4667, 1
  %v4680 = vpop.permute.xlu0 %4679
  %4681 = vrot.lane.b32.xlu0 %v4668, 1
  %v4682 = vpop.permute.xlu0 %4681
  %4683 = vrot.lane.b32.xlu0 %v4669, 1
  %v4684 = vpop.permute.xlu0 %4683
  %4685 = vrot.lane.b32.xlu0 %v4670, 1
  %v4686 = vpop.permute.xlu0 %4685
  %v4687 = vsel %vm250, %v4672, %v4674
  %v4688 = vsel %vm250, %v4674, %v4676
  %v4689 = vsel %vm250, %v4676, %v4678
  %v4690 = vsel %vm250, %v4680, %v4682
  %v4691 = vsel %vm250, %v4682, %v4684
  %v4692 = vsel %vm250, %v4684, %v4686
  %v4700 = vsel %vm1494, %v4637, 0
  %v4703 = vsel %vm1494, %v4638, 0
  %4705 = vmatprep.subr.bf16.mxu0 %v4688
  %4706 = vmatpush1.bf16.msra.mxu0 %v4687
  %4707 = vmatprep.subr.bf16.mxu0 %v4691
  %4708 = vmatpush1.bf16.msra.mxu0 %v4690
  %4709 = vmatprep.subr.bf16.mxu0 0
  %4710 = vmatpush1.bf16.msra.mxu0 0
  %4711 = vmatprep.subr.bf16.mxu0 0
  %4712 = vmatpush1.bf16.msra.mxu0 0
  %4713 = vmatprep.subr.bf16.mxu0 0
  %4714 = vmatpush1.bf16.msra.mxu0 0
  %4715 = vmatprep.subr.bf16.mxu0 0
  %4716 = vmatpush1.bf16.msra.mxu0 0
  %4717 = vmatprep.subr.bf16.mxu0 0
  %4718 = vmatpush1.bf16.msra.mxu0 0
  %4719 = vmatprep.subr.bf16.mxu0 0
  %4720 = vmatpush1.bf16.msra.mxu0 0
  %4721 = vmatprep.subr.bf16.mxu0 0
  %4722 = vmatpush1.bf16.msra.mxu0 0
  %4723 = vmatprep.subr.bf16.mxu0 0
  %4724 = vmatpush1.bf16.msra.mxu0 0
  %4725 = vmatprep.subr.bf16.mxu0 0
  %4726 = vmatpush1.bf16.msra.mxu0 0
  %4727 = vmatprep.subr.bf16.mxu0 0
  %4728 = vmatpush1.bf16.msra.mxu0 0
  %4729 = vmatprep.subr.bf16.mxu0 0
  %4730 = vmatpush1.bf16.msra.mxu0 0
  %4731 = vmatprep.subr.bf16.mxu0 0
  %4732 = vmatpush1.bf16.msra.mxu0 0
  %4733 = vmatprep.subr.bf16.mxu0 0
  %4734 = vmatpush1.bf16.msra.mxu0 0
  %4735 = vmatprep.subr.bf16.mxu0 0
  %4736 = vmatpush1.bf16.msra.mxu0 0
  %4737 = vmatprep.mubr.bf16.mxu0 0
  %4738 = vmatmul.mubr.bf16.gmra.mrb[0].mxu0 %v4700
  %v4739 = vpop.f32.mrb[0].mxu0
  %v4740 = vadd.f32 %v4562, %v4739
  %v4741 = vpop.f32.mrb[0].mxu0
  %v4742 = vadd.f32 %v4564, %v4741
  %v4743 = vpop.f32.mrb[0].mxu0
  %v4744 = vadd.f32 %v4566, %v4743
  %v4745 = vpop.f32.mrb[0].mxu0
  %v4746 = vadd.f32 %v4568, %v4745
  %4747 = vmatprep.mubr.bf16.mxu0 0
  %4748 = vmatmul.mubr.bf16.gmra.mrb[0].mxu0 %v4703
  %v4749 = vpop.f32.mrb[0].mxu0
  %v4750 = vadd.f32 %v4572, %v4749
  %v4751 = vpop.f32.mrb[0].mxu0
  %v4752 = vadd.f32 %v4574, %v4751
  %v4753 = vpop.f32.mrb[0].mxu0
  %v4754 = vadd.f32 %v4576, %v4753
  %v4755 = vpop.f32.mrb[0].mxu0
  %v4756 = vadd.f32 %v4578, %v4755
  %4757 = vdwg.mxu0
  %4758 = vmatprep.subr.bf16.mxu0 0
  %4759 = vmatpush1.bf16.msra.mxu0 %v4689
  %4760 = vmatprep.subr.bf16.mxu0 0
  %4761 = vmatpush1.bf16.msra.mxu0 %v4692
  %4762 = vmatprep.subr.bf16.mxu0 0
  %4763 = vmatpush1.bf16.msra.mxu0 0
  %4764 = vmatprep.subr.bf16.mxu0 0
  %4765 = vmatpush1.bf16.msra.mxu0 0
  %4766 = vmatprep.subr.bf16.mxu0 0
  %4767 = vmatpush1.bf16.msra.mxu0 0
  %4768 = vmatprep.subr.bf16.mxu0 0
  %4769 = vmatpush1.bf16.msra.mxu0 0
  %4770 = vmatprep.subr.bf16.mxu0 0
  %4771 = vmatpush1.bf16.msra.mxu0 0
  %4772 = vmatprep.subr.bf16.mxu0 0
  %4773 = vmatpush1.bf16.msra.mxu0 0
  %4774 = vmatprep.subr.bf16.mxu0 0
  %4775 = vmatpush1.bf16.msra.mxu0 0
  %4776 = vmatprep.subr.bf16.mxu0 0
  %4777 = vmatpush1.bf16.msra.mxu0 0
  %4778 = vmatprep.subr.bf16.mxu0 0
  %4779 = vmatpush1.bf16.msra.mxu0 0
  %4780 = vmatprep.subr.bf16.mxu0 0
  %4781 = vmatpush1.bf16.msra.mxu0 0
  %4782 = vmatprep.subr.bf16.mxu0 0
  %4783 = vmatpush1.bf16.msra.mxu0 0
  %4784 = vmatprep.subr.bf16.mxu0 0
  %4785 = vmatpush1.bf16.msra.mxu0 0
  %4786 = vmatprep.subr.bf16.mxu0 0
  %4787 = vmatpush1.bf16.msra.mxu0 0
  %4788 = vmatprep.subr.bf16.mxu0 0
  %4789 = vmatpush1.bf16.msra.mxu0 0
  %4790 = vmatprep.mubr.bf16.mxu0 0
  %4791 = vmatmul.mubr.bf16.gmra.mrb[0].mxu0 %v4700
  %v4792 = vpop.f32.mrb[0].mxu0
  %v4793 = vadd.f32 %v4615, %v4792
  %v4794 = vpop.f32.mrb[0].mxu0
  %v4795 = vpop.f32.mrb[0].mxu0
  %v4796 = vadd.f32 %v4618, %v4795
  %v4797 = vpop.f32.mrb[0].mxu0
  %4798 = vmatprep.mubr.bf16.mxu0 0
  %4799 = vmatmul.mubr.bf16.gmra.mrb[0].mxu0 %v4703
  %v4800 = vpop.f32.mrb[0].mxu0
  %v4801 = vadd.f32 %v4623, %v4800
  %v4802 = vpop.f32.mrb[0].mxu0
  %v4803 = vpop.f32.mrb[0].mxu0
  %v4804 = vadd.f32 %v4626, %v4803
  %v4805 = vpop.f32.mrb[0].mxu0
  %4806 = vdwg.mxu0
  %v4807 = vld [vmem:[#allocation2 + $0x4] sm:$0xff]
  %v4808 = vld [vmem:[#allocation2 + $0xc] sm:$0xff]
  %v4809 = vld [vmem:[#allocation2 + $0x18] sm:$0xff]
  %v4810 = vld [vmem:[#allocation2 + $0x20] sm:$0xff]
  %v4811 = vld [vmem:[#allocation2 + $0x2c] sm:$0xff]
  %v4812 = vld [vmem:[#allocation2 + $0x34] sm:$0xff]
  %v4813 = vld [vmem:[#allocation2 + $0x40] sm:$0xff]
  %v4814 = vld [vmem:[#allocation2 + $0x48] sm:$0xff]
  %s4815 = scalar_lea.vmem %s5, 32
  %v4816 = vld [vmem:[%s4815] sm:$0xf]
  %v4817 = vld [vmem:[%s4815 + $0x4] sm:$0xf]
  %v4818 = vld [vmem:[%s4815 + $0x8] sm:$0xf]
  %v4819 = vld [vmem:[%s4815 + $0xc] sm:$0xf]
  %v4824 = vunpack.c.l.b16 %v4816
  %v4825 = vunpack.c.l.b16 %v4817
  %v4826 = vunpack.c.l.b16 %v4818
  %v4827 = vunpack.c.l.b16 %v4819
  %v4828 = vpack.c.b16 %v4825, %v4824
  %v4829 = vpack.c.b16 %v4827, %v4826
  %v4838 = vunpack.c.l.b16 %v4807
  %v4839 = vunpack.c.h.b16 %v4807
  %v4840 = vunpack.c.l.b16 %v4808
  %v4841 = vunpack.c.h.b16 %v4808
  %v4842 = vunpack.c.l.b16 %v4809
  %v4843 = vunpack.c.h.b16 %v4809
  %v4844 = vunpack.c.l.b16 %v4810
  %v4845 = vunpack.c.h.b16 %v4810
  %v4846 = vunpack.c.l.b16 %v4811
  %v4847 = vunpack.c.h.b16 %v4811
  %v4848 = vunpack.c.l.b16 %v4812
  %v4849 = vunpack.c.h.b16 %v4812
  %v4850 = vunpack.c.l.b16 %v4813
  %v4851 = vunpack.c.h.b16 %v4813
  %v4852 = vunpack.c.l.b16 %v4814
  %v4853 = vunpack.c.h.b16 %v4814
  %v4854 = vpack.c.b16 %v4842, %v4838
  %v4855 = vpack.c.b16 %v4843, %v4839
  %v4856 = vpack.c.b16 %v4844, %v4840
  %v4857 = vpack.c.b16 %v4845, %v4841
  %v4858 = vpack.c.b16 %v4850, %v4846
  %v4859 = vpack.c.b16 %v4851, %v4847
  %v4860 = vpack.c.b16 %v4852, %v4848
  %v4861 = vpack.c.b16 %v4853, %v4849
  %4862 = vrot.lane.b32.xlu0 %v4854, 127
  %v4863 = vpop.permute.xlu0 %4862
  %4864 = vrot.lane.b32.xlu0 %v4855, 127
  %v4865 = vpop.permute.xlu0 %4864
  %4866 = vrot.lane.b32.xlu0 %v4856, 127
  %v4867 = vpop.permute.xlu0 %4866
  %4868 = vrot.lane.b32.xlu0 %v4857, 127
  %v4869 = vpop.permute.xlu0 %4868
  %4870 = vrot.lane.b32.xlu0 %v4858, 127
  %v4871 = vpop.permute.xlu0 %4870
  %4872 = vrot.lane.b32.xlu0 %v4859, 127
  %v4873 = vpop.permute.xlu0 %4872
  %4874 = vrot.lane.b32.xlu0 %v4860, 127
  %v4875 = vpop.permute.xlu0 %4874
  %4876 = vrot.lane.b32.xlu0 %v4861, 127
  %v4877 = vpop.permute.xlu0 %4876
  %v4878 = vsel %vm837, %v4863, %v4865
  %v4879 = vsel %vm837, %v4865, %v4867
  %v4880 = vsel %vm837, %v4867, %v4869
  %v4881 = vsel %vm837, %v4871, %v4873
  %v4882 = vsel %vm837, %v4873, %v4875
  %v4883 = vsel %vm837, %v4875, %v4877
  %v4891 = vsel %vm1494, %v4828, 0
  %v4894 = vsel %vm1494, %v4829, 0
  %4896 = vmatprep.subr.bf16.mxu0 %v4879
  %4897 = vmatpush1.bf16.msra.mxu0 %v4878
  %4898 = vmatprep.subr.bf16.mxu0 %v4882
  %4899 = vmatpush1.bf16.msra.mxu0 %v4881
  %4900 = vmatprep.subr.bf16.mxu0 0
  %4901 = vmatpush1.bf16.msra.mxu0 0
  %4902 = vmatprep.subr.bf16.mxu0 0
  %4903 = vmatpush1.bf16.msra.mxu0 0
  %4904 = vmatprep.subr.bf16.mxu0 0
  %4905 = vmatpush1.bf16.msra.mxu0 0
  %4906 = vmatprep.subr.bf16.mxu0 0
  %4907 = vmatpush1.bf16.msra.mxu0 0
  %4908 = vmatprep.subr.bf16.mxu0 0
  %4909 = vmatpush1.bf16.msra.mxu0 0
  %4910 = vmatprep.subr.bf16.mxu0 0
  %4911 = vmatpush1.bf16.msra.mxu0 0
  %4912 = vmatprep.subr.bf16.mxu0 0
  %4913 = vmatpush1.bf16.msra.mxu0 0
  %4914 = vmatprep.subr.bf16.mxu0 0
  %4915 = vmatpush1.bf16.msra.mxu0 0
  %4916 = vmatprep.subr.bf16.mxu0 0
  %4917 = vmatpush1.bf16.msra.mxu0 0
  %4918 = vmatprep.subr.bf16.mxu0 0
  %4919 = vmatpush1.bf16.msra.mxu0 0
  %4920 = vmatprep.subr.bf16.mxu0 0
  %4921 = vmatpush1.bf16.msra.mxu0 0
  %4922 = vmatprep.subr.bf16.mxu0 0
  %4923 = vmatpush1.bf16.msra.mxu0 0
  %4924 = vmatprep.subr.bf16.mxu0 0
  %4925 = vmatpush1.bf16.msra.mxu0 0
  %4926 = vmatprep.subr.bf16.mxu0 0
  %4927 = vmatpush1.bf16.msra.mxu0 0
  %4928 = vmatprep.mubr.bf16.mxu0 0
  %4929 = vmatmul.mubr.bf16.gmra.mrb[0].mxu0 %v4891
  %v4930 = vpop.f32.mrb[0].mxu0
  %v4931 = vadd.f32 0.0, %v4930
  %v4932 = vpop.f32.mrb[0].mxu0
  %v4933 = vadd.f32 0.0, %v4932
  %v4934 = vpop.f32.mrb[0].mxu0
  %v4935 = vadd.f32 0.0, %v4934
  %v4936 = vpop.f32.mrb[0].mxu0
  %v4937 = vadd.f32 0.0, %v4936
  %4938 = vmatprep.mubr.bf16.mxu0 0
  %4939 = vmatmul.mubr.bf16.gmra.mrb[0].mxu0 %v4894
  %v4940 = vpop.f32.mrb[0].mxu0
  %v4941 = vadd.f32 0.0, %v4940
  %v4942 = vpop.f32.mrb[0].mxu0
  %v4943 = vadd.f32 0.0, %v4942
  %v4944 = vpop.f32.mrb[0].mxu0
  %v4945 = vadd.f32 0.0, %v4944
  %v4946 = vpop.f32.mrb[0].mxu0
  %v4947 = vadd.f32 0.0, %v4946
  %4948 = vdwg.mxu0
  %4949 = vmatprep.subr.bf16.mxu0 0
  %4950 = vmatpush1.bf16.msra.mxu0 %v4880
  %4951 = vmatprep.subr.bf16.mxu0 0
  %4952 = vmatpush1.bf16.msra.mxu0 %v4883
  %4953 = vmatprep.subr.bf16.mxu0 0
  %4954 = vmatpush1.bf16.msra.mxu0 0
  %4955 = vmatprep.subr.bf16.mxu0 0
  %4956 = vmatpush1.bf16.msra.mxu0 0
  %4957 = vmatprep.subr.bf16.mxu0 0
  %4958 = vmatpush1.bf16.msra.mxu0 0
  %4959 = vmatprep.subr.bf16.mxu0 0
  %4960 = vmatpush1.bf16.msra.mxu0 0
  %4961 = vmatprep.subr.bf16.mxu0 0
  %4962 = vmatpush1.bf16.msra.mxu0 0
  %4963 = vmatprep.subr.bf16.mxu0 0
  %4964 = vmatpush1.bf16.msra.mxu0 0
  %4965 = vmatprep.subr.bf16.mxu0 0
  %4966 = vmatpush1.bf16.msra.mxu0 0
  %4967 = vmatprep.subr.bf16.mxu0 0
  %4968 = vmatpush1.bf16.msra.mxu0 0
  %4969 = vmatprep.subr.bf16.mxu0 0
  %4970 = vmatpush1.bf16.msra.mxu0 0
  %4971 = vmatprep.subr.bf16.mxu0 0
  %4972 = vmatpush1.bf16.msra.mxu0 0
  %4973 = vmatprep.subr.bf16.mxu0 0
  %4974 = vmatpush1.bf16.msra.mxu0 0
  %4975 = vmatprep.subr.bf16.mxu0 0
  %4976 = vmatpush1.bf16.msra.mxu0 0
  %4977 = vmatprep.subr.bf16.mxu0 0
  %4978 = vmatpush1.bf16.msra.mxu0 0
  %4979 = vmatprep.subr.bf16.mxu0 0
  %4980 = vmatpush1.bf16.msra.mxu0 0
  %4981 = vmatprep.mubr.bf16.mxu0 0
  %4982 = vmatmul.mubr.bf16.gmra.mrb[0].mxu0 %v4891
  %v4983 = vpop.f32.mrb[0].mxu0
  %v4984 = vadd.f32 0.0, %v4983
  %v4985 = vpop.f32.mrb[0].mxu0
  %v4986 = vpop.f32.mrb[0].mxu0
  %v4987 = vadd.f32 0.0, %v4986
  %v4988 = vpop.f32.mrb[0].mxu0
  %4989 = vmatprep.mubr.bf16.mxu0 0
  %4990 = vmatmul.mubr.bf16.gmra.mrb[0].mxu0 %v4894
  %v4991 = vpop.f32.mrb[0].mxu0
  %v4992 = vadd.f32 0.0, %v4991
  %v4993 = vpop.f32.mrb[0].mxu0
  %v4994 = vpop.f32.mrb[0].mxu0
  %v4995 = vadd.f32 0.0, %v4994
  %v4996 = vpop.f32.mrb[0].mxu0
  %4997 = vdwg.mxu0
  %v4998 = vadd.f32 %v4740, %v4931
  %v4999 = vadd.f32 %v4742, %v4933
  %v5000 = vadd.f32 %v4793, %v4984
  %v5001 = vadd.f32 %v4744, %v4935
  %v5002 = vadd.f32 %v4746, %v4937
  %v5003 = vadd.f32 %v4796, %v4987
  %v5004 = vadd.f32 %v4750, %v4941
  %v5005 = vadd.f32 %v4752, %v4943
  %v5006 = vadd.f32 %v4801, %v4992
  %v5007 = vadd.f32 %v4754, %v4945
  %v5008 = vadd.f32 %v4756, %v4947
  %v5009 = vadd.f32 %v4804, %v4995
  %v5010 = vmul.f32 %v4998, %v65
  %v5011 = vmul.f32 %v4999, %v69
  %v5012 = vmul.f32 %v5000, %v73
  %v5013 = vmul.f32 %v5001, %v65
  %v5014 = vmul.f32 %v5002, %v69
  %v5015 = vmul.f32 %v5003, %v73
  %v5016 = vmul.f32 %v5004, %v65
  %v5017 = vmul.f32 %v5005, %v69
  %v5018 = vmul.f32 %v5006, %v73
  %v5019 = vmul.f32 %v5007, %v65
  %v5020 = vmul.f32 %v5008, %v69
  %v5021 = vmul.f32 %v5009, %v73
  %v5022 = vmul.f32 %v5010, %v5010
  %v5023 = vmul.f32 %v5011, %v5011
  %v5024 = vmul.f32 %v5012, %v5012
  %v5025 = vmul.f32 %v5013, %v5013
  %v5026 = vmul.f32 %v5014, %v5014
  %v5027 = vmul.f32 %v5015, %v5015
  %v5028 = vmul.f32 %v5016, %v5016
  %v5029 = vmul.f32 %v5017, %v5017
  %v5030 = vmul.f32 %v5018, %v5018
  %v5031 = vmul.f32 %v5019, %v5019
  %v5032 = vmul.f32 %v5020, %v5020
  %v5033 = vmul.f32 %v5021, %v5021
  %v5034 = vadd.f32 %v5010, %v5011
  %v5035 = vadd.f32 %v5034, %v5012
  %5036 = vadd.xlane.f32.xlu0 %v5035
  %v5037 = vpop.xlane.xlu0 %5036
  %v5038 = vadd.f32 %v5013, %v5014
  %v5039 = vadd.f32 %v5038, %v5015
  %5040 = vadd.xlane.f32.xlu0 %v5039
  %v5041 = vpop.xlane.xlu0 %5040
  %v5042 = vadd.f32 %v5016, %v5017
  %v5043 = vadd.f32 %v5042, %v5018
  %5044 = vadd.xlane.f32.xlu0 %v5043
  %v5045 = vpop.xlane.xlu0 %5044
  %v5046 = vadd.f32 %v5019, %v5020
  %v5047 = vadd.f32 %v5046, %v5021
  %5048 = vadd.xlane.f32.xlu0 %v5047
  %v5049 = vpop.xlane.xlu0 %5048
  %v5050 = vadd.f32 %v5022, %v5023
  %v5051 = vadd.f32 %v5050, %v5024
  %5052 = vadd.xlane.f32.xlu0 %v5051
  %v5053 = vpop.xlane.xlu0 %5052
  %v5054 = vadd.f32 %v5025, %v5026
  %v5055 = vadd.f32 %v5054, %v5027
  %5056 = vadd.xlane.f32.xlu0 %v5055
  %v5057 = vpop.xlane.xlu0 %5056
  %v5058 = vadd.f32 %v5028, %v5029
  %v5059 = vadd.f32 %v5058, %v5030
  %5060 = vadd.xlane.f32.xlu0 %v5059
  %v5061 = vpop.xlane.xlu0 %5060
  %v5062 = vadd.f32 %v5031, %v5032
  %v5063 = vadd.f32 %v5062, %v5033
  %5064 = vadd.xlane.f32.xlu0 %v5063
  %v5065 = vpop.xlane.xlu0 %5064
  %v5066 = vmul.f32 %v5037, %v1222
  %v5067 = vmul.f32 %v5041, %v1222
  %v5068 = vmul.f32 %v5045, %v1222
  %v5069 = vmul.f32 %v5049, %v1222
  %v5070 = vmul.f32 %v5053, %v1222
  %v5071 = vmul.f32 %v5057, %v1222
  %v5072 = vmul.f32 %v5061, %v1222
  %v5073 = vmul.f32 %v5065, %v1222
  %v5074 = vmul.f32 %v5066, %v5066
  %v5075 = vmul.f32 %v5067, %v5067
  %v5076 = vmul.f32 %v5068, %v5068
  %v5077 = vmul.f32 %v5069, %v5069
  %v5078 = vsub.f32 %v5070, %v5074
  %v5079 = vsub.f32 %v5071, %v5075
  %v5080 = vsub.f32 %v5072, %v5076
  %v5081 = vsub.f32 %v5073, %v5077
  %v5082 = vmax.f32 %v5078, 0.0
  %v5083 = vmax.f32 %v5079, 0.0
  %v5084 = vmax.f32 %v5080, 0.0
  %v5085 = vmax.f32 %v5081, 0.0
  %s5086 = scalar_lea.vmem %s7, 128
  %v5087 = vld [vmem:[%s5086] sm:$0xff]
  %v5088 = vld [vmem:[%s5086 + $0x8] sm:$0xff]
  %v5089 = vld [vmem:[%s5086 + $0x10] sm:$0xff]
  %v5090 = vld [vmem:[%s5086 + $0x18] sm:$0xff]
  %v5091 = vadd.f32 %v5082, 1e-05
  %v5092 = vadd.f32 %v5083, 1e-05
  %v5093 = vadd.f32 %v5084, 1e-05
  %v5094 = vadd.f32 %v5085, 1e-05
  %v5095 = vrsqrt.pop %v5091
  %v5096 = vrsqrt.pop %v5092
  %v5097 = vrsqrt.pop %v5093
  %v5098 = vrsqrt.pop %v5094
  %v5099 = vmul.f32 %v5087, %v5095
  %v5100 = vmul.f32 %v5088, %v5096
  %v5101 = vmul.f32 %v5089, %v5097
  %v5102 = vmul.f32 %v5090, %v5098
  %s5103 = scalar_lea.vmem %s8, 128
  %v5104 = vld [vmem:[%s5103] sm:$0xff]
  %v5105 = vld [vmem:[%s5103 + $0x8] sm:$0xff]
  %v5106 = vld [vmem:[%s5103 + $0x10] sm:$0xff]
  %v5107 = vld [vmem:[%s5103 + $0x18] sm:$0xff]
  %v5108 = vmul.f32 %v5066, %v5099
  %v5109 = vmul.f32 %v5067, %v5100
  %v5110 = vmul.f32 %v5068, %v5101
  %v5111 = vmul.f32 %v5069, %v5102
  %v5112 = vsub.f32 %v5104, %v5108
  %v5113 = vsub.f32 %v5105, %v5109
  %v5114 = vsub.f32 %v5106, %v5110
  %v5115 = vsub.f32 %v5107, %v5111
  %5117 = vset.pattern.permute.xlu0 0
  %5118 = vperm.xlu0 %5117, %v5099
  %v5119 = vpop.permute.xlu0 %5118
  %5122 = vset.pattern.permute.xlu0 0
  %5123 = vperm.xlu0 %5122, %v5100
  %v5124 = vpop.permute.xlu0 %5123
  %5127 = vset.pattern.permute.xlu0 0
  %5128 = vperm.xlu0 %5127, %v5101
  %v5129 = vpop.permute.xlu0 %5128
  %5132 = vset.pattern.permute.xlu0 0
  %5133 = vperm.xlu0 %5132, %v5102
  %v5134 = vpop.permute.xlu0 %5133
  %v5136 = vmul.f32 %v4998, %v5119
  %v5137 = vmul.f32 %v4999, %v5119
  %v5138 = vmul.f32 %v5000, %v5119
  %v5139 = vmul.f32 %v5001, %v5124
  %v5140 = vmul.f32 %v5002, %v5124
  %v5141 = vmul.f32 %v5003, %v5124
  %v5142 = vmul.f32 %v5004, %v5129
  %v5143 = vmul.f32 %v5005, %v5129
  %v5144 = vmul.f32 %v5006, %v5129
  %v5145 = vmul.f32 %v5007, %v5134
  %v5146 = vmul.f32 %v5008, %v5134
  %v5147 = vmul.f32 %v5009, %v5134
  %5149 = vset.pattern.permute.xlu0 0
  %5150 = vperm.xlu0 %5149, %v5112
  %v5151 = vpop.permute.xlu0 %5150
  %5154 = vset.pattern.permute.xlu0 0
  %5155 = vperm.xlu0 %5154, %v5113
  %v5156 = vpop.permute.xlu0 %5155
  %5159 = vset.pattern.permute.xlu0 0
  %5160 = vperm.xlu0 %5159, %v5114
  %v5161 = vpop.permute.xlu0 %5160
  %5164 = vset.pattern.permute.xlu0 0
  %5165 = vperm.xlu0 %5164, %v5115
  %v5166 = vpop.permute.xlu0 %5165
  %v5168 = vadd.f32 %v5136, %v5151
  %v5169 = vadd.f32 %v5137, %v5151
  %v5170 = vadd.f32 %v5138, %v5151
  %v5171 = vadd.f32 %v5139, %v5156
  %v5172 = vadd.f32 %v5140, %v5156
  %v5173 = vadd.f32 %v5141, %v5156
  %v5174 = vadd.f32 %v5142, %v5161
  %v5175 = vadd.f32 %v5143, %v5161
  %v5176 = vadd.f32 %v5144, %v5161
  %v5177 = vadd.f32 %v5145, %v5166
  %v5178 = vadd.f32 %v5146, %v5166
  %v5179 = vadd.f32 %v5147, %v5166
  %v5180 = vmax.f32 %v5168, 0.0
  %v5181 = vmax.f32 %v5169, 0.0
  %v5182 = vmax.f32 %v5170, 0.0
  %v5183 = vmax.f32 %v5171, 0.0
  %v5184 = vmax.f32 %v5172, 0.0
  %v5185 = vmax.f32 %v5173, 0.0
  %v5186 = vmax.f32 %v5174, 0.0
  %v5187 = vmax.f32 %v5175, 0.0
  %v5188 = vmax.f32 %v5176, 0.0
  %v5189 = vmax.f32 %v5177, 0.0
  %v5190 = vmax.f32 %v5178, 0.0
  %v5191 = vmax.f32 %v5179, 0.0
  %v5192 = vmul.f32 %v5180, %v65
  %v5193 = vmul.f32 %v5181, %v69
  %v5194 = vmul.f32 %v5182, %v73
  %v5195 = vmul.f32 %v5183, %v65
  %v5196 = vmul.f32 %v5184, %v69
  %v5197 = vmul.f32 %v5185, %v73
  %v5198 = vmul.f32 %v5186, %v65
  %v5199 = vmul.f32 %v5187, %v69
  %v5200 = vmul.f32 %v5188, %v73
  %v5201 = vmul.f32 %v5189, %v65
  %v5202 = vmul.f32 %v5190, %v69
  %v5203 = vmul.f32 %v5191, %v73
  %v5204 = vpack.c.bf16 %v5195, %v5192
  %v5205 = vpack.c.bf16 %v5196, %v5193
  %v5206 = vpack.c.bf16 %v5197, %v5194
  %v5207 = vpack.c.bf16 %v5201, %v5198
  %v5208 = vpack.c.bf16 %v5202, %v5199
  %v5209 = vpack.c.bf16 %v5203, %v5200
  %v5216 = vunpack.c.l.b16 %v5204
  %v5217 = vunpack.c.l.b16 %v5205
  %v5218 = vunpack.c.l.b16 %v5206
  %v5219 = vunpack.c.h.b16 %v5204
  %v5220 = vunpack.c.h.b16 %v5205
  %v5221 = vunpack.c.h.b16 %v5206
  %v5222 = vunpack.c.l.b16 %v5207
  %v5223 = vunpack.c.l.b16 %v5208
  %v5224 = vunpack.c.l.b16 %v5209
  %v5225 = vunpack.c.h.b16 %v5207
  %v5226 = vunpack.c.h.b16 %v5208
  %v5227 = vunpack.c.h.b16 %v5209
  %v5228 = vpack.c.b16 %v5217, %v5216
  %v5229 = vpack.c.b16 %v5218, %v5218
  %v5230 = vpack.c.b16 %v5220, %v5219
  %v5231 = vpack.c.b16 %v5221, %v5221
  %v5232 = vpack.c.b16 %v5223, %v5222
  %v5233 = vpack.c.b16 %v5224, %v5224
  %v5234 = vpack.c.b16 %v5226, %v5225
  %v5235 = vpack.c.b16 %v5227, %v5227
  %5244 = vst [vmem:[#allocation2 + $0x4] sm:$0xff] %v5228
  %5245 = vst [vmem:[#allocation2 + $0xc] sm:$0xf] %v5229
  %5246 = vst [vmem:[#allocation2 + $0x18] sm:$0xff] %v5230
  %5247 = vst [vmem:[#allocation2 + $0x20] sm:$0xf] %v5231
  %5248 = vst [vmem:[#allocation2 + $0x2c] sm:$0xff] %v5232
  %5249 = vst [vmem:[#allocation2 + $0x34] sm:$0xf] %v5233
  %5250 = vst [vmem:[#allocation2 + $0x40] sm:$0xff] %v5234
  %5251 = vst [vmem:[#allocation2 + $0x48] sm:$0xf] %v5235
  %v5252 = vld [vmem:[#allocation2] sm:$0xff]
  %v5253 = vld [vmem:[#allocation2 + $0x8] sm:$0xff]
  %v5254 = vld [vmem:[#allocation2 + $0x14] sm:$0xff]
  %v5255 = vld [vmem:[#allocation2 + $0x1c] sm:$0xff]
  %v5256 = vld [vmem:[#allocation2 + $0x28] sm:$0xff]
  %v5257 = vld [vmem:[#allocation2 + $0x30] sm:$0xff]
  %v5258 = vld [vmem:[#allocation2 + $0x3c] sm:$0xff]
  %v5259 = vld [vmem:[#allocation2 + $0x44] sm:$0xff]
  %v5260 = vld [vmem:[%s6] sm:$0xf]
  %v5261 = vld [vmem:[%s6 + $0x4] sm:$0xf]
  %v5262 = vld [vmem:[%s6 + $0x8] sm:$0xf]
  %v5263 = vld [vmem:[%s6 + $0xc] sm:$0xf]
  %v5264 = vld [vmem:[#allocation2 + $0x4] sm:$0xff]
  %v5265 = vld [vmem:[#allocation2 + $0xc] sm:$0xf]
  %v5266 = vld [vmem:[#allocation2 + $0x18] sm:$0xff]
  %v5267 = vld [vmem:[#allocation2 + $0x20] sm:$0xf]
  %v5268 = vld [vmem:[#allocation2 + $0x2c] sm:$0xff]
  %v5269 = vld [vmem:[#allocation2 + $0x34] sm:$0xf]
  %v5270 = vld [vmem:[#allocation2 + $0x40] sm:$0xff]
  %v5271 = vld [vmem:[#allocation2 + $0x48] sm:$0xf]
  %s5272 = scalar_lea.vmem %s6, 16
  %v5273 = vld [vmem:[%s5272] sm:$0xf]
  %v5274 = vld [vmem:[%s5272 + $0x4] sm:$0xf]
  %v5275 = vld [vmem:[%s5272 + $0x8] sm:$0xf]
  %v5276 = vld [vmem:[%s5272 + $0xc] sm:$0xf]
  %v5281 = vunpack.c.l.b16 %v5273
  %v5282 = vunpack.c.l.b16 %v5274
  %v5283 = vunpack.c.l.b16 %v5275
  %v5284 = vunpack.c.l.b16 %v5276
  %v5285 = vpack.c.b16 %v5282, %v5281
  %v5286 = vpack.c.b16 %v5284, %v5283
  %v5295 = vunpack.c.l.b16 %v5264
  %v5296 = vunpack.c.h.b16 %v5264
  %v5297 = vunpack.c.l.b16 %v5265
  %v5298 = vunpack.c.l.b16 %v5266
  %v5299 = vunpack.c.h.b16 %v5266
  %v5300 = vunpack.c.l.b16 %v5267
  %v5301 = vunpack.c.l.b16 %v5268
  %v5302 = vunpack.c.h.b16 %v5268
  %v5303 = vunpack.c.l.b16 %v5269
  %v5304 = vunpack.c.l.b16 %v5270
  %v5305 = vunpack.c.h.b16 %v5270
  %v5306 = vunpack.c.l.b16 %v5271
  %v5307 = vpack.c.b16 %v5298, %v5295
  %v5308 = vpack.c.b16 %v5299, %v5296
  %v5309 = vpack.c.b16 %v5300, %v5297
  %v5310 = vpack.c.b16 %v5304, %v5301
  %v5311 = vpack.c.b16 %v5305, %v5302
  %v5312 = vpack.c.b16 %v5306, %v5303
  %v5320 = vsel %vm1494, %v5285, 0
  %v5323 = vsel %vm1494, %v5286, 0
  %5325 = vmatprep.subr.bf16.mxu0 %v5308
  %5326 = vmatpush1.bf16.msra.mxu0 %v5307
  %5327 = vmatprep.subr.bf16.mxu0 %v5311
  %5328 = vmatpush1.bf16.msra.mxu0 %v5310
  %5329 = vmatprep.subr.bf16.mxu0 0
  %5330 = vmatpush1.bf16.msra.mxu0 0
  %5331 = vmatprep.subr.bf16.mxu0 0
  %5332 = vmatpush1.bf16.msra.mxu0 0
  %5333 = vmatprep.subr.bf16.mxu0 0
  %5334 = vmatpush1.bf16.msra.mxu0 0
  %5335 = vmatprep.subr.bf16.mxu0 0
  %5336 = vmatpush1.bf16.msra.mxu0 0
  %5337 = vmatprep.subr.bf16.mxu0 0
  %5338 = vmatpush1.bf16.msra.mxu0 0
  %5339 = vmatprep.subr.bf16.mxu0 0
  %5340 = vmatpush1.bf16.msra.mxu0 0
  %5341 = vmatprep.subr.bf16.mxu0 0
  %5342 = vmatpush1.bf16.msra.mxu0 0
  %5343 = vmatprep.subr.bf16.mxu0 0
  %5344 = vmatpush1.bf16.msra.mxu0 0
  %5345 = vmatprep.subr.bf16.mxu0 0
  %5346 = vmatpush1.bf16.msra.mxu0 0
  %5347 = vmatprep.subr.bf16.mxu0 0
  %5348 = vmatpush1.bf16.msra.mxu0 0
  %5349 = vmatprep.subr.bf16.mxu0 0
  %5350 = vmatpush1.bf16.msra.mxu0 0
  %5351 = vmatprep.subr.bf16.mxu0 0
  %5352 = vmatpush1.bf16.msra.mxu0 0
  %5353 = vmatprep.subr.bf16.mxu0 0
  %5354 = vmatpush1.bf16.msra.mxu0 0
  %5355 = vmatprep.subr.bf16.mxu0 0
  %5356 = vmatpush1.bf16.msra.mxu0 0
  %5357 = vmatprep.mubr.bf16.mxu0 0
  %5358 = vmatmul.mubr.bf16.gmra.mrb[0].mxu0 %v5320
  %v5359 = vpop.f32.mrb[0].mxu0
  %v5360 = vadd.f32 0.0, %v5359
  %v5361 = vpop.f32.mrb[0].mxu0
  %v5362 = vadd.f32 0.0, %v5361
  %v5363 = vpop.f32.mrb[0].mxu0
  %v5364 = vadd.f32 0.0, %v5363
  %v5365 = vpop.f32.mrb[0].mxu0
  %v5366 = vadd.f32 0.0, %v5365
  %5367 = vmatprep.mubr.bf16.mxu0 0
  %5368 = vmatmul.mubr.bf16.gmra.mrb[0].mxu0 %v5323
  %v5369 = vpop.f32.mrb[0].mxu0
  %v5370 = vadd.f32 0.0, %v5369
  %v5371 = vpop.f32.mrb[0].mxu0
  %v5372 = vadd.f32 0.0, %v5371
  %v5373 = vpop.f32.mrb[0].mxu0
  %v5374 = vadd.f32 0.0, %v5373
  %v5375 = vpop.f32.mrb[0].mxu0
  %v5376 = vadd.f32 0.0, %v5375
  %5377 = vdwg.mxu0
  %5378 = vmatprep.subr.bf16.mxu0 0
  %5379 = vmatpush1.bf16.msra.mxu0 %v5309
  %5380 = vmatprep.subr.bf16.mxu0 0
  %5381 = vmatpush1.bf16.msra.mxu0 %v5312
  %5382 = vmatprep.subr.bf16.mxu0 0
  %5383 = vmatpush1.bf16.msra.mxu0 0
  %5384 = vmatprep.subr.bf16.mxu0 0
  %5385 = vmatpush1.bf16.msra.mxu0 0
  %5386 = vmatprep.subr.bf16.mxu0 0
  %5387 = vmatpush1.bf16.msra.mxu0 0
  %5388 = vmatprep.subr.bf16.mxu0 0
  %5389 = vmatpush1.bf16.msra.mxu0 0
  %5390 = vmatprep.subr.bf16.mxu0 0
  %5391 = vmatpush1.bf16.msra.mxu0 0
  %5392 = vmatprep.subr.bf16.mxu0 0
  %5393 = vmatpush1.bf16.msra.mxu0 0
  %5394 = vmatprep.subr.bf16.mxu0 0
  %5395 = vmatpush1.bf16.msra.mxu0 0
  %5396 = vmatprep.subr.bf16.mxu0 0
  %5397 = vmatpush1.bf16.msra.mxu0 0
  %5398 = vmatprep.subr.bf16.mxu0 0
  %5399 = vmatpush1.bf16.msra.mxu0 0
  %5400 = vmatprep.subr.bf16.mxu0 0
  %5401 = vmatpush1.bf16.msra.mxu0 0
  %5402 = vmatprep.subr.bf16.mxu0 0
  %5403 = vmatpush1.bf16.msra.mxu0 0
  %5404 = vmatprep.subr.bf16.mxu0 0
  %5405 = vmatpush1.bf16.msra.mxu0 0
  %5406 = vmatprep.subr.bf16.mxu0 0
  %5407 = vmatpush1.bf16.msra.mxu0 0
  %5408 = vmatprep.subr.bf16.mxu0 0
  %5409 = vmatpush1.bf16.msra.mxu0 0
  %5410 = vmatprep.mubr.bf16.mxu0 0
  %5411 = vmatmul.mubr.bf16.gmra.mrb[0].mxu0 %v5320
  %v5412 = vpop.f32.mrb[0].mxu0
  %v5413 = vadd.f32 0.0, %v5412
  %v5414 = vpop.f32.mrb[0].mxu0
  %v5415 = vpop.f32.mrb[0].mxu0
  %v5416 = vadd.f32 0.0, %v5415
  %v5417 = vpop.f32.mrb[0].mxu0
  %5418 = vmatprep.mubr.bf16.mxu0 0
  %5419 = vmatmul.mubr.bf16.gmra.mrb[0].mxu0 %v5323
  %v5420 = vpop.f32.mrb[0].mxu0
  %v5421 = vadd.f32 0.0, %v5420
  %v5422 = vpop.f32.mrb[0].mxu0
  %v5423 = vpop.f32.mrb[0].mxu0
  %v5424 = vadd.f32 0.0, %v5423
  %v5425 = vpop.f32.mrb[0].mxu0
  %5426 = vdwg.mxu0
  %v5431 = vunpack.c.l.b16 %v5260
  %v5432 = vunpack.c.l.b16 %v5261
  %v5433 = vunpack.c.l.b16 %v5262
  %v5434 = vunpack.c.l.b16 %v5263
  %v5435 = vpack.c.b16 %v5432, %v5431
  %v5436 = vpack.c.b16 %v5434, %v5433
  %v5445 = vunpack.c.l.b16 %v5252
  %v5446 = vunpack.c.h.b16 %v5252
  %v5447 = vunpack.c.l.b16 %v5253
  %v5448 = vunpack.c.h.b16 %v5253
  %v5449 = vunpack.c.l.b16 %v5254
  %v5450 = vunpack.c.h.b16 %v5254
  %v5451 = vunpack.c.l.b16 %v5255
  %v5452 = vunpack.c.h.b16 %v5255
  %v5453 = vunpack.c.l.b16 %v5256
  %v5454 = vunpack.c.h.b16 %v5256
  %v5455 = vunpack.c.l.b16 %v5257
  %v5456 = vunpack.c.h.b16 %v5257
  %v5457 = vunpack.c.l.b16 %v5258
  %v5458 = vunpack.c.h.b16 %v5258
  %v5459 = vunpack.c.l.b16 %v5259
  %v5460 = vunpack.c.h.b16 %v5259
  %v5461 = vpack.c.b16 %v5449, %v5445
  %v5462 = vpack.c.b16 %v5450, %v5446
  %v5463 = vpack.c.b16 %v5451, %v5447
  %v5464 = vpack.c.b16 %v5452, %v5448
  %v5465 = vpack.c.b16 %v5457, %v5453
  %v5466 = vpack.c.b16 %v5458, %v5454
  %v5467 = vpack.c.b16 %v5459, %v5455
  %v5468 = vpack.c.b16 %v5460, %v5456
  %5469 = vrot.lane.b32.xlu0 %v5461, 1
  %v5470 = vpop.permute.xlu0 %5469
  %5471 = vrot.lane.b32.xlu0 %v5462, 1
  %v5472 = vpop.permute.xlu0 %5471
  %5473 = vrot.lane.b32.xlu0 %v5463, 1
  %v5474 = vpop.permute.xlu0 %5473
  %5475 = vrot.lane.b32.xlu0 %v5464, 1
  %v5476 = vpop.permute.xlu0 %5475
  %5477 = vrot.lane.b32.xlu0 %v5465, 1
  %v5478 = vpop.permute.xlu0 %5477
  %5479 = vrot.lane.b32.xlu0 %v5466, 1
  %v5480 = vpop.permute.xlu0 %5479
  %5481 = vrot.lane.b32.xlu0 %v5467, 1
  %v5482 = vpop.permute.xlu0 %5481
  %5483 = vrot.lane.b32.xlu0 %v5468, 1
  %v5484 = vpop.permute.xlu0 %5483
  %v5485 = vsel %vm250, %v5470, %v5472
  %v5486 = vsel %vm250, %v5472, %v5474
  %v5487 = vsel %vm250, %v5474, %v5476
  %v5488 = vsel %vm250, %v5478, %v5480
  %v5489 = vsel %vm250, %v5480, %v5482
  %v5490 = vsel %vm250, %v5482, %v5484
  %v5498 = vsel %vm1494, %v5435, 0
  %v5501 = vsel %vm1494, %v5436, 0
  %5503 = vmatprep.subr.bf16.mxu0 %v5486
  %5504 = vmatpush1.bf16.msra.mxu0 %v5485
  %5505 = vmatprep.subr.bf16.mxu0 %v5489
  %5506 = vmatpush1.bf16.msra.mxu0 %v5488
  %5507 = vmatprep.subr.bf16.mxu0 0
  %5508 = vmatpush1.bf16.msra.mxu0 0
  %5509 = vmatprep.subr.bf16.mxu0 0
  %5510 = vmatpush1.bf16.msra.mxu0 0
  %5511 = vmatprep.subr.bf16.mxu0 0
  %5512 = vmatpush1.bf16.msra.mxu0 0
  %5513 = vmatprep.subr.bf16.mxu0 0
  %5514 = vmatpush1.bf16.msra.mxu0 0
  %5515 = vmatprep.subr.bf16.mxu0 0
  %5516 = vmatpush1.bf16.msra.mxu0 0
  %5517 = vmatprep.subr.bf16.mxu0 0
  %5518 = vmatpush1.bf16.msra.mxu0 0
  %5519 = vmatprep.subr.bf16.mxu0 0
  %5520 = vmatpush1.bf16.msra.mxu0 0
  %5521 = vmatprep.subr.bf16.mxu0 0
  %5522 = vmatpush1.bf16.msra.mxu0 0
  %5523 = vmatprep.subr.bf16.mxu0 0
  %5524 = vmatpush1.bf16.msra.mxu0 0
  %5525 = vmatprep.subr.bf16.mxu0 0
  %5526 = vmatpush1.bf16.msra.mxu0 0
  %5527 = vmatprep.subr.bf16.mxu0 0
  %5528 = vmatpush1.bf16.msra.mxu0 0
  %5529 = vmatprep.subr.bf16.mxu0 0
  %5530 = vmatpush1.bf16.msra.mxu0 0
  %5531 = vmatprep.subr.bf16.mxu0 0
  %5532 = vmatpush1.bf16.msra.mxu0 0
  %5533 = vmatprep.subr.bf16.mxu0 0
  %5534 = vmatpush1.bf16.msra.mxu0 0
  %5535 = vmatprep.mubr.bf16.mxu0 0
  %5536 = vmatmul.mubr.bf16.gmra.mrb[0].mxu0 %v5498
  %v5537 = vpop.f32.mrb[0].mxu0
  %v5538 = vadd.f32 %v5360, %v5537
  %v5539 = vpop.f32.mrb[0].mxu0
  %v5540 = vadd.f32 %v5362, %v5539
  %v5541 = vpop.f32.mrb[0].mxu0
  %v5542 = vadd.f32 %v5364, %v5541
  %v5543 = vpop.f32.mrb[0].mxu0
  %v5544 = vadd.f32 %v5366, %v5543
  %5545 = vmatprep.mubr.bf16.mxu0 0
  %5546 = vmatmul.mubr.bf16.gmra.mrb[0].mxu0 %v5501
  %v5547 = vpop.f32.mrb[0].mxu0
  %v5548 = vadd.f32 %v5370, %v5547
  %v5549 = vpop.f32.mrb[0].mxu0
  %v5550 = vadd.f32 %v5372, %v5549
  %v5551 = vpop.f32.mrb[0].mxu0
  %v5552 = vadd.f32 %v5374, %v5551
  %v5553 = vpop.f32.mrb[0].mxu0
  %v5554 = vadd.f32 %v5376, %v5553
  %5555 = vdwg.mxu0
  %5556 = vmatprep.subr.bf16.mxu0 0
  %5557 = vmatpush1.bf16.msra.mxu0 %v5487
  %5558 = vmatprep.subr.bf16.mxu0 0
  %5559 = vmatpush1.bf16.msra.mxu0 %v5490
  %5560 = vmatprep.subr.bf16.mxu0 0
  %5561 = vmatpush1.bf16.msra.mxu0 0
  %5562 = vmatprep.subr.bf16.mxu0 0
  %5563 = vmatpush1.bf16.msra.mxu0 0
  %5564 = vmatprep.subr.bf16.mxu0 0
  %5565 = vmatpush1.bf16.msra.mxu0 0
  %5566 = vmatprep.subr.bf16.mxu0 0
  %5567 = vmatpush1.bf16.msra.mxu0 0
  %5568 = vmatprep.subr.bf16.mxu0 0
  %5569 = vmatpush1.bf16.msra.mxu0 0
  %5570 = vmatprep.subr.bf16.mxu0 0
  %5571 = vmatpush1.bf16.msra.mxu0 0
  %5572 = vmatprep.subr.bf16.mxu0 0
  %5573 = vmatpush1.bf16.msra.mxu0 0
  %5574 = vmatprep.subr.bf16.mxu0 0
  %5575 = vmatpush1.bf16.msra.mxu0 0
  %5576 = vmatprep.subr.bf16.mxu0 0
  %5577 = vmatpush1.bf16.msra.mxu0 0
  %5578 = vmatprep.subr.bf16.mxu0 0
  %5579 = vmatpush1.bf16.msra.mxu0 0
  %5580 = vmatprep.subr.bf16.mxu0 0
  %5581 = vmatpush1.bf16.msra.mxu0 0
  %5582 = vmatprep.subr.bf16.mxu0 0
  %5583 = vmatpush1.bf16.msra.mxu0 0
  %5584 = vmatprep.subr.bf16.mxu0 0
  %5585 = vmatpush1.bf16.msra.mxu0 0
  %5586 = vmatprep.subr.bf16.mxu0 0
  %5587 = vmatpush1.bf16.msra.mxu0 0
  %5588 = vmatprep.mubr.bf16.mxu0 0
  %5589 = vmatmul.mubr.bf16.gmra.mrb[0].mxu0 %v5498
  %v5590 = vpop.f32.mrb[0].mxu0
  %v5591 = vadd.f32 %v5413, %v5590
  %v5592 = vpop.f32.mrb[0].mxu0
  %v5593 = vpop.f32.mrb[0].mxu0
  %v5594 = vadd.f32 %v5416, %v5593
  %v5595 = vpop.f32.mrb[0].mxu0
  %5596 = vmatprep.mubr.bf16.mxu0 0
  %5597 = vmatmul.mubr.bf16.gmra.mrb[0].mxu0 %v5501
  %v5598 = vpop.f32.mrb[0].mxu0
  %v5599 = vadd.f32 %v5421, %v5598
  %v5600 = vpop.f32.mrb[0].mxu0
  %v5601 = vpop.f32.mrb[0].mxu0
  %v5602 = vadd.f32 %v5424, %v5601
  %v5603 = vpop.f32.mrb[0].mxu0
  %5604 = vdwg.mxu0
  %v5605 = vld [vmem:[#allocation2 + $0x4] sm:$0xff]
  %v5606 = vld [vmem:[#allocation2 + $0xc] sm:$0xff]
  %v5607 = vld [vmem:[#allocation2 + $0x18] sm:$0xff]
  %v5608 = vld [vmem:[#allocation2 + $0x20] sm:$0xff]
  %v5609 = vld [vmem:[#allocation2 + $0x2c] sm:$0xff]
  %v5610 = vld [vmem:[#allocation2 + $0x34] sm:$0xff]
  %v5611 = vld [vmem:[#allocation2 + $0x40] sm:$0xff]
  %v5612 = vld [vmem:[#allocation2 + $0x48] sm:$0xff]
  %s5613 = scalar_lea.vmem %s6, 32
  %v5614 = vld [vmem:[%s5613] sm:$0xf]
  %v5615 = vld [vmem:[%s5613 + $0x4] sm:$0xf]
  %v5616 = vld [vmem:[%s5613 + $0x8] sm:$0xf]
  %v5617 = vld [vmem:[%s5613 + $0xc] sm:$0xf]
  %v5622 = vunpack.c.l.b16 %v5614
  %v5623 = vunpack.c.l.b16 %v5615
  %v5624 = vunpack.c.l.b16 %v5616
  %v5625 = vunpack.c.l.b16 %v5617
  %v5626 = vpack.c.b16 %v5623, %v5622
  %v5627 = vpack.c.b16 %v5625, %v5624
  %v5636 = vunpack.c.l.b16 %v5605
  %v5637 = vunpack.c.h.b16 %v5605
  %v5638 = vunpack.c.l.b16 %v5606
  %v5639 = vunpack.c.h.b16 %v5606
  %v5640 = vunpack.c.l.b16 %v5607
  %v5641 = vunpack.c.h.b16 %v5607
  %v5642 = vunpack.c.l.b16 %v5608
  %v5643 = vunpack.c.h.b16 %v5608
  %v5644 = vunpack.c.l.b16 %v5609
  %v5645 = vunpack.c.h.b16 %v5609
  %v5646 = vunpack.c.l.b16 %v5610
  %v5647 = vunpack.c.h.b16 %v5610
  %v5648 = vunpack.c.l.b16 %v5611
  %v5649 = vunpack.c.h.b16 %v5611
  %v5650 = vunpack.c.l.b16 %v5612
  %v5651 = vunpack.c.h.b16 %v5612
  %v5652 = vpack.c.b16 %v5640, %v5636
  %v5653 = vpack.c.b16 %v5641, %v5637
  %v5654 = vpack.c.b16 %v5642, %v5638
  %v5655 = vpack.c.b16 %v5643, %v5639
  %v5656 = vpack.c.b16 %v5648, %v5644
  %v5657 = vpack.c.b16 %v5649, %v5645
  %v5658 = vpack.c.b16 %v5650, %v5646
  %v5659 = vpack.c.b16 %v5651, %v5647
  %5660 = vrot.lane.b32.xlu0 %v5652, 127
  %v5661 = vpop.permute.xlu0 %5660
  %5662 = vrot.lane.b32.xlu0 %v5653, 127
  %v5663 = vpop.permute.xlu0 %5662
  %5664 = vrot.lane.b32.xlu0 %v5654, 127
  %v5665 = vpop.permute.xlu0 %5664
  %5666 = vrot.lane.b32.xlu0 %v5655, 127
  %v5667 = vpop.permute.xlu0 %5666
  %5668 = vrot.lane.b32.xlu0 %v5656, 127
  %v5669 = vpop.permute.xlu0 %5668
  %5670 = vrot.lane.b32.xlu0 %v5657, 127
  %v5671 = vpop.permute.xlu0 %5670
  %5672 = vrot.lane.b32.xlu0 %v5658, 127
  %v5673 = vpop.permute.xlu0 %5672
  %5674 = vrot.lane.b32.xlu0 %v5659, 127
  %v5675 = vpop.permute.xlu0 %5674
  %v5676 = vsel %vm837, %v5661, %v5663
  %v5677 = vsel %vm837, %v5663, %v5665
  %v5678 = vsel %vm837, %v5665, %v5667
  %v5679 = vsel %vm837, %v5669, %v5671
  %v5680 = vsel %vm837, %v5671, %v5673
  %v5681 = vsel %vm837, %v5673, %v5675
  %v5689 = vsel %vm1494, %v5626, 0
  %v5692 = vsel %vm1494, %v5627, 0
  %5694 = vmatprep.subr.bf16.mxu0 %v5677
  %5695 = vmatpush1.bf16.msra.mxu0 %v5676
  %5696 = vmatprep.subr.bf16.mxu0 %v5680
  %5697 = vmatpush1.bf16.msra.mxu0 %v5679
  %5698 = vmatprep.subr.bf16.mxu0 0
  %5699 = vmatpush1.bf16.msra.mxu0 0
  %5700 = vmatprep.subr.bf16.mxu0 0
  %5701 = vmatpush1.bf16.msra.mxu0 0
  %5702 = vmatprep.subr.bf16.mxu0 0
  %5703 = vmatpush1.bf16.msra.mxu0 0
  %5704 = vmatprep.subr.bf16.mxu0 0
  %5705 = vmatpush1.bf16.msra.mxu0 0
  %5706 = vmatprep.subr.bf16.mxu0 0
  %5707 = vmatpush1.bf16.msra.mxu0 0
  %5708 = vmatprep.subr.bf16.mxu0 0
  %5709 = vmatpush1.bf16.msra.mxu0 0
  %5710 = vmatprep.subr.bf16.mxu0 0
  %5711 = vmatpush1.bf16.msra.mxu0 0
  %5712 = vmatprep.subr.bf16.mxu0 0
  %5713 = vmatpush1.bf16.msra.mxu0 0
  %5714 = vmatprep.subr.bf16.mxu0 0
  %5715 = vmatpush1.bf16.msra.mxu0 0
  %5716 = vmatprep.subr.bf16.mxu0 0
  %5717 = vmatpush1.bf16.msra.mxu0 0
  %5718 = vmatprep.subr.bf16.mxu0 0
  %5719 = vmatpush1.bf16.msra.mxu0 0
  %5720 = vmatprep.subr.bf16.mxu0 0
  %5721 = vmatpush1.bf16.msra.mxu0 0
  %5722 = vmatprep.subr.bf16.mxu0 0
  %5723 = vmatpush1.bf16.msra.mxu0 0
  %5724 = vmatprep.subr.bf16.mxu0 0
  %5725 = vmatpush1.bf16.msra.mxu0 0
  %5726 = vmatprep.mubr.bf16.mxu0 0
  %5727 = vmatmul.mubr.bf16.gmra.mrb[0].mxu0 %v5689
  %v5728 = vpop.f32.mrb[0].mxu0
  %v5729 = vadd.f32 0.0, %v5728
  %v5730 = vpop.f32.mrb[0].mxu0
  %v5731 = vadd.f32 0.0, %v5730
  %v5732 = vpop.f32.mrb[0].mxu0
  %v5733 = vadd.f32 0.0, %v5732
  %v5734 = vpop.f32.mrb[0].mxu0
  %v5735 = vadd.f32 0.0, %v5734
  %5736 = vmatprep.mubr.bf16.mxu0 0
  %5737 = vmatmul.mubr.bf16.gmra.mrb[0].mxu0 %v5692
  %v5738 = vpop.f32.mrb[0].mxu0
  %v5739 = vadd.f32 0.0, %v5738
  %v5740 = vpop.f32.mrb[0].mxu0
  %v5741 = vadd.f32 0.0, %v5740
  %v5742 = vpop.f32.mrb[0].mxu0
  %v5743 = vadd.f32 0.0, %v5742
  %v5744 = vpop.f32.mrb[0].mxu0
  %v5745 = vadd.f32 0.0, %v5744
  %5746 = vdwg.mxu0
  %5747 = vmatprep.subr.bf16.mxu0 0
  %5748 = vmatpush1.bf16.msra.mxu0 %v5678
  %5749 = vmatprep.subr.bf16.mxu0 0
  %5750 = vmatpush1.bf16.msra.mxu0 %v5681
  %5751 = vmatprep.subr.bf16.mxu0 0
  %5752 = vmatpush1.bf16.msra.mxu0 0
  %5753 = vmatprep.subr.bf16.mxu0 0
  %5754 = vmatpush1.bf16.msra.mxu0 0
  %5755 = vmatprep.subr.bf16.mxu0 0
  %5756 = vmatpush1.bf16.msra.mxu0 0
  %5757 = vmatprep.subr.bf16.mxu0 0
  %5758 = vmatpush1.bf16.msra.mxu0 0
  %5759 = vmatprep.subr.bf16.mxu0 0
  %5760 = vmatpush1.bf16.msra.mxu0 0
  %5761 = vmatprep.subr.bf16.mxu0 0
  %5762 = vmatpush1.bf16.msra.mxu0 0
  %5763 = vmatprep.subr.bf16.mxu0 0
  %5764 = vmatpush1.bf16.msra.mxu0 0
  %5765 = vmatprep.subr.bf16.mxu0 0
  %5766 = vmatpush1.bf16.msra.mxu0 0
  %5767 = vmatprep.subr.bf16.mxu0 0
  %5768 = vmatpush1.bf16.msra.mxu0 0
  %5769 = vmatprep.subr.bf16.mxu0 0
  %5770 = vmatpush1.bf16.msra.mxu0 0
  %5771 = vmatprep.subr.bf16.mxu0 0
  %5772 = vmatpush1.bf16.msra.mxu0 0
  %5773 = vmatprep.subr.bf16.mxu0 0
  %5774 = vmatpush1.bf16.msra.mxu0 0
  %5775 = vmatprep.subr.bf16.mxu0 0
  %5776 = vmatpush1.bf16.msra.mxu0 0
  %5777 = vmatprep.subr.bf16.mxu0 0
  %5778 = vmatpush1.bf16.msra.mxu0 0
  %5779 = vmatprep.mubr.bf16.mxu0 0
  %5780 = vmatmul.mubr.bf16.gmra.mrb[0].mxu0 %v5689
  %v5781 = vpop.f32.mrb[0].mxu0
  %v5782 = vadd.f32 0.0, %v5781
  %v5783 = vpop.f32.mrb[0].mxu0
  %v5784 = vpop.f32.mrb[0].mxu0
  %v5785 = vadd.f32 0.0, %v5784
  %v5786 = vpop.f32.mrb[0].mxu0
  %5787 = vmatprep.mubr.bf16.mxu0 0
  %5788 = vmatmul.mubr.bf16.gmra.mrb[0].mxu0 %v5692
  %v5789 = vpop.f32.mrb[0].mxu0
  %v5790 = vadd.f32 0.0, %v5789
  %v5791 = vpop.f32.mrb[0].mxu0
  %v5792 = vpop.f32.mrb[0].mxu0
  %v5793 = vadd.f32 0.0, %v5792
  %v5794 = vpop.f32.mrb[0].mxu0
  %5795 = vdwg.mxu0
  %v5796 = vadd.f32 %v5538, %v5729
  %v5797 = vadd.f32 %v5540, %v5731
  %v5798 = vadd.f32 %v5591, %v5782
  %v5799 = vadd.f32 %v5542, %v5733
  %v5800 = vadd.f32 %v5544, %v5735
  %v5801 = vadd.f32 %v5594, %v5785
  %v5802 = vadd.f32 %v5548, %v5739
  %v5803 = vadd.f32 %v5550, %v5741
  %v5804 = vadd.f32 %v5599, %v5790
  %v5805 = vadd.f32 %v5552, %v5743
  %v5806 = vadd.f32 %v5554, %v5745
  %v5807 = vadd.f32 %v5602, %v5793
  %v5808 = vmul.f32 %v5796, %v65
  %v5809 = vmul.f32 %v5797, %v69
  %v5810 = vmul.f32 %v5798, %v73
  %v5811 = vmul.f32 %v5799, %v65
  %v5812 = vmul.f32 %v5800, %v69
  %v5813 = vmul.f32 %v5801, %v73
  %v5814 = vmul.f32 %v5802, %v65
  %v5815 = vmul.f32 %v5803, %v69
  %v5816 = vmul.f32 %v5804, %v73
  %v5817 = vmul.f32 %v5805, %v65
  %v5818 = vmul.f32 %v5806, %v69
  %v5819 = vmul.f32 %v5807, %v73
  %v5820 = vmul.f32 %v5808, %v5808
  %v5821 = vmul.f32 %v5809, %v5809
  %v5822 = vmul.f32 %v5810, %v5810
  %v5823 = vmul.f32 %v5811, %v5811
  %v5824 = vmul.f32 %v5812, %v5812
  %v5825 = vmul.f32 %v5813, %v5813
  %v5826 = vmul.f32 %v5814, %v5814
  %v5827 = vmul.f32 %v5815, %v5815
  %v5828 = vmul.f32 %v5816, %v5816
  %v5829 = vmul.f32 %v5817, %v5817
  %v5830 = vmul.f32 %v5818, %v5818
  %v5831 = vmul.f32 %v5819, %v5819
  %v5832 = vadd.f32 %v5808, %v5809
  %v5833 = vadd.f32 %v5832, %v5810
  %5834 = vadd.xlane.f32.xlu0 %v5833
  %v5835 = vpop.xlane.xlu0 %5834
  %v5836 = vadd.f32 %v5811, %v5812
  %v5837 = vadd.f32 %v5836, %v5813
  %5838 = vadd.xlane.f32.xlu0 %v5837
  %v5839 = vpop.xlane.xlu0 %5838
  %v5840 = vadd.f32 %v5814, %v5815
  %v5841 = vadd.f32 %v5840, %v5816
  %5842 = vadd.xlane.f32.xlu0 %v5841
  %v5843 = vpop.xlane.xlu0 %5842
  %v5844 = vadd.f32 %v5817, %v5818
  %v5845 = vadd.f32 %v5844, %v5819
  %5846 = vadd.xlane.f32.xlu0 %v5845
  %v5847 = vpop.xlane.xlu0 %5846
  %v5848 = vadd.f32 %v5820, %v5821
  %v5849 = vadd.f32 %v5848, %v5822
  %5850 = vadd.xlane.f32.xlu0 %v5849
  %v5851 = vpop.xlane.xlu0 %5850
  %v5852 = vadd.f32 %v5823, %v5824
  %v5853 = vadd.f32 %v5852, %v5825
  %5854 = vadd.xlane.f32.xlu0 %v5853
  %v5855 = vpop.xlane.xlu0 %5854
  %v5856 = vadd.f32 %v5826, %v5827
  %v5857 = vadd.f32 %v5856, %v5828
  %5858 = vadd.xlane.f32.xlu0 %v5857
  %v5859 = vpop.xlane.xlu0 %5858
  %v5860 = vadd.f32 %v5829, %v5830
  %v5861 = vadd.f32 %v5860, %v5831
  %5862 = vadd.xlane.f32.xlu0 %v5861
  %v5863 = vpop.xlane.xlu0 %5862
  %v5864 = vmul.f32 %v5835, %v1222
  %v5865 = vmul.f32 %v5839, %v1222
  %v5866 = vmul.f32 %v5843, %v1222
  %v5867 = vmul.f32 %v5847, %v1222
  %v5868 = vmul.f32 %v5851, %v1222
  %v5869 = vmul.f32 %v5855, %v1222
  %v5870 = vmul.f32 %v5859, %v1222
  %v5871 = vmul.f32 %v5863, %v1222
  %v5872 = vmul.f32 %v5864, %v5864
  %v5873 = vmul.f32 %v5865, %v5865
  %v5874 = vmul.f32 %v5866, %v5866
  %v5875 = vmul.f32 %v5867, %v5867
  %v5876 = vsub.f32 %v5868, %v5872
  %v5877 = vsub.f32 %v5869, %v5873
  %v5878 = vsub.f32 %v5870, %v5874
  %v5879 = vsub.f32 %v5871, %v5875
  %v5880 = vmax.f32 %v5876, 0.0
  %v5881 = vmax.f32 %v5877, 0.0
  %v5882 = vmax.f32 %v5878, 0.0
  %v5883 = vmax.f32 %v5879, 0.0
  %s5884 = scalar_lea.vmem %s7, 160
  %v5885 = vld [vmem:[%s5884] sm:$0xff]
  %v5886 = vld [vmem:[%s5884 + $0x8] sm:$0xff]
  %v5887 = vld [vmem:[%s5884 + $0x10] sm:$0xff]
  %v5888 = vld [vmem:[%s5884 + $0x18] sm:$0xff]
  %v5889 = vadd.f32 %v5880, 1e-05
  %v5890 = vadd.f32 %v5881, 1e-05
  %v5891 = vadd.f32 %v5882, 1e-05
  %v5892 = vadd.f32 %v5883, 1e-05
  %v5893 = vrsqrt.pop %v5889
  %v5894 = vrsqrt.pop %v5890
  %v5895 = vrsqrt.pop %v5891
  %v5896 = vrsqrt.pop %v5892
  %v5897 = vmul.f32 %v5885, %v5893
  %v5898 = vmul.f32 %v5886, %v5894
  %v5899 = vmul.f32 %v5887, %v5895
  %v5900 = vmul.f32 %v5888, %v5896
  %s5901 = scalar_lea.vmem %s8, 160
  %v5902 = vld [vmem:[%s5901] sm:$0xff]
  %v5903 = vld [vmem:[%s5901 + $0x8] sm:$0xff]
  %v5904 = vld [vmem:[%s5901 + $0x10] sm:$0xff]
  %v5905 = vld [vmem:[%s5901 + $0x18] sm:$0xff]
  %v5906 = vmul.f32 %v5864, %v5897
  %v5907 = vmul.f32 %v5865, %v5898
  %v5908 = vmul.f32 %v5866, %v5899
  %v5909 = vmul.f32 %v5867, %v5900
  %v5910 = vsub.f32 %v5902, %v5906
  %v5911 = vsub.f32 %v5903, %v5907
  %v5912 = vsub.f32 %v5904, %v5908
  %v5913 = vsub.f32 %v5905, %v5909
  %5915 = vset.pattern.permute.xlu0 0
  %5916 = vperm.xlu0 %5915, %v5897
  %v5917 = vpop.permute.xlu0 %5916
  %5920 = vset.pattern.permute.xlu0 0
  %5921 = vperm.xlu0 %5920, %v5898
  %v5922 = vpop.permute.xlu0 %5921
  %5925 = vset.pattern.permute.xlu0 0
  %5926 = vperm.xlu0 %5925, %v5899
  %v5927 = vpop.permute.xlu0 %5926
  %5930 = vset.pattern.permute.xlu0 0
  %5931 = vperm.xlu0 %5930, %v5900
  %v5932 = vpop.permute.xlu0 %5931
  %v5934 = vmul.f32 %v5796, %v5917
  %v5935 = vmul.f32 %v5797, %v5917
  %v5936 = vmul.f32 %v5798, %v5917
  %v5937 = vmul.f32 %v5799, %v5922
  %v5938 = vmul.f32 %v5800, %v5922
  %v5939 = vmul.f32 %v5801, %v5922
  %v5940 = vmul.f32 %v5802, %v5927
  %v5941 = vmul.f32 %v5803, %v5927
  %v5942 = vmul.f32 %v5804, %v5927
  %v5943 = vmul.f32 %v5805, %v5932
  %v5944 = vmul.f32 %v5806, %v5932
  %v5945 = vmul.f32 %v5807, %v5932
  %5947 = vset.pattern.permute.xlu0 0
  %5948 = vperm.xlu0 %5947, %v5910
  %v5949 = vpop.permute.xlu0 %5948
  %5952 = vset.pattern.permute.xlu0 0
  %5953 = vperm.xlu0 %5952, %v5911
  %v5954 = vpop.permute.xlu0 %5953
  %5957 = vset.pattern.permute.xlu0 0
  %5958 = vperm.xlu0 %5957, %v5912
  %v5959 = vpop.permute.xlu0 %5958
  %5962 = vset.pattern.permute.xlu0 0
  %5963 = vperm.xlu0 %5962, %v5913
  %v5964 = vpop.permute.xlu0 %5963
  %v5966 = vadd.f32 %v5934, %v5949
  %v5967 = vadd.f32 %v5935, %v5949
  %v5968 = vadd.f32 %v5936, %v5949
  %v5969 = vadd.f32 %v5937, %v5954
  %v5970 = vadd.f32 %v5938, %v5954
  %v5971 = vadd.f32 %v5939, %v5954
  %v5972 = vadd.f32 %v5940, %v5959
  %v5973 = vadd.f32 %v5941, %v5959
  %v5974 = vadd.f32 %v5942, %v5959
  %v5975 = vadd.f32 %v5943, %v5964
  %v5976 = vadd.f32 %v5944, %v5964
  %v5977 = vadd.f32 %v5945, %v5964
  %v5978 = vmax.f32 %v5966, 0.0
  %v5979 = vmax.f32 %v5967, 0.0
  %v5980 = vmax.f32 %v5968, 0.0
  %v5981 = vmax.f32 %v5969, 0.0
  %v5982 = vmax.f32 %v5970, 0.0
  %v5983 = vmax.f32 %v5971, 0.0
  %v5984 = vmax.f32 %v5972, 0.0
  %v5985 = vmax.f32 %v5973, 0.0
  %v5986 = vmax.f32 %v5974, 0.0
  %v5987 = vmax.f32 %v5975, 0.0
  %v5988 = vmax.f32 %v5976, 0.0
  %v5989 = vmax.f32 %v5977, 0.0
  %v5990 = vmul.f32 %v5978, %v65
  %v5991 = vmul.f32 %v5979, %v69
  %v5992 = vmul.f32 %v5980, %v73
  %v5993 = vmul.f32 %v5981, %v65
  %v5994 = vmul.f32 %v5982, %v69
  %v5995 = vmul.f32 %v5983, %v73
  %v5996 = vmul.f32 %v5984, %v65
  %v5997 = vmul.f32 %v5985, %v69
  %v5998 = vmul.f32 %v5986, %v73
  %v5999 = vmul.f32 %v5987, %v65
  %v6000 = vmul.f32 %v5988, %v69
  %v6001 = vmul.f32 %v5989, %v73
  %v6002 = vmul.f32 %v5990, %v5990
  %v6003 = vmul.f32 %v5991, %v5991
  %v6004 = vmul.f32 %v5992, %v5992
  %v6005 = vmul.f32 %v5993, %v5993
  %v6006 = vmul.f32 %v5994, %v5994
  %v6007 = vmul.f32 %v5995, %v5995
  %v6008 = vmul.f32 %v5996, %v5996
  %v6009 = vmul.f32 %v5997, %v5997
  %v6010 = vmul.f32 %v5998, %v5998
  %v6011 = vmul.f32 %v5999, %v5999
  %v6012 = vmul.f32 %v6000, %v6000
  %v6013 = vmul.f32 %v6001, %v6001
  %v6014 = vld [vmem:[%s12] sm:$0xff]
  %v6015 = vld [vmem:[%s12 + $0x8] sm:$0xff]
  %v6016 = vld [vmem:[%s12 + $0x10] sm:$0xff]
  %v6017 = vld [vmem:[%s12 + $0x18] sm:$0xff]
  %v6018 = vld [vmem:[%s12 + $0x20] sm:$0xff]
  %v6019 = vld [vmem:[%s12 + $0x28] sm:$0xff]
  %v6020 = vld [vmem:[%s12 + $0x30] sm:$0xff]
  %v6021 = vld [vmem:[%s12 + $0x38] sm:$0xff]
  %v6022 = vld [vmem:[%s12 + $0x40] sm:$0xff]
  %v6023 = vld [vmem:[%s12 + $0x48] sm:$0xff]
  %v6024 = vld [vmem:[%s12 + $0x50] sm:$0xff]
  %v6025 = vld [vmem:[%s12 + $0x58] sm:$0xff]
  %v6026 = vld [vmem:[%s12 + $0x60] sm:$0xff]
  %v6027 = vld [vmem:[%s12 + $0x68] sm:$0xff]
  %v6028 = vld [vmem:[%s12 + $0x70] sm:$0xff]
  %v6029 = vld [vmem:[%s12 + $0x78] sm:$0xff]
  %v6030 = vld [vmem:[%s12 + $0x80] sm:$0xff]
  %v6031 = vld [vmem:[%s12 + $0x88] sm:$0xff]
  %v6032 = vld [vmem:[%s12 + $0x90] sm:$0xff]
  %v6033 = vld [vmem:[%s12 + $0x98] sm:$0xff]
  %v6034 = vld [vmem:[%s12 + $0xa0] sm:$0xff]
  %v6035 = vld [vmem:[%s12 + $0xa8] sm:$0xff]
  %v6036 = vld [vmem:[%s12 + $0xb0] sm:$0xff]
  %v6037 = vld [vmem:[%s12 + $0xb8] sm:$0xff]
  %v6038 = vld [vmem:[%s12 + $0xc0] sm:$0xff]
  %v6039 = vld [vmem:[%s12 + $0xc8] sm:$0xff]
  %v6040 = vld [vmem:[%s12 + $0xd0] sm:$0xff]
  %v6041 = vld [vmem:[%s12 + $0xd8] sm:$0xff]
  %v6042 = vld [vmem:[%s12 + $0xe0] sm:$0xff]
  %v6043 = vld [vmem:[%s12 + $0xe8] sm:$0xff]
  %v6044 = vld [vmem:[%s12 + $0xf0] sm:$0xff]
  %v6045 = vld [vmem:[%s12 + $0xf8] sm:$0xff]
  %v6046 = vld [vmem:[%s12 + $0x100] sm:$0xff]
  %v6047 = vld [vmem:[%s12 + $0x108] sm:$0xff]
  %v6048 = vld [vmem:[%s12 + $0x110] sm:$0xff]
  %v6049 = vld [vmem:[%s12 + $0x118] sm:$0xff]
  %v6050 = vld [vmem:[%s12 + $0x120] sm:$0xff]
  %v6051 = vld [vmem:[%s12 + $0x128] sm:$0xff]
  %v6052 = vld [vmem:[%s12 + $0x130] sm:$0xff]
  %v6053 = vld [vmem:[%s12 + $0x138] sm:$0xff]
  %v6054 = vld [vmem:[%s12 + $0x140] sm:$0xff]
  %v6055 = vld [vmem:[%s12 + $0x148] sm:$0xff]
  %v6056 = vld [vmem:[%s12 + $0x150] sm:$0xff]
  %v6057 = vld [vmem:[%s12 + $0x158] sm:$0xff]
  %v6058 = vld [vmem:[%s12 + $0x160] sm:$0xff]
  %v6059 = vld [vmem:[%s12 + $0x168] sm:$0xff]
  %v6060 = vld [vmem:[%s12 + $0x170] sm:$0xff]
  %v6061 = vld [vmem:[%s12 + $0x178] sm:$0xff]
  %6062 = vmatprep.subr.mxu0 0.0
  %6063 = vmatpush1.msra.mxu0 %v6014
  %6064 = vmatprep.subr.mxu0 0.0
  %6065 = vmatpush1.msra.mxu0 %v6015
  %6066 = vmatprep.subr.mxu0 0.0
  %6067 = vmatpush1.msra.mxu0 %v6016
  %6068 = vmatprep.subr.mxu0 0.0
  %6069 = vmatpush1.msra.mxu0 %v6017
  %6070 = vmatprep.subr.mxu0 0.0
  %6071 = vmatpush1.msra.mxu0 %v6018
  %6072 = vmatprep.subr.mxu0 0.0
  %6073 = vmatpush1.msra.mxu0 %v6019
  %6074 = vmatprep.subr.mxu0 0.0
  %6075 = vmatpush1.msra.mxu0 %v6020
  %6076 = vmatprep.subr.mxu0 0.0
  %6077 = vmatpush1.msra.mxu0 %v6021
  %6078 = vmatprep.subr.mxu0 0.0
  %6079 = vmatpush1.msra.mxu0 %v6022
  %6080 = vmatprep.subr.mxu0 0.0
  %6081 = vmatpush1.msra.mxu0 %v6023
  %6082 = vmatprep.subr.mxu0 0.0
  %6083 = vmatpush1.msra.mxu0 %v6024
  %6084 = vmatprep.subr.mxu0 0.0
  %6085 = vmatpush1.msra.mxu0 %v6025
  %6086 = vmatprep.subr.mxu0 0.0
  %6087 = vmatpush1.msra.mxu0 %v6026
  %6088 = vmatprep.subr.mxu0 0.0
  %6089 = vmatpush1.msra.mxu0 %v6027
  %6090 = vmatprep.subr.mxu0 0.0
  %6091 = vmatpush1.msra.mxu0 %v6028
  %6092 = vmatprep.subr.mxu0 0.0
  %6093 = vmatpush1.msra.mxu0 %v6029
  %6094 = vmatprep.subr.mxu0 0.0
  %6095 = vmatpush1.msra.mxu0 %v6030
  %6096 = vmatprep.subr.mxu0 0.0
  %6097 = vmatpush1.msra.mxu0 %v6031
  %6098 = vmatprep.subr.mxu0 0.0
  %6099 = vmatpush1.msra.mxu0 %v6032
  %6100 = vmatprep.subr.mxu0 0.0
  %6101 = vmatpush1.msra.mxu0 %v6033
  %6102 = vmatprep.subr.mxu0 0.0
  %6103 = vmatpush1.msra.mxu0 %v6034
  %6104 = vmatprep.subr.mxu0 0.0
  %6105 = vmatpush1.msra.mxu0 %v6035
  %6106 = vmatprep.subr.mxu0 0.0
  %6107 = vmatpush1.msra.mxu0 %v6036
  %6108 = vmatprep.subr.mxu0 0.0
  %6109 = vmatpush1.msra.mxu0 %v6037
  %6110 = vmatprep.subr.mxu0 0.0
  %6111 = vmatpush1.msra.mxu0 %v6038
  %6112 = vmatprep.subr.mxu0 0.0
  %6113 = vmatpush1.msra.mxu0 %v6039
  %6114 = vmatprep.subr.mxu0 0.0
  %6115 = vmatpush1.msra.mxu0 %v6040
  %6116 = vmatprep.subr.mxu0 0.0
  %6117 = vmatpush1.msra.mxu0 %v6041
  %6118 = vmatprep.subr.mxu0 0.0
  %6119 = vmatpush1.msra.mxu0 %v6042
  %6120 = vmatprep.subr.mxu0 0.0
  %6121 = vmatpush1.msra.mxu0 %v6043
  %6122 = vmatprep.subr.mxu0 0.0
  %6123 = vmatpush1.msra.mxu0 %v6044
  %6124 = vmatprep.subr.mxu0 0.0
  %6125 = vmatpush1.msra.mxu0 %v6045
  %6126 = vmatprep.mubr.f32.mxu0 %v5991
  %6127 = vmatmul.mubr.f32.gmra.mrb[0].mxu0 %v5990
  %v6128 = vpop.f32.mrb[0].mxu0
  %v6129 = vadd.f32 0.0, %v6128
  %v6130 = vpop.f32.mrb[0].mxu0
  %6131 = vmatprep.mubr.f32.mxu0 %v5994
  %6132 = vmatmul.mubr.f32.gmra.mrb[0].mxu0 %v5993
  %v6133 = vpop.f32.mrb[0].mxu0
  %v6134 = vadd.f32 0.0, %v6133
  %v6135 = vpop.f32.mrb[0].mxu0
  %6136 = vmatprep.mubr.f32.mxu0 %v5997
  %6137 = vmatmul.mubr.f32.gmra.mrb[0].mxu0 %v5996
  %v6138 = vpop.f32.mrb[0].mxu0
  %v6139 = vadd.f32 0.0, %v6138
  %v6140 = vpop.f32.mrb[0].mxu0
  %6141 = vmatprep.mubr.f32.mxu0 %v6000
  %6142 = vmatmul.mubr.f32.gmra.mrb[0].mxu0 %v5999
  %v6143 = vpop.f32.mrb[0].mxu0
  %v6144 = vadd.f32 0.0, %v6143
  %v6145 = vpop.f32.mrb[0].mxu0
  %6146 = vmatprep.mubr.f32.mxu0 %v6003
  %6147 = vmatmul.mubr.f32.gmra.mrb[0].mxu0 %v6002
  %v6148 = vpop.f32.mrb[0].mxu0
  %v6149 = vadd.f32 0.0, %v6148
  %v6150 = vpop.f32.mrb[0].mxu0
  %6151 = vmatprep.mubr.f32.mxu0 %v6006
  %6152 = vmatmul.mubr.f32.gmra.mrb[0].mxu0 %v6005
  %v6153 = vpop.f32.mrb[0].mxu0
  %v6154 = vadd.f32 0.0, %v6153
  %v6155 = vpop.f32.mrb[0].mxu0
  %6156 = vmatprep.mubr.f32.mxu0 %v6009
  %6157 = vmatmul.mubr.f32.gmra.mrb[0].mxu0 %v6008
  %v6158 = vpop.f32.mrb[0].mxu0
  %v6159 = vadd.f32 0.0, %v6158
  %v6160 = vpop.f32.mrb[0].mxu0
  %6161 = vmatprep.mubr.f32.mxu0 %v6012
  %6162 = vmatmul.mubr.f32.gmra.mrb[0].mxu0 %v6011
  %v6163 = vpop.f32.mrb[0].mxu0
  %v6164 = vadd.f32 0.0, %v6163
  %v6165 = vpop.f32.mrb[0].mxu0
  %6166 = vdwg.mxu0
  %6167 = vmatprep.subr.mxu0 0.0
  %6168 = vmatpush1.msra.mxu0 %v6046
  %6169 = vmatprep.subr.mxu0 0.0
  %6170 = vmatpush1.msra.mxu0 %v6047
  %6171 = vmatprep.subr.mxu0 0.0
  %6172 = vmatpush1.msra.mxu0 %v6048
  %6173 = vmatprep.subr.mxu0 0.0
  %6174 = vmatpush1.msra.mxu0 %v6049
  %6175 = vmatprep.subr.mxu0 0.0
  %6176 = vmatpush1.msra.mxu0 %v6050
  %6177 = vmatprep.subr.mxu0 0.0
  %6178 = vmatpush1.msra.mxu0 %v6051
  %6179 = vmatprep.subr.mxu0 0.0
  %6180 = vmatpush1.msra.mxu0 %v6052
  %6181 = vmatprep.subr.mxu0 0.0
  %6182 = vmatpush1.msra.mxu0 %v6053
  %6183 = vmatprep.subr.mxu0 0.0
  %6184 = vmatpush1.msra.mxu0 %v6054
  %6185 = vmatprep.subr.mxu0 0.0
  %6186 = vmatpush1.msra.mxu0 %v6055
  %6187 = vmatprep.subr.mxu0 0.0
  %6188 = vmatpush1.msra.mxu0 %v6056
  %6189 = vmatprep.subr.mxu0 0.0
  %6190 = vmatpush1.msra.mxu0 %v6057
  %6191 = vmatprep.subr.mxu0 0.0
  %6192 = vmatpush1.msra.mxu0 %v6058
  %6193 = vmatprep.subr.mxu0 0.0
  %6194 = vmatpush1.msra.mxu0 %v6059
  %6195 = vmatprep.subr.mxu0 0.0
  %6196 = vmatpush1.msra.mxu0 %v6060
  %6197 = vmatprep.subr.mxu0 0.0
  %6198 = vmatpush1.msra.mxu0 %v6061
  %6199 = vmatprep.subr.mxu0 0.0
  %6200 = vmatpush1.msra.mxu0 0.0
  %6201 = vmatprep.subr.mxu0 0.0
  %6202 = vmatpush1.msra.mxu0 0.0
  %6203 = vmatprep.subr.mxu0 0.0
  %6204 = vmatpush1.msra.mxu0 0.0
  %6205 = vmatprep.subr.mxu0 0.0
  %6206 = vmatpush1.msra.mxu0 0.0
  %6207 = vmatprep.subr.mxu0 0.0
  %6208 = vmatpush1.msra.mxu0 0.0
  %6209 = vmatprep.subr.mxu0 0.0
  %6210 = vmatpush1.msra.mxu0 0.0
  %6211 = vmatprep.subr.mxu0 0.0
  %6212 = vmatpush1.msra.mxu0 0.0
  %6213 = vmatprep.subr.mxu0 0.0
  %6214 = vmatpush1.msra.mxu0 0.0
  %6215 = vmatprep.subr.mxu0 0.0
  %6216 = vmatpush1.msra.mxu0 0.0
  %6217 = vmatprep.subr.mxu0 0.0
  %6218 = vmatpush1.msra.mxu0 0.0
  %6219 = vmatprep.subr.mxu0 0.0
  %6220 = vmatpush1.msra.mxu0 0.0
  %6221 = vmatprep.subr.mxu0 0.0
  %6222 = vmatpush1.msra.mxu0 0.0
  %6223 = vmatprep.subr.mxu0 0.0
  %6224 = vmatpush1.msra.mxu0 0.0
  %6225 = vmatprep.subr.mxu0 0.0
  %6226 = vmatpush1.msra.mxu0 0.0
  %6227 = vmatprep.subr.mxu0 0.0
  %6228 = vmatpush1.msra.mxu0 0.0
  %6229 = vmatprep.subr.mxu0 0.0
  %6230 = vmatpush1.msra.mxu0 0.0
  %6231 = vmatprep.mubr.f32.mxu0 0.0
  %6232 = vmatmul.mubr.f32.gmra.mrb[0].mxu0 %v5992
  %v6233 = vpop.f32.mrb[0].mxu0
  %v6234 = vadd.f32 %v6129, %v6233
  %v6235 = vpop.f32.mrb[0].mxu0
  %6236 = vmatprep.mubr.f32.mxu0 0.0
  %6237 = vmatmul.mubr.f32.gmra.mrb[0].mxu0 %v5995
  %v6238 = vpop.f32.mrb[0].mxu0
  %v6239 = vadd.f32 %v6134, %v6238
  %v6240 = vpop.f32.mrb[0].mxu0
  %6241 = vmatprep.mubr.f32.mxu0 0.0
  %6242 = vmatmul.mubr.f32.gmra.mrb[0].mxu0 %v5998
  %v6243 = vpop.f32.mrb[0].mxu0
  %v6244 = vadd.f32 %v6139, %v6243
  %v6245 = vpop.f32.mrb[0].mxu0
  %6246 = vmatprep.mubr.f32.mxu0 0.0
  %6247 = vmatmul.mubr.f32.gmra.mrb[0].mxu0 %v6001
  %v6248 = vpop.f32.mrb[0].mxu0
  %v6249 = vadd.f32 %v6144, %v6248
  %v6250 = vpop.f32.mrb[0].mxu0
  %6251 = vmatprep.mubr.f32.mxu0 0.0
  %6252 = vmatmul.mubr.f32.gmra.mrb[0].mxu0 %v6004
  %v6253 = vpop.f32.mrb[0].mxu0
  %v6254 = vadd.f32 %v6149, %v6253
  %v6255 = vpop.f32.mrb[0].mxu0
  %6256 = vmatprep.mubr.f32.mxu0 0.0
  %6257 = vmatmul.mubr.f32.gmra.mrb[0].mxu0 %v6007
  %v6258 = vpop.f32.mrb[0].mxu0
  %v6259 = vadd.f32 %v6154, %v6258
  %v6260 = vpop.f32.mrb[0].mxu0
  %6261 = vmatprep.mubr.f32.mxu0 0.0
  %6262 = vmatmul.mubr.f32.gmra.mrb[0].mxu0 %v6010
  %v6263 = vpop.f32.mrb[0].mxu0
  %v6264 = vadd.f32 %v6159, %v6263
  %v6265 = vpop.f32.mrb[0].mxu0
  %6266 = vmatprep.mubr.f32.mxu0 0.0
  %6267 = vmatmul.mubr.f32.gmra.mrb[0].mxu0 %v6013
  %v6268 = vpop.f32.mrb[0].mxu0
  %v6269 = vadd.f32 %v6164, %v6268
  %v6270 = vpop.f32.mrb[0].mxu0
  %6271 = vdwg.mxu0
  %v6272 = vrcp.pop 128.0
  %v6273 = vmul.f32 %v6234, %v6272
  %v6274 = vmul.f32 %v6239, %v6272
  %v6275 = vmul.f32 %v6244, %v6272
  %v6276 = vmul.f32 %v6249, %v6272
  %v6277 = vmul.f32 %v6234, %v6234
  %v6278 = vmul.f32 %v6239, %v6239
  %v6279 = vmul.f32 %v6244, %v6244
  %v6280 = vmul.f32 %v6249, %v6249
  %v6281 = vmul.f32 %v6277, %v6272
  %v6282 = vmul.f32 %v6278, %v6272
  %v6283 = vmul.f32 %v6279, %v6272
  %v6284 = vmul.f32 %v6280, %v6272
  %v6285 = vsub.f32 %v6254, %v6281
  %v6286 = vsub.f32 %v6259, %v6282
  %v6287 = vsub.f32 %v6264, %v6283
  %v6288 = vsub.f32 %v6269, %v6284
  %v6289 = vrcp.pop 127.0
  %v6290 = vmul.f32 %v6285, %v6289
  %v6291 = vmul.f32 %v6286, %v6289
  %v6292 = vmul.f32 %v6287, %v6289
  %v6293 = vmul.f32 %v6288, %v6289
  %v6294 = vmax.f32 %v6290, 0.0
  %v6295 = vmax.f32 %v6291, 0.0
  %v6296 = vmax.f32 %v6292, 0.0
  %v6297 = vmax.f32 %v6293, 0.0
  %v6298 = vrsqrt.pop %v6294
  %v6299 = vmul.f32 %v6294, %v6298
  %vm6300 = vcmp.eq.f32.partialorder %v6294, inf
  %v6301 = vsel %vm6300, %v6294, %v6299
  %vm6302 = vcmp.eq.f32.partialorder %v6294, 0.0
  %v6303 = vand.u32 %v6294, 2147483648
  %v6304 = vsel %vm6302, %v6303, %v6301
  %v6305 = vrsqrt.pop %v6295
  %v6306 = vmul.f32 %v6295, %v6305
  %vm6307 = vcmp.eq.f32.partialorder %v6295, inf
  %v6308 = vsel %vm6307, %v6295, %v6306
  %vm6309 = vcmp.eq.f32.partialorder %v6295, 0.0
  %v6310 = vand.u32 %v6295, 2147483648
  %v6311 = vsel %vm6309, %v6310, %v6308
  %v6312 = vrsqrt.pop %v6296
  %v6313 = vmul.f32 %v6296, %v6312
  %vm6314 = vcmp.eq.f32.partialorder %v6296, inf
  %v6315 = vsel %vm6314, %v6296, %v6313
  %vm6316 = vcmp.eq.f32.partialorder %v6296, 0.0
  %v6317 = vand.u32 %v6296, 2147483648
  %v6318 = vsel %vm6316, %v6317, %v6315
  %v6319 = vrsqrt.pop %v6297
  %v6320 = vmul.f32 %v6297, %v6319
  %vm6321 = vcmp.eq.f32.partialorder %v6297, inf
  %v6322 = vsel %vm6321, %v6297, %v6320
  %vm6323 = vcmp.eq.f32.partialorder %v6297, 0.0
  %v6324 = vand.u32 %v6297, 2147483648
  %v6325 = vsel %vm6323, %v6324, %v6322
  %v6326 = vld [vmem:[%s9] sm:$0xff]
  %v6327 = vld [vmem:[%s9 + $0x8] sm:$0xff]
  %v6328 = vld [vmem:[%s9 + $0x10] sm:$0xff]
  %v6329 = vld [vmem:[%s9 + $0x18] sm:$0xff]
  %v6330 = vld [vmem:[%s10] sm:$0xff]
  %v6331 = vld [vmem:[%s10 + $0x8] sm:$0xff]
  %v6332 = vld [vmem:[%s10 + $0x10] sm:$0xff]
  %v6333 = vld [vmem:[%s10 + $0x18] sm:$0xff]
  %6335 = vset.pattern.permute.xlu0 0
  %6336 = vperm.xlu0 %6335, %v6330
  %v6337 = vpop.permute.xlu0 %6336
  %6340 = vset.pattern.permute.xlu0 0
  %6341 = vperm.xlu0 %6340, %v6331
  %v6342 = vpop.permute.xlu0 %6341
  %6345 = vset.pattern.permute.xlu0 0
  %6346 = vperm.xlu0 %6345, %v6332
  %v6347 = vpop.permute.xlu0 %6346
  %6350 = vset.pattern.permute.xlu0 0
  %6351 = vperm.xlu0 %6350, %v6333
  %v6352 = vpop.permute.xlu0 %6351
  %vm6354 = vcmask 523264
  %v6356 = vsel %vm6354, %v6326, 0
  %v6359 = vsel %vm6354, %v6327, 0
  %v6362 = vsel %vm6354, %v6328, 0
  %v6365 = vsel %vm6354, %v6329, 0
  %6367 = vmatprep.subr.mxu0 0.0
  %6368 = vmatpush1.msra.mxu0 %v6273
  %6369 = vmatprep.subr.mxu0 0.0
  %6370 = vmatpush1.msra.mxu0 %v6274
  %6371 = vmatprep.subr.mxu0 0.0
  %6372 = vmatpush1.msra.mxu0 %v6275
  %6373 = vmatprep.subr.mxu0 0.0
  %6374 = vmatpush1.msra.mxu0 %v6276
  %6375 = vmatprep.subr.mxu0 0.0
  %6376 = vmatpush1.msra.mxu0 %v6304
  %6377 = vmatprep.subr.mxu0 0.0
  %6378 = vmatpush1.msra.mxu0 %v6311
  %6379 = vmatprep.subr.mxu0 0.0
  %6380 = vmatpush1.msra.mxu0 %v6318
  %6381 = vmatprep.subr.mxu0 0.0
  %6382 = vmatpush1.msra.mxu0 %v6325
  %6383 = vmatprep.subr.mxu0 0.0
  %6384 = vmatpush1.msra.mxu0 0.0
  %6385 = vmatprep.subr.mxu0 0.0
  %6386 = vmatpush1.msra.mxu0 0.0
  %6387 = vmatprep.subr.mxu0 0.0
  %6388 = vmatpush1.msra.mxu0 0.0
  %6389 = vmatprep.subr.mxu0 0.0
  %6390 = vmatpush1.msra.mxu0 0.0
  %6391 = vmatprep.subr.mxu0 0.0
  %6392 = vmatpush1.msra.mxu0 0.0
  %6393 = vmatprep.subr.mxu0 0.0
  %6394 = vmatpush1.msra.mxu0 0.0
  %6395 = vmatprep.subr.mxu0 0.0
  %6396 = vmatpush1.msra.mxu0 0.0
  %6397 = vmatprep.subr.mxu0 0.0
  %6398 = vmatpush1.msra.mxu0 0.0
  %6399 = vmatprep.subr.mxu0 0.0
  %6400 = vmatpush1.msra.mxu0 0.0
  %6401 = vmatprep.subr.mxu0 0.0
  %6402 = vmatpush1.msra.mxu0 0.0
  %6403 = vmatprep.subr.mxu0 0.0
  %6404 = vmatpush1.msra.mxu0 0.0
  %6405 = vmatprep.subr.mxu0 0.0
  %6406 = vmatpush1.msra.mxu0 0.0
  %6407 = vmatprep.subr.mxu0 0.0
  %6408 = vmatpush1.msra.mxu0 0.0
  %6409 = vmatprep.subr.mxu0 0.0
  %6410 = vmatpush1.msra.mxu0 0.0
  %6411 = vmatprep.subr.mxu0 0.0
  %6412 = vmatpush1.msra.mxu0 0.0
  %6413 = vmatprep.subr.mxu0 0.0
  %6414 = vmatpush1.msra.mxu0 0.0
  %6415 = vmatprep.subr.mxu0 0.0
  %6416 = vmatpush1.msra.mxu0 0.0
  %6417 = vmatprep.subr.mxu0 0.0
  %6418 = vmatpush1.msra.mxu0 0.0
  %6419 = vmatprep.subr.mxu0 0.0
  %6420 = vmatpush1.msra.mxu0 0.0
  %6421 = vmatprep.subr.mxu0 0.0
  %6422 = vmatpush1.msra.mxu0 0.0
  %6423 = vmatprep.subr.mxu0 0.0
  %6424 = vmatpush1.msra.mxu0 0.0
  %6425 = vmatprep.subr.mxu0 0.0
  %6426 = vmatpush1.msra.mxu0 0.0
  %6427 = vmatprep.subr.mxu0 0.0
  %6428 = vmatpush1.msra.mxu0 0.0
  %6429 = vmatprep.subr.mxu0 0.0
  %6430 = vmatpush1.msra.mxu0 0.0
  %6431 = vmatprep.mubr.f32.mxu0 0.0
  %6432 = vmatmul.mubr.f32.gmra.mrb[0].mxu0 %v6356
  %v6433 = vpop.f32.mrb[0].mxu0
  %v6434 = vadd.f32 %v6337, %v6433
  %v6435 = vpop.f32.mrb[0].mxu0
  %6436 = vmatprep.mubr.f32.mxu0 0.0
  %6437 = vmatmul.mubr.f32.gmra.mrb[0].mxu0 %v6359
  %v6438 = vpop.f32.mrb[0].mxu0
  %v6439 = vadd.f32 %v6342, %v6438
  %v6440 = vpop.f32.mrb[0].mxu0
  %6441 = vmatprep.mubr.f32.mxu0 0.0
  %6442 = vmatmul.mubr.f32.gmra.mrb[0].mxu0 %v6362
  %v6443 = vpop.f32.mrb[0].mxu0
  %v6444 = vadd.f32 %v6347, %v6443
  %v6445 = vpop.f32.mrb[0].mxu0
  %6446 = vmatprep.mubr.f32.mxu0 0.0
  %6447 = vmatmul.mubr.f32.gmra.mrb[0].mxu0 %v6365
  %v6448 = vpop.f32.mrb[0].mxu0
  %v6449 = vadd.f32 %v6352, %v6448
  %v6450 = vpop.f32.mrb[0].mxu0
  %6451 = vdwg.mxu0
  %v6452 = vtanh.pop %v6434
  %v6453 = vtanh.pop %v6439
  %v6454 = vtanh.pop %v6444
  %v6455 = vtanh.pop %v6449
  %vm6456 = vcmask 15360
  %6457 = vst.msk [vmem:[%s13] sm:$0xff] %vm6456, %v6452
  %6458 = vst.msk [vmem:[%s13 + $0x8] sm:$0xff] %vm6456, %v6453
  %6459 = vst.msk [vmem:[%s13 + $0x10] sm:$0xff] %vm6456, %v6454
  %6460 = vst.msk [vmem:[%s13 + $0x18] sm:$0xff] %vm6456, %v6455
  // Predicated region
  $region54: #{tpu_custom_call.1} parent=0 // pred_check
    _
  $region55: #{tpu_custom_call.1} parent=0 // pred_check_branch
    %6462 = sbr.rel (0) target = $region57
  $region56: #{tpu_custom_call.1} parent=0 // pred_region
    _
  $region57: #{tpu_custom_call.1} parent=0 // pred_fallthru
    _
  // Predicated region
  $region58: #{tpu_custom_call.1} parent=0 // pred_check
    _
  $region59: #{tpu_custom_call.1} parent=0 // pred_check_branch
    %6464 = sbr.rel (0) target = $region61
  $region60: #{tpu_custom_call.1} parent=0 // pred_region
    _
  $region61: #{tpu_custom_call.1} parent=0 // pred_fallthru
    _

</llo_original>
